<compile_context>
chip_gen: v7x
topology: tpu7x:2x2x1
jax: 0.10.0
libtpu: 0.0.40
codegen_flags: <defaults>
</compile_context>

<pallas_src>
import functools
import math

import jax
import jax.numpy as jnp
from jax import lax
from jax.experimental import pallas as pl
from jax.experimental.pallas import tpu as pltpu


# ----------------------------- in-kernel helpers -----------------------------

_GELU_C = math.sqrt(2.0 / math.pi)


def _gelu_tanh(x):
    # tanh-approximate GELU (EUP tanh path); tiny, documented deviation from exact erf GELU.
    return 0.5 * x * (1.0 + jnp.tanh(_GELU_C * (x + 0.044715 * x * x * x)))


def _batchnorm(y, gamma, beta, eps):
    """BatchNorm1d (training-mode batch stats) over axis 0 of y: [M, C].

    Column sums go through a ones-row matmul so the reduction runs on the MXU instead of
    an axis-0 (sublane / XLU) reduction.
    """
    m_rows = y.shape[0]
    ones_row = jnp.ones((1, m_rows), jnp.float32)
    inv_m = 1.0 / m_rows
    mean = jnp.dot(ones_row, y, preferred_element_type=jnp.float32) * inv_m      # [1, C]
    c = y - mean
    var = jnp.dot(ones_row, c * c, preferred_element_type=jnp.float32) * inv_m   # [1, C]
    return gamma * c * lax.rsqrt(var + eps) + beta


# --------------------------- layer-pipelined backbone -------------------------

def _backbone_kernel(z_ref, wpos_ref, wp_ref, bp_ref,
                     wqkv_ref, bqkv_ref, wo_ref, bo_ref,
                     w1_ref, b1_ref, w2_ref, b2_ref,
                     g1_ref, be1_ref, g2_ref, be2_ref,
                     out_ref, src_sc, scores_sc,
                     *, n_layers, n_heads, eps, compute_dtype):
    B, L, P = z_ref.shape
    D = wp_ref.shape[1]
    H = n_heads
    dk = D // H
    scale = dk ** -0.5
    M = B * L
    cdt = compute_dtype
    layer = pl.program_id(0)

    # ---- layer 0: patch embedding + positional add; zero the res-attention carry ----
    @pl.when(layer == 0)
    def _init():
        x2 = z_ref[...].reshape(M, P).astype(cdt)
        emb = jnp.dot(x2, wp_ref[...], preferred_element_type=jnp.float32) + bp_ref[...]
        src_sc[...] = (emb.reshape(B, L, D) + wpos_ref[...]).reshape(M, D)
        scores_sc[...] = jnp.zeros_like(scores_sc)

    src = src_sc[...]                                                     # [M, D] f32

    # ---- fused Q/K/V projection: one [M, D] x [D, 3D] matmul (lane-dense output) ----
    qkv = jnp.dot(src.astype(cdt), wqkv_ref[0],
                  preferred_element_type=jnp.float32) + bqkv_ref[0]       # [M, 3D] f32
    qkv = qkv.astype(cdt).reshape(B, L, 3 * D)

    # ---- heads folded into a single (H*B)-batched attention ----
    q_all = jnp.stack([qkv[:, :, h * dk:(h + 1) * dk] for h in range(H)],
                      axis=0).reshape(H * B, L, dk)
    k_all = jnp.stack([qkv[:, :, D + h * dk:D + (h + 1) * dk] for h in range(H)],
                      axis=0).reshape(H * B, L, dk)
    v_all = jnp.stack([qkv[:, :, 2 * D + h * dk:2 * D + (h + 1) * dk] for h in range(H)],
                      axis=0).reshape(H * B, L, dk)

    sc = jnp.einsum('xld,xmd->xlm', q_all, k_all,
                    preferred_element_type=jnp.float32) * scale           # [H*B, L, L] f32
    sc = sc + scores_sc[...]        # res_attention: accumulate pre-softmax scores (kept f32)
    scores_sc[...] = sc             # carried to the next layer, reused in place

    m = jnp.max(sc, axis=-1, keepdims=True)
    p = jnp.exp(sc - m)
    inv = pl.reciprocal(jnp.sum(p, axis=-1, keepdims=True), approx=True)
    attn = (p * inv).astype(cdt)                                          # softmax

    ctx = jnp.einsum('xlm,xmd->xld', attn, v_all,
                     preferred_element_type=jnp.float32)                  # [H*B, L, dk]
    ctx = ctx.astype(cdt).reshape(H, B, L, dk)
    ctx2 = jnp.concatenate([ctx[h] for h in range(H)], axis=-1).reshape(M, D)

    # ---- output projection, residual add, BatchNorm (post-norm) ----
    attn_out = jnp.dot(ctx2, wo_ref[0], preferred_element_type=jnp.float32) + bo_ref[0]
    y = _batchnorm(src + attn_out, g1_ref[0], be1_ref[0], eps)

    # ---- FFN: Linear -> GELU -> Linear, residual add, BatchNorm ----
    ff = jnp.dot(y.astype(cdt), w1_ref[0], preferred_element_type=jnp.float32) + b1_ref[0]
    ff = _gelu_tanh(ff)
    ff2 = jnp.dot(ff.astype(cdt), w2_ref[0], preferred_element_type=jnp.float32) + b2_ref[0]
    src_new = _batchnorm(y + ff2, g2_ref[0], be2_ref[0], eps)

    src_sc[...] = src_new

    @pl.when(layer == n_layers - 1)
    def _finalize():
        out_ref[...] = src_new.astype(out_ref.dtype)


def pallas_backbone(z3, wpos, wp, bp, wqkv, bqkv, wo, bo, w1, b1, w2, b2,
                    g1, be1, g2, be2, *, n_heads, compute_dtype=jnp.bfloat16):
    """z3: [B, L, patch_len] -> encoder output [B*L, d_model] (bf16); B = bs*n_vars, L = num_patch."""
    B, L, P = z3.shape
    D = wp.shape[1]
    nl = wqkv.shape[0]
    d_ff = w1.shape[2]
    M = B * L

    shared = (z3, wpos, wp, bp)
    layered = (wqkv, bqkv, wo, bo, w1, b1, w2, b2, g1, be1, g2, be2)

    def const_spec(arr):
        zeros = (0,) * arr.ndim
        return pl.BlockSpec(arr.shape, lambda l: zeros)

    def layer_spec(arr):
        tail = (0,) * (arr.ndim - 1)
        return pl.BlockSpec((1,) + tuple(arr.shape[1:]), lambda l: (l,) + tail)

    in_specs = [const_spec(a) for a in shared] + [layer_spec(a) for a in layered]

    # Explicit VMEM budget: shared inputs + 2x (double-buffered) per-layer weights + scratch
    # (activation carry, score carry) + output + working-set slop; clamped to 32..64 MiB so it
    # is valid on every generation (v7x physical = 64 MiB).
    def nbytes(a):
        return int(a.size) * jnp.dtype(a.dtype).itemsize

    shared_b = sum(nbytes(a) for a in shared)
    layer_b = sum(nbytes(a) // a.shape[0] for a in layered)
    scratch_b = M * D * 4 + n_heads * B * L * L * 4
    out_b = M * D * 2
    work_b = M * (3 * D + d_ff) * 4 + 3 * n_heads * B * L * L * 4
    needed = shared_b + 2 * layer_b + scratch_b + out_b + work_b
    vmem_limit = int(min(max(2 * needed, 32 * 1024 * 1024), 64 * 1024 * 1024))

    kernel = functools.partial(_backbone_kernel, n_layers=nl, n_heads=n_heads,
                               eps=1e-5, compute_dtype=compute_dtype)
    return pl.pallas_call(
        kernel,
        out_shape=jax.ShapeDtypeStruct((M, D), jnp.bfloat16),
        grid=(nl,),
        in_specs=in_specs,
        out_specs=pl.BlockSpec((M, D), lambda l: (0, 0)),
        scratch_shapes=[
            pltpu.VMEM((M, D), jnp.float32),                  # running activation carry
            pltpu.VMEM((n_heads * B, L, L), jnp.float32),     # res-attention score carry
        ],
        compiler_params=pltpu.CompilerParams(
            dimension_semantics=("arbitrary",),
            vmem_limit_bytes=vmem_limit),
    )(*shared, *layered)


# ------------------------------- tiled linear ---------------------------------

def _linear_kernel(x_ref, w_ref, b_ref, o_ref):
    o_ref[...] = (jnp.dot(x_ref[...], w_ref[...], preferred_element_type=jnp.float32)
                  + b_ref[...]).astype(o_ref.dtype)


def pallas_linear(x, w, b, *, block_m=512):
    """y = x @ w + b.  x: [M, K] (bf16), w: [K, N] (bf16), b: [1, N] (f32).  M-tiled, parallel."""
    M, K = x.shape
    N = w.shape[1]
    bm = M
    if M > block_m:
        # Largest multiple-of-8 divisor of M within the block budget: keeps both TensorCores
        # busy on megacore parts and bounds the per-step [bm, K] block instead of loading all M.
        for cand in range(block_m, 7, -8):
            if M % cand == 0:
                bm = cand
                break

    def nb(shape, dt):
        return int(math.prod(shape)) * jnp.dtype(dt).itemsize

    needed = (2 * (nb((bm, K), x.dtype) + nb((bm, N), jnp.float32))
              + nb((K, N), w.dtype) + nb((1, N), b.dtype))
    vmem_limit = int(min(max(4 * needed, 32 * 1024 * 1024), 64 * 1024 * 1024))

    return pl.pallas_call(
        _linear_kernel,
        out_shape=jax.ShapeDtypeStruct((M, N), jnp.float32),
        grid=(M // bm,),
        in_specs=[
            pl.BlockSpec((bm, K), lambda i: (i, 0)),
            pl.BlockSpec((K, N), lambda i: (0, 0)),
            pl.BlockSpec((1, N), lambda i: (0, 0)),
        ],
        out_specs=pl.BlockSpec((bm, N), lambda i: (i, 0)),
        compiler_params=pltpu.CompilerParams(
            dimension_semantics=("parallel",),
            vmem_limit_bytes=vmem_limit),
    )(x, w, b)


# ------------------------------ parameter setup -------------------------------

def _linear_init(key, fan_in, fan_out):
    kw, kb = jax.random.split(key)
    lim = 1.0 / math.sqrt(fan_in)
    w = jax.random.uniform(kw, (fan_in, fan_out), jnp.float32, -lim, lim)
    b = jax.random.uniform(kb, (fan_out,), jnp.float32, -lim, lim)
    return w, b


def init_params(key, *, patch_len, num_patch, d_model, n_heads, d_ff, n_layers, target_dim):
    bf16 = jnp.bfloat16
    keys = jax.random.split(key, 2 + n_layers)
    p = {}
    wP, bP = _linear_init(keys[0], patch_len, d_model)
    p["W_P"], p["b_P"] = wP.astype(bf16), bP.reshape(1, d_model)        # weights pre-cast bf16
    # positional_encoding(pe='zeros'): uniform(-0.02, 0.02) of shape [num_patch, d_model]
    p["W_pos"] = jax.random.uniform(keys[1], (num_patch, d_model), jnp.float32, -0.02, 0.02)

    Wqkv, bqkv, Wo, bo, W1, b1, W2, b2 = [], [], [], [], [], [], [], []
    for l in range(n_layers):
        lk = jax.random.split(keys[2 + l], 6)
        wq, bq = _linear_init(lk[0], d_model, d_model)
        wk, bk = _linear_init(lk[1], d_model, d_model)
        wv, bv = _linear_init(lk[2], d_model, d_model)
        # fused QKV: concatenate along the output dimension (lane-dense 3*d_model output)
        Wqkv.append(jnp.concatenate([wq, wk, wv], axis=1))
        bqkv.append(jnp.concatenate([bq, bk, bv], axis=0).reshape(1, 3 * d_model))
        w, bb = _linear_init(lk[3], d_model, d_model); Wo.append(w); bo.append(bb.reshape(1, d_model))
        w, bb = _linear_init(lk[4], d_model, d_ff);    W1.append(w); b1.append(bb.reshape(1, d_ff))
        w, bb = _linear_init(lk[5], d_ff, d_model);    W2.append(w); b2.append(bb.reshape(1, d_model))

    p["Wqkv"], p["bqkv"] = jnp.stack(Wqkv).astype(bf16), jnp.stack(bqkv)
    p["Wo"], p["bo"] = jnp.stack(Wo).astype(bf16), jnp.stack(bo)
    p["W1"], p["b1"] = jnp.stack(W1).astype(bf16), jnp.stack(b1)
    p["W2"], p["b2"] = jnp.stack(W2).astype(bf16), jnp.stack(b2)
    ones = jnp.ones((n_layers, 1, d_model), jnp.float32)
    zeros = jnp.zeros((n_layers, 1, d_model), jnp.float32)
    p["g1"], p["be1"], p["g2"], p["be2"] = ones, zeros, ones, zeros

    kh = jax.random.fold_in(key, 12345)
    wh, bh = _linear_init(kh, d_model * num_patch, target_dim)
    p["Wh"], p["bh"] = wh.astype(bf16), bh.reshape(1, target_dim)
    return p


# -------------------------------- full forward --------------------------------

def patchtst_self_forward(z, params, *, n_heads, target_dim):
    """z: [bs, num_patch, n_vars, patch_len] -> [bs, target_dim, n_vars] (prediction head)."""
    bs, num_patch, n_vars, patch_len = z.shape
    d_model = params["W_P"].shape[1]

    # [bs, np, nv, P] -> [bs, nv, np, P] -> [bs*nv, np, P]  (linear acts on the last dim, so
    # this pre-transpose is equivalent to PyTorch's W_P(x) followed by transpose(1, 2)).
    z3 = jnp.transpose(z, (0, 2, 1, 3)).reshape(bs * n_vars, num_patch, patch_len)

    # Entire backbone (embed + pos + all encoder layers), pipelined over the layer grid axis.
    src = pallas_backbone(
        z3, params["W_pos"], params["W_P"], params["b_P"],
        params["Wqkv"], params["bqkv"], params["Wo"], params["bo"],
        params["W1"], params["b1"], params["W2"], params["b2"],
        params["g1"], params["be1"], params["g2"], params["be2"],
        n_heads=n_heads)                                       # [bs*nv*np, d_model] bf16

    # PredictionHead flattens over (d_model, num_patch).  Instead of transposing the activation
    # ([B, np, D] -> [B, D, np] -> extra HBM round-trip), permute the head weight's rows once at
    # trace time so it consumes the FREE row-major [B, np*d_model] reshape of the backbone output.
    h = src.reshape(bs * n_vars, num_patch * d_model)
    wh = params["Wh"].reshape(d_model, num_patch, target_dim)
    wh = jnp.transpose(wh, (1, 0, 2)).reshape(num_patch * d_model, target_dim)
    out = pallas_linear(h, wh, params["bh"])                   # [bs*nv, target_dim] f32
    out = out.reshape(bs, n_vars, target_dim)
    return jnp.transpose(out, (0, 2, 1))                       # [bs, target_dim, n_vars]


# ------------------------------------ main ------------------------------------

if __name__ == "__main__":
    # Small, self-consistent configuration.
    bs, num_patch, n_vars, patch_len = 2, 8, 4, 16
    d_model, n_heads, d_ff, n_layers = 32, 4, 64, 2
    target_dim = 24

    key = jax.random.PRNGKey(0)
    k_in, k_par = jax.random.split(key)
    z = jax.random.normal(k_in, (bs, num_patch, n_vars, patch_len), jnp.float32)

    params = init_params(
        k_par,
        patch_len=patch_len,
        num_patch=num_patch,
        d_model=d_model,
        n_heads=n_heads,
        d_ff=d_ff,
        n_layers=n_layers,
        target_dim=target_dim,
    )

    fwd = jax.jit(
        functools.partial(patchtst_self_forward, n_heads=n_heads, target_dim=target_dim)
    )
    out = fwd(z, params)
    out = jax.block_until_ready(out)
    assert out.shape == (bs, target_dim, n_vars), out.shape
    assert bool(jnp.all(jnp.isfinite(out)))
    print("KERNEL_OK")
</pallas_src>

<mosaic_0001>
module attributes {stable_mosaic.version = 11 : i64} {
  func.func @_backbone_kernel(%arg0: i32, %arg1: memref<8x8x16xf32, #tpu.memory_space<vmem>>, %arg2: memref<8x32xf32, #tpu.memory_space<vmem>>, %arg3: memref<16x32xbf16, #tpu.memory_space<vmem>>, %arg4: memref<1x32xf32, #tpu.memory_space<vmem>>, %arg5: memref<1x32x96xbf16, #tpu.memory_space<vmem>>, %arg6: memref<1x1x96xf32, #tpu.memory_space<vmem>>, %arg7: memref<1x32x32xbf16, #tpu.memory_space<vmem>>, %arg8: memref<1x1x32xf32, #tpu.memory_space<vmem>>, %arg9: memref<1x32x64xbf16, #tpu.memory_space<vmem>>, %arg10: memref<1x1x64xf32, #tpu.memory_space<vmem>>, %arg11: memref<1x64x32xbf16, #tpu.memory_space<vmem>>, %arg12: memref<1x1x32xf32, #tpu.memory_space<vmem>>, %arg13: memref<1x1x32xf32, #tpu.memory_space<vmem>>, %arg14: memref<1x1x32xf32, #tpu.memory_space<vmem>>, %arg15: memref<1x1x32xf32, #tpu.memory_space<vmem>>, %arg16: memref<1x1x32xf32, #tpu.memory_space<vmem>>, %arg17: memref<64x32xbf16, #tpu.memory_space<vmem>>, %arg18: memref<64x32xf32, #tpu.memory_space<vmem>>, %arg19: memref<32x8x8xf32, #tpu.memory_space<vmem>>) attributes {dimension_semantics = [#tpu.dimension_semantics<arbitrary>], iteration_bounds = array<i64: 2>, scalar_prefetch = 0 : i64, scratch_operands = 2 : i64, tpu.core_type = #tpu.core_type<tc>, window_params = [{pipeline_mode = #tpu.pipeline_mode<synchronous>, transform_indices = @transform_0, window_bounds = array<i64: 8, 8, 16>}, {pipeline_mode = #tpu.pipeline_mode<synchronous>, transform_indices = @transform_1, window_bounds = array<i64: 8, 32>}, {pipeline_mode = #tpu.pipeline_mode<synchronous>, transform_indices = @transform_2, window_bounds = array<i64: 16, 32>}, {pipeline_mode = #tpu.pipeline_mode<synchronous>, transform_indices = @transform_3, window_bounds = array<i64: 1, 32>}, {transform_indices = @transform_4, window_bounds = array<i64: 1, 32, 96>}, {transform_indices = @transform_5, window_bounds = array<i64: 1, 1, 96>}, {transform_indices = @transform_6, window_bounds = array<i64: 1, 32, 32>}, {transform_indices = @transform_7, window_bounds = array<i64: 1, 1, 32>}, {transform_indices = @transform_8, window_bounds = array<i64: 1, 32, 64>}, {transform_indices = @transform_9, window_bounds = array<i64: 1, 1, 64>}, {transform_indices = @transform_10, window_bounds = array<i64: 1, 64, 32>}, {transform_indices = @transform_11, window_bounds = array<i64: 1, 1, 32>}, {transform_indices = @transform_12, window_bounds = array<i64: 1, 1, 32>}, {transform_indices = @transform_13, window_bounds = array<i64: 1, 1, 32>}, {transform_indices = @transform_14, window_bounds = array<i64: 1, 1, 32>}, {transform_indices = @transform_15, window_bounds = array<i64: 1, 1, 32>}, {pipeline_mode = #tpu.pipeline_mode<synchronous>, transform_indices = @transform_16, window_bounds = array<i64: 64, 32>}]} {
    %c0_i32 = arith.constant 0 : i32
    %0 = arith.cmpi eq, %arg0, %c0_i32 : i32
    %1 = arith.extui %0 : i1 to i32
    %c0_i32_0 = arith.constant 0 : i32
    %2 = arith.cmpi ne, %1, %c0_i32_0 : i32
    scf.if %2 {
      %c0_71 = arith.constant 0 : index
      %c0_72 = arith.constant 0 : index
      %c0_73 = arith.constant 0 : index
      %162 = vector.load %arg1[%c0_71, %c0_72, %c0_73] : memref<8x8x16xf32, #tpu.memory_space<vmem>>, vector<8x8x16xf32>
      %163 = vector.shape_cast %162 : vector<8x8x16xf32> to vector<64x16xf32>
      %164 = arith.truncf %163 : vector<64x16xf32> to vector<64x16xbf16>
      %c0_74 = arith.constant 0 : index
      %c0_75 = arith.constant 0 : index
      %165 = vector.load %arg3[%c0_74, %c0_75] : memref<16x32xbf16, #tpu.memory_space<vmem>>, vector<16x32xbf16>
      %cst_76 = arith.constant dense<0.000000e+00> : vector<64x32xf32>
      %166 = tpu.matmul %164, %165, %cst_76 {dimension_numbers = #tpu.dot_dimension_numbers<[1], [0], [0], [1], [0, 0, 1, 1], [], []>} : vector<64x16xbf16>, vector<16x32xbf16>, vector<64x32xf32> -> vector<64x32xf32>
      %c0_77 = arith.constant 0 : index
      %c0_78 = arith.constant 0 : index
      %167 = vector.load %arg4[%c0_77, %c0_78] : memref<1x32xf32, #tpu.memory_space<vmem>>, vector<1x32xf32>
      %168 = vector.broadcast %167 : vector<1x32xf32> to vector<64x32xf32>
      %169 = arith.addf %166, %168 : vector<64x32xf32>
      %170 = vector.shape_cast %169 : vector<64x32xf32> to vector<8x8x32xf32>
      %c0_79 = arith.constant 0 : index
      %c0_80 = arith.constant 0 : index
      %171 = vector.load %arg2[%c0_79, %c0_80] : memref<8x32xf32, #tpu.memory_space<vmem>>, vector<8x32xf32>
      %172 = vector.shape_cast %171 : vector<8x32xf32> to vector<1x8x32xf32>
      %173 = vector.broadcast %172 : vector<1x8x32xf32> to vector<8x8x32xf32>
      %174 = arith.addf %170, %173 : vector<8x8x32xf32>
      %175 = vector.shape_cast %174 : vector<8x8x32xf32> to vector<64x32xf32>
      %c0_81 = arith.constant 0 : index
      %c0_82 = arith.constant 0 : index
      %176 = vector.load %arg18[%c0_81, %c0_82] : memref<64x32xf32, #tpu.memory_space<vmem>>, vector<64x32xf32>
      tpu.vector_store %arg18[%c0_81, %c0_82], %175 {strides = array<i32>} : memref<64x32xf32, #tpu.memory_space<vmem>>, vector<64x32xf32>,
      %cst_83 = arith.constant 0.000000e+00 : f32
      %177 = vector.broadcast %cst_83 : f32 to vector<32x8x8xf32>
      %c0_84 = arith.constant 0 : index
      %c0_85 = arith.constant 0 : index
      %c0_86 = arith.constant 0 : index
      %178 = vector.load %arg19[%c0_84, %c0_85, %c0_86] : memref<32x8x8xf32, #tpu.memory_space<vmem>>, vector<32x8x8xf32>
      tpu.vector_store %arg19[%c0_84, %c0_85, %c0_86], %177 {strides = array<i32>} : memref<32x8x8xf32, #tpu.memory_space<vmem>>, vector<32x8x8xf32>,
    } else {
    }
    %c0 = arith.constant 0 : index
    %c0_1 = arith.constant 0 : index
    %3 = vector.load %arg18[%c0, %c0_1] : memref<64x32xf32, #tpu.memory_space<vmem>>, vector<64x32xf32>
    %4 = arith.truncf %3 : vector<64x32xf32> to vector<64x32xbf16>
    %c0_2 = arith.constant 0 : index
    %c0_3 = arith.constant 0 : index
    %c0_4 = arith.constant 0 : index
    %5 = vector.load %arg5[%c0_2, %c0_3, %c0_4] : memref<1x32x96xbf16, #tpu.memory_space<vmem>>, vector<1x32x96xbf16>
    %6 = vector.shape_cast %5 : vector<1x32x96xbf16> to vector<32x96xbf16>
    %cst = arith.constant dense<0.000000e+00> : vector<64x96xf32>
    %7 = tpu.matmul %4, %6, %cst {dimension_numbers = #tpu.dot_dimension_numbers<[1], [0], [0], [1], [0, 0, 1, 1], [], []>} : vector<64x32xbf16>, vector<32x96xbf16>, vector<64x96xf32> -> vector<64x96xf32>
    %c0_5 = arith.constant 0 : index
    %c0_6 = arith.constant 0 : index
    %c0_7 = arith.constant 0 : index
    %8 = vector.load %arg6[%c0_5, %c0_6, %c0_7] : memref<1x1x96xf32, #tpu.memory_space<vmem>>, vector<1x1x96xf32>
    %9 = vector.shape_cast %8 : vector<1x1x96xf32> to vector<1x96xf32>
    %10 = vector.broadcast %9 : vector<1x96xf32> to vector<64x96xf32>
    %11 = arith.addf %7, %10 : vector<64x96xf32>
    %12 = arith.truncf %11 : vector<64x96xf32> to vector<64x96xbf16>
    %13 = vector.shape_cast %12 : vector<64x96xbf16> to vector<8x8x96xbf16>
    %14 = vector.extract_strided_slice %13 {offsets = [0, 0, 0], sizes = [8, 8, 8], strides = [1, 1, 1]} : vector<8x8x96xbf16> to vector<8x8x8xbf16>
    %15 = vector.extract_strided_slice %13 {offsets = [0, 0, 8], sizes = [8, 8, 8], strides = [1, 1, 1]} : vector<8x8x96xbf16> to vector<8x8x8xbf16>
    %16 = vector.extract_strided_slice %13 {offsets = [0, 0, 16], sizes = [8, 8, 8], strides = [1, 1, 1]} : vector<8x8x96xbf16> to vector<8x8x8xbf16>
    %17 = vector.extract_strided_slice %13 {offsets = [0, 0, 24], sizes = [8, 8, 8], strides = [1, 1, 1]} : vector<8x8x96xbf16> to vector<8x8x8xbf16>
    %18 = vector.shape_cast %14 : vector<8x8x8xbf16> to vector<1x8x8x8xbf16>
    %19 = vector.shape_cast %15 : vector<8x8x8xbf16> to vector<1x8x8x8xbf16>
    %20 = vector.shape_cast %16 : vector<8x8x8xbf16> to vector<1x8x8x8xbf16>
    %21 = vector.shape_cast %17 : vector<8x8x8xbf16> to vector<1x8x8x8xbf16>
    %22 = tpu.concatenate %18, %19, %20, %21 in 0 : vector<1x8x8x8xbf16>, vector<1x8x8x8xbf16>, vector<1x8x8x8xbf16>, vector<1x8x8x8xbf16> -> vector<4x8x8x8xbf16>
    %23 = vector.shape_cast %22 : vector<4x8x8x8xbf16> to vector<32x8x8xbf16>
    %24 = vector.extract_strided_slice %13 {offsets = [0, 0, 32], sizes = [8, 8, 8], strides = [1, 1, 1]} : vector<8x8x96xbf16> to vector<8x8x8xbf16>
    %25 = vector.extract_strided_slice %13 {offsets = [0, 0, 40], sizes = [8, 8, 8], strides = [1, 1, 1]} : vector<8x8x96xbf16> to vector<8x8x8xbf16>
    %26 = vector.extract_strided_slice %13 {offsets = [0, 0, 48], sizes = [8, 8, 8], strides = [1, 1, 1]} : vector<8x8x96xbf16> to vector<8x8x8xbf16>
    %27 = vector.extract_strided_slice %13 {offsets = [0, 0, 56], sizes = [8, 8, 8], strides = [1, 1, 1]} : vector<8x8x96xbf16> to vector<8x8x8xbf16>
    %28 = vector.shape_cast %24 : vector<8x8x8xbf16> to vector<1x8x8x8xbf16>
    %29 = vector.shape_cast %25 : vector<8x8x8xbf16> to vector<1x8x8x8xbf16>
    %30 = vector.shape_cast %26 : vector<8x8x8xbf16> to vector<1x8x8x8xbf16>
    %31 = vector.shape_cast %27 : vector<8x8x8xbf16> to vector<1x8x8x8xbf16>
    %32 = tpu.concatenate %28, %29, %30, %31 in 0 : vector<1x8x8x8xbf16>, vector<1x8x8x8xbf16>, vector<1x8x8x8xbf16>, vector<1x8x8x8xbf16> -> vector<4x8x8x8xbf16>
    %33 = vector.shape_cast %32 : vector<4x8x8x8xbf16> to vector<32x8x8xbf16>
    %34 = vector.extract_strided_slice %13 {offsets = [0, 0, 64], sizes = [8, 8, 8], strides = [1, 1, 1]} : vector<8x8x96xbf16> to vector<8x8x8xbf16>
    %35 = vector.extract_strided_slice %13 {offsets = [0, 0, 72], sizes = [8, 8, 8], strides = [1, 1, 1]} : vector<8x8x96xbf16> to vector<8x8x8xbf16>
    %36 = vector.extract_strided_slice %13 {offsets = [0, 0, 80], sizes = [8, 8, 8], strides = [1, 1, 1]} : vector<8x8x96xbf16> to vector<8x8x8xbf16>
    %37 = vector.extract_strided_slice %13 {offsets = [0, 0, 88], sizes = [8, 8, 8], strides = [1, 1, 1]} : vector<8x8x96xbf16> to vector<8x8x8xbf16>
    %38 = vector.shape_cast %34 : vector<8x8x8xbf16> to vector<1x8x8x8xbf16>
    %39 = vector.shape_cast %35 : vector<8x8x8xbf16> to vector<1x8x8x8xbf16>
    %40 = vector.shape_cast %36 : vector<8x8x8xbf16> to vector<1x8x8x8xbf16>
    %41 = vector.shape_cast %37 : vector<8x8x8xbf16> to vector<1x8x8x8xbf16>
    %42 = tpu.concatenate %38, %39, %40, %41 in 0 : vector<1x8x8x8xbf16>, vector<1x8x8x8xbf16>, vector<1x8x8x8xbf16>, vector<1x8x8x8xbf16> -> vector<4x8x8x8xbf16>
    %43 = vector.shape_cast %42 : vector<4x8x8x8xbf16> to vector<32x8x8xbf16>
    "tpu.trace_start"() <{level = 10 : i32, message = "xld,xmd->xlm"}> : () -> ()
    %cst_8 = arith.constant dense<0.000000e+00> : vector<32x8x8xf32>
    %44 = tpu.matmul %23, %33, %cst_8 {dimension_numbers = #tpu.dot_dimension_numbers<[2], [2], [1], [1], [0, 0, 0, 1, 1, 1], [0], [0]>} : vector<32x8x8xbf16>, vector<32x8x8xbf16>, vector<32x8x8xf32> -> vector<32x8x8xf32>
    "tpu.trace_stop"() : () -> ()
    %cst_9 = arith.constant 0.353553385 : f32
    %45 = vector.broadcast %cst_9 : f32 to vector<32x8x8xf32>
    %46 = arith.mulf %44, %45 : vector<32x8x8xf32>
    %c0_10 = arith.constant 0 : index
    %c0_11 = arith.constant 0 : index
    %c0_12 = arith.constant 0 : index
    %47 = vector.load %arg19[%c0_10, %c0_11, %c0_12] : memref<32x8x8xf32, #tpu.memory_space<vmem>>, vector<32x8x8xf32>
    %48 = arith.addf %46, %47 : vector<32x8x8xf32>
    %c0_13 = arith.constant 0 : index
    %c0_14 = arith.constant 0 : index
    %c0_15 = arith.constant 0 : index
    %49 = vector.load %arg19[%c0_13, %c0_14, %c0_15] : memref<32x8x8xf32, #tpu.memory_space<vmem>>, vector<32x8x8xf32>
    tpu.vector_store %arg19[%c0_13, %c0_14, %c0_15], %48 {strides = array<i32>} : memref<32x8x8xf32, #tpu.memory_space<vmem>>, vector<32x8x8xf32>,
    %cst_16 = arith.constant dense<0xFF800000> : vector<32x8xf32>
    %50 = vector.multi_reduction <maximumf>, %48, %cst_16 [2] : vector<32x8x8xf32> to vector<32x8xf32>
    %51 = vector.shape_cast %50 : vector<32x8xf32> to vector<32x8x1xf32>
    %52 = vector.broadcast %51 : vector<32x8x1xf32> to vector<32x8x8xf32>
    %53 = arith.subf %48, %52 : vector<32x8x8xf32>
    %54 = math.exp %53 : vector<32x8x8xf32>
    %cst_17 = arith.constant dense<0.000000e+00> : vector<32x8xf32>
    %55 = vector.multi_reduction <add>, %54, %cst_17 [2] : vector<32x8x8xf32> to vector<32x8xf32>
    %56 = vector.shape_cast %55 : vector<32x8xf32> to vector<32x8x1xf32>
    %57 = tpu.reciprocal %56 {approx = true} : vector<32x8x1xf32> -> vector<32x8x1xf32>
    %58 = vector.broadcast %57 : vector<32x8x1xf32> to vector<32x8x8xf32>
    %59 = arith.mulf %54, %58 : vector<32x8x8xf32>
    %60 = arith.truncf %59 : vector<32x8x8xf32> to vector<32x8x8xbf16>
    "tpu.trace_start"() <{level = 10 : i32, message = "xlm,xmd->xld"}> : () -> ()
    %cst_18 = arith.constant dense<0.000000e+00> : vector<32x8x8xf32>
    %61 = tpu.matmul %60, %43, %cst_18 {dimension_numbers = #tpu.dot_dimension_numbers<[2], [1], [1], [2], [0, 0, 0, 1, 1, 2], [0], [0]>} : vector<32x8x8xbf16>, vector<32x8x8xbf16>, vector<32x8x8xf32> -> vector<32x8x8xf32>
    "tpu.trace_stop"() : () -> ()
    %62 = arith.truncf %61 : vector<32x8x8xf32> to vector<32x8x8xbf16>
    %63 = vector.shape_cast %62 : vector<32x8x8xbf16> to vector<4x8x8x8xbf16>
    %64 = vector.extract_strided_slice %63 {offsets = [0, 0, 0, 0], sizes = [1, 8, 8, 8], strides = [1, 1, 1, 1]} : vector<4x8x8x8xbf16> to vector<1x8x8x8xbf16>
    %65 = vector.shape_cast %64 : vector<1x8x8x8xbf16> to vector<8x8x8xbf16>
    %66 = vector.extract_strided_slice %63 {offsets = [1, 0, 0, 0], sizes = [1, 8, 8, 8], strides = [1, 1, 1, 1]} : vector<4x8x8x8xbf16> to vector<1x8x8x8xbf16>
    %67 = vector.shape_cast %66 : vector<1x8x8x8xbf16> to vector<8x8x8xbf16>
    %68 = vector.extract_strided_slice %63 {offsets = [2, 0, 0, 0], sizes = [1, 8, 8, 8], strides = [1, 1, 1, 1]} : vector<4x8x8x8xbf16> to vector<1x8x8x8xbf16>
    %69 = vector.shape_cast %68 : vector<1x8x8x8xbf16> to vector<8x8x8xbf16>
    %70 = vector.extract_strided_slice %63 {offsets = [3, 0, 0, 0], sizes = [1, 8, 8, 8], strides = [1, 1, 1, 1]} : vector<4x8x8x8xbf16> to vector<1x8x8x8xbf16>
    %71 = vector.shape_cast %70 : vector<1x8x8x8xbf16> to vector<8x8x8xbf16>
    %72 = tpu.concatenate %65, %67, %69, %71 in 2 : vector<8x8x8xbf16>, vector<8x8x8xbf16>, vector<8x8x8xbf16>, vector<8x8x8xbf16> -> vector<8x8x32xbf16>
    %73 = vector.shape_cast %72 : vector<8x8x32xbf16> to vector<64x32xbf16>
    %c0_19 = arith.constant 0 : index
    %c0_20 = arith.constant 0 : index
    %c0_21 = arith.constant 0 : index
    %74 = vector.load %arg7[%c0_19, %c0_20, %c0_21] : memref<1x32x32xbf16, #tpu.memory_space<vmem>>, vector<1x32x32xbf16>
    %75 = vector.shape_cast %74 : vector<1x32x32xbf16> to vector<32x32xbf16>
    %cst_22 = arith.constant dense<0.000000e+00> : vector<64x32xf32>
    %76 = tpu.matmul %73, %75, %cst_22 {dimension_numbers = #tpu.dot_dimension_numbers<[1], [0], [0], [1], [0, 0, 1, 1], [], []>} : vector<64x32xbf16>, vector<32x32xbf16>, vector<64x32xf32> -> vector<64x32xf32>
    %c0_23 = arith.constant 0 : index
    %c0_24 = arith.constant 0 : index
    %c0_25 = arith.constant 0 : index
    %77 = vector.load %arg8[%c0_23, %c0_24, %c0_25] : memref<1x1x32xf32, #tpu.memory_space<vmem>>, vector<1x1x32xf32>
    %78 = vector.shape_cast %77 : vector<1x1x32xf32> to vector<1x32xf32>
    %79 = vector.broadcast %78 : vector<1x32xf32> to vector<64x32xf32>
    %80 = arith.addf %76, %79 : vector<64x32xf32>
    %81 = arith.addf %3, %80 : vector<64x32xf32>
    %c0_26 = arith.constant 0 : index
    %c0_27 = arith.constant 0 : index
    %c0_28 = arith.constant 0 : index
    %82 = vector.load %arg13[%c0_26, %c0_27, %c0_28] : memref<1x1x32xf32, #tpu.memory_space<vmem>>, vector<1x1x32xf32>
    %83 = vector.shape_cast %82 : vector<1x1x32xf32> to vector<1x32xf32>
    %c0_29 = arith.constant 0 : index
    %c0_30 = arith.constant 0 : index
    %c0_31 = arith.constant 0 : index
    %84 = vector.load %arg14[%c0_29, %c0_30, %c0_31] : memref<1x1x32xf32, #tpu.memory_space<vmem>>, vector<1x1x32xf32>
    %85 = vector.shape_cast %84 : vector<1x1x32xf32> to vector<1x32xf32>
    %cst_32 = arith.constant 1.000000e+00 : f32
    %86 = vector.broadcast %cst_32 : f32 to vector<1x64xf32>
    %cst_33 = arith.constant dense<0.000000e+00> : vector<1x32xf32>
    %87 = tpu.matmul %86, %81, %cst_33 {dimension_numbers = #tpu.dot_dimension_numbers<[1], [0], [0], [1], [0, 0, 1, 1], [], []>} : vector<1x64xf32>, vector<64x32xf32>, vector<1x32xf32> -> vector<1x32xf32>
    %cst_34 = arith.constant 1.562500e-02 : f32
    %88 = vector.broadcast %cst_34 : f32 to vector<1x32xf32>
    %89 = arith.mulf %87, %88 : vector<1x32xf32>
    %90 = vector.broadcast %89 : vector<1x32xf32> to vector<64x32xf32>
    %91 = arith.subf %81, %90 : vector<64x32xf32>
    %92 = arith.mulf %91, %91 : vector<64x32xf32>
    %cst_35 = arith.constant dense<0.000000e+00> : vector<1x32xf32>
    %93 = tpu.matmul %86, %92, %cst_35 {dimension_numbers = #tpu.dot_dimension_numbers<[1], [0], [0], [1], [0, 0, 1, 1], [], []>} : vector<1x64xf32>, vector<64x32xf32>, vector<1x32xf32> -> vector<1x32xf32>
    %cst_36 = arith.constant 1.562500e-02 : f32
    %94 = vector.broadcast %cst_36 : f32 to vector<1x32xf32>
    %95 = arith.mulf %93, %94 : vector<1x32xf32>
    %96 = vector.broadcast %83 : vector<1x32xf32> to vector<64x32xf32>
    %97 = arith.mulf %96, %91 : vector<64x32xf32>
    %cst_37 = arith.constant 9.99999974E-6 : f32
    %98 = vector.broadcast %cst_37 : f32 to vector<1x32xf32>
    %99 = arith.addf %95, %98 : vector<1x32xf32>
    %100 = math.rsqrt %99 : vector<1x32xf32>
    %101 = vector.broadcast %100 : vector<1x32xf32> to vector<64x32xf32>
    %102 = arith.mulf %97, %101 : vector<64x32xf32>
    %103 = vector.broadcast %85 : vector<1x32xf32> to vector<64x32xf32>
    %104 = arith.addf %102, %103 : vector<64x32xf32>
    %105 = arith.truncf %104 : vector<64x32xf32> to vector<64x32xbf16>
    %c0_38 = arith.constant 0 : index
    %c0_39 = arith.constant 0 : index
    %c0_40 = arith.constant 0 : index
    %106 = vector.load %arg9[%c0_38, %c0_39, %c0_40] : memref<1x32x64xbf16, #tpu.memory_space<vmem>>, vector<1x32x64xbf16>
    %107 = vector.shape_cast %106 : vector<1x32x64xbf16> to vector<32x64xbf16>
    %cst_41 = arith.constant dense<0.000000e+00> : vector<64x64xf32>
    %108 = tpu.matmul %105, %107, %cst_41 {dimension_numbers = #tpu.dot_dimension_numbers<[1], [0], [0], [1], [0, 0, 1, 1], [], []>} : vector<64x32xbf16>, vector<32x64xbf16>, vector<64x64xf32> -> vector<64x64xf32>
    %c0_42 = arith.constant 0 : index
    %c0_43 = arith.constant 0 : index
    %c0_44 = arith.constant 0 : index
    %109 = vector.load %arg10[%c0_42, %c0_43, %c0_44] : memref<1x1x64xf32, #tpu.memory_space<vmem>>, vector<1x1x64xf32>
    %110 = vector.shape_cast %109 : vector<1x1x64xf32> to vector<1x64xf32>
    %111 = vector.broadcast %110 : vector<1x64xf32> to vector<64x64xf32>
    %112 = arith.addf %108, %111 : vector<64x64xf32>
    %cst_45 = arith.constant 5.000000e-01 : f32
    %113 = vector.broadcast %cst_45 : f32 to vector<64x64xf32>
    %114 = arith.mulf %113, %112 : vector<64x64xf32>
    %cst_46 = arith.constant 4.471500e-02 : f32
    %115 = vector.broadcast %cst_46 : f32 to vector<64x64xf32>
    %116 = arith.mulf %115, %112 : vector<64x64xf32>
    %117 = arith.mulf %116, %112 : vector<64x64xf32>
    %118 = arith.mulf %117, %112 : vector<64x64xf32>
    %119 = arith.addf %112, %118 : vector<64x64xf32>
    %cst_47 = arith.constant 0.797884583 : f32
    %120 = vector.broadcast %cst_47 : f32 to vector<64x64xf32>
    %121 = arith.mulf %120, %119 : vector<64x64xf32>
    %122 = math.tanh %121 : vector<64x64xf32>
    %cst_48 = arith.constant 1.000000e+00 : f32
    %123 = vector.broadcast %cst_48 : f32 to vector<64x64xf32>
    %124 = arith.addf %123, %122 : vector<64x64xf32>
    %125 = arith.mulf %114, %124 : vector<64x64xf32>
    %126 = arith.truncf %125 : vector<64x64xf32> to vector<64x64xbf16>
    %c0_49 = arith.constant 0 : index
    %c0_50 = arith.constant 0 : index
    %c0_51 = arith.constant 0 : index
    %127 = vector.load %arg11[%c0_49, %c0_50, %c0_51] : memref<1x64x32xbf16, #tpu.memory_space<vmem>>, vector<1x64x32xbf16>
    %128 = vector.shape_cast %127 : vector<1x64x32xbf16> to vector<64x32xbf16>
    %cst_52 = arith.constant dense<0.000000e+00> : vector<64x32xf32>
    %129 = tpu.matmul %126, %128, %cst_52 {dimension_numbers = #tpu.dot_dimension_numbers<[1], [0], [0], [1], [0, 0, 1, 1], [], []>} : vector<64x64xbf16>, vector<64x32xbf16>, vector<64x32xf32> -> vector<64x32xf32>
    %c0_53 = arith.constant 0 : index
    %c0_54 = arith.constant 0 : index
    %c0_55 = arith.constant 0 : index
    %130 = vector.load %arg12[%c0_53, %c0_54, %c0_55] : memref<1x1x32xf32, #tpu.memory_space<vmem>>, vector<1x1x32xf32>
    %131 = vector.shape_cast %130 : vector<1x1x32xf32> to vector<1x32xf32>
    %132 = vector.broadcast %131 : vector<1x32xf32> to vector<64x32xf32>
    %133 = arith.addf %129, %132 : vector<64x32xf32>
    %134 = arith.addf %104, %133 : vector<64x32xf32>
    %c0_56 = arith.constant 0 : index
    %c0_57 = arith.constant 0 : index
    %c0_58 = arith.constant 0 : index
    %135 = vector.load %arg15[%c0_56, %c0_57, %c0_58] : memref<1x1x32xf32, #tpu.memory_space<vmem>>, vector<1x1x32xf32>
    %136 = vector.shape_cast %135 : vector<1x1x32xf32> to vector<1x32xf32>
    %c0_59 = arith.constant 0 : index
    %c0_60 = arith.constant 0 : index
    %c0_61 = arith.constant 0 : index
    %137 = vector.load %arg16[%c0_59, %c0_60, %c0_61] : memref<1x1x32xf32, #tpu.memory_space<vmem>>, vector<1x1x32xf32>
    %138 = vector.shape_cast %137 : vector<1x1x32xf32> to vector<1x32xf32>
    %cst_62 = arith.constant 1.000000e+00 : f32
    %139 = vector.broadcast %cst_62 : f32 to vector<1x64xf32>
    %cst_63 = arith.constant dense<0.000000e+00> : vector<1x32xf32>
    %140 = tpu.matmul %139, %134, %cst_63 {dimension_numbers = #tpu.dot_dimension_numbers<[1], [0], [0], [1], [0, 0, 1, 1], [], []>} : vector<1x64xf32>, vector<64x32xf32>, vector<1x32xf32> -> vector<1x32xf32>
    %cst_64 = arith.constant 1.562500e-02 : f32
    %141 = vector.broadcast %cst_64 : f32 to vector<1x32xf32>
    %142 = arith.mulf %140, %141 : vector<1x32xf32>
    %143 = vector.broadcast %142 : vector<1x32xf32> to vector<64x32xf32>
    %144 = arith.subf %134, %143 : vector<64x32xf32>
    %145 = arith.mulf %144, %144 : vector<64x32xf32>
    %cst_65 = arith.constant dense<0.000000e+00> : vector<1x32xf32>
    %146 = tpu.matmul %139, %145, %cst_65 {dimension_numbers = #tpu.dot_dimension_numbers<[1], [0], [0], [1], [0, 0, 1, 1], [], []>} : vector<1x64xf32>, vector<64x32xf32>, vector<1x32xf32> -> vector<1x32xf32>
    %cst_66 = arith.constant 1.562500e-02 : f32
    %147 = vector.broadcast %cst_66 : f32 to vector<1x32xf32>
    %148 = arith.mulf %146, %147 : vector<1x32xf32>
    %149 = vector.broadcast %136 : vector<1x32xf32> to vector<64x32xf32>
    %150 = arith.mulf %149, %144 : vector<64x32xf32>
    %cst_67 = arith.constant 9.99999974E-6 : f32
    %151 = vector.broadcast %cst_67 : f32 to vector<1x32xf32>
    %152 = arith.addf %148, %151 : vector<1x32xf32>
    %153 = math.rsqrt %152 : vector<1x32xf32>
    %154 = vector.broadcast %153 : vector<1x32xf32> to vector<64x32xf32>
    %155 = arith.mulf %150, %154 : vector<64x32xf32>
    %156 = vector.broadcast %138 : vector<1x32xf32> to vector<64x32xf32>
    %157 = arith.addf %155, %156 : vector<64x32xf32>
    %c0_68 = arith.constant 0 : index
    %c0_69 = arith.constant 0 : index
    %158 = vector.load %arg18[%c0_68, %c0_69] : memref<64x32xf32, #tpu.memory_space<vmem>>, vector<64x32xf32>
    tpu.vector_store %arg18[%c0_68, %c0_69], %157 {strides = array<i32>} : memref<64x32xf32, #tpu.memory_space<vmem>>, vector<64x32xf32>,
    %c1_i32 = arith.constant 1 : i32
    %159 = arith.cmpi eq, %arg0, %c1_i32 : i32
    %160 = arith.extui %159 : i1 to i32
    %c0_i32_70 = arith.constant 0 : i32
    %161 = arith.cmpi ne, %160, %c0_i32_70 : i32
    scf.if %161 {
      %162 = arith.truncf %157 : vector<64x32xf32> to vector<64x32xbf16>
      %c0_71 = arith.constant 0 : index
      %c0_72 = arith.constant 0 : index
      %163 = vector.load %arg17[%c0_71, %c0_72] : memref<64x32xbf16, #tpu.memory_space<vmem>>, vector<64x32xbf16>
      tpu.vector_store %arg17[%c0_71, %c0_72], %162 {strides = array<i32>} : memref<64x32xbf16, #tpu.memory_space<vmem>>, vector<64x32xbf16>,
    } else {
    }
    return
  }
  func.func @transform_0(%arg0: i32) -> (i32, i32, i32) {
    %c0_i32 = arith.constant 0 : i32
    %c0_i32_0 = arith.constant 0 : i32
    %c0_i32_1 = arith.constant 0 : i32
    %c0_i32_2 = arith.constant 0 : i32
    return %c0_i32, %c0_i32_0, %c0_i32_1 : i32, i32, i32
  }
  func.func @transform_1(%arg0: i32) -> (i32, i32) {
    %c0_i32 = arith.constant 0 : i32
    %c0_i32_0 = arith.constant 0 : i32
    %c0_i32_1 = arith.constant 0 : i32
    return %c0_i32, %c0_i32_0 : i32, i32
  }
  func.func @transform_2(%arg0: i32) -> (i32, i32) {
    %c0_i32 = arith.constant 0 : i32
    %c0_i32_0 = arith.constant 0 : i32
    %c0_i32_1 = arith.constant 0 : i32
    return %c0_i32, %c0_i32_0 : i32, i32
  }
  func.func @transform_3(%arg0: i32) -> (i32, i32) {
    %c0_i32 = arith.constant 0 : i32
    %c0_i32_0 = arith.constant 0 : i32
    %c0_i32_1 = arith.constant 0 : i32
    return %c0_i32, %c0_i32_0 : i32, i32
  }
  func.func @transform_4(%arg0: i32) -> (i32, i32, i32) {
    %c0_i32 = arith.constant 0 : i32
    %c0_i32_0 = arith.constant 0 : i32
    %c0_i32_1 = arith.constant 0 : i32
    return %arg0, %c0_i32, %c0_i32_0 : i32, i32, i32
  }
  func.func @transform_5(%arg0: i32) -> (i32, i32, i32) {
    %c0_i32 = arith.constant 0 : i32
    %c0_i32_0 = arith.constant 0 : i32
    %c0_i32_1 = arith.constant 0 : i32
    return %arg0, %c0_i32, %c0_i32_0 : i32, i32, i32
  }
  func.func @transform_6(%arg0: i32) -> (i32, i32, i32) {
    %c0_i32 = arith.constant 0 : i32
    %c0_i32_0 = arith.constant 0 : i32
    %c0_i32_1 = arith.constant 0 : i32
    return %arg0, %c0_i32, %c0_i32_0 : i32, i32, i32
  }
  func.func @transform_7(%arg0: i32) -> (i32, i32, i32) {
    %c0_i32 = arith.constant 0 : i32
    %c0_i32_0 = arith.constant 0 : i32
    %c0_i32_1 = arith.constant 0 : i32
    return %arg0, %c0_i32, %c0_i32_0 : i32, i32, i32
  }
  func.func @transform_8(%arg0: i32) -> (i32, i32, i32) {
    %c0_i32 = arith.constant 0 : i32
    %c0_i32_0 = arith.constant 0 : i32
    %c0_i32_1 = arith.constant 0 : i32
    return %arg0, %c0_i32, %c0_i32_0 : i32, i32, i32
  }
  func.func @transform_9(%arg0: i32) -> (i32, i32, i32) {
    %c0_i32 = arith.constant 0 : i32
    %c0_i32_0 = arith.constant 0 : i32
    %c0_i32_1 = arith.constant 0 : i32
    return %arg0, %c0_i32, %c0_i32_0 : i32, i32, i32
  }
  func.func @transform_10(%arg0: i32) -> (i32, i32, i32) {
    %c0_i32 = arith.constant 0 : i32
    %c0_i32_0 = arith.constant 0 : i32
    %c0_i32_1 = arith.constant 0 : i32
    return %arg0, %c0_i32, %c0_i32_0 : i32, i32, i32
  }
  func.func @transform_11(%arg0: i32) -> (i32, i32, i32) {
    %c0_i32 = arith.constant 0 : i32
    %c0_i32_0 = arith.constant 0 : i32
    %c0_i32_1 = arith.constant 0 : i32
    return %arg0, %c0_i32, %c0_i32_0 : i32, i32, i32
  }
  func.func @transform_12(%arg0: i32) -> (i32, i32, i32) {
    %c0_i32 = arith.constant 0 : i32
    %c0_i32_0 = arith.constant 0 : i32
    %c0_i32_1 = arith.constant 0 : i32
    return %arg0, %c0_i32, %c0_i32_0 : i32, i32, i32
  }
  func.func @transform_13(%arg0: i32) -> (i32, i32, i32) {
    %c0_i32 = arith.constant 0 : i32
    %c0_i32_0 = arith.constant 0 : i32
    %c0_i32_1 = arith.constant 0 : i32
    return %arg0, %c0_i32, %c0_i32_0 : i32, i32, i32
  }
  func.func @transform_14(%arg0: i32) -> (i32, i32, i32) {
    %c0_i32 = arith.constant 0 : i32
    %c0_i32_0 = arith.constant 0 : i32
    %c0_i32_1 = arith.constant 0 : i32
    return %arg0, %c0_i32, %c0_i32_0 : i32, i32, i32
  }
  func.func @transform_15(%arg0: i32) -> (i32, i32, i32) {
    %c0_i32 = arith.constant 0 : i32
    %c0_i32_0 = arith.constant 0 : i32
    %c0_i32_1 = arith.constant 0 : i32
    return %arg0, %c0_i32, %c0_i32_0 : i32, i32, i32
  }
  func.func @transform_16(%arg0: i32) -> (i32, i32) {
    %c0_i32 = arith.constant 0 : i32
    %c0_i32_0 = arith.constant 0 : i32
    %c0_i32_1 = arith.constant 0 : i32
    return %c0_i32, %c0_i32_0 : i32, i32
  }
}

module attributes {stable_mosaic.version = 11 : i64} {
  func.func @_linear_kernel(%arg0: i32, %arg1: memref<8x256xbf16, #tpu.memory_space<vmem>>, %arg2: memref<256x24xbf16, #tpu.memory_space<vmem>>, %arg3: memref<1x24xf32, #tpu.memory_space<vmem>>, %arg4: memref<8x24xf32, #tpu.memory_space<vmem>>) attributes {dimension_semantics = [#tpu.dimension_semantics<parallel>], iteration_bounds = array<i64: 1>, scalar_prefetch = 0 : i64, scratch_operands = 0 : i64, tpu.core_type = #tpu.core_type<tc>, window_params = [{transform_indices = @transform_0, window_bounds = array<i64: 8, 256>}, {pipeline_mode = #tpu.pipeline_mode<synchronous>, transform_indices = @transform_1, window_bounds = array<i64: 256, 24>}, {pipeline_mode = #tpu.pipeline_mode<synchronous>, transform_indices = @transform_2, window_bounds = array<i64: 1, 24>}, {transform_indices = @transform_3, window_bounds = array<i64: 8, 24>}]} {
    %c0 = arith.constant 0 : index
    %c0_0 = arith.constant 0 : index
    %0 = vector.load %arg1[%c0, %c0_0] : memref<8x256xbf16, #tpu.memory_space<vmem>>, vector<8x256xbf16>
    %c0_1 = arith.constant 0 : index
    %c0_2 = arith.constant 0 : index
    %1 = vector.load %arg2[%c0_1, %c0_2] : memref<256x24xbf16, #tpu.memory_space<vmem>>, vector<256x24xbf16>
    %cst = arith.constant dense<0.000000e+00> : vector<8x24xf32>
    %2 = tpu.matmul %0, %1, %cst {dimension_numbers = #tpu.dot_dimension_numbers<[1], [0], [0], [1], [0, 0, 1, 1], [], []>} : vector<8x256xbf16>, vector<256x24xbf16>, vector<8x24xf32> -> vector<8x24xf32>
    %c0_3 = arith.constant 0 : index
    %c0_4 = arith.constant 0 : index
    %3 = vector.load %arg3[%c0_3, %c0_4] : memref<1x24xf32, #tpu.memory_space<vmem>>, vector<1x24xf32>
    %4 = vector.broadcast %3 : vector<1x24xf32> to vector<8x24xf32>
    %5 = arith.addf %2, %4 : vector<8x24xf32>
    %c0_5 = arith.constant 0 : index
    %c0_6 = arith.constant 0 : index
    %6 = vector.load %arg4[%c0_5, %c0_6] : memref<8x24xf32, #tpu.memory_space<vmem>>, vector<8x24xf32>
    tpu.vector_store %arg4[%c0_5, %c0_6], %5 {strides = array<i32>} : memref<8x24xf32, #tpu.memory_space<vmem>>, vector<8x24xf32>,
    return
  }
  func.func @transform_0(%arg0: i32) -> (i32, i32) {
    %c0_i32 = arith.constant 0 : i32
    %c0_i32_0 = arith.constant 0 : i32
    return %arg0, %c0_i32 : i32, i32
  }
  func.func @transform_1(%arg0: i32) -> (i32, i32) {
    %c0_i32 = arith.constant 0 : i32
    %c0_i32_0 = arith.constant 0 : i32
    %c0_i32_1 = arith.constant 0 : i32
    return %c0_i32, %c0_i32_0 : i32, i32
  }
  func.func @transform_2(%arg0: i32) -> (i32, i32) {
    %c0_i32 = arith.constant 0 : i32
    %c0_i32_0 = arith.constant 0 : i32
    %c0_i32_1 = arith.constant 0 : i32
    return %c0_i32, %c0_i32_0 : i32, i32
  }
  func.func @transform_3(%arg0: i32) -> (i32, i32) {
    %c0_i32 = arith.constant 0 : i32
    %c0_i32_0 = arith.constant 0 : i32
    return %arg0, %c0_i32 : i32, i32
  }
}

</mosaic_0001>

<llo_original>
// kernel: patchtst_self_forward.3
$region0: #{patchtst_self_forward.3}
  #allocation0 [shape = 'u32[]', space=smem, size = 0x4, offset = 0x4, fixed_abs, tag = 'smem constant byte address 0x4 - core index']
  #allocation1 [shape = 'u32[144,128]{1,0:T(1,128)}', space=vmem, size = 0x12000, scoped, tag = 'internal scratch']
  %s0 = inlined_call_operand.vmem [shape: bf16[8,256], index: 0, kind: input, shape index: {}]
  %s1 = inlined_call_operand.vmem [shape: bf16[256,24], index: 1, kind: input, shape index: {}]
  %s2 = inlined_call_operand.vmem [shape: f32[1,24], index: 2, kind: input, shape index: {}]
  %s3 = inlined_call_operand.hbm [shape: f32[8,24], index: 3, kind: output, shape index: {}]
  %s4 = sld [smem:[#allocation0]]
  $region22: #{patchtst_self_forward.3} parent=0
    _
  %s6 = ssub.s32 1, %s4
  %s7 = scalar_select 0, %s6, %s4
  $region1: #{patchtst_self_forward.3} parent=0
    #allocation2 [shape = 'u8[4096]{0}', space=vmem, size = 0x1000, scoped, tag = 'output window, operand 0, single buffered']
    #allocation3 [shape = 's32[1]{0}', space=sflag, size = 0x4, scoped, tag = 'scoped memory for patchtst_self_forward.3']
    %8 = vsyncpa [#allocation3], 0
    // Predicated region
    $region2: #{patchtst_self_forward.3} parent=1 // pred_check
      _
    $region3: #{patchtst_self_forward.3} parent=1 // pred_check_branch
      %10 = sbr.rel (0) target = $region5
    $region4: #{patchtst_self_forward.3} parent=1 // pred_region
      _
    $region5: #{patchtst_self_forward.3} parent=1 // pred_fallthru
      _
    // Predicated region
    $region6: #{patchtst_self_forward.3} parent=1 // pred_check
      _
    $region7: #{patchtst_self_forward.3} parent=1 // pred_check_branch
      %12 = sbr.rel (0) target = $region9
    $region8: #{patchtst_self_forward.3} parent=1 // pred_region
      _
    $region9: #{patchtst_self_forward.3} parent=1 // pred_fallthru
      _
    // Predicated region
    $region10: #{patchtst_self_forward.3} parent=1 // pred_check
      _
    $region11: #{patchtst_self_forward.3} parent=1 // pred_check_branch
      %14 = sbr.rel (0) target = $region13
    $region12: #{patchtst_self_forward.3} parent=1 // pred_region
      _
    $region13: #{patchtst_self_forward.3} parent=1 // pred_fallthru
      _
    %v16 = vld [vmem:[%s0] sm:$0xff]
    %v17 = vld [vmem:[%s1] sm:$0xf]
    %v18 = vld [vmem:[%s1 + $0x4] sm:$0xf]
    %v19 = vld [vmem:[%s1 + $0x8] sm:$0xf]
    %v20 = vld [vmem:[%s1 + $0xc] sm:$0xf]
    %v21 = vld [vmem:[%s1 + $0x10] sm:$0xf]
    %v22 = vld [vmem:[%s1 + $0x14] sm:$0xf]
    %v23 = vld [vmem:[%s1 + $0x18] sm:$0xf]
    %v24 = vld [vmem:[%s1 + $0x1c] sm:$0xf]
    %v25 = vld [vmem:[%s1 + $0x20] sm:$0xf]
    %v26 = vld [vmem:[%s1 + $0x24] sm:$0xf]
    %v27 = vld [vmem:[%s1 + $0x28] sm:$0xf]
    %v28 = vld [vmem:[%s1 + $0x2c] sm:$0xf]
    %v29 = vld [vmem:[%s1 + $0x30] sm:$0xf]
    %v30 = vld [vmem:[%s1 + $0x34] sm:$0xf]
    %v31 = vld [vmem:[%s1 + $0x38] sm:$0xf]
    %v32 = vld [vmem:[%s1 + $0x3c] sm:$0xf]
    %v33 = vld [vmem:[%s1 + $0x40] sm:$0xf]
    %v34 = vld [vmem:[%s1 + $0x44] sm:$0xf]
    %v35 = vld [vmem:[%s1 + $0x48] sm:$0xf]
    %v36 = vld [vmem:[%s1 + $0x4c] sm:$0xf]
    %v37 = vld [vmem:[%s1 + $0x50] sm:$0xf]
    %v38 = vld [vmem:[%s1 + $0x54] sm:$0xf]
    %v39 = vld [vmem:[%s1 + $0x58] sm:$0xf]
    %v40 = vld [vmem:[%s1 + $0x5c] sm:$0xf]
    %v41 = vld [vmem:[%s1 + $0x60] sm:$0xf]
    %v42 = vld [vmem:[%s1 + $0x64] sm:$0xf]
    %v43 = vld [vmem:[%s1 + $0x68] sm:$0xf]
    %v44 = vld [vmem:[%s1 + $0x6c] sm:$0xf]
    %v45 = vld [vmem:[%s1 + $0x70] sm:$0xf]
    %v46 = vld [vmem:[%s1 + $0x74] sm:$0xf]
    %v47 = vld [vmem:[%s1 + $0x78] sm:$0xf]
    %v48 = vld [vmem:[%s1 + $0x7c] sm:$0xf]
    %v49 = vld [vmem:[%s2] sm:$0x1]
    %v51 = vlaneseq
    %v52 = vshrl.u32 %v51, 7
    %v53 = vsub.s32 0, %v52
    %v54 = vrot.slane %v49, %v53
    %v57 = vunpack.c.l.b16 %v16
    %v58 = vunpack.c.h.b16 %v16
    %v59 = vpack.c.b16 %v57, %v57
    %v60 = vpack.c.b16 %v58, %v58
    %v95 = vunpack.c.l.b16 %v17
    %v96 = vunpack.c.l.b16 %v18
    %v97 = vunpack.c.l.b16 %v19
    %v98 = vunpack.c.l.b16 %v20
    %v99 = vunpack.c.l.b16 %v21
    %v100 = vunpack.c.l.b16 %v22
    %v101 = vunpack.c.l.b16 %v23
    %v102 = vunpack.c.l.b16 %v24
    %v103 = vunpack.c.l.b16 %v25
    %v104 = vunpack.c.l.b16 %v26
    %v105 = vunpack.c.l.b16 %v27
    %v106 = vunpack.c.l.b16 %v28
    %v107 = vunpack.c.l.b16 %v29
    %v108 = vunpack.c.l.b16 %v30
    %v109 = vunpack.c.l.b16 %v31
    %v110 = vunpack.c.l.b16 %v32
    %v111 = vunpack.c.l.b16 %v33
    %v112 = vunpack.c.l.b16 %v34
    %v113 = vunpack.c.l.b16 %v35
    %v114 = vunpack.c.l.b16 %v36
    %v115 = vunpack.c.l.b16 %v37
    %v116 = vunpack.c.l.b16 %v38
    %v117 = vunpack.c.l.b16 %v39
    %v118 = vunpack.c.l.b16 %v40
    %v119 = vunpack.c.l.b16 %v41
    %v120 = vunpack.c.l.b16 %v42
    %v121 = vunpack.c.l.b16 %v43
    %v122 = vunpack.c.l.b16 %v44
    %v123 = vunpack.c.l.b16 %v45
    %v124 = vunpack.c.l.b16 %v46
    %v125 = vunpack.c.l.b16 %v47
    %v126 = vunpack.c.l.b16 %v48
    %v127 = vpack.c.b16 %v96, %v95
    %v128 = vpack.c.b16 %v98, %v97
    %v129 = vpack.c.b16 %v100, %v99
    %v130 = vpack.c.b16 %v102, %v101
    %v131 = vpack.c.b16 %v104, %v103
    %v132 = vpack.c.b16 %v106, %v105
    %v133 = vpack.c.b16 %v108, %v107
    %v134 = vpack.c.b16 %v110, %v109
    %v135 = vpack.c.b16 %v112, %v111
    %v136 = vpack.c.b16 %v114, %v113
    %v137 = vpack.c.b16 %v116, %v115
    %v138 = vpack.c.b16 %v118, %v117
    %v139 = vpack.c.b16 %v120, %v119
    %v140 = vpack.c.b16 %v122, %v121
    %v141 = vpack.c.b16 %v124, %v123
    %v142 = vpack.c.b16 %v126, %v125
    %159 = vmatprep.subr.bf16.mxu0 0
    %160 = vmatpush1.bf16.msra.mxu0 %v127
    %161 = vmatprep.subr.bf16.mxu0 0
    %162 = vmatpush1.bf16.msra.mxu0 %v128
    %163 = vmatprep.subr.bf16.mxu0 0
    %164 = vmatpush1.bf16.msra.mxu0 %v129
    %165 = vmatprep.subr.bf16.mxu0 0
    %166 = vmatpush1.bf16.msra.mxu0 %v130
    %167 = vmatprep.subr.bf16.mxu0 0
    %168 = vmatpush1.bf16.msra.mxu0 %v131
    %169 = vmatprep.subr.bf16.mxu0 0
    %170 = vmatpush1.bf16.msra.mxu0 %v132
    %171 = vmatprep.subr.bf16.mxu0 0
    %172 = vmatpush1.bf16.msra.mxu0 %v133
    %173 = vmatprep.subr.bf16.mxu0 0
    %174 = vmatpush1.bf16.msra.mxu0 %v134
    %175 = vmatprep.subr.bf16.mxu0 0
    %176 = vmatpush1.bf16.msra.mxu0 %v135
    %177 = vmatprep.subr.bf16.mxu0 0
    %178 = vmatpush1.bf16.msra.mxu0 %v136
    %179 = vmatprep.subr.bf16.mxu0 0
    %180 = vmatpush1.bf16.msra.mxu0 %v137
    %181 = vmatprep.subr.bf16.mxu0 0
    %182 = vmatpush1.bf16.msra.mxu0 %v138
    %183 = vmatprep.subr.bf16.mxu0 0
    %184 = vmatpush1.bf16.msra.mxu0 %v139
    %185 = vmatprep.subr.bf16.mxu0 0
    %186 = vmatpush1.bf16.msra.mxu0 %v140
    %187 = vmatprep.subr.bf16.mxu0 0
    %188 = vmatpush1.bf16.msra.mxu0 %v141
    %189 = vmatprep.subr.bf16.mxu0 0
    %190 = vmatpush1.bf16.msra.mxu0 %v142
    %191 = vmatprep.mubr.bf16.mxu0 %v60
    %192 = vmatmul.mubr.bf16.gmra.mrb[0].mxu0 %v59
    %v193 = vpop.f32.mrb[0].mxu0
    %v194 = vadd.f32 %v54, %v193
    %v195 = vpop.f32.mrb[0].mxu0
    %v196 = vpop.f32.mrb[0].mxu0
    %v197 = vpop.f32.mrb[0].mxu0
    %198 = vdwg.mxu0
    %vm199 = vcmask 195584
    %200 = vst.msk [vmem:[#allocation2] sm:$0xff] %vm199, %v194
    // Predicated region
    $region14: #{patchtst_self_forward.3} parent=1 // pred_check
      _
    $region15: #{patchtst_self_forward.3} parent=1 // pred_check_branch
      %202 = sbr.rel (0) target = $region17
    $region16: #{patchtst_self_forward.3} parent=1 // pred_region
      %s204 = ssub.s32 128, 128
      %205 = vsyncadd [#allocation3], %s204
      %s207 = sshll.u32 [#allocation2], 4
      %s208 = int_to_ptr.vmem [resolvable:$true] %s207
      %210 = dma.vmem_to_hbm [thread:$0]  %s208, 128, %s3, [#allocation3]
    $region17: #{patchtst_self_forward.3} parent=1 // pred_fallthru
      _
    // Predicated region
    $region18: #{patchtst_self_forward.3} parent=1 // pred_check
      _
    $region19: #{patchtst_self_forward.3} parent=1 // pred_check_branch
      %212 = sbr.rel (0) target = $region21
    $region20: #{patchtst_self_forward.3} parent=1 // pred_region
      %213 = dma.done [#allocation3], 128
    $region21: #{patchtst_self_forward.3} parent=1 // pred_fallthru
      _
    %214 = vsyncpa [#allocation3], 1

// kernel: patchtst_self_forward.2
$region0: #{patchtst_self_forward.2}
  #allocation0 [shape = 'u32[]', space=smem, size = 0x4, offset = 0x4, fixed_abs, tag = 'smem constant byte address 0x4 - core index']
  #allocation1 [shape = 'u32[144,128]{1,0:T(1,128)}', space=vmem, size = 0x12000, scoped, tag = 'internal scratch']
  #allocation2 [shape = 'f32[64,32]{1,0:T(8,128)}', space=vmem, size = 0x8000, scoped, tag = 'scratch operand']
  #allocation3 [shape = 'f32[32,8,8]{2,1,0:T(8,128)}', space=vmem, size = 0x20000, scoped, tag = 'scratch operand']
  %s0 = inlined_call_operand.vmem [shape: f32[8,8,16], index: 0, kind: input, shape index: {}]
  %s1 = inlined_call_operand.vmem [shape: f32[8,32], index: 1, kind: input, shape index: {}]
  %s2 = inlined_call_operand.vmem [shape: bf16[16,32], index: 2, kind: input, shape index: {}]
  %s3 = inlined_call_operand.vmem [shape: f32[1,32], index: 3, kind: input, shape index: {}]
  %s4 = inlined_call_operand.vmem [shape: bf16[2,32,96], index: 4, kind: input, shape index: {}]
  %s5 = inlined_call_operand.vmem [shape: f32[2,1,96], index: 5, kind: input, shape index: {}]
  %s6 = inlined_call_operand.vmem [shape: bf16[2,32,32], index: 6, kind: input, shape index: {}]
  %s7 = inlined_call_operand.vmem [shape: f32[2,1,32], index: 7, kind: input, shape index: {}]
  %s8 = inlined_call_operand.vmem [shape: bf16[2,32,64], index: 8, kind: input, shape index: {}]
  %s9 = inlined_call_operand.vmem [shape: f32[2,1,64], index: 9, kind: input, shape index: {}]
  %s10 = inlined_call_operand.vmem [shape: bf16[2,64,32], index: 10, kind: input, shape index: {}]
  %s11 = inlined_call_operand.vmem [shape: f32[2,1,32], index: 11, kind: input, shape index: {}]
  %s12 = inlined_call_operand.vmem [shape: f32[2,1,32], index: 12, kind: input, shape index: {}]
  %s13 = inlined_call_operand.vmem [shape: f32[2,1,32], index: 13, kind: input, shape index: {}]
  %s14 = inlined_call_operand.vmem [shape: f32[2,1,32], index: 14, kind: input, shape index: {}]
  %s15 = inlined_call_operand.vmem [shape: f32[2,1,32], index: 15, kind: input, shape index: {}]
  %s16 = inlined_call_operand.vmem [shape: bf16[64,32], index: 16, kind: output, shape index: {}]
  %s17 = sld [smem:[#allocation0]]
  $region105: #{patchtst_self_forward.2} parent=0
    _
  %s19 = ssub.s32 1, %s17
  %s20 = scalar_select 0, %s19, %s17
  loop: start=0, step=1, limit=4
  $region2: #{patchtst_self_forward.2} parent=0 // loop_pre_header
    _
  $region3: #{patchtst_self_forward.2} parent=0 // loop_header
    %s22 = sphi 0, %s26
    %p23 = scmp.ge.s32.totalorder %s22, 4
    %s30 = sphi 0, %s30
    %s32 = sphi 0, %s30
    %s33 = sphi 0, %s32
    %s47 = sphi 0, %s33
    %s51 = sphi 0, %s51
    %s53 = sphi 0, %s51
    %s54 = sphi 0, %s53
    %s68 = sphi 0, %s54
    %s72 = sphi 0, %s72
    %s74 = sphi 0, %s72
    %s75 = sphi 0, %s74
    %s89 = sphi 0, %s75
    %s93 = sphi 0, %s93
    %s95 = sphi 0, %s93
    %s96 = sphi 0, %s95
    %s110 = sphi 0, %s96
    %s116 = sphi 0, %s118
    %s119 = sphi 0, %s116
    %s120 = sphi 0, %s119
    %s136 = sphi 0, %s120
    %s142 = sphi 0, %s144
    %s145 = sphi 0, %s142
    %s146 = sphi 0, %s145
    %s162 = sphi 0, %s146
    %s168 = sphi 0, %s170
    %s171 = sphi 0, %s168
    %s172 = sphi 0, %s171
    %s188 = sphi 0, %s172
    %s194 = sphi 0, %s196
    %s197 = sphi 0, %s194
    %s198 = sphi 0, %s197
    %s214 = sphi 0, %s198
    %s220 = sphi 0, %s222
    %s223 = sphi 0, %s220
    %s224 = sphi 0, %s223
    %s240 = sphi 0, %s224
    %s246 = sphi 0, %s248
    %s249 = sphi 0, %s246
    %s250 = sphi 0, %s249
    %s266 = sphi 0, %s250
    %s272 = sphi 0, %s274
    %s275 = sphi 0, %s272
    %s276 = sphi 0, %s275
    %s292 = sphi 0, %s276
    %s298 = sphi 0, %s300
    %s301 = sphi 0, %s298
    %s302 = sphi 0, %s301
    %s318 = sphi 0, %s302
    %s324 = sphi 0, %s326
    %s327 = sphi 0, %s324
    %s328 = sphi 0, %s327
    %s344 = sphi 0, %s328
    %s350 = sphi 0, %s352
    %s353 = sphi 0, %s350
    %s354 = sphi 0, %s353
    %s370 = sphi 0, %s354
    %s376 = sphi 0, %s378
    %s379 = sphi 0, %s376
    %s380 = sphi 0, %s379
    %s396 = sphi 0, %s380
    %s402 = sphi 0, %s404
    %s405 = sphi 0, %s402
    %s406 = sphi 0, %s405
    %s422 = sphi 0, %s406
    %s426 = sphi 0, %s426
    %s428 = sphi 0, %s426
    %s429 = sphi 0, %s428
    %s443 = sphi 0, %s429
  $region4: #{patchtst_self_forward.2} parent=0 // loop_header_branch
    %25 = sbr.rel (%p23) target = $region8
  $region5: #{patchtst_self_forward.2} parent=0 // loop_body
    %s27 = ssub.s32 %s22, 1
    %s28 = ssub.s32 %s22, 2
    %s29 = sadd.s32 %s22, 1
    %s31 = sadd.s32 %s30, 1
    %p34 = scmp.eq.s32.totalorder %s22, 1
    %p35 = scmp.ne.s32.totalorder %s30, %s32
    %p36 = scmp.eq.s32.totalorder %s22, 0
    %p37 = por %p35, %p36
    %p38 = scmp.ne.s32.totalorder %s30, %s32
    %p39 = scmp.eq.s32.totalorder %s27, 1
    %p40 = por %p38, %p39
    %p41 = scmp.ne.s32.totalorder %s32, %s33
    %p42 = scmp.eq.s32.totalorder %s27, 0
    %p43 = por %p41, %p42
    %p44 = scmp.ne.s32.totalorder %s32, %s33
    %p45 = scmp.eq.s32.totalorder %s28, 1
    %p46 = por %p44, %p45
    %p48 = scmp.ne.s32.totalorder %s33, %s47
    %p49 = scmp.eq.s32.totalorder %s28, 0
    %p50 = por %p48, %p49
    %s52 = sadd.s32 %s51, 1
    %p55 = scmp.eq.s32.totalorder %s22, 1
    %p56 = scmp.ne.s32.totalorder %s51, %s53
    %p57 = scmp.eq.s32.totalorder %s22, 0
    %p58 = por %p56, %p57
    %p59 = scmp.ne.s32.totalorder %s51, %s53
    %p60 = scmp.eq.s32.totalorder %s27, 1
    %p61 = por %p59, %p60
    %p62 = scmp.ne.s32.totalorder %s53, %s54
    %p63 = scmp.eq.s32.totalorder %s27, 0
    %p64 = por %p62, %p63
    %p65 = scmp.ne.s32.totalorder %s53, %s54
    %p66 = scmp.eq.s32.totalorder %s28, 1
    %p67 = por %p65, %p66
    %p69 = scmp.ne.s32.totalorder %s54, %s68
    %p70 = scmp.eq.s32.totalorder %s28, 0
    %p71 = por %p69, %p70
    %s73 = sadd.s32 %s72, 1
    %p76 = scmp.eq.s32.totalorder %s22, 1
    %p77 = scmp.ne.s32.totalorder %s72, %s74
    %p78 = scmp.eq.s32.totalorder %s22, 0
    %p79 = por %p77, %p78
    %p80 = scmp.ne.s32.totalorder %s72, %s74
    %p81 = scmp.eq.s32.totalorder %s27, 1
    %p82 = por %p80, %p81
    %p83 = scmp.ne.s32.totalorder %s74, %s75
    %p84 = scmp.eq.s32.totalorder %s27, 0
    %p85 = por %p83, %p84
    %p86 = scmp.ne.s32.totalorder %s74, %s75
    %p87 = scmp.eq.s32.totalorder %s28, 1
    %p88 = por %p86, %p87
    %p90 = scmp.ne.s32.totalorder %s75, %s89
    %p91 = scmp.eq.s32.totalorder %s28, 0
    %p92 = por %p90, %p91
    %s94 = sadd.s32 %s93, 1
    %p97 = scmp.eq.s32.totalorder %s22, 1
    %p98 = scmp.ne.s32.totalorder %s93, %s95
    %p99 = scmp.eq.s32.totalorder %s22, 0
    %p100 = por %p98, %p99
    %p101 = scmp.ne.s32.totalorder %s93, %s95
    %p102 = scmp.eq.s32.totalorder %s27, 1
    %p103 = por %p101, %p102
    %p104 = scmp.ne.s32.totalorder %s95, %s96
    %p105 = scmp.eq.s32.totalorder %s27, 0
    %p106 = por %p104, %p105
    %p107 = scmp.ne.s32.totalorder %s95, %s96
    %p108 = scmp.eq.s32.totalorder %s28, 1
    %p109 = por %p107, %p108
    %p111 = scmp.ne.s32.totalorder %s96, %s110
    %p112 = scmp.eq.s32.totalorder %s28, 0
    %p113 = por %p111, %p112
    %s114 = ssub.s32 %s22, %s29
    %p115 = scmp.eq.s32.totalorder %s114, 0
    %s117 = sadd.s32 %s116, 1
    %s118 = scalar_select %p115, %s116, %s117
    %p121 = pneg %p115
    %p122 = scmp.eq.s32.totalorder %s22, 1
    %p123 = por %p121, %p122
    %p124 = scmp.ne.s32.totalorder %s116, %s119
    %p125 = scmp.eq.s32.totalorder %s22, 0
    %p126 = por %p124, %p125
    %p127 = scmp.ne.s32.totalorder %s116, %s119
    %p128 = scmp.eq.s32.totalorder %s27, 1
    %p129 = por %p127, %p128
    %p130 = scmp.ne.s32.totalorder %s119, %s120
    %p131 = scmp.eq.s32.totalorder %s27, 0
    %p132 = por %p130, %p131
    %p133 = scmp.ne.s32.totalorder %s119, %s120
    %p134 = scmp.eq.s32.totalorder %s28, 1
    %p135 = por %p133, %p134
    %p137 = scmp.ne.s32.totalorder %s120, %s136
    %p138 = scmp.eq.s32.totalorder %s28, 0
    %p139 = por %p137, %p138
    %s140 = ssub.s32 %s22, %s29
    %p141 = scmp.eq.s32.totalorder %s140, 0
    %s143 = sadd.s32 %s142, 1
    %s144 = scalar_select %p141, %s142, %s143
    %p147 = pneg %p141
    %p148 = scmp.eq.s32.totalorder %s22, 1
    %p149 = por %p147, %p148
    %p150 = scmp.ne.s32.totalorder %s142, %s145
    %p151 = scmp.eq.s32.totalorder %s22, 0
    %p152 = por %p150, %p151
    %p153 = scmp.ne.s32.totalorder %s142, %s145
    %p154 = scmp.eq.s32.totalorder %s27, 1
    %p155 = por %p153, %p154
    %p156 = scmp.ne.s32.totalorder %s145, %s146
    %p157 = scmp.eq.s32.totalorder %s27, 0
    %p158 = por %p156, %p157
    %p159 = scmp.ne.s32.totalorder %s145, %s146
    %p160 = scmp.eq.s32.totalorder %s28, 1
    %p161 = por %p159, %p160
    %p163 = scmp.ne.s32.totalorder %s146, %s162
    %p164 = scmp.eq.s32.totalorder %s28, 0
    %p165 = por %p163, %p164
    %s166 = ssub.s32 %s22, %s29
    %p167 = scmp.eq.s32.totalorder %s166, 0
    %s169 = sadd.s32 %s168, 1
    %s170 = scalar_select %p167, %s168, %s169
    %p173 = pneg %p167
    %p174 = scmp.eq.s32.totalorder %s22, 1
    %p175 = por %p173, %p174
    %p176 = scmp.ne.s32.totalorder %s168, %s171
    %p177 = scmp.eq.s32.totalorder %s22, 0
    %p178 = por %p176, %p177
    %p179 = scmp.ne.s32.totalorder %s168, %s171
    %p180 = scmp.eq.s32.totalorder %s27, 1
    %p181 = por %p179, %p180
    %p182 = scmp.ne.s32.totalorder %s171, %s172
    %p183 = scmp.eq.s32.totalorder %s27, 0
    %p184 = por %p182, %p183
    %p185 = scmp.ne.s32.totalorder %s171, %s172
    %p186 = scmp.eq.s32.totalorder %s28, 1
    %p187 = por %p185, %p186
    %p189 = scmp.ne.s32.totalorder %s172, %s188
    %p190 = scmp.eq.s32.totalorder %s28, 0
    %p191 = por %p189, %p190
    %s192 = ssub.s32 %s22, %s29
    %p193 = scmp.eq.s32.totalorder %s192, 0
    %s195 = sadd.s32 %s194, 1
    %s196 = scalar_select %p193, %s194, %s195
    %p199 = pneg %p193
    %p200 = scmp.eq.s32.totalorder %s22, 1
    %p201 = por %p199, %p200
    %p202 = scmp.ne.s32.totalorder %s194, %s197
    %p203 = scmp.eq.s32.totalorder %s22, 0
    %p204 = por %p202, %p203
    %p205 = scmp.ne.s32.totalorder %s194, %s197
    %p206 = scmp.eq.s32.totalorder %s27, 1
    %p207 = por %p205, %p206
    %p208 = scmp.ne.s32.totalorder %s197, %s198
    %p209 = scmp.eq.s32.totalorder %s27, 0
    %p210 = por %p208, %p209
    %p211 = scmp.ne.s32.totalorder %s197, %s198
    %p212 = scmp.eq.s32.totalorder %s28, 1
    %p213 = por %p211, %p212
    %p215 = scmp.ne.s32.totalorder %s198, %s214
    %p216 = scmp.eq.s32.totalorder %s28, 0
    %p217 = por %p215, %p216
    %s218 = ssub.s32 %s22, %s29
    %p219 = scmp.eq.s32.totalorder %s218, 0
    %s221 = sadd.s32 %s220, 1
    %s222 = scalar_select %p219, %s220, %s221
    %p225 = pneg %p219
    %p226 = scmp.eq.s32.totalorder %s22, 1
    %p227 = por %p225, %p226
    %p228 = scmp.ne.s32.totalorder %s220, %s223
    %p229 = scmp.eq.s32.totalorder %s22, 0
    %p230 = por %p228, %p229
    %p231 = scmp.ne.s32.totalorder %s220, %s223
    %p232 = scmp.eq.s32.totalorder %s27, 1
    %p233 = por %p231, %p232
    %p234 = scmp.ne.s32.totalorder %s223, %s224
    %p235 = scmp.eq.s32.totalorder %s27, 0
    %p236 = por %p234, %p235
    %p237 = scmp.ne.s32.totalorder %s223, %s224
    %p238 = scmp.eq.s32.totalorder %s28, 1
    %p239 = por %p237, %p238
    %p241 = scmp.ne.s32.totalorder %s224, %s240
    %p242 = scmp.eq.s32.totalorder %s28, 0
    %p243 = por %p241, %p242
    %s244 = ssub.s32 %s22, %s29
    %p245 = scmp.eq.s32.totalorder %s244, 0
    %s247 = sadd.s32 %s246, 1
    %s248 = scalar_select %p245, %s246, %s247
    %p251 = pneg %p245
    %p252 = scmp.eq.s32.totalorder %s22, 1
    %p253 = por %p251, %p252
    %p254 = scmp.ne.s32.totalorder %s246, %s249
    %p255 = scmp.eq.s32.totalorder %s22, 0
    %p256 = por %p254, %p255
    %p257 = scmp.ne.s32.totalorder %s246, %s249
    %p258 = scmp.eq.s32.totalorder %s27, 1
    %p259 = por %p257, %p258
    %p260 = scmp.ne.s32.totalorder %s249, %s250
    %p261 = scmp.eq.s32.totalorder %s27, 0
    %p262 = por %p260, %p261
    %p263 = scmp.ne.s32.totalorder %s249, %s250
    %p264 = scmp.eq.s32.totalorder %s28, 1
    %p265 = por %p263, %p264
    %p267 = scmp.ne.s32.totalorder %s250, %s266
    %p268 = scmp.eq.s32.totalorder %s28, 0
    %p269 = por %p267, %p268
    %s270 = ssub.s32 %s22, %s29
    %p271 = scmp.eq.s32.totalorder %s270, 0
    %s273 = sadd.s32 %s272, 1
    %s274 = scalar_select %p271, %s272, %s273
    %p277 = pneg %p271
    %p278 = scmp.eq.s32.totalorder %s22, 1
    %p279 = por %p277, %p278
    %p280 = scmp.ne.s32.totalorder %s272, %s275
    %p281 = scmp.eq.s32.totalorder %s22, 0
    %p282 = por %p280, %p281
    %p283 = scmp.ne.s32.totalorder %s272, %s275
    %p284 = scmp.eq.s32.totalorder %s27, 1
    %p285 = por %p283, %p284
    %p286 = scmp.ne.s32.totalorder %s275, %s276
    %p287 = scmp.eq.s32.totalorder %s27, 0
    %p288 = por %p286, %p287
    %p289 = scmp.ne.s32.totalorder %s275, %s276
    %p290 = scmp.eq.s32.totalorder %s28, 1
    %p291 = por %p289, %p290
    %p293 = scmp.ne.s32.totalorder %s276, %s292
    %p294 = scmp.eq.s32.totalorder %s28, 0
    %p295 = por %p293, %p294
    %s296 = ssub.s32 %s22, %s29
    %p297 = scmp.eq.s32.totalorder %s296, 0
    %s299 = sadd.s32 %s298, 1
    %s300 = scalar_select %p297, %s298, %s299
    %p303 = pneg %p297
    %p304 = scmp.eq.s32.totalorder %s22, 1
    %p305 = por %p303, %p304
    %p306 = scmp.ne.s32.totalorder %s298, %s301
    %p307 = scmp.eq.s32.totalorder %s22, 0
    %p308 = por %p306, %p307
    %p309 = scmp.ne.s32.totalorder %s298, %s301
    %p310 = scmp.eq.s32.totalorder %s27, 1
    %p311 = por %p309, %p310
    %p312 = scmp.ne.s32.totalorder %s301, %s302
    %p313 = scmp.eq.s32.totalorder %s27, 0
    %p314 = por %p312, %p313
    %p315 = scmp.ne.s32.totalorder %s301, %s302
    %p316 = scmp.eq.s32.totalorder %s28, 1
    %p317 = por %p315, %p316
    %p319 = scmp.ne.s32.totalorder %s302, %s318
    %p320 = scmp.eq.s32.totalorder %s28, 0
    %p321 = por %p319, %p320
    %s322 = ssub.s32 %s22, %s29
    %p323 = scmp.eq.s32.totalorder %s322, 0
    %s325 = sadd.s32 %s324, 1
    %s326 = scalar_select %p323, %s324, %s325
    %p329 = pneg %p323
    %p330 = scmp.eq.s32.totalorder %s22, 1
    %p331 = por %p329, %p330
    %p332 = scmp.ne.s32.totalorder %s324, %s327
    %p333 = scmp.eq.s32.totalorder %s22, 0
    %p334 = por %p332, %p333
    %p335 = scmp.ne.s32.totalorder %s324, %s327
    %p336 = scmp.eq.s32.totalorder %s27, 1
    %p337 = por %p335, %p336
    %p338 = scmp.ne.s32.totalorder %s327, %s328
    %p339 = scmp.eq.s32.totalorder %s27, 0
    %p340 = por %p338, %p339
    %p341 = scmp.ne.s32.totalorder %s327, %s328
    %p342 = scmp.eq.s32.totalorder %s28, 1
    %p343 = por %p341, %p342
    %p345 = scmp.ne.s32.totalorder %s328, %s344
    %p346 = scmp.eq.s32.totalorder %s28, 0
    %p347 = por %p345, %p346
    %s348 = ssub.s32 %s22, %s29
    %p349 = scmp.eq.s32.totalorder %s348, 0
    %s351 = sadd.s32 %s350, 1
    %s352 = scalar_select %p349, %s350, %s351
    %p355 = pneg %p349
    %p356 = scmp.eq.s32.totalorder %s22, 1
    %p357 = por %p355, %p356
    %p358 = scmp.ne.s32.totalorder %s350, %s353
    %p359 = scmp.eq.s32.totalorder %s22, 0
    %p360 = por %p358, %p359
    %p361 = scmp.ne.s32.totalorder %s350, %s353
    %p362 = scmp.eq.s32.totalorder %s27, 1
    %p363 = por %p361, %p362
    %p364 = scmp.ne.s32.totalorder %s353, %s354
    %p365 = scmp.eq.s32.totalorder %s27, 0
    %p366 = por %p364, %p365
    %p367 = scmp.ne.s32.totalorder %s353, %s354
    %p368 = scmp.eq.s32.totalorder %s28, 1
    %p369 = por %p367, %p368
    %p371 = scmp.ne.s32.totalorder %s354, %s370
    %p372 = scmp.eq.s32.totalorder %s28, 0
    %p373 = por %p371, %p372
    %s374 = ssub.s32 %s22, %s29
    %p375 = scmp.eq.s32.totalorder %s374, 0
    %s377 = sadd.s32 %s376, 1
    %s378 = scalar_select %p375, %s376, %s377
    %p381 = pneg %p375
    %p382 = scmp.eq.s32.totalorder %s22, 1
    %p383 = por %p381, %p382
    %p384 = scmp.ne.s32.totalorder %s376, %s379
    %p385 = scmp.eq.s32.totalorder %s22, 0
    %p386 = por %p384, %p385
    %p387 = scmp.ne.s32.totalorder %s376, %s379
    %p388 = scmp.eq.s32.totalorder %s27, 1
    %p389 = por %p387, %p388
    %p390 = scmp.ne.s32.totalorder %s379, %s380
    %p391 = scmp.eq.s32.totalorder %s27, 0
    %p392 = por %p390, %p391
    %p393 = scmp.ne.s32.totalorder %s379, %s380
    %p394 = scmp.eq.s32.totalorder %s28, 1
    %p395 = por %p393, %p394
    %p397 = scmp.ne.s32.totalorder %s380, %s396
    %p398 = scmp.eq.s32.totalorder %s28, 0
    %p399 = por %p397, %p398
    %s400 = ssub.s32 %s22, %s29
    %p401 = scmp.eq.s32.totalorder %s400, 0
    %s403 = sadd.s32 %s402, 1
    %s404 = scalar_select %p401, %s402, %s403
    %p407 = pneg %p401
    %p408 = scmp.eq.s32.totalorder %s22, 1
    %p409 = por %p407, %p408
    %p410 = scmp.ne.s32.totalorder %s402, %s405
    %p411 = scmp.eq.s32.totalorder %s22, 0
    %p412 = por %p410, %p411
    %p413 = scmp.ne.s32.totalorder %s402, %s405
    %p414 = scmp.eq.s32.totalorder %s27, 1
    %p415 = por %p413, %p414
    %p416 = scmp.ne.s32.totalorder %s405, %s406
    %p417 = scmp.eq.s32.totalorder %s27, 0
    %p418 = por %p416, %p417
    %p419 = scmp.ne.s32.totalorder %s405, %s406
    %p420 = scmp.eq.s32.totalorder %s28, 1
    %p421 = por %p419, %p420
    %p423 = scmp.ne.s32.totalorder %s406, %s422
    %p424 = scmp.eq.s32.totalorder %s28, 0
    %p425 = por %p423, %p424
    %s427 = sadd.s32 %s426, 1
    %p430 = scmp.eq.s32.totalorder %s22, 1
    %p431 = scmp.ne.s32.totalorder %s426, %s428
    %p432 = scmp.eq.s32.totalorder %s22, 0
    %p433 = por %p431, %p432
    %p434 = scmp.ne.s32.totalorder %s426, %s428
    %p435 = scmp.eq.s32.totalorder %s27, 1
    %p436 = por %p434, %p435
    %p437 = scmp.ne.s32.totalorder %s428, %s429
    %p438 = scmp.eq.s32.totalorder %s27, 0
    %p439 = por %p437, %p438
    %p440 = scmp.ne.s32.totalorder %s428, %s429
    %p441 = scmp.eq.s32.totalorder %s28, 1
    %p442 = por %p440, %p441
    %p444 = scmp.ne.s32.totalorder %s429, %s443
    %p445 = scmp.eq.s32.totalorder %s28, 0
    %p446 = por %p444, %p445
    %p447 = scmp.le.s32.totalorder 1, %s22
    %p448 = scmp.lt.s32.totalorder %s22, 3
    %p449 = pnand %p447, %p448
    %p450 = pneg %p449
    // Predicated region
    $region9: #{patchtst_self_forward.2} parent=5 // pred_check
      _
    $region10: #{patchtst_self_forward.2} parent=5 // pred_check_branch
      %452 = sbr.rel (%p449) target = $region12
    $region11: #{patchtst_self_forward.2} parent=5 // pred_region
      %s453 = ssub.s32 %s22, 1
      // Predicated region
      $region13: #{patchtst_self_forward.2} parent=11 // pred_check
        %p454 = pneg %p43
      $region14: #{patchtst_self_forward.2} parent=11 // pred_check_branch
        %456 = sbr.rel (%p454) target = $region16
      $region15: #{patchtst_self_forward.2} parent=11 // pred_region
        _
      $region16: #{patchtst_self_forward.2} parent=11 // pred_fallthru
        _
      // Predicated region
      $region17: #{patchtst_self_forward.2} parent=11 // pred_check
        %p457 = pneg %p64
      $region18: #{patchtst_self_forward.2} parent=11 // pred_check_branch
        %459 = sbr.rel (%p457) target = $region20
      $region19: #{patchtst_self_forward.2} parent=11 // pred_region
        _
      $region20: #{patchtst_self_forward.2} parent=11 // pred_fallthru
        _
      // Predicated region
      $region21: #{patchtst_self_forward.2} parent=11 // pred_check
        %p460 = pneg %p85
      $region22: #{patchtst_self_forward.2} parent=11 // pred_check_branch
        %462 = sbr.rel (%p460) target = $region24
      $region23: #{patchtst_self_forward.2} parent=11 // pred_region
        _
      $region24: #{patchtst_self_forward.2} parent=11 // pred_fallthru
        _
      // Predicated region
      $region25: #{patchtst_self_forward.2} parent=11 // pred_check
        %p463 = pneg %p106
      $region26: #{patchtst_self_forward.2} parent=11 // pred_check_branch
        %465 = sbr.rel (%p463) target = $region28
      $region27: #{patchtst_self_forward.2} parent=11 // pred_region
        _
      $region28: #{patchtst_self_forward.2} parent=11 // pred_fallthru
        _
    $region12: #{patchtst_self_forward.2} parent=5 // pred_fallthru
      _
    %p466 = scmp.lt.s32.totalorder %s22, 2
    // Predicated region
    $region29: #{patchtst_self_forward.2} parent=5 // pred_check
      %p467 = pneg %p466
    $region30: #{patchtst_self_forward.2} parent=5 // pred_check_branch
      %469 = sbr.rel (%p467) target = $region32
    $region31: #{patchtst_self_forward.2} parent=5 // pred_region
      // Predicated region
      $region33: #{patchtst_self_forward.2} parent=31 // pred_check
        %p470 = pneg %p126
      $region34: #{patchtst_self_forward.2} parent=31 // pred_check_branch
        %472 = sbr.rel (%p470) target = $region36
      $region35: #{patchtst_self_forward.2} parent=31 // pred_region
        %p473 = scmp.lt.s32.totalorder %s22, 1
        %s474 = scalar_select %p473, %s22, 1
        %s475 = smul.addr %s474, 4
        %s476 = smul.addr %s475, 4
        %s477 = scalar_lea.vmem %s4, %s476
      $region36: #{patchtst_self_forward.2} parent=31 // pred_fallthru
        _
      // Predicated region
      $region37: #{patchtst_self_forward.2} parent=31 // pred_check
        %p478 = pneg %p152
      $region38: #{patchtst_self_forward.2} parent=31 // pred_check_branch
        %480 = sbr.rel (%p478) target = $region40
      $region39: #{patchtst_self_forward.2} parent=31 // pred_region
        %p481 = scmp.lt.s32.totalorder %s22, 1
        %s482 = scalar_select %p481, %s22, 1
        %s483 = scalar_lea.vmem %s5, %s482
      $region40: #{patchtst_self_forward.2} parent=31 // pred_fallthru
        _
      // Predicated region
      $region41: #{patchtst_self_forward.2} parent=31 // pred_check
        %p484 = pneg %p178
      $region42: #{patchtst_self_forward.2} parent=31 // pred_check_branch
        %486 = sbr.rel (%p484) target = $region44
      $region43: #{patchtst_self_forward.2} parent=31 // pred_region
        %p487 = scmp.lt.s32.totalorder %s22, 1
        %s488 = scalar_select %p487, %s22, 1
        %s489 = smul.addr %s488, 4
        %s490 = smul.addr %s489, 4
        %s491 = scalar_lea.vmem %s6, %s490
      $region44: #{patchtst_self_forward.2} parent=31 // pred_fallthru
        _
      // Predicated region
      $region45: #{patchtst_self_forward.2} parent=31 // pred_check
        %p492 = pneg %p204
      $region46: #{patchtst_self_forward.2} parent=31 // pred_check_branch
        %494 = sbr.rel (%p492) target = $region48
      $region47: #{patchtst_self_forward.2} parent=31 // pred_region
        %p495 = scmp.lt.s32.totalorder %s22, 1
        %s496 = scalar_select %p495, %s22, 1
        %s497 = scalar_lea.vmem %s7, %s496
      $region48: #{patchtst_self_forward.2} parent=31 // pred_fallthru
        _
      // Predicated region
      $region49: #{patchtst_self_forward.2} parent=31 // pred_check
        %p498 = pneg %p230
      $region50: #{patchtst_self_forward.2} parent=31 // pred_check_branch
        %500 = sbr.rel (%p498) target = $region52
      $region51: #{patchtst_self_forward.2} parent=31 // pred_region
        %p501 = scmp.lt.s32.totalorder %s22, 1
        %s502 = scalar_select %p501, %s22, 1
        %s503 = smul.addr %s502, 4
        %s504 = smul.addr %s503, 4
        %s505 = scalar_lea.vmem %s8, %s504
      $region52: #{patchtst_self_forward.2} parent=31 // pred_fallthru
        _
      // Predicated region
      $region53: #{patchtst_self_forward.2} parent=31 // pred_check
        %p506 = pneg %p256
      $region54: #{patchtst_self_forward.2} parent=31 // pred_check_branch
        %508 = sbr.rel (%p506) target = $region56
      $region55: #{patchtst_self_forward.2} parent=31 // pred_region
        %p509 = scmp.lt.s32.totalorder %s22, 1
        %s510 = scalar_select %p509, %s22, 1
        %s511 = scalar_lea.vmem %s9, %s510
      $region56: #{patchtst_self_forward.2} parent=31 // pred_fallthru
        _
      // Predicated region
      $region57: #{patchtst_self_forward.2} parent=31 // pred_check
        %p512 = pneg %p282
      $region58: #{patchtst_self_forward.2} parent=31 // pred_check_branch
        %514 = sbr.rel (%p512) target = $region60
      $region59: #{patchtst_self_forward.2} parent=31 // pred_region
        %p515 = scmp.lt.s32.totalorder %s22, 1
        %s516 = scalar_select %p515, %s22, 1
        %s517 = smul.addr %s516, 8
        %s518 = smul.addr %s517, 4
        %s519 = scalar_lea.vmem %s10, %s518
      $region60: #{patchtst_self_forward.2} parent=31 // pred_fallthru
        _
      // Predicated region
      $region61: #{patchtst_self_forward.2} parent=31 // pred_check
        %p520 = pneg %p308
      $region62: #{patchtst_self_forward.2} parent=31 // pred_check_branch
        %522 = sbr.rel (%p520) target = $region64
      $region63: #{patchtst_self_forward.2} parent=31 // pred_region
        %p523 = scmp.lt.s32.totalorder %s22, 1
        %s524 = scalar_select %p523, %s22, 1
        %s525 = scalar_lea.vmem %s11, %s524
      $region64: #{patchtst_self_forward.2} parent=31 // pred_fallthru
        _
      // Predicated region
      $region65: #{patchtst_self_forward.2} parent=31 // pred_check
        %p526 = pneg %p334
      $region66: #{patchtst_self_forward.2} parent=31 // pred_check_branch
        %528 = sbr.rel (%p526) target = $region68
      $region67: #{patchtst_self_forward.2} parent=31 // pred_region
        %p529 = scmp.lt.s32.totalorder %s22, 1
        %s530 = scalar_select %p529, %s22, 1
        %s531 = scalar_lea.vmem %s12, %s530
      $region68: #{patchtst_self_forward.2} parent=31 // pred_fallthru
        _
      // Predicated region
      $region69: #{patchtst_self_forward.2} parent=31 // pred_check
        %p532 = pneg %p360
      $region70: #{patchtst_self_forward.2} parent=31 // pred_check_branch
        %534 = sbr.rel (%p532) target = $region72
      $region71: #{patchtst_self_forward.2} parent=31 // pred_region
        %p535 = scmp.lt.s32.totalorder %s22, 1
        %s536 = scalar_select %p535, %s22, 1
        %s537 = scalar_lea.vmem %s13, %s536
      $region72: #{patchtst_self_forward.2} parent=31 // pred_fallthru
        _
      // Predicated region
      $region73: #{patchtst_self_forward.2} parent=31 // pred_check
        %p538 = pneg %p386
      $region74: #{patchtst_self_forward.2} parent=31 // pred_check_branch
        %540 = sbr.rel (%p538) target = $region76
      $region75: #{patchtst_self_forward.2} parent=31 // pred_region
        %p541 = scmp.lt.s32.totalorder %s22, 1
        %s542 = scalar_select %p541, %s22, 1
        %s543 = scalar_lea.vmem %s14, %s542
      $region76: #{patchtst_self_forward.2} parent=31 // pred_fallthru
        _
      // Predicated region
      $region77: #{patchtst_self_forward.2} parent=31 // pred_check
        %p544 = pneg %p412
      $region78: #{patchtst_self_forward.2} parent=31 // pred_check_branch
        %546 = sbr.rel (%p544) target = $region80
      $region79: #{patchtst_self_forward.2} parent=31 // pred_region
        %p547 = scmp.lt.s32.totalorder %s22, 1
        %s548 = scalar_select %p547, %s22, 1
        %s549 = scalar_lea.vmem %s15, %s548
      $region80: #{patchtst_self_forward.2} parent=31 // pred_fallthru
        _
    $region32: #{patchtst_self_forward.2} parent=5 // pred_fallthru
      _
    %p550 = scmp.le.s32.totalorder 1, %s22
    %p551 = scmp.lt.s32.totalorder %s22, 3
    %p552 = pnand %p550, %p551
    %p553 = pneg %p552
    // Predicated region
    $region81: #{patchtst_self_forward.2} parent=5 // pred_check
      _
    $region82: #{patchtst_self_forward.2} parent=5 // pred_check_branch
      %555 = sbr.rel (%p552) target = $region84
    $region83: #{patchtst_self_forward.2} parent=5 // pred_region
      %s556 = ssub.s32 %s22, 1
      %p557 = pneg %p43
      %p558 = pneg %p40
      %p559 = pneg %p64
      %p560 = pneg %p61
      %p561 = pneg %p85
      %p562 = pneg %p82
      %p563 = pneg %p106
      %p564 = pneg %p103
      %p565 = scmp.lt.s32.totalorder %s27, 1
      %s566 = scalar_select %p565, %s27, 1
      %s567 = smul.addr %s566, 4
      %s568 = smul.addr %s567, 4
      %s569 = scalar_lea.vmem %s4, %s568
      %p570 = pneg %p132
      %p571 = pneg %p129
      %p572 = scmp.lt.s32.totalorder %s27, 1
      %s573 = scalar_select %p572, %s27, 1
      %s574 = scalar_lea.vmem %s5, %s573
      %p575 = pneg %p158
      %p576 = pneg %p155
      %p577 = scmp.lt.s32.totalorder %s27, 1
      %s578 = scalar_select %p577, %s27, 1
      %s579 = smul.addr %s578, 4
      %s580 = smul.addr %s579, 4
      %s581 = scalar_lea.vmem %s6, %s580
      %p582 = pneg %p184
      %p583 = pneg %p181
      %p584 = scmp.lt.s32.totalorder %s27, 1
      %s585 = scalar_select %p584, %s27, 1
      %s586 = scalar_lea.vmem %s7, %s585
      %p587 = pneg %p210
      %p588 = pneg %p207
      %p589 = scmp.lt.s32.totalorder %s27, 1
      %s590 = scalar_select %p589, %s27, 1
      %s591 = smul.addr %s590, 4
      %s592 = smul.addr %s591, 4
      %s593 = scalar_lea.vmem %s8, %s592
      %p594 = pneg %p236
      %p595 = pneg %p233
      %p596 = scmp.lt.s32.totalorder %s27, 1
      %s597 = scalar_select %p596, %s27, 1
      %s598 = scalar_lea.vmem %s9, %s597
      %p599 = pneg %p262
      %p600 = pneg %p259
      %p601 = scmp.lt.s32.totalorder %s27, 1
      %s602 = scalar_select %p601, %s27, 1
      %s603 = smul.addr %s602, 8
      %s604 = smul.addr %s603, 4
      %s605 = scalar_lea.vmem %s10, %s604
      %p606 = pneg %p288
      %p607 = pneg %p285
      %p608 = scmp.lt.s32.totalorder %s27, 1
      %s609 = scalar_select %p608, %s27, 1
      %s610 = scalar_lea.vmem %s11, %s609
      %p611 = pneg %p314
      %p612 = pneg %p311
      %p613 = scmp.lt.s32.totalorder %s27, 1
      %s614 = scalar_select %p613, %s27, 1
      %s615 = scalar_lea.vmem %s12, %s614
      %p616 = pneg %p340
      %p617 = pneg %p337
      %p618 = scmp.lt.s32.totalorder %s27, 1
      %s619 = scalar_select %p618, %s27, 1
      %s620 = scalar_lea.vmem %s13, %s619
      %p621 = pneg %p366
      %p622 = pneg %p363
      %p623 = scmp.lt.s32.totalorder %s27, 1
      %s624 = scalar_select %p623, %s27, 1
      %s625 = scalar_lea.vmem %s14, %s624
      %p626 = pneg %p392
      %p627 = pneg %p389
      %p628 = scmp.lt.s32.totalorder %s27, 1
      %s629 = scalar_select %p628, %s27, 1
      %s630 = scalar_lea.vmem %s15, %s629
      %p631 = pneg %p418
      %p632 = pneg %p415
      %p633 = pneg %p439
      %p634 = pneg %p436
      %p635 = scmp.lt.s32.totalorder %s27, 1
      %s636 = scalar_select %p635, %s27, 1
      %s637 = smul.addr %s636, 4
      %s638 = smul.addr %s637, 4
      %s639 = scalar_lea.vmem %s4, %s638
      %p640 = scmp.lt.s32.totalorder %s27, 1
      %s641 = scalar_select %p640, %s27, 1
      %s642 = scalar_lea.vmem %s5, %s641
      %p643 = scmp.lt.s32.totalorder %s27, 1
      %s644 = scalar_select %p643, %s27, 1
      %s645 = smul.addr %s644, 4
      %s646 = smul.addr %s645, 4
      %s647 = scalar_lea.vmem %s6, %s646
      %p648 = scmp.lt.s32.totalorder %s27, 1
      %s649 = scalar_select %p648, %s27, 1
      %s650 = scalar_lea.vmem %s7, %s649
      %p651 = scmp.lt.s32.totalorder %s27, 1
      %s652 = scalar_select %p651, %s27, 1
      %s653 = smul.addr %s652, 4
      %s654 = smul.addr %s653, 4
      %s655 = scalar_lea.vmem %s8, %s654
      %p656 = scmp.lt.s32.totalorder %s27, 1
      %s657 = scalar_select %p656, %s27, 1
      %s658 = scalar_lea.vmem %s9, %s657
      %p659 = scmp.lt.s32.totalorder %s27, 1
      %s660 = scalar_select %p659, %s27, 1
      %s661 = smul.addr %s660, 8
      %s662 = smul.addr %s661, 4
      %s663 = scalar_lea.vmem %s10, %s662
      %p664 = scmp.lt.s32.totalorder %s27, 1
      %s665 = scalar_select %p664, %s27, 1
      %s666 = scalar_lea.vmem %s11, %s665
      %p667 = scmp.lt.s32.totalorder %s27, 1
      %s668 = scalar_select %p667, %s27, 1
      %s669 = scalar_lea.vmem %s12, %s668
      %p670 = scmp.lt.s32.totalorder %s27, 1
      %s671 = scalar_select %p670, %s27, 1
      %s672 = scalar_lea.vmem %s13, %s671
      %p673 = scmp.lt.s32.totalorder %s27, 1
      %s674 = scalar_select %p673, %s27, 1
      %s675 = scalar_lea.vmem %s14, %s674
      %p676 = scmp.lt.s32.totalorder %s27, 1
      %s677 = scalar_select %p676, %s27, 1
      %s678 = scalar_lea.vmem %s15, %s677
      %p680 = scmp.eq.s32.totalorder %s27, 0
      // Predicated region
      $region85: #{patchtst_self_forward.2} parent=83 // pred_check
        %p681 = pneg %p680
      $region86: #{patchtst_self_forward.2} parent=83 // pred_check_branch
        %683 = sbr.rel (%p681) target = $region88
      $region87: #{patchtst_self_forward.2} parent=83 // pred_region
        %v684 = vld [vmem:[%s0] sm:$0xff]
        %v685 = vld [vmem:[%s0 + $0x8] sm:$0xff]
        %v686 = vld [vmem:[%s0 + $0x10] sm:$0xff]
        %v687 = vld [vmem:[%s0 + $0x18] sm:$0xff]
        %v688 = vld [vmem:[%s0 + $0x20] sm:$0xff]
        %v689 = vld [vmem:[%s0 + $0x28] sm:$0xff]
        %v690 = vld [vmem:[%s0 + $0x30] sm:$0xff]
        %v691 = vld [vmem:[%s0 + $0x38] sm:$0xff]
        %v692 = vpack.c.bf16 %v685, %v684
        %v693 = vpack.c.bf16 %v687, %v686
        %v694 = vpack.c.bf16 %v689, %v688
        %v695 = vpack.c.bf16 %v691, %v690
        %v696 = vld [vmem:[%s2] sm:$0xf]
        %v697 = vld [vmem:[%s2 + $0x4] sm:$0xf]
        %v698 = vld [vmem:[%s3] sm:$0x1]
        %v700 = vlaneseq
        %v701 = vshrl.u32 %v700, 7
        %v702 = vsub.s32 0, %v701
        %v703 = vrot.slane %v698, %v702
        %v707 = vunpack.c.l.b16 %v696
        %v708 = vunpack.c.l.b16 %v697
        %v709 = vpack.c.b16 %v708, %v707
        %vm711 = vcmask 130048
        %v713 = vsel %vm711, %v692, 0
        %v716 = vsel %vm711, %v693, 0
        %v719 = vsel %vm711, %v694, 0
        %v722 = vsel %vm711, %v695, 0
        %724 = vmatprep.subr.bf16.mxu0 0
        %725 = vmatpush1.bf16.msra.mxu0 %v709
        %726 = vmatprep.subr.bf16.mxu0 0
        %727 = vmatpush1.bf16.msra.mxu0 0
        %728 = vmatprep.subr.bf16.mxu0 0
        %729 = vmatpush1.bf16.msra.mxu0 0
        %730 = vmatprep.subr.bf16.mxu0 0
        %731 = vmatpush1.bf16.msra.mxu0 0
        %732 = vmatprep.subr.bf16.mxu0 0
        %733 = vmatpush1.bf16.msra.mxu0 0
        %734 = vmatprep.subr.bf16.mxu0 0
        %735 = vmatpush1.bf16.msra.mxu0 0
        %736 = vmatprep.subr.bf16.mxu0 0
        %737 = vmatpush1.bf16.msra.mxu0 0
        %738 = vmatprep.subr.bf16.mxu0 0
        %739 = vmatpush1.bf16.msra.mxu0 0
        %740 = vmatprep.subr.bf16.mxu0 0
        %741 = vmatpush1.bf16.msra.mxu0 0
        %742 = vmatprep.subr.bf16.mxu0 0
        %743 = vmatpush1.bf16.msra.mxu0 0
        %744 = vmatprep.subr.bf16.mxu0 0
        %745 = vmatpush1.bf16.msra.mxu0 0
        %746 = vmatprep.subr.bf16.mxu0 0
        %747 = vmatpush1.bf16.msra.mxu0 0
        %748 = vmatprep.subr.bf16.mxu0 0
        %749 = vmatpush1.bf16.msra.mxu0 0
        %750 = vmatprep.subr.bf16.mxu0 0
        %751 = vmatpush1.bf16.msra.mxu0 0
        %752 = vmatprep.subr.bf16.mxu0 0
        %753 = vmatpush1.bf16.msra.mxu0 0
        %754 = vmatprep.subr.bf16.mxu0 0
        %755 = vmatpush1.bf16.msra.mxu0 0
        %756 = vmatprep.mubr.bf16.mxu0 0
        %757 = vmatmul.mubr.bf16.gmra.mrb[0].mxu0 %v713
        %v758 = vpop.f32.mrb[0].mxu0
        %v759 = vadd.f32 %v703, %v758
        %v760 = vpop.f32.mrb[0].mxu0
        %v761 = vpop.f32.mrb[0].mxu0
        %v762 = vadd.f32 %v703, %v761
        %v763 = vpop.f32.mrb[0].mxu0
        %764 = vmatprep.mubr.bf16.mxu0 0
        %765 = vmatmul.mubr.bf16.gmra.mrb[0].mxu0 %v716
        %v766 = vpop.f32.mrb[0].mxu0
        %v767 = vadd.f32 %v703, %v766
        %v768 = vpop.f32.mrb[0].mxu0
        %v769 = vpop.f32.mrb[0].mxu0
        %v770 = vadd.f32 %v703, %v769
        %v771 = vpop.f32.mrb[0].mxu0
        %772 = vmatprep.mubr.bf16.mxu0 0
        %773 = vmatmul.mubr.bf16.gmra.mrb[0].mxu0 %v719
        %v774 = vpop.f32.mrb[0].mxu0
        %v775 = vadd.f32 %v703, %v774
        %v776 = vpop.f32.mrb[0].mxu0
        %v777 = vpop.f32.mrb[0].mxu0
        %v778 = vadd.f32 %v703, %v777
        %v779 = vpop.f32.mrb[0].mxu0
        %780 = vmatprep.mubr.bf16.mxu0 0
        %781 = vmatmul.mubr.bf16.gmra.mrb[0].mxu0 %v722
        %v782 = vpop.f32.mrb[0].mxu0
        %v783 = vadd.f32 %v703, %v782
        %v784 = vpop.f32.mrb[0].mxu0
        %v785 = vpop.f32.mrb[0].mxu0
        %v786 = vadd.f32 %v703, %v785
        %v787 = vpop.f32.mrb[0].mxu0
        %788 = vdwg.mxu0
        %v789 = vld [vmem:[%s1] sm:$0xff]
        %v790 = vadd.f32 %v759, %v789
        %v791 = vadd.f32 %v762, %v789
        %v792 = vadd.f32 %v767, %v789
        %v793 = vadd.f32 %v770, %v789
        %v794 = vadd.f32 %v775, %v789
        %v795 = vadd.f32 %v778, %v789
        %v796 = vadd.f32 %v783, %v789
        %v797 = vadd.f32 %v786, %v789
        %vm798 = vcmask 261120
        %799 = vst.msk [vmem:[#allocation2] sm:$0xff] %vm798, %v790
        %800 = vst.msk [vmem:[#allocation2 + $0x8] sm:$0xff] %vm798, %v791
        %801 = vst.msk [vmem:[#allocation2 + $0x10] sm:$0xff] %vm798, %v792
        %802 = vst.msk [vmem:[#allocation2 + $0x18] sm:$0xff] %vm798, %v793
        %803 = vst.msk [vmem:[#allocation2 + $0x20] sm:$0xff] %vm798, %v794
        %804 = vst.msk [vmem:[#allocation2 + $0x28] sm:$0xff] %vm798, %v795
        %805 = vst.msk [vmem:[#allocation2 + $0x30] sm:$0xff] %vm798, %v796
        %806 = vst.msk [vmem:[#allocation2 + $0x38] sm:$0xff] %vm798, %v797
        %vm807 = vcmask 64512
        %808 = vst.msk [vmem:[#allocation3] sm:$0xff] %vm807, 0.0
        %809 = vst.msk [vmem:[#allocation3 + $0x8] sm:$0xff] %vm807, 0.0
        %810 = vst.msk [vmem:[#allocation3 + $0x10] sm:$0xff] %vm807, 0.0
        %811 = vst.msk [vmem:[#allocation3 + $0x18] sm:$0xff] %vm807, 0.0
        %812 = vst.msk [vmem:[#allocation3 + $0x20] sm:$0xff] %vm807, 0.0
        %813 = vst.msk [vmem:[#allocation3 + $0x28] sm:$0xff] %vm807, 0.0
        %814 = vst.msk [vmem:[#allocation3 + $0x30] sm:$0xff] %vm807, 0.0
        %815 = vst.msk [vmem:[#allocation3 + $0x38] sm:$0xff] %vm807, 0.0
        %816 = vst.msk [vmem:[#allocation3 + $0x40] sm:$0xff] %vm807, 0.0
        %817 = vst.msk [vmem:[#allocation3 + $0x48] sm:$0xff] %vm807, 0.0
        %818 = vst.msk [vmem:[#allocation3 + $0x50] sm:$0xff] %vm807, 0.0
        %819 = vst.msk [vmem:[#allocation3 + $0x58] sm:$0xff] %vm807, 0.0
        %820 = vst.msk [vmem:[#allocation3 + $0x60] sm:$0xff] %vm807, 0.0
        %821 = vst.msk [vmem:[#allocation3 + $0x68] sm:$0xff] %vm807, 0.0
        %822 = vst.msk [vmem:[#allocation3 + $0x70] sm:$0xff] %vm807, 0.0
        %823 = vst.msk [vmem:[#allocation3 + $0x78] sm:$0xff] %vm807, 0.0
        %824 = vst.msk [vmem:[#allocation3 + $0x80] sm:$0xff] %vm807, 0.0
        %825 = vst.msk [vmem:[#allocation3 + $0x88] sm:$0xff] %vm807, 0.0
        %826 = vst.msk [vmem:[#allocation3 + $0x90] sm:$0xff] %vm807, 0.0
        %827 = vst.msk [vmem:[#allocation3 + $0x98] sm:$0xff] %vm807, 0.0
        %828 = vst.msk [vmem:[#allocation3 + $0xa0] sm:$0xff] %vm807, 0.0
        %829 = vst.msk [vmem:[#allocation3 + $0xa8] sm:$0xff] %vm807, 0.0
        %830 = vst.msk [vmem:[#allocation3 + $0xb0] sm:$0xff] %vm807, 0.0
        %831 = vst.msk [vmem:[#allocation3 + $0xb8] sm:$0xff] %vm807, 0.0
        %832 = vst.msk [vmem:[#allocation3 + $0xc0] sm:$0xff] %vm807, 0.0
        %833 = vst.msk [vmem:[#allocation3 + $0xc8] sm:$0xff] %vm807, 0.0
        %834 = vst.msk [vmem:[#allocation3 + $0xd0] sm:$0xff] %vm807, 0.0
        %835 = vst.msk [vmem:[#allocation3 + $0xd8] sm:$0xff] %vm807, 0.0
        %836 = vst.msk [vmem:[#allocation3 + $0xe0] sm:$0xff] %vm807, 0.0
        %837 = vst.msk [vmem:[#allocation3 + $0xe8] sm:$0xff] %vm807, 0.0
        %838 = vst.msk [vmem:[#allocation3 + $0xf0] sm:$0xff] %vm807, 0.0
        %839 = vst.msk [vmem:[#allocation3 + $0xf8] sm:$0xff] %vm807, 0.0
      $region88: #{patchtst_self_forward.2} parent=83 // pred_fallthru
        _
      %v840 = vld [vmem:[#allocation2] sm:$0xff]
      %v841 = vld [vmem:[#allocation2 + $0x8] sm:$0xff]
      %v842 = vld [vmem:[#allocation2 + $0x10] sm:$0xff]
      %v843 = vld [vmem:[#allocation2 + $0x18] sm:$0xff]
      %v844 = vld [vmem:[#allocation2 + $0x20] sm:$0xff]
      %v845 = vld [vmem:[#allocation2 + $0x28] sm:$0xff]
      %v846 = vld [vmem:[#allocation2 + $0x30] sm:$0xff]
      %v847 = vld [vmem:[#allocation2 + $0x38] sm:$0xff]
      %v848 = vpack.c.bf16 %v841, %v840
      %v849 = vpack.c.bf16 %v843, %v842
      %v850 = vpack.c.bf16 %v845, %v844
      %v851 = vpack.c.bf16 %v847, %v846
      %v852 = vld [vmem:[%s639] sm:$0xf]
      %v853 = vld [vmem:[%s639 + $0x4] sm:$0xf]
      %v854 = vld [vmem:[%s639 + $0x8] sm:$0xf]
      %v855 = vld [vmem:[%s639 + $0xc] sm:$0xf]
      %v856 = vld [vmem:[%s642] sm:$0x1]
      %v858 = vlaneseq
      %v859 = vshrl.u32 %v858, 7
      %v860 = vsub.s32 0, %v859
      %v861 = vrot.slane %v856, %v860
      %v867 = vunpack.c.l.b16 %v852
      %v868 = vunpack.c.l.b16 %v853
      %v869 = vunpack.c.l.b16 %v854
      %v870 = vunpack.c.l.b16 %v855
      %v871 = vpack.c.b16 %v868, %v867
      %v872 = vpack.c.b16 %v870, %v869
      %vm875 = vcmask 261120
      %v877 = vsel %vm875, %v848, 0
      %v880 = vsel %vm875, %v849, 0
      %v883 = vsel %vm875, %v850, 0
      %v886 = vsel %vm875, %v851, 0
      %888 = vmatprep.subr.bf16.mxu0 0
      %889 = vmatpush1.bf16.msra.mxu0 %v871
      %890 = vmatprep.subr.bf16.mxu0 0
      %891 = vmatpush1.bf16.msra.mxu0 %v872
      %892 = vmatprep.subr.bf16.mxu0 0
      %893 = vmatpush1.bf16.msra.mxu0 0
      %894 = vmatprep.subr.bf16.mxu0 0
      %895 = vmatpush1.bf16.msra.mxu0 0
      %896 = vmatprep.subr.bf16.mxu0 0
      %897 = vmatpush1.bf16.msra.mxu0 0
      %898 = vmatprep.subr.bf16.mxu0 0
      %899 = vmatpush1.bf16.msra.mxu0 0
      %900 = vmatprep.subr.bf16.mxu0 0
      %901 = vmatpush1.bf16.msra.mxu0 0
      %902 = vmatprep.subr.bf16.mxu0 0
      %903 = vmatpush1.bf16.msra.mxu0 0
      %904 = vmatprep.subr.bf16.mxu0 0
      %905 = vmatpush1.bf16.msra.mxu0 0
      %906 = vmatprep.subr.bf16.mxu0 0
      %907 = vmatpush1.bf16.msra.mxu0 0
      %908 = vmatprep.subr.bf16.mxu0 0
      %909 = vmatpush1.bf16.msra.mxu0 0
      %910 = vmatprep.subr.bf16.mxu0 0
      %911 = vmatpush1.bf16.msra.mxu0 0
      %912 = vmatprep.subr.bf16.mxu0 0
      %913 = vmatpush1.bf16.msra.mxu0 0
      %914 = vmatprep.subr.bf16.mxu0 0
      %915 = vmatpush1.bf16.msra.mxu0 0
      %916 = vmatprep.subr.bf16.mxu0 0
      %917 = vmatpush1.bf16.msra.mxu0 0
      %918 = vmatprep.subr.bf16.mxu0 0
      %919 = vmatpush1.bf16.msra.mxu0 0
      %920 = vmatprep.mubr.bf16.mxu0 0
      %921 = vmatmul.mubr.bf16.gmra.mrb[0].mxu0 %v877
      %v922 = vpop.f32.mrb[0].mxu0
      %v923 = vadd.f32 %v861, %v922
      %v924 = vpop.f32.mrb[0].mxu0
      %v925 = vpop.f32.mrb[0].mxu0
      %v926 = vadd.f32 %v861, %v925
      %v927 = vpop.f32.mrb[0].mxu0
      %928 = vmatprep.mubr.bf16.mxu0 0
      %929 = vmatmul.mubr.bf16.gmra.mrb[0].mxu0 %v880
      %v930 = vpop.f32.mrb[0].mxu0
      %v931 = vadd.f32 %v861, %v930
      %v932 = vpop.f32.mrb[0].mxu0
      %v933 = vpop.f32.mrb[0].mxu0
      %v934 = vadd.f32 %v861, %v933
      %v935 = vpop.f32.mrb[0].mxu0
      %936 = vmatprep.mubr.bf16.mxu0 0
      %937 = vmatmul.mubr.bf16.gmra.mrb[0].mxu0 %v883
      %v938 = vpop.f32.mrb[0].mxu0
      %v939 = vadd.f32 %v861, %v938
      %v940 = vpop.f32.mrb[0].mxu0
      %v941 = vpop.f32.mrb[0].mxu0
      %v942 = vadd.f32 %v861, %v941
      %v943 = vpop.f32.mrb[0].mxu0
      %944 = vmatprep.mubr.bf16.mxu0 0
      %945 = vmatmul.mubr.bf16.gmra.mrb[0].mxu0 %v886
      %v946 = vpop.f32.mrb[0].mxu0
      %v947 = vadd.f32 %v861, %v946
      %v948 = vpop.f32.mrb[0].mxu0
      %v949 = vpop.f32.mrb[0].mxu0
      %v950 = vadd.f32 %v861, %v949
      %v951 = vpop.f32.mrb[0].mxu0
      %952 = vdwg.mxu0
      %v953 = vpack.c.bf16 %v926, %v923
      %v954 = vpack.c.bf16 %v934, %v931
      %v955 = vpack.c.bf16 %v942, %v939
      %v956 = vpack.c.bf16 %v950, %v947
      %v961 = vunpack.c.l.b16 %v953
      %v962 = vunpack.c.h.b16 %v953
      %v963 = vunpack.c.l.b16 %v954
      %v964 = vunpack.c.h.b16 %v954
      %v965 = vunpack.c.l.b16 %v955
      %v966 = vunpack.c.h.b16 %v955
      %v967 = vunpack.c.l.b16 %v956
      %v968 = vunpack.c.h.b16 %v956
      %v969 = vpack.c.b16 %v961, %v961
      %v970 = vpack.c.b16 %v962, %v962
      %v971 = vpack.c.b16 %v963, %v963
      %v972 = vpack.c.b16 %v964, %v964
      %v973 = vpack.c.b16 %v965, %v965
      %v974 = vpack.c.b16 %v966, %v966
      %v975 = vpack.c.b16 %v967, %v967
      %v976 = vpack.c.b16 %v968, %v968
      %977 = vrot.lane.b32.xlu0 %v969, 120
      %v978 = vpop.permute.xlu0 %977
      %979 = vrot.lane.b32.xlu0 %v970, 120
      %v980 = vpop.permute.xlu0 %979
      %981 = vrot.lane.b32.xlu0 %v971, 120
      %v982 = vpop.permute.xlu0 %981
      %983 = vrot.lane.b32.xlu0 %v972, 120
      %v984 = vpop.permute.xlu0 %983
      %985 = vrot.lane.b32.xlu0 %v973, 120
      %v986 = vpop.permute.xlu0 %985
      %987 = vrot.lane.b32.xlu0 %v974, 120
      %v988 = vpop.permute.xlu0 %987
      %989 = vrot.lane.b32.xlu0 %v975, 120
      %v990 = vpop.permute.xlu0 %989
      %991 = vrot.lane.b32.xlu0 %v976, 120
      %v992 = vpop.permute.xlu0 %991
      %993 = vrot.lane.b32.xlu0 %v969, 112
      %v994 = vpop.permute.xlu0 %993
      %995 = vrot.lane.b32.xlu0 %v970, 112
      %v996 = vpop.permute.xlu0 %995
      %997 = vrot.lane.b32.xlu0 %v971, 112
      %v998 = vpop.permute.xlu0 %997
      %999 = vrot.lane.b32.xlu0 %v972, 112
      %v1000 = vpop.permute.xlu0 %999
      %1001 = vrot.lane.b32.xlu0 %v973, 112
      %v1002 = vpop.permute.xlu0 %1001
      %1003 = vrot.lane.b32.xlu0 %v974, 112
      %v1004 = vpop.permute.xlu0 %1003
      %1005 = vrot.lane.b32.xlu0 %v975, 112
      %v1006 = vpop.permute.xlu0 %1005
      %1007 = vrot.lane.b32.xlu0 %v976, 112
      %v1008 = vpop.permute.xlu0 %1007
      %1009 = vrot.lane.b32.xlu0 %v969, 104
      %v1010 = vpop.permute.xlu0 %1009
      %1011 = vrot.lane.b32.xlu0 %v970, 104
      %v1012 = vpop.permute.xlu0 %1011
      %1013 = vrot.lane.b32.xlu0 %v971, 104
      %v1014 = vpop.permute.xlu0 %1013
      %1015 = vrot.lane.b32.xlu0 %v972, 104
      %v1016 = vpop.permute.xlu0 %1015
      %1017 = vrot.lane.b32.xlu0 %v973, 104
      %v1018 = vpop.permute.xlu0 %1017
      %1019 = vrot.lane.b32.xlu0 %v974, 104
      %v1020 = vpop.permute.xlu0 %1019
      %1021 = vrot.lane.b32.xlu0 %v975, 104
      %v1022 = vpop.permute.xlu0 %1021
      %1023 = vrot.lane.b32.xlu0 %v976, 104
      %v1024 = vpop.permute.xlu0 %1023
      %1025 = vrot.lane.b32.xlu0 %v969, 96
      %v1026 = vpop.permute.xlu0 %1025
      %vm1027 = vcmask 64512
      %v1029 = vsel %vm1027, %v969, 0
      %v1032 = vsel %vm1027, %v1026, 0
      %1034 = vmatprep.subr.bf16.mxu0 0
      %1035 = vmatpush1.bf16.xpose.msra.mxu0 %v1032
      %1036 = vmatprep.subr.bf16.mxu0 0
      %1037 = vmatpush1.bf16.xpose.msra.mxu0 0
      %1038 = vmatprep.subr.bf16.mxu0 0
      %1039 = vmatpush1.bf16.xpose.msra.mxu0 0
      %1040 = vmatprep.subr.bf16.mxu0 0
      %1041 = vmatpush1.bf16.xpose.msra.mxu0 0
      %1042 = vmatprep.subr.bf16.mxu0 0
      %1043 = vmatpush1.bf16.xpose.msra.mxu0 0
      %1044 = vmatprep.subr.bf16.mxu0 0
      %1045 = vmatpush1.bf16.xpose.msra.mxu0 0
      %1046 = vmatprep.subr.bf16.mxu0 0
      %1047 = vmatpush1.bf16.xpose.msra.mxu0 0
      %1048 = vmatprep.subr.bf16.mxu0 0
      %1049 = vmatpush1.bf16.xpose.msra.mxu0 0
      %1050 = vmatprep.subr.bf16.mxu0 0
      %1051 = vmatpush1.bf16.xpose.msra.mxu0 0
      %1052 = vmatprep.subr.bf16.mxu0 0
      %1053 = vmatpush1.bf16.xpose.msra.mxu0 0
      %1054 = vmatprep.subr.bf16.mxu0 0
      %1055 = vmatpush1.bf16.xpose.msra.mxu0 0
      %1056 = vmatprep.subr.bf16.mxu0 0
      %1057 = vmatpush1.bf16.xpose.msra.mxu0 0
      %1058 = vmatprep.subr.bf16.mxu0 0
      %1059 = vmatpush1.bf16.xpose.msra.mxu0 0
      %1060 = vmatprep.subr.bf16.mxu0 0
      %1061 = vmatpush1.bf16.xpose.msra.mxu0 0
      %1062 = vmatprep.subr.bf16.mxu0 0
      %1063 = vmatpush1.bf16.xpose.msra.mxu0 0
      %1064 = vmatprep.subr.bf16.mxu0 0
      %1065 = vmatpush1.bf16.xpose.msra.mxu0 0
      %1066 = vmatprep.mubr.bf16.mxu0 0
      %1067 = vmatmul.mubr.bf16.gmra.mrb[0].mxu0 %v1029
      %v1068 = vpop.f32.mrb[0].mxu0
      %v1069 = vadd.f32 0.0, %v1068
      %v1070 = vpop.f32.mrb[0].mxu0
      %v1071 = vpop.f32.mrb[0].mxu0
      %v1072 = vpop.f32.mrb[0].mxu0
      %1073 = vdwg.mxu0
      %1074 = vrot.lane.b32.xlu0 %v970, 96
      %v1075 = vpop.permute.xlu0 %1074
      %v1077 = vsel %vm1027, %v970, 0
      %v1080 = vsel %vm1027, %v1075, 0
      %1082 = vmatprep.subr.bf16.mxu0 0
      %1083 = vmatpush1.bf16.xpose.msra.mxu0 %v1080
      %1084 = vmatprep.subr.bf16.mxu0 0
      %1085 = vmatpush1.bf16.xpose.msra.mxu0 0
      %1086 = vmatprep.subr.bf16.mxu0 0
      %1087 = vmatpush1.bf16.xpose.msra.mxu0 0
      %1088 = vmatprep.subr.bf16.mxu0 0
      %1089 = vmatpush1.bf16.xpose.msra.mxu0 0
      %1090 = vmatprep.subr.bf16.mxu0 0
      %1091 = vmatpush1.bf16.xpose.msra.mxu0 0
      %1092 = vmatprep.subr.bf16.mxu0 0
      %1093 = vmatpush1.bf16.xpose.msra.mxu0 0
      %1094 = vmatprep.subr.bf16.mxu0 0
      %1095 = vmatpush1.bf16.xpose.msra.mxu0 0
      %1096 = vmatprep.subr.bf16.mxu0 0
      %1097 = vmatpush1.bf16.xpose.msra.mxu0 0
      %1098 = vmatprep.subr.bf16.mxu0 0
      %1099 = vmatpush1.bf16.xpose.msra.mxu0 0
      %1100 = vmatprep.subr.bf16.mxu0 0
      %1101 = vmatpush1.bf16.xpose.msra.mxu0 0
      %1102 = vmatprep.subr.bf16.mxu0 0
      %1103 = vmatpush1.bf16.xpose.msra.mxu0 0
      %1104 = vmatprep.subr.bf16.mxu0 0
      %1105 = vmatpush1.bf16.xpose.msra.mxu0 0
      %1106 = vmatprep.subr.bf16.mxu0 0
      %1107 = vmatpush1.bf16.xpose.msra.mxu0 0
      %1108 = vmatprep.subr.bf16.mxu0 0
      %1109 = vmatpush1.bf16.xpose.msra.mxu0 0
      %1110 = vmatprep.subr.bf16.mxu0 0
      %1111 = vmatpush1.bf16.xpose.msra.mxu0 0
      %1112 = vmatprep.subr.bf16.mxu0 0
      %1113 = vmatpush1.bf16.xpose.msra.mxu0 0
      %1114 = vmatprep.mubr.bf16.mxu0 0
      %1115 = vmatmul.mubr.bf16.gmra.mrb[0].mxu0 %v1077
      %v1116 = vpop.f32.mrb[0].mxu0
      %v1117 = vadd.f32 0.0, %v1116
      %v1118 = vpop.f32.mrb[0].mxu0
      %v1119 = vpop.f32.mrb[0].mxu0
      %v1120 = vpop.f32.mrb[0].mxu0
      %1121 = vdwg.mxu0
      %1122 = vrot.lane.b32.xlu0 %v971, 96
      %v1123 = vpop.permute.xlu0 %1122
      %v1125 = vsel %vm1027, %v971, 0
      %v1128 = vsel %vm1027, %v1123, 0
      %1130 = vmatprep.subr.bf16.mxu0 0
      %1131 = vmatpush1.bf16.xpose.msra.mxu0 %v1128
      %1132 = vmatprep.subr.bf16.mxu0 0
      %1133 = vmatpush1.bf16.xpose.msra.mxu0 0
      %1134 = vmatprep.subr.bf16.mxu0 0
      %1135 = vmatpush1.bf16.xpose.msra.mxu0 0
      %1136 = vmatprep.subr.bf16.mxu0 0
      %1137 = vmatpush1.bf16.xpose.msra.mxu0 0
      %1138 = vmatprep.subr.bf16.mxu0 0
      %1139 = vmatpush1.bf16.xpose.msra.mxu0 0
      %1140 = vmatprep.subr.bf16.mxu0 0
      %1141 = vmatpush1.bf16.xpose.msra.mxu0 0
      %1142 = vmatprep.subr.bf16.mxu0 0
      %1143 = vmatpush1.bf16.xpose.msra.mxu0 0
      %1144 = vmatprep.subr.bf16.mxu0 0
      %1145 = vmatpush1.bf16.xpose.msra.mxu0 0
      %1146 = vmatprep.subr.bf16.mxu0 0
      %1147 = vmatpush1.bf16.xpose.msra.mxu0 0
      %1148 = vmatprep.subr.bf16.mxu0 0
      %1149 = vmatpush1.bf16.xpose.msra.mxu0 0
      %1150 = vmatprep.subr.bf16.mxu0 0
      %1151 = vmatpush1.bf16.xpose.msra.mxu0 0
      %1152 = vmatprep.subr.bf16.mxu0 0
      %1153 = vmatpush1.bf16.xpose.msra.mxu0 0
      %1154 = vmatprep.subr.bf16.mxu0 0
      %1155 = vmatpush1.bf16.xpose.msra.mxu0 0
      %1156 = vmatprep.subr.bf16.mxu0 0
      %1157 = vmatpush1.bf16.xpose.msra.mxu0 0
      %1158 = vmatprep.subr.bf16.mxu0 0
      %1159 = vmatpush1.bf16.xpose.msra.mxu0 0
      %1160 = vmatprep.subr.bf16.mxu0 0
      %1161 = vmatpush1.bf16.xpose.msra.mxu0 0
      %1162 = vmatprep.mubr.bf16.mxu0 0
      %1163 = vmatmul.mubr.bf16.gmra.mrb[0].mxu0 %v1125
      %v1164 = vpop.f32.mrb[0].mxu0
      %v1165 = vadd.f32 0.0, %v1164
      %v1166 = vpop.f32.mrb[0].mxu0
      %v1167 = vpop.f32.mrb[0].mxu0
      %v1168 = vpop.f32.mrb[0].mxu0
      %1169 = vdwg.mxu0
      %1170 = vrot.lane.b32.xlu0 %v972, 96
      %v1171 = vpop.permute.xlu0 %1170
      %v1173 = vsel %vm1027, %v972, 0
      %v1176 = vsel %vm1027, %v1171, 0
      %1178 = vmatprep.subr.bf16.mxu0 0
      %1179 = vmatpush1.bf16.xpose.msra.mxu0 %v1176
      %1180 = vmatprep.subr.bf16.mxu0 0
      %1181 = vmatpush1.bf16.xpose.msra.mxu0 0
      %1182 = vmatprep.subr.bf16.mxu0 0
      %1183 = vmatpush1.bf16.xpose.msra.mxu0 0
      %1184 = vmatprep.subr.bf16.mxu0 0
      %1185 = vmatpush1.bf16.xpose.msra.mxu0 0
      %1186 = vmatprep.subr.bf16.mxu0 0
      %1187 = vmatpush1.bf16.xpose.msra.mxu0 0
      %1188 = vmatprep.subr.bf16.mxu0 0
      %1189 = vmatpush1.bf16.xpose.msra.mxu0 0
      %1190 = vmatprep.subr.bf16.mxu0 0
      %1191 = vmatpush1.bf16.xpose.msra.mxu0 0
      %1192 = vmatprep.subr.bf16.mxu0 0
      %1193 = vmatpush1.bf16.xpose.msra.mxu0 0
      %1194 = vmatprep.subr.bf16.mxu0 0
      %1195 = vmatpush1.bf16.xpose.msra.mxu0 0
      %1196 = vmatprep.subr.bf16.mxu0 0
      %1197 = vmatpush1.bf16.xpose.msra.mxu0 0
      %1198 = vmatprep.subr.bf16.mxu0 0
      %1199 = vmatpush1.bf16.xpose.msra.mxu0 0
      %1200 = vmatprep.subr.bf16.mxu0 0
      %1201 = vmatpush1.bf16.xpose.msra.mxu0 0
      %1202 = vmatprep.subr.bf16.mxu0 0
      %1203 = vmatpush1.bf16.xpose.msra.mxu0 0
      %1204 = vmatprep.subr.bf16.mxu0 0
      %1205 = vmatpush1.bf16.xpose.msra.mxu0 0
      %1206 = vmatprep.subr.bf16.mxu0 0
      %1207 = vmatpush1.bf16.xpose.msra.mxu0 0
      %1208 = vmatprep.subr.bf16.mxu0 0
      %1209 = vmatpush1.bf16.xpose.msra.mxu0 0
      %1210 = vmatprep.mubr.bf16.mxu0 0
      %1211 = vmatmul.mubr.bf16.gmra.mrb[0].mxu0 %v1173
      %v1212 = vpop.f32.mrb[0].mxu0
      %v1213 = vadd.f32 0.0, %v1212
      %v1214 = vpop.f32.mrb[0].mxu0
      %v1215 = vpop.f32.mrb[0].mxu0
      %v1216 = vpop.f32.mrb[0].mxu0
      %1217 = vdwg.mxu0
      %1218 = vrot.lane.b32.xlu0 %v973, 96
      %v1219 = vpop.permute.xlu0 %1218
      %v1221 = vsel %vm1027, %v973, 0
      %v1224 = vsel %vm1027, %v1219, 0
      %1226 = vmatprep.subr.bf16.mxu0 0
      %1227 = vmatpush1.bf16.xpose.msra.mxu0 %v1224
      %1228 = vmatprep.subr.bf16.mxu0 0
      %1229 = vmatpush1.bf16.xpose.msra.mxu0 0
      %1230 = vmatprep.subr.bf16.mxu0 0
      %1231 = vmatpush1.bf16.xpose.msra.mxu0 0
      %1232 = vmatprep.subr.bf16.mxu0 0
      %1233 = vmatpush1.bf16.xpose.msra.mxu0 0
      %1234 = vmatprep.subr.bf16.mxu0 0
      %1235 = vmatpush1.bf16.xpose.msra.mxu0 0
      %1236 = vmatprep.subr.bf16.mxu0 0
      %1237 = vmatpush1.bf16.xpose.msra.mxu0 0
      %1238 = vmatprep.subr.bf16.mxu0 0
      %1239 = vmatpush1.bf16.xpose.msra.mxu0 0
      %1240 = vmatprep.subr.bf16.mxu0 0
      %1241 = vmatpush1.bf16.xpose.msra.mxu0 0
      %1242 = vmatprep.subr.bf16.mxu0 0
      %1243 = vmatpush1.bf16.xpose.msra.mxu0 0
      %1244 = vmatprep.subr.bf16.mxu0 0
      %1245 = vmatpush1.bf16.xpose.msra.mxu0 0
      %1246 = vmatprep.subr.bf16.mxu0 0
      %1247 = vmatpush1.bf16.xpose.msra.mxu0 0
      %1248 = vmatprep.subr.bf16.mxu0 0
      %1249 = vmatpush1.bf16.xpose.msra.mxu0 0
      %1250 = vmatprep.subr.bf16.mxu0 0
      %1251 = vmatpush1.bf16.xpose.msra.mxu0 0
      %1252 = vmatprep.subr.bf16.mxu0 0
      %1253 = vmatpush1.bf16.xpose.msra.mxu0 0
      %1254 = vmatprep.subr.bf16.mxu0 0
      %1255 = vmatpush1.bf16.xpose.msra.mxu0 0
      %1256 = vmatprep.subr.bf16.mxu0 0
      %1257 = vmatpush1.bf16.xpose.msra.mxu0 0
      %1258 = vmatprep.mubr.bf16.mxu0 0
      %1259 = vmatmul.mubr.bf16.gmra.mrb[0].mxu0 %v1221
      %v1260 = vpop.f32.mrb[0].mxu0
      %v1261 = vadd.f32 0.0, %v1260
      %v1262 = vpop.f32.mrb[0].mxu0
      %v1263 = vpop.f32.mrb[0].mxu0
      %v1264 = vpop.f32.mrb[0].mxu0
      %1265 = vdwg.mxu0
      %1266 = vrot.lane.b32.xlu0 %v974, 96
      %v1267 = vpop.permute.xlu0 %1266
      %v1269 = vsel %vm1027, %v974, 0
      %v1272 = vsel %vm1027, %v1267, 0
      %1274 = vmatprep.subr.bf16.mxu0 0
      %1275 = vmatpush1.bf16.xpose.msra.mxu0 %v1272
      %1276 = vmatprep.subr.bf16.mxu0 0
      %1277 = vmatpush1.bf16.xpose.msra.mxu0 0
      %1278 = vmatprep.subr.bf16.mxu0 0
      %1279 = vmatpush1.bf16.xpose.msra.mxu0 0
      %1280 = vmatprep.subr.bf16.mxu0 0
      %1281 = vmatpush1.bf16.xpose.msra.mxu0 0
      %1282 = vmatprep.subr.bf16.mxu0 0
      %1283 = vmatpush1.bf16.xpose.msra.mxu0 0
      %1284 = vmatprep.subr.bf16.mxu0 0
      %1285 = vmatpush1.bf16.xpose.msra.mxu0 0
      %1286 = vmatprep.subr.bf16.mxu0 0
      %1287 = vmatpush1.bf16.xpose.msra.mxu0 0
      %1288 = vmatprep.subr.bf16.mxu0 0
      %1289 = vmatpush1.bf16.xpose.msra.mxu0 0
      %1290 = vmatprep.subr.bf16.mxu0 0
      %1291 = vmatpush1.bf16.xpose.msra.mxu0 0
      %1292 = vmatprep.subr.bf16.mxu0 0
      %1293 = vmatpush1.bf16.xpose.msra.mxu0 0
      %1294 = vmatprep.subr.bf16.mxu0 0
      %1295 = vmatpush1.bf16.xpose.msra.mxu0 0
      %1296 = vmatprep.subr.bf16.mxu0 0
      %1297 = vmatpush1.bf16.xpose.msra.mxu0 0
      %1298 = vmatprep.subr.bf16.mxu0 0
      %1299 = vmatpush1.bf16.xpose.msra.mxu0 0
      %1300 = vmatprep.subr.bf16.mxu0 0
      %1301 = vmatpush1.bf16.xpose.msra.mxu0 0
      %1302 = vmatprep.subr.bf16.mxu0 0
      %1303 = vmatpush1.bf16.xpose.msra.mxu0 0
      %1304 = vmatprep.subr.bf16.mxu0 0
      %1305 = vmatpush1.bf16.xpose.msra.mxu0 0
      %1306 = vmatprep.mubr.bf16.mxu0 0
      %1307 = vmatmul.mubr.bf16.gmra.mrb[0].mxu0 %v1269
      %v1308 = vpop.f32.mrb[0].mxu0
      %v1309 = vadd.f32 0.0, %v1308
      %v1310 = vpop.f32.mrb[0].mxu0
      %v1311 = vpop.f32.mrb[0].mxu0
      %v1312 = vpop.f32.mrb[0].mxu0
      %1313 = vdwg.mxu0
      %1314 = vrot.lane.b32.xlu0 %v975, 96
      %v1315 = vpop.permute.xlu0 %1314
      %v1317 = vsel %vm1027, %v975, 0
      %v1320 = vsel %vm1027, %v1315, 0
      %1322 = vmatprep.subr.bf16.mxu0 0
      %1323 = vmatpush1.bf16.xpose.msra.mxu0 %v1320
      %1324 = vmatprep.subr.bf16.mxu0 0
      %1325 = vmatpush1.bf16.xpose.msra.mxu0 0
      %1326 = vmatprep.subr.bf16.mxu0 0
      %1327 = vmatpush1.bf16.xpose.msra.mxu0 0
      %1328 = vmatprep.subr.bf16.mxu0 0
      %1329 = vmatpush1.bf16.xpose.msra.mxu0 0
      %1330 = vmatprep.subr.bf16.mxu0 0
      %1331 = vmatpush1.bf16.xpose.msra.mxu0 0
      %1332 = vmatprep.subr.bf16.mxu0 0
      %1333 = vmatpush1.bf16.xpose.msra.mxu0 0
      %1334 = vmatprep.subr.bf16.mxu0 0
      %1335 = vmatpush1.bf16.xpose.msra.mxu0 0
      %1336 = vmatprep.subr.bf16.mxu0 0
      %1337 = vmatpush1.bf16.xpose.msra.mxu0 0
      %1338 = vmatprep.subr.bf16.mxu0 0
      %1339 = vmatpush1.bf16.xpose.msra.mxu0 0
      %1340 = vmatprep.subr.bf16.mxu0 0
      %1341 = vmatpush1.bf16.xpose.msra.mxu0 0
      %1342 = vmatprep.subr.bf16.mxu0 0
      %1343 = vmatpush1.bf16.xpose.msra.mxu0 0
      %1344 = vmatprep.subr.bf16.mxu0 0
      %1345 = vmatpush1.bf16.xpose.msra.mxu0 0
      %1346 = vmatprep.subr.bf16.mxu0 0
      %1347 = vmatpush1.bf16.xpose.msra.mxu0 0
      %1348 = vmatprep.subr.bf16.mxu0 0
      %1349 = vmatpush1.bf16.xpose.msra.mxu0 0
      %1350 = vmatprep.subr.bf16.mxu0 0
      %1351 = vmatpush1.bf16.xpose.msra.mxu0 0
      %1352 = vmatprep.subr.bf16.mxu0 0
      %1353 = vmatpush1.bf16.xpose.msra.mxu0 0
      %1354 = vmatprep.mubr.bf16.mxu0 0
      %1355 = vmatmul.mubr.bf16.gmra.mrb[0].mxu0 %v1317
      %v1356 = vpop.f32.mrb[0].mxu0
      %v1357 = vadd.f32 0.0, %v1356
      %v1358 = vpop.f32.mrb[0].mxu0
      %v1359 = vpop.f32.mrb[0].mxu0
      %v1360 = vpop.f32.mrb[0].mxu0
      %1361 = vdwg.mxu0
      %1362 = vrot.lane.b32.xlu0 %v976, 96
      %v1363 = vpop.permute.xlu0 %1362
      %v1365 = vsel %vm1027, %v976, 0
      %v1368 = vsel %vm1027, %v1363, 0
      %1370 = vmatprep.subr.bf16.mxu0 0
      %1371 = vmatpush1.bf16.xpose.msra.mxu0 %v1368
      %1372 = vmatprep.subr.bf16.mxu0 0
      %1373 = vmatpush1.bf16.xpose.msra.mxu0 0
      %1374 = vmatprep.subr.bf16.mxu0 0
      %1375 = vmatpush1.bf16.xpose.msra.mxu0 0
      %1376 = vmatprep.subr.bf16.mxu0 0
      %1377 = vmatpush1.bf16.xpose.msra.mxu0 0
      %1378 = vmatprep.subr.bf16.mxu0 0
      %1379 = vmatpush1.bf16.xpose.msra.mxu0 0
      %1380 = vmatprep.subr.bf16.mxu0 0
      %1381 = vmatpush1.bf16.xpose.msra.mxu0 0
      %1382 = vmatprep.subr.bf16.mxu0 0
      %1383 = vmatpush1.bf16.xpose.msra.mxu0 0
      %1384 = vmatprep.subr.bf16.mxu0 0
      %1385 = vmatpush1.bf16.xpose.msra.mxu0 0
      %1386 = vmatprep.subr.bf16.mxu0 0
      %1387 = vmatpush1.bf16.xpose.msra.mxu0 0
      %1388 = vmatprep.subr.bf16.mxu0 0
      %1389 = vmatpush1.bf16.xpose.msra.mxu0 0
      %1390 = vmatprep.subr.bf16.mxu0 0
      %1391 = vmatpush1.bf16.xpose.msra.mxu0 0
      %1392 = vmatprep.subr.bf16.mxu0 0
      %1393 = vmatpush1.bf16.xpose.msra.mxu0 0
      %1394 = vmatprep.subr.bf16.mxu0 0
      %1395 = vmatpush1.bf16.xpose.msra.mxu0 0
      %1396 = vmatprep.subr.bf16.mxu0 0
      %1397 = vmatpush1.bf16.xpose.msra.mxu0 0
      %1398 = vmatprep.subr.bf16.mxu0 0
      %1399 = vmatpush1.bf16.xpose.msra.mxu0 0
      %1400 = vmatprep.subr.bf16.mxu0 0
      %1401 = vmatpush1.bf16.xpose.msra.mxu0 0
      %1402 = vmatprep.mubr.bf16.mxu0 0
      %1403 = vmatmul.mubr.bf16.gmra.mrb[0].mxu0 %v1365
      %v1404 = vpop.f32.mrb[0].mxu0
      %v1405 = vadd.f32 0.0, %v1404
      %v1406 = vpop.f32.mrb[0].mxu0
      %v1407 = vpop.f32.mrb[0].mxu0
      %v1408 = vpop.f32.mrb[0].mxu0
      %1409 = vdwg.mxu0
      %v1410 = vunpack.c.l.b16 %v978
      %v1411 = vpack.c.b16 %v1410, %v1410
      %1412 = vrot.lane.b32.xlu0 %v1411, 96
      %v1413 = vpop.permute.xlu0 %1412
      %v1415 = vsel %vm1027, %v978, 0
      %v1418 = vsel %vm1027, %v1413, 0
      %1420 = vmatprep.subr.bf16.mxu0 0
      %1421 = vmatpush1.bf16.xpose.msra.mxu0 %v1418
      %1422 = vmatprep.subr.bf16.mxu0 0
      %1423 = vmatpush1.bf16.xpose.msra.mxu0 0
      %1424 = vmatprep.subr.bf16.mxu0 0
      %1425 = vmatpush1.bf16.xpose.msra.mxu0 0
      %1426 = vmatprep.subr.bf16.mxu0 0
      %1427 = vmatpush1.bf16.xpose.msra.mxu0 0
      %1428 = vmatprep.subr.bf16.mxu0 0
      %1429 = vmatpush1.bf16.xpose.msra.mxu0 0
      %1430 = vmatprep.subr.bf16.mxu0 0
      %1431 = vmatpush1.bf16.xpose.msra.mxu0 0
      %1432 = vmatprep.subr.bf16.mxu0 0
      %1433 = vmatpush1.bf16.xpose.msra.mxu0 0
      %1434 = vmatprep.subr.bf16.mxu0 0
      %1435 = vmatpush1.bf16.xpose.msra.mxu0 0
      %1436 = vmatprep.subr.bf16.mxu0 0
      %1437 = vmatpush1.bf16.xpose.msra.mxu0 0
      %1438 = vmatprep.subr.bf16.mxu0 0
      %1439 = vmatpush1.bf16.xpose.msra.mxu0 0
      %1440 = vmatprep.subr.bf16.mxu0 0
      %1441 = vmatpush1.bf16.xpose.msra.mxu0 0
      %1442 = vmatprep.subr.bf16.mxu0 0
      %1443 = vmatpush1.bf16.xpose.msra.mxu0 0
      %1444 = vmatprep.subr.bf16.mxu0 0
      %1445 = vmatpush1.bf16.xpose.msra.mxu0 0
      %1446 = vmatprep.subr.bf16.mxu0 0
      %1447 = vmatpush1.bf16.xpose.msra.mxu0 0
      %1448 = vmatprep.subr.bf16.mxu0 0
      %1449 = vmatpush1.bf16.xpose.msra.mxu0 0
      %1450 = vmatprep.subr.bf16.mxu0 0
      %1451 = vmatpush1.bf16.xpose.msra.mxu0 0
      %1452 = vmatprep.mubr.bf16.mxu0 0
      %1453 = vmatmul.mubr.bf16.gmra.mrb[0].mxu0 %v1415
      %v1454 = vpop.f32.mrb[0].mxu0
      %v1455 = vadd.f32 0.0, %v1454
      %v1456 = vpop.f32.mrb[0].mxu0
      %v1457 = vpop.f32.mrb[0].mxu0
      %v1458 = vpop.f32.mrb[0].mxu0
      %1459 = vdwg.mxu0
      %v1460 = vunpack.c.l.b16 %v980
      %v1461 = vpack.c.b16 %v1460, %v1460
      %1462 = vrot.lane.b32.xlu0 %v1461, 96
      %v1463 = vpop.permute.xlu0 %1462
      %v1465 = vsel %vm1027, %v980, 0
      %v1468 = vsel %vm1027, %v1463, 0
      %1470 = vmatprep.subr.bf16.mxu0 0
      %1471 = vmatpush1.bf16.xpose.msra.mxu0 %v1468
      %1472 = vmatprep.subr.bf16.mxu0 0
      %1473 = vmatpush1.bf16.xpose.msra.mxu0 0
      %1474 = vmatprep.subr.bf16.mxu0 0
      %1475 = vmatpush1.bf16.xpose.msra.mxu0 0
      %1476 = vmatprep.subr.bf16.mxu0 0
      %1477 = vmatpush1.bf16.xpose.msra.mxu0 0
      %1478 = vmatprep.subr.bf16.mxu0 0
      %1479 = vmatpush1.bf16.xpose.msra.mxu0 0
      %1480 = vmatprep.subr.bf16.mxu0 0
      %1481 = vmatpush1.bf16.xpose.msra.mxu0 0
      %1482 = vmatprep.subr.bf16.mxu0 0
      %1483 = vmatpush1.bf16.xpose.msra.mxu0 0
      %1484 = vmatprep.subr.bf16.mxu0 0
      %1485 = vmatpush1.bf16.xpose.msra.mxu0 0
      %1486 = vmatprep.subr.bf16.mxu0 0
      %1487 = vmatpush1.bf16.xpose.msra.mxu0 0
      %1488 = vmatprep.subr.bf16.mxu0 0
      %1489 = vmatpush1.bf16.xpose.msra.mxu0 0
      %1490 = vmatprep.subr.bf16.mxu0 0
      %1491 = vmatpush1.bf16.xpose.msra.mxu0 0
      %1492 = vmatprep.subr.bf16.mxu0 0
      %1493 = vmatpush1.bf16.xpose.msra.mxu0 0
      %1494 = vmatprep.subr.bf16.mxu0 0
      %1495 = vmatpush1.bf16.xpose.msra.mxu0 0
      %1496 = vmatprep.subr.bf16.mxu0 0
      %1497 = vmatpush1.bf16.xpose.msra.mxu0 0
      %1498 = vmatprep.subr.bf16.mxu0 0
      %1499 = vmatpush1.bf16.xpose.msra.mxu0 0
      %1500 = vmatprep.subr.bf16.mxu0 0
      %1501 = vmatpush1.bf16.xpose.msra.mxu0 0
      %1502 = vmatprep.mubr.bf16.mxu0 0
      %1503 = vmatmul.mubr.bf16.gmra.mrb[0].mxu0 %v1465
      %v1504 = vpop.f32.mrb[0].mxu0
      %v1505 = vadd.f32 0.0, %v1504
      %v1506 = vpop.f32.mrb[0].mxu0
      %v1507 = vpop.f32.mrb[0].mxu0
      %v1508 = vpop.f32.mrb[0].mxu0
      %1509 = vdwg.mxu0
      %v1510 = vunpack.c.l.b16 %v982
      %v1511 = vpack.c.b16 %v1510, %v1510
      %1512 = vrot.lane.b32.xlu0 %v1511, 96
      %v1513 = vpop.permute.xlu0 %1512
      %v1515 = vsel %vm1027, %v982, 0
      %v1518 = vsel %vm1027, %v1513, 0
      %1520 = vmatprep.subr.bf16.mxu0 0
      %1521 = vmatpush1.bf16.xpose.msra.mxu0 %v1518
      %1522 = vmatprep.subr.bf16.mxu0 0
      %1523 = vmatpush1.bf16.xpose.msra.mxu0 0
      %1524 = vmatprep.subr.bf16.mxu0 0
      %1525 = vmatpush1.bf16.xpose.msra.mxu0 0
      %1526 = vmatprep.subr.bf16.mxu0 0
      %1527 = vmatpush1.bf16.xpose.msra.mxu0 0
      %1528 = vmatprep.subr.bf16.mxu0 0
      %1529 = vmatpush1.bf16.xpose.msra.mxu0 0
      %1530 = vmatprep.subr.bf16.mxu0 0
      %1531 = vmatpush1.bf16.xpose.msra.mxu0 0
      %1532 = vmatprep.subr.bf16.mxu0 0
      %1533 = vmatpush1.bf16.xpose.msra.mxu0 0
      %1534 = vmatprep.subr.bf16.mxu0 0
      %1535 = vmatpush1.bf16.xpose.msra.mxu0 0
      %1536 = vmatprep.subr.bf16.mxu0 0
      %1537 = vmatpush1.bf16.xpose.msra.mxu0 0
      %1538 = vmatprep.subr.bf16.mxu0 0
      %1539 = vmatpush1.bf16.xpose.msra.mxu0 0
      %1540 = vmatprep.subr.bf16.mxu0 0
      %1541 = vmatpush1.bf16.xpose.msra.mxu0 0
      %1542 = vmatprep.subr.bf16.mxu0 0
      %1543 = vmatpush1.bf16.xpose.msra.mxu0 0
      %1544 = vmatprep.subr.bf16.mxu0 0
      %1545 = vmatpush1.bf16.xpose.msra.mxu0 0
      %1546 = vmatprep.subr.bf16.mxu0 0
      %1547 = vmatpush1.bf16.xpose.msra.mxu0 0
      %1548 = vmatprep.subr.bf16.mxu0 0
      %1549 = vmatpush1.bf16.xpose.msra.mxu0 0
      %1550 = vmatprep.subr.bf16.mxu0 0
      %1551 = vmatpush1.bf16.xpose.msra.mxu0 0
      %1552 = vmatprep.mubr.bf16.mxu0 0
      %1553 = vmatmul.mubr.bf16.gmra.mrb[0].mxu0 %v1515
      %v1554 = vpop.f32.mrb[0].mxu0
      %v1555 = vadd.f32 0.0, %v1554
      %v1556 = vpop.f32.mrb[0].mxu0
      %v1557 = vpop.f32.mrb[0].mxu0
      %v1558 = vpop.f32.mrb[0].mxu0
      %1559 = vdwg.mxu0
      %v1560 = vunpack.c.l.b16 %v984
      %v1561 = vpack.c.b16 %v1560, %v1560
      %1562 = vrot.lane.b32.xlu0 %v1561, 96
      %v1563 = vpop.permute.xlu0 %1562
      %v1565 = vsel %vm1027, %v984, 0
      %v1568 = vsel %vm1027, %v1563, 0
      %1570 = vmatprep.subr.bf16.mxu0 0
      %1571 = vmatpush1.bf16.xpose.msra.mxu0 %v1568
      %1572 = vmatprep.subr.bf16.mxu0 0
      %1573 = vmatpush1.bf16.xpose.msra.mxu0 0
      %1574 = vmatprep.subr.bf16.mxu0 0
      %1575 = vmatpush1.bf16.xpose.msra.mxu0 0
      %1576 = vmatprep.subr.bf16.mxu0 0
      %1577 = vmatpush1.bf16.xpose.msra.mxu0 0
      %1578 = vmatprep.subr.bf16.mxu0 0
      %1579 = vmatpush1.bf16.xpose.msra.mxu0 0
      %1580 = vmatprep.subr.bf16.mxu0 0
      %1581 = vmatpush1.bf16.xpose.msra.mxu0 0
      %1582 = vmatprep.subr.bf16.mxu0 0
      %1583 = vmatpush1.bf16.xpose.msra.mxu0 0
      %1584 = vmatprep.subr.bf16.mxu0 0
      %1585 = vmatpush1.bf16.xpose.msra.mxu0 0
      %1586 = vmatprep.subr.bf16.mxu0 0
      %1587 = vmatpush1.bf16.xpose.msra.mxu0 0
      %1588 = vmatprep.subr.bf16.mxu0 0
      %1589 = vmatpush1.bf16.xpose.msra.mxu0 0
      %1590 = vmatprep.subr.bf16.mxu0 0
      %1591 = vmatpush1.bf16.xpose.msra.mxu0 0
      %1592 = vmatprep.subr.bf16.mxu0 0
      %1593 = vmatpush1.bf16.xpose.msra.mxu0 0
      %1594 = vmatprep.subr.bf16.mxu0 0
      %1595 = vmatpush1.bf16.xpose.msra.mxu0 0
      %1596 = vmatprep.subr.bf16.mxu0 0
      %1597 = vmatpush1.bf16.xpose.msra.mxu0 0
      %1598 = vmatprep.subr.bf16.mxu0 0
      %1599 = vmatpush1.bf16.xpose.msra.mxu0 0
      %1600 = vmatprep.subr.bf16.mxu0 0
      %1601 = vmatpush1.bf16.xpose.msra.mxu0 0
      %1602 = vmatprep.mubr.bf16.mxu0 0
      %1603 = vmatmul.mubr.bf16.gmra.mrb[0].mxu0 %v1565
      %v1604 = vpop.f32.mrb[0].mxu0
      %v1605 = vadd.f32 0.0, %v1604
      %v1606 = vpop.f32.mrb[0].mxu0
      %v1607 = vpop.f32.mrb[0].mxu0
      %v1608 = vpop.f32.mrb[0].mxu0
      %1609 = vdwg.mxu0
      %v1610 = vunpack.c.l.b16 %v986
      %v1611 = vpack.c.b16 %v1610, %v1610
      %1612 = vrot.lane.b32.xlu0 %v1611, 96
      %v1613 = vpop.permute.xlu0 %1612
      %v1615 = vsel %vm1027, %v986, 0
      %v1618 = vsel %vm1027, %v1613, 0
      %1620 = vmatprep.subr.bf16.mxu0 0
      %1621 = vmatpush1.bf16.xpose.msra.mxu0 %v1618
      %1622 = vmatprep.subr.bf16.mxu0 0
      %1623 = vmatpush1.bf16.xpose.msra.mxu0 0
      %1624 = vmatprep.subr.bf16.mxu0 0
      %1625 = vmatpush1.bf16.xpose.msra.mxu0 0
      %1626 = vmatprep.subr.bf16.mxu0 0
      %1627 = vmatpush1.bf16.xpose.msra.mxu0 0
      %1628 = vmatprep.subr.bf16.mxu0 0
      %1629 = vmatpush1.bf16.xpose.msra.mxu0 0
      %1630 = vmatprep.subr.bf16.mxu0 0
      %1631 = vmatpush1.bf16.xpose.msra.mxu0 0
      %1632 = vmatprep.subr.bf16.mxu0 0
      %1633 = vmatpush1.bf16.xpose.msra.mxu0 0
      %1634 = vmatprep.subr.bf16.mxu0 0
      %1635 = vmatpush1.bf16.xpose.msra.mxu0 0
      %1636 = vmatprep.subr.bf16.mxu0 0
      %1637 = vmatpush1.bf16.xpose.msra.mxu0 0
      %1638 = vmatprep.subr.bf16.mxu0 0
      %1639 = vmatpush1.bf16.xpose.msra.mxu0 0
      %1640 = vmatprep.subr.bf16.mxu0 0
      %1641 = vmatpush1.bf16.xpose.msra.mxu0 0
      %1642 = vmatprep.subr.bf16.mxu0 0
      %1643 = vmatpush1.bf16.xpose.msra.mxu0 0
      %1644 = vmatprep.subr.bf16.mxu0 0
      %1645 = vmatpush1.bf16.xpose.msra.mxu0 0
      %1646 = vmatprep.subr.bf16.mxu0 0
      %1647 = vmatpush1.bf16.xpose.msra.mxu0 0
      %1648 = vmatprep.subr.bf16.mxu0 0
      %1649 = vmatpush1.bf16.xpose.msra.mxu0 0
      %1650 = vmatprep.subr.bf16.mxu0 0
      %1651 = vmatpush1.bf16.xpose.msra.mxu0 0
      %1652 = vmatprep.mubr.bf16.mxu0 0
      %1653 = vmatmul.mubr.bf16.gmra.mrb[0].mxu0 %v1615
      %v1654 = vpop.f32.mrb[0].mxu0
      %v1655 = vadd.f32 0.0, %v1654
      %v1656 = vpop.f32.mrb[0].mxu0
      %v1657 = vpop.f32.mrb[0].mxu0
      %v1658 = vpop.f32.mrb[0].mxu0
      %1659 = vdwg.mxu0
      %v1660 = vunpack.c.l.b16 %v988
      %v1661 = vpack.c.b16 %v1660, %v1660
      %1662 = vrot.lane.b32.xlu0 %v1661, 96
      %v1663 = vpop.permute.xlu0 %1662
      %v1665 = vsel %vm1027, %v988, 0
      %v1668 = vsel %vm1027, %v1663, 0
      %1670 = vmatprep.subr.bf16.mxu0 0
      %1671 = vmatpush1.bf16.xpose.msra.mxu0 %v1668
      %1672 = vmatprep.subr.bf16.mxu0 0
      %1673 = vmatpush1.bf16.xpose.msra.mxu0 0
      %1674 = vmatprep.subr.bf16.mxu0 0
      %1675 = vmatpush1.bf16.xpose.msra.mxu0 0
      %1676 = vmatprep.subr.bf16.mxu0 0
      %1677 = vmatpush1.bf16.xpose.msra.mxu0 0
      %1678 = vmatprep.subr.bf16.mxu0 0
      %1679 = vmatpush1.bf16.xpose.msra.mxu0 0
      %1680 = vmatprep.subr.bf16.mxu0 0
      %1681 = vmatpush1.bf16.xpose.msra.mxu0 0
      %1682 = vmatprep.subr.bf16.mxu0 0
      %1683 = vmatpush1.bf16.xpose.msra.mxu0 0
      %1684 = vmatprep.subr.bf16.mxu0 0
      %1685 = vmatpush1.bf16.xpose.msra.mxu0 0
      %1686 = vmatprep.subr.bf16.mxu0 0
      %1687 = vmatpush1.bf16.xpose.msra.mxu0 0
      %1688 = vmatprep.subr.bf16.mxu0 0
      %1689 = vmatpush1.bf16.xpose.msra.mxu0 0
      %1690 = vmatprep.subr.bf16.mxu0 0
      %1691 = vmatpush1.bf16.xpose.msra.mxu0 0
      %1692 = vmatprep.subr.bf16.mxu0 0
      %1693 = vmatpush1.bf16.xpose.msra.mxu0 0
      %1694 = vmatprep.subr.bf16.mxu0 0
      %1695 = vmatpush1.bf16.xpose.msra.mxu0 0
      %1696 = vmatprep.subr.bf16.mxu0 0
      %1697 = vmatpush1.bf16.xpose.msra.mxu0 0
      %1698 = vmatprep.subr.bf16.mxu0 0
      %1699 = vmatpush1.bf16.xpose.msra.mxu0 0
      %1700 = vmatprep.subr.bf16.mxu0 0
      %1701 = vmatpush1.bf16.xpose.msra.mxu0 0
      %1702 = vmatprep.mubr.bf16.mxu0 0
      %1703 = vmatmul.mubr.bf16.gmra.mrb[0].mxu0 %v1665
      %v1704 = vpop.f32.mrb[0].mxu0
      %v1705 = vadd.f32 0.0, %v1704
      %v1706 = vpop.f32.mrb[0].mxu0
      %v1707 = vpop.f32.mrb[0].mxu0
      %v1708 = vpop.f32.mrb[0].mxu0
      %1709 = vdwg.mxu0
      %v1710 = vunpack.c.l.b16 %v990
      %v1711 = vpack.c.b16 %v1710, %v1710
      %1712 = vrot.lane.b32.xlu0 %v1711, 96
      %v1713 = vpop.permute.xlu0 %1712
      %v1715 = vsel %vm1027, %v990, 0
      %v1718 = vsel %vm1027, %v1713, 0
      %1720 = vmatprep.subr.bf16.mxu0 0
      %1721 = vmatpush1.bf16.xpose.msra.mxu0 %v1718
      %1722 = vmatprep.subr.bf16.mxu0 0
      %1723 = vmatpush1.bf16.xpose.msra.mxu0 0
      %1724 = vmatprep.subr.bf16.mxu0 0
      %1725 = vmatpush1.bf16.xpose.msra.mxu0 0
      %1726 = vmatprep.subr.bf16.mxu0 0
      %1727 = vmatpush1.bf16.xpose.msra.mxu0 0
      %1728 = vmatprep.subr.bf16.mxu0 0
      %1729 = vmatpush1.bf16.xpose.msra.mxu0 0
      %1730 = vmatprep.subr.bf16.mxu0 0
      %1731 = vmatpush1.bf16.xpose.msra.mxu0 0
      %1732 = vmatprep.subr.bf16.mxu0 0
      %1733 = vmatpush1.bf16.xpose.msra.mxu0 0
      %1734 = vmatprep.subr.bf16.mxu0 0
      %1735 = vmatpush1.bf16.xpose.msra.mxu0 0
      %1736 = vmatprep.subr.bf16.mxu0 0
      %1737 = vmatpush1.bf16.xpose.msra.mxu0 0
      %1738 = vmatprep.subr.bf16.mxu0 0
      %1739 = vmatpush1.bf16.xpose.msra.mxu0 0
      %1740 = vmatprep.subr.bf16.mxu0 0
      %1741 = vmatpush1.bf16.xpose.msra.mxu0 0
      %1742 = vmatprep.subr.bf16.mxu0 0
      %1743 = vmatpush1.bf16.xpose.msra.mxu0 0
      %1744 = vmatprep.subr.bf16.mxu0 0
      %1745 = vmatpush1.bf16.xpose.msra.mxu0 0
      %1746 = vmatprep.subr.bf16.mxu0 0
      %1747 = vmatpush1.bf16.xpose.msra.mxu0 0
      %1748 = vmatprep.subr.bf16.mxu0 0
      %1749 = vmatpush1.bf16.xpose.msra.mxu0 0
      %1750 = vmatprep.subr.bf16.mxu0 0
      %1751 = vmatpush1.bf16.xpose.msra.mxu0 0
      %1752 = vmatprep.mubr.bf16.mxu0 0
      %1753 = vmatmul.mubr.bf16.gmra.mrb[0].mxu0 %v1715
      %v1754 = vpop.f32.mrb[0].mxu0
      %v1755 = vadd.f32 0.0, %v1754
      %v1756 = vpop.f32.mrb[0].mxu0
      %v1757 = vpop.f32.mrb[0].mxu0
      %v1758 = vpop.f32.mrb[0].mxu0
      %1759 = vdwg.mxu0
      %v1760 = vunpack.c.l.b16 %v992
      %v1761 = vpack.c.b16 %v1760, %v1760
      %1762 = vrot.lane.b32.xlu0 %v1761, 96
      %v1763 = vpop.permute.xlu0 %1762
      %v1765 = vsel %vm1027, %v992, 0
      %v1768 = vsel %vm1027, %v1763, 0
      %1770 = vmatprep.subr.bf16.mxu0 0
      %1771 = vmatpush1.bf16.xpose.msra.mxu0 %v1768
      %1772 = vmatprep.subr.bf16.mxu0 0
      %1773 = vmatpush1.bf16.xpose.msra.mxu0 0
      %1774 = vmatprep.subr.bf16.mxu0 0
      %1775 = vmatpush1.bf16.xpose.msra.mxu0 0
      %1776 = vmatprep.subr.bf16.mxu0 0
      %1777 = vmatpush1.bf16.xpose.msra.mxu0 0
      %1778 = vmatprep.subr.bf16.mxu0 0
      %1779 = vmatpush1.bf16.xpose.msra.mxu0 0
      %1780 = vmatprep.subr.bf16.mxu0 0
      %1781 = vmatpush1.bf16.xpose.msra.mxu0 0
      %1782 = vmatprep.subr.bf16.mxu0 0
      %1783 = vmatpush1.bf16.xpose.msra.mxu0 0
      %1784 = vmatprep.subr.bf16.mxu0 0
      %1785 = vmatpush1.bf16.xpose.msra.mxu0 0
      %1786 = vmatprep.subr.bf16.mxu0 0
      %1787 = vmatpush1.bf16.xpose.msra.mxu0 0
      %1788 = vmatprep.subr.bf16.mxu0 0
      %1789 = vmatpush1.bf16.xpose.msra.mxu0 0
      %1790 = vmatprep.subr.bf16.mxu0 0
      %1791 = vmatpush1.bf16.xpose.msra.mxu0 0
      %1792 = vmatprep.subr.bf16.mxu0 0
      %1793 = vmatpush1.bf16.xpose.msra.mxu0 0
      %1794 = vmatprep.subr.bf16.mxu0 0
      %1795 = vmatpush1.bf16.xpose.msra.mxu0 0
      %1796 = vmatprep.subr.bf16.mxu0 0
      %1797 = vmatpush1.bf16.xpose.msra.mxu0 0
      %1798 = vmatprep.subr.bf16.mxu0 0
      %1799 = vmatpush1.bf16.xpose.msra.mxu0 0
      %1800 = vmatprep.subr.bf16.mxu0 0
      %1801 = vmatpush1.bf16.xpose.msra.mxu0 0
      %1802 = vmatprep.mubr.bf16.mxu0 0
      %1803 = vmatmul.mubr.bf16.gmra.mrb[0].mxu0 %v1765
      %v1804 = vpop.f32.mrb[0].mxu0
      %v1805 = vadd.f32 0.0, %v1804
      %v1806 = vpop.f32.mrb[0].mxu0
      %v1807 = vpop.f32.mrb[0].mxu0
      %v1808 = vpop.f32.mrb[0].mxu0
      %1809 = vdwg.mxu0
      %v1810 = vunpack.c.l.b16 %v994
      %v1811 = vpack.c.b16 %v1810, %v1810
      %1812 = vrot.lane.b32.xlu0 %v1811, 96
      %v1813 = vpop.permute.xlu0 %1812
      %v1815 = vsel %vm1027, %v994, 0
      %v1818 = vsel %vm1027, %v1813, 0
      %1820 = vmatprep.subr.bf16.mxu0 0
      %1821 = vmatpush1.bf16.xpose.msra.mxu0 %v1818
      %1822 = vmatprep.subr.bf16.mxu0 0
      %1823 = vmatpush1.bf16.xpose.msra.mxu0 0
      %1824 = vmatprep.subr.bf16.mxu0 0
      %1825 = vmatpush1.bf16.xpose.msra.mxu0 0
      %1826 = vmatprep.subr.bf16.mxu0 0
      %1827 = vmatpush1.bf16.xpose.msra.mxu0 0
      %1828 = vmatprep.subr.bf16.mxu0 0
      %1829 = vmatpush1.bf16.xpose.msra.mxu0 0
      %1830 = vmatprep.subr.bf16.mxu0 0
      %1831 = vmatpush1.bf16.xpose.msra.mxu0 0
      %1832 = vmatprep.subr.bf16.mxu0 0
      %1833 = vmatpush1.bf16.xpose.msra.mxu0 0
      %1834 = vmatprep.subr.bf16.mxu0 0
      %1835 = vmatpush1.bf16.xpose.msra.mxu0 0
      %1836 = vmatprep.subr.bf16.mxu0 0
      %1837 = vmatpush1.bf16.xpose.msra.mxu0 0
      %1838 = vmatprep.subr.bf16.mxu0 0
      %1839 = vmatpush1.bf16.xpose.msra.mxu0 0
      %1840 = vmatprep.subr.bf16.mxu0 0
      %1841 = vmatpush1.bf16.xpose.msra.mxu0 0
      %1842 = vmatprep.subr.bf16.mxu0 0
      %1843 = vmatpush1.bf16.xpose.msra.mxu0 0
      %1844 = vmatprep.subr.bf16.mxu0 0
      %1845 = vmatpush1.bf16.xpose.msra.mxu0 0
      %1846 = vmatprep.subr.bf16.mxu0 0
      %1847 = vmatpush1.bf16.xpose.msra.mxu0 0
      %1848 = vmatprep.subr.bf16.mxu0 0
      %1849 = vmatpush1.bf16.xpose.msra.mxu0 0
      %1850 = vmatprep.subr.bf16.mxu0 0
      %1851 = vmatpush1.bf16.xpose.msra.mxu0 0
      %1852 = vmatprep.mubr.bf16.mxu0 0
      %1853 = vmatmul.mubr.bf16.gmra.mrb[0].mxu0 %v1815
      %v1854 = vpop.f32.mrb[0].mxu0
      %v1855 = vadd.f32 0.0, %v1854
      %v1856 = vpop.f32.mrb[0].mxu0
      %v1857 = vpop.f32.mrb[0].mxu0
      %v1858 = vpop.f32.mrb[0].mxu0
      %1859 = vdwg.mxu0
      %v1860 = vunpack.c.l.b16 %v996
      %v1861 = vpack.c.b16 %v1860, %v1860
      %1862 = vrot.lane.b32.xlu0 %v1861, 96
      %v1863 = vpop.permute.xlu0 %1862
      %v1865 = vsel %vm1027, %v996, 0
      %v1868 = vsel %vm1027, %v1863, 0
      %1870 = vmatprep.subr.bf16.mxu0 0
      %1871 = vmatpush1.bf16.xpose.msra.mxu0 %v1868
      %1872 = vmatprep.subr.bf16.mxu0 0
      %1873 = vmatpush1.bf16.xpose.msra.mxu0 0
      %1874 = vmatprep.subr.bf16.mxu0 0
      %1875 = vmatpush1.bf16.xpose.msra.mxu0 0
      %1876 = vmatprep.subr.bf16.mxu0 0
      %1877 = vmatpush1.bf16.xpose.msra.mxu0 0
      %1878 = vmatprep.subr.bf16.mxu0 0
      %1879 = vmatpush1.bf16.xpose.msra.mxu0 0
      %1880 = vmatprep.subr.bf16.mxu0 0
      %1881 = vmatpush1.bf16.xpose.msra.mxu0 0
      %1882 = vmatprep.subr.bf16.mxu0 0
      %1883 = vmatpush1.bf16.xpose.msra.mxu0 0
      %1884 = vmatprep.subr.bf16.mxu0 0
      %1885 = vmatpush1.bf16.xpose.msra.mxu0 0
      %1886 = vmatprep.subr.bf16.mxu0 0
      %1887 = vmatpush1.bf16.xpose.msra.mxu0 0
      %1888 = vmatprep.subr.bf16.mxu0 0
      %1889 = vmatpush1.bf16.xpose.msra.mxu0 0
      %1890 = vmatprep.subr.bf16.mxu0 0
      %1891 = vmatpush1.bf16.xpose.msra.mxu0 0
      %1892 = vmatprep.subr.bf16.mxu0 0
      %1893 = vmatpush1.bf16.xpose.msra.mxu0 0
      %1894 = vmatprep.subr.bf16.mxu0 0
      %1895 = vmatpush1.bf16.xpose.msra.mxu0 0
      %1896 = vmatprep.subr.bf16.mxu0 0
      %1897 = vmatpush1.bf16.xpose.msra.mxu0 0
      %1898 = vmatprep.subr.bf16.mxu0 0
      %1899 = vmatpush1.bf16.xpose.msra.mxu0 0
      %1900 = vmatprep.subr.bf16.mxu0 0
      %1901 = vmatpush1.bf16.xpose.msra.mxu0 0
      %1902 = vmatprep.mubr.bf16.mxu0 0
      %1903 = vmatmul.mubr.bf16.gmra.mrb[0].mxu0 %v1865
      %v1904 = vpop.f32.mrb[0].mxu0
      %v1905 = vadd.f32 0.0, %v1904
      %v1906 = vpop.f32.mrb[0].mxu0
      %v1907 = vpop.f32.mrb[0].mxu0
      %v1908 = vpop.f32.mrb[0].mxu0
      %1909 = vdwg.mxu0
      %v1910 = vunpack.c.l.b16 %v998
      %v1911 = vpack.c.b16 %v1910, %v1910
      %1912 = vrot.lane.b32.xlu0 %v1911, 96
      %v1913 = vpop.permute.xlu0 %1912
      %v1915 = vsel %vm1027, %v998, 0
      %v1918 = vsel %vm1027, %v1913, 0
      %1920 = vmatprep.subr.bf16.mxu0 0
      %1921 = vmatpush1.bf16.xpose.msra.mxu0 %v1918
      %1922 = vmatprep.subr.bf16.mxu0 0
      %1923 = vmatpush1.bf16.xpose.msra.mxu0 0
      %1924 = vmatprep.subr.bf16.mxu0 0
      %1925 = vmatpush1.bf16.xpose.msra.mxu0 0
      %1926 = vmatprep.subr.bf16.mxu0 0
      %1927 = vmatpush1.bf16.xpose.msra.mxu0 0
      %1928 = vmatprep.subr.bf16.mxu0 0
      %1929 = vmatpush1.bf16.xpose.msra.mxu0 0
      %1930 = vmatprep.subr.bf16.mxu0 0
      %1931 = vmatpush1.bf16.xpose.msra.mxu0 0
      %1932 = vmatprep.subr.bf16.mxu0 0
      %1933 = vmatpush1.bf16.xpose.msra.mxu0 0
      %1934 = vmatprep.subr.bf16.mxu0 0
      %1935 = vmatpush1.bf16.xpose.msra.mxu0 0
      %1936 = vmatprep.subr.bf16.mxu0 0
      %1937 = vmatpush1.bf16.xpose.msra.mxu0 0
      %1938 = vmatprep.subr.bf16.mxu0 0
      %1939 = vmatpush1.bf16.xpose.msra.mxu0 0
      %1940 = vmatprep.subr.bf16.mxu0 0
      %1941 = vmatpush1.bf16.xpose.msra.mxu0 0
      %1942 = vmatprep.subr.bf16.mxu0 0
      %1943 = vmatpush1.bf16.xpose.msra.mxu0 0
      %1944 = vmatprep.subr.bf16.mxu0 0
      %1945 = vmatpush1.bf16.xpose.msra.mxu0 0
      %1946 = vmatprep.subr.bf16.mxu0 0
      %1947 = vmatpush1.bf16.xpose.msra.mxu0 0
      %1948 = vmatprep.subr.bf16.mxu0 0
      %1949 = vmatpush1.bf16.xpose.msra.mxu0 0
      %1950 = vmatprep.subr.bf16.mxu0 0
      %1951 = vmatpush1.bf16.xpose.msra.mxu0 0
      %1952 = vmatprep.mubr.bf16.mxu0 0
      %1953 = vmatmul.mubr.bf16.gmra.mrb[0].mxu0 %v1915
      %v1954 = vpop.f32.mrb[0].mxu0
      %v1955 = vadd.f32 0.0, %v1954
      %v1956 = vpop.f32.mrb[0].mxu0
      %v1957 = vpop.f32.mrb[0].mxu0
      %v1958 = vpop.f32.mrb[0].mxu0
      %1959 = vdwg.mxu0
      %v1960 = vunpack.c.l.b16 %v1000
      %v1961 = vpack.c.b16 %v1960, %v1960
      %1962 = vrot.lane.b32.xlu0 %v1961, 96
      %v1963 = vpop.permute.xlu0 %1962
      %v1965 = vsel %vm1027, %v1000, 0
      %v1968 = vsel %vm1027, %v1963, 0
      %1970 = vmatprep.subr.bf16.mxu0 0
      %1971 = vmatpush1.bf16.xpose.msra.mxu0 %v1968
      %1972 = vmatprep.subr.bf16.mxu0 0
      %1973 = vmatpush1.bf16.xpose.msra.mxu0 0
      %1974 = vmatprep.subr.bf16.mxu0 0
      %1975 = vmatpush1.bf16.xpose.msra.mxu0 0
      %1976 = vmatprep.subr.bf16.mxu0 0
      %1977 = vmatpush1.bf16.xpose.msra.mxu0 0
      %1978 = vmatprep.subr.bf16.mxu0 0
      %1979 = vmatpush1.bf16.xpose.msra.mxu0 0
      %1980 = vmatprep.subr.bf16.mxu0 0
      %1981 = vmatpush1.bf16.xpose.msra.mxu0 0
      %1982 = vmatprep.subr.bf16.mxu0 0
      %1983 = vmatpush1.bf16.xpose.msra.mxu0 0
      %1984 = vmatprep.subr.bf16.mxu0 0
      %1985 = vmatpush1.bf16.xpose.msra.mxu0 0
      %1986 = vmatprep.subr.bf16.mxu0 0
      %1987 = vmatpush1.bf16.xpose.msra.mxu0 0
      %1988 = vmatprep.subr.bf16.mxu0 0
      %1989 = vmatpush1.bf16.xpose.msra.mxu0 0
      %1990 = vmatprep.subr.bf16.mxu0 0
      %1991 = vmatpush1.bf16.xpose.msra.mxu0 0
      %1992 = vmatprep.subr.bf16.mxu0 0
      %1993 = vmatpush1.bf16.xpose.msra.mxu0 0
      %1994 = vmatprep.subr.bf16.mxu0 0
      %1995 = vmatpush1.bf16.xpose.msra.mxu0 0
      %1996 = vmatprep.subr.bf16.mxu0 0
      %1997 = vmatpush1.bf16.xpose.msra.mxu0 0
      %1998 = vmatprep.subr.bf16.mxu0 0
      %1999 = vmatpush1.bf16.xpose.msra.mxu0 0
      %2000 = vmatprep.subr.bf16.mxu0 0
      %2001 = vmatpush1.bf16.xpose.msra.mxu0 0
      %2002 = vmatprep.mubr.bf16.mxu0 0
      %2003 = vmatmul.mubr.bf16.gmra.mrb[0].mxu0 %v1965
      %v2004 = vpop.f32.mrb[0].mxu0
      %v2005 = vadd.f32 0.0, %v2004
      %v2006 = vpop.f32.mrb[0].mxu0
      %v2007 = vpop.f32.mrb[0].mxu0
      %v2008 = vpop.f32.mrb[0].mxu0
      %2009 = vdwg.mxu0
      %v2010 = vunpack.c.l.b16 %v1002
      %v2011 = vpack.c.b16 %v2010, %v2010
      %2012 = vrot.lane.b32.xlu0 %v2011, 96
      %v2013 = vpop.permute.xlu0 %2012
      %v2015 = vsel %vm1027, %v1002, 0
      %v2018 = vsel %vm1027, %v2013, 0
      %2020 = vmatprep.subr.bf16.mxu0 0
      %2021 = vmatpush1.bf16.xpose.msra.mxu0 %v2018
      %2022 = vmatprep.subr.bf16.mxu0 0
      %2023 = vmatpush1.bf16.xpose.msra.mxu0 0
      %2024 = vmatprep.subr.bf16.mxu0 0
      %2025 = vmatpush1.bf16.xpose.msra.mxu0 0
      %2026 = vmatprep.subr.bf16.mxu0 0
      %2027 = vmatpush1.bf16.xpose.msra.mxu0 0
      %2028 = vmatprep.subr.bf16.mxu0 0
      %2029 = vmatpush1.bf16.xpose.msra.mxu0 0
      %2030 = vmatprep.subr.bf16.mxu0 0
      %2031 = vmatpush1.bf16.xpose.msra.mxu0 0
      %2032 = vmatprep.subr.bf16.mxu0 0
      %2033 = vmatpush1.bf16.xpose.msra.mxu0 0
      %2034 = vmatprep.subr.bf16.mxu0 0
      %2035 = vmatpush1.bf16.xpose.msra.mxu0 0
      %2036 = vmatprep.subr.bf16.mxu0 0
      %2037 = vmatpush1.bf16.xpose.msra.mxu0 0
      %2038 = vmatprep.subr.bf16.mxu0 0
      %2039 = vmatpush1.bf16.xpose.msra.mxu0 0
      %2040 = vmatprep.subr.bf16.mxu0 0
      %2041 = vmatpush1.bf16.xpose.msra.mxu0 0
      %2042 = vmatprep.subr.bf16.mxu0 0
      %2043 = vmatpush1.bf16.xpose.msra.mxu0 0
      %2044 = vmatprep.subr.bf16.mxu0 0
      %2045 = vmatpush1.bf16.xpose.msra.mxu0 0
      %2046 = vmatprep.subr.bf16.mxu0 0
      %2047 = vmatpush1.bf16.xpose.msra.mxu0 0
      %2048 = vmatprep.subr.bf16.mxu0 0
      %2049 = vmatpush1.bf16.xpose.msra.mxu0 0
      %2050 = vmatprep.subr.bf16.mxu0 0
      %2051 = vmatpush1.bf16.xpose.msra.mxu0 0
      %2052 = vmatprep.mubr.bf16.mxu0 0
      %2053 = vmatmul.mubr.bf16.gmra.mrb[0].mxu0 %v2015
      %v2054 = vpop.f32.mrb[0].mxu0
      %v2055 = vadd.f32 0.0, %v2054
      %v2056 = vpop.f32.mrb[0].mxu0
      %v2057 = vpop.f32.mrb[0].mxu0
      %v2058 = vpop.f32.mrb[0].mxu0
      %2059 = vdwg.mxu0
      %v2060 = vunpack.c.l.b16 %v1004
      %v2061 = vpack.c.b16 %v2060, %v2060
      %2062 = vrot.lane.b32.xlu0 %v2061, 96
      %v2063 = vpop.permute.xlu0 %2062
      %v2065 = vsel %vm1027, %v1004, 0
      %v2068 = vsel %vm1027, %v2063, 0
      %2070 = vmatprep.subr.bf16.mxu0 0
      %2071 = vmatpush1.bf16.xpose.msra.mxu0 %v2068
      %2072 = vmatprep.subr.bf16.mxu0 0
      %2073 = vmatpush1.bf16.xpose.msra.mxu0 0
      %2074 = vmatprep.subr.bf16.mxu0 0
      %2075 = vmatpush1.bf16.xpose.msra.mxu0 0
      %2076 = vmatprep.subr.bf16.mxu0 0
      %2077 = vmatpush1.bf16.xpose.msra.mxu0 0
      %2078 = vmatprep.subr.bf16.mxu0 0
      %2079 = vmatpush1.bf16.xpose.msra.mxu0 0
      %2080 = vmatprep.subr.bf16.mxu0 0
      %2081 = vmatpush1.bf16.xpose.msra.mxu0 0
      %2082 = vmatprep.subr.bf16.mxu0 0
      %2083 = vmatpush1.bf16.xpose.msra.mxu0 0
      %2084 = vmatprep.subr.bf16.mxu0 0
      %2085 = vmatpush1.bf16.xpose.msra.mxu0 0
      %2086 = vmatprep.subr.bf16.mxu0 0
      %2087 = vmatpush1.bf16.xpose.msra.mxu0 0
      %2088 = vmatprep.subr.bf16.mxu0 0
      %2089 = vmatpush1.bf16.xpose.msra.mxu0 0
      %2090 = vmatprep.subr.bf16.mxu0 0
      %2091 = vmatpush1.bf16.xpose.msra.mxu0 0
      %2092 = vmatprep.subr.bf16.mxu0 0
      %2093 = vmatpush1.bf16.xpose.msra.mxu0 0
      %2094 = vmatprep.subr.bf16.mxu0 0
      %2095 = vmatpush1.bf16.xpose.msra.mxu0 0
      %2096 = vmatprep.subr.bf16.mxu0 0
      %2097 = vmatpush1.bf16.xpose.msra.mxu0 0
      %2098 = vmatprep.subr.bf16.mxu0 0
      %2099 = vmatpush1.bf16.xpose.msra.mxu0 0
      %2100 = vmatprep.subr.bf16.mxu0 0
      %2101 = vmatpush1.bf16.xpose.msra.mxu0 0
      %2102 = vmatprep.mubr.bf16.mxu0 0
      %2103 = vmatmul.mubr.bf16.gmra.mrb[0].mxu0 %v2065
      %v2104 = vpop.f32.mrb[0].mxu0
      %v2105 = vadd.f32 0.0, %v2104
      %v2106 = vpop.f32.mrb[0].mxu0
      %v2107 = vpop.f32.mrb[0].mxu0
      %v2108 = vpop.f32.mrb[0].mxu0
      %2109 = vdwg.mxu0
      %v2110 = vunpack.c.l.b16 %v1006
      %v2111 = vpack.c.b16 %v2110, %v2110
      %2112 = vrot.lane.b32.xlu0 %v2111, 96
      %v2113 = vpop.permute.xlu0 %2112
      %v2115 = vsel %vm1027, %v1006, 0
      %v2118 = vsel %vm1027, %v2113, 0
      %2120 = vmatprep.subr.bf16.mxu0 0
      %2121 = vmatpush1.bf16.xpose.msra.mxu0 %v2118
      %2122 = vmatprep.subr.bf16.mxu0 0
      %2123 = vmatpush1.bf16.xpose.msra.mxu0 0
      %2124 = vmatprep.subr.bf16.mxu0 0
      %2125 = vmatpush1.bf16.xpose.msra.mxu0 0
      %2126 = vmatprep.subr.bf16.mxu0 0
      %2127 = vmatpush1.bf16.xpose.msra.mxu0 0
      %2128 = vmatprep.subr.bf16.mxu0 0
      %2129 = vmatpush1.bf16.xpose.msra.mxu0 0
      %2130 = vmatprep.subr.bf16.mxu0 0
      %2131 = vmatpush1.bf16.xpose.msra.mxu0 0
      %2132 = vmatprep.subr.bf16.mxu0 0
      %2133 = vmatpush1.bf16.xpose.msra.mxu0 0
      %2134 = vmatprep.subr.bf16.mxu0 0
      %2135 = vmatpush1.bf16.xpose.msra.mxu0 0
      %2136 = vmatprep.subr.bf16.mxu0 0
      %2137 = vmatpush1.bf16.xpose.msra.mxu0 0
      %2138 = vmatprep.subr.bf16.mxu0 0
      %2139 = vmatpush1.bf16.xpose.msra.mxu0 0
      %2140 = vmatprep.subr.bf16.mxu0 0
      %2141 = vmatpush1.bf16.xpose.msra.mxu0 0
      %2142 = vmatprep.subr.bf16.mxu0 0
      %2143 = vmatpush1.bf16.xpose.msra.mxu0 0
      %2144 = vmatprep.subr.bf16.mxu0 0
      %2145 = vmatpush1.bf16.xpose.msra.mxu0 0
      %2146 = vmatprep.subr.bf16.mxu0 0
      %2147 = vmatpush1.bf16.xpose.msra.mxu0 0
      %2148 = vmatprep.subr.bf16.mxu0 0
      %2149 = vmatpush1.bf16.xpose.msra.mxu0 0
      %2150 = vmatprep.subr.bf16.mxu0 0
      %2151 = vmatpush1.bf16.xpose.msra.mxu0 0
      %2152 = vmatprep.mubr.bf16.mxu0 0
      %2153 = vmatmul.mubr.bf16.gmra.mrb[0].mxu0 %v2115
      %v2154 = vpop.f32.mrb[0].mxu0
      %v2155 = vadd.f32 0.0, %v2154
      %v2156 = vpop.f32.mrb[0].mxu0
      %v2157 = vpop.f32.mrb[0].mxu0
      %v2158 = vpop.f32.mrb[0].mxu0
      %2159 = vdwg.mxu0
      %v2160 = vunpack.c.l.b16 %v1008
      %v2161 = vpack.c.b16 %v2160, %v2160
      %2162 = vrot.lane.b32.xlu0 %v2161, 96
      %v2163 = vpop.permute.xlu0 %2162
      %v2165 = vsel %vm1027, %v1008, 0
      %v2168 = vsel %vm1027, %v2163, 0
      %2170 = vmatprep.subr.bf16.mxu0 0
      %2171 = vmatpush1.bf16.xpose.msra.mxu0 %v2168
      %2172 = vmatprep.subr.bf16.mxu0 0
      %2173 = vmatpush1.bf16.xpose.msra.mxu0 0
      %2174 = vmatprep.subr.bf16.mxu0 0
      %2175 = vmatpush1.bf16.xpose.msra.mxu0 0
      %2176 = vmatprep.subr.bf16.mxu0 0
      %2177 = vmatpush1.bf16.xpose.msra.mxu0 0
      %2178 = vmatprep.subr.bf16.mxu0 0
      %2179 = vmatpush1.bf16.xpose.msra.mxu0 0
      %2180 = vmatprep.subr.bf16.mxu0 0
      %2181 = vmatpush1.bf16.xpose.msra.mxu0 0
      %2182 = vmatprep.subr.bf16.mxu0 0
      %2183 = vmatpush1.bf16.xpose.msra.mxu0 0
      %2184 = vmatprep.subr.bf16.mxu0 0
      %2185 = vmatpush1.bf16.xpose.msra.mxu0 0
      %2186 = vmatprep.subr.bf16.mxu0 0
      %2187 = vmatpush1.bf16.xpose.msra.mxu0 0
      %2188 = vmatprep.subr.bf16.mxu0 0
      %2189 = vmatpush1.bf16.xpose.msra.mxu0 0
      %2190 = vmatprep.subr.bf16.mxu0 0
      %2191 = vmatpush1.bf16.xpose.msra.mxu0 0
      %2192 = vmatprep.subr.bf16.mxu0 0
      %2193 = vmatpush1.bf16.xpose.msra.mxu0 0
      %2194 = vmatprep.subr.bf16.mxu0 0
      %2195 = vmatpush1.bf16.xpose.msra.mxu0 0
      %2196 = vmatprep.subr.bf16.mxu0 0
      %2197 = vmatpush1.bf16.xpose.msra.mxu0 0
      %2198 = vmatprep.subr.bf16.mxu0 0
      %2199 = vmatpush1.bf16.xpose.msra.mxu0 0
      %2200 = vmatprep.subr.bf16.mxu0 0
      %2201 = vmatpush1.bf16.xpose.msra.mxu0 0
      %2202 = vmatprep.mubr.bf16.mxu0 0
      %2203 = vmatmul.mubr.bf16.gmra.mrb[0].mxu0 %v2165
      %v2204 = vpop.f32.mrb[0].mxu0
      %v2205 = vadd.f32 0.0, %v2204
      %v2206 = vpop.f32.mrb[0].mxu0
      %v2207 = vpop.f32.mrb[0].mxu0
      %v2208 = vpop.f32.mrb[0].mxu0
      %2209 = vdwg.mxu0
      %v2210 = vunpack.c.l.b16 %v1010
      %v2211 = vpack.c.b16 %v2210, %v2210
      %2212 = vrot.lane.b32.xlu0 %v2211, 96
      %v2213 = vpop.permute.xlu0 %2212
      %v2215 = vsel %vm1027, %v1010, 0
      %v2218 = vsel %vm1027, %v2213, 0
      %2220 = vmatprep.subr.bf16.mxu0 0
      %2221 = vmatpush1.bf16.xpose.msra.mxu0 %v2218
      %2222 = vmatprep.subr.bf16.mxu0 0
      %2223 = vmatpush1.bf16.xpose.msra.mxu0 0
      %2224 = vmatprep.subr.bf16.mxu0 0
      %2225 = vmatpush1.bf16.xpose.msra.mxu0 0
      %2226 = vmatprep.subr.bf16.mxu0 0
      %2227 = vmatpush1.bf16.xpose.msra.mxu0 0
      %2228 = vmatprep.subr.bf16.mxu0 0
      %2229 = vmatpush1.bf16.xpose.msra.mxu0 0
      %2230 = vmatprep.subr.bf16.mxu0 0
      %2231 = vmatpush1.bf16.xpose.msra.mxu0 0
      %2232 = vmatprep.subr.bf16.mxu0 0
      %2233 = vmatpush1.bf16.xpose.msra.mxu0 0
      %2234 = vmatprep.subr.bf16.mxu0 0
      %2235 = vmatpush1.bf16.xpose.msra.mxu0 0
      %2236 = vmatprep.subr.bf16.mxu0 0
      %2237 = vmatpush1.bf16.xpose.msra.mxu0 0
      %2238 = vmatprep.subr.bf16.mxu0 0
      %2239 = vmatpush1.bf16.xpose.msra.mxu0 0
      %2240 = vmatprep.subr.bf16.mxu0 0
      %2241 = vmatpush1.bf16.xpose.msra.mxu0 0
      %2242 = vmatprep.subr.bf16.mxu0 0
      %2243 = vmatpush1.bf16.xpose.msra.mxu0 0
      %2244 = vmatprep.subr.bf16.mxu0 0
      %2245 = vmatpush1.bf16.xpose.msra.mxu0 0
      %2246 = vmatprep.subr.bf16.mxu0 0
      %2247 = vmatpush1.bf16.xpose.msra.mxu0 0
      %2248 = vmatprep.subr.bf16.mxu0 0
      %2249 = vmatpush1.bf16.xpose.msra.mxu0 0
      %2250 = vmatprep.subr.bf16.mxu0 0
      %2251 = vmatpush1.bf16.xpose.msra.mxu0 0
      %2252 = vmatprep.mubr.bf16.mxu0 0
      %2253 = vmatmul.mubr.bf16.gmra.mrb[0].mxu0 %v2215
      %v2254 = vpop.f32.mrb[0].mxu0
      %v2255 = vadd.f32 0.0, %v2254
      %v2256 = vpop.f32.mrb[0].mxu0
      %v2257 = vpop.f32.mrb[0].mxu0
      %v2258 = vpop.f32.mrb[0].mxu0
      %2259 = vdwg.mxu0
      %v2260 = vunpack.c.l.b16 %v1012
      %v2261 = vpack.c.b16 %v2260, %v2260
      %2262 = vrot.lane.b32.xlu0 %v2261, 96
      %v2263 = vpop.permute.xlu0 %2262
      %v2265 = vsel %vm1027, %v1012, 0
      %v2268 = vsel %vm1027, %v2263, 0
      %2270 = vmatprep.subr.bf16.mxu0 0
      %2271 = vmatpush1.bf16.xpose.msra.mxu0 %v2268
      %2272 = vmatprep.subr.bf16.mxu0 0
      %2273 = vmatpush1.bf16.xpose.msra.mxu0 0
      %2274 = vmatprep.subr.bf16.mxu0 0
      %2275 = vmatpush1.bf16.xpose.msra.mxu0 0
      %2276 = vmatprep.subr.bf16.mxu0 0
      %2277 = vmatpush1.bf16.xpose.msra.mxu0 0
      %2278 = vmatprep.subr.bf16.mxu0 0
      %2279 = vmatpush1.bf16.xpose.msra.mxu0 0
      %2280 = vmatprep.subr.bf16.mxu0 0
      %2281 = vmatpush1.bf16.xpose.msra.mxu0 0
      %2282 = vmatprep.subr.bf16.mxu0 0
      %2283 = vmatpush1.bf16.xpose.msra.mxu0 0
      %2284 = vmatprep.subr.bf16.mxu0 0
      %2285 = vmatpush1.bf16.xpose.msra.mxu0 0
      %2286 = vmatprep.subr.bf16.mxu0 0
      %2287 = vmatpush1.bf16.xpose.msra.mxu0 0
      %2288 = vmatprep.subr.bf16.mxu0 0
      %2289 = vmatpush1.bf16.xpose.msra.mxu0 0
      %2290 = vmatprep.subr.bf16.mxu0 0
      %2291 = vmatpush1.bf16.xpose.msra.mxu0 0
      %2292 = vmatprep.subr.bf16.mxu0 0
      %2293 = vmatpush1.bf16.xpose.msra.mxu0 0
      %2294 = vmatprep.subr.bf16.mxu0 0
      %2295 = vmatpush1.bf16.xpose.msra.mxu0 0
      %2296 = vmatprep.subr.bf16.mxu0 0
      %2297 = vmatpush1.bf16.xpose.msra.mxu0 0
      %2298 = vmatprep.subr.bf16.mxu0 0
      %2299 = vmatpush1.bf16.xpose.msra.mxu0 0
      %2300 = vmatprep.subr.bf16.mxu0 0
      %2301 = vmatpush1.bf16.xpose.msra.mxu0 0
      %2302 = vmatprep.mubr.bf16.mxu0 0
      %2303 = vmatmul.mubr.bf16.gmra.mrb[0].mxu0 %v2265
      %v2304 = vpop.f32.mrb[0].mxu0
      %v2305 = vadd.f32 0.0, %v2304
      %v2306 = vpop.f32.mrb[0].mxu0
      %v2307 = vpop.f32.mrb[0].mxu0
      %v2308 = vpop.f32.mrb[0].mxu0
      %2309 = vdwg.mxu0
      %v2310 = vunpack.c.l.b16 %v1014
      %v2311 = vpack.c.b16 %v2310, %v2310
      %2312 = vrot.lane.b32.xlu0 %v2311, 96
      %v2313 = vpop.permute.xlu0 %2312
      %v2315 = vsel %vm1027, %v1014, 0
      %v2318 = vsel %vm1027, %v2313, 0
      %2320 = vmatprep.subr.bf16.mxu0 0
      %2321 = vmatpush1.bf16.xpose.msra.mxu0 %v2318
      %2322 = vmatprep.subr.bf16.mxu0 0
      %2323 = vmatpush1.bf16.xpose.msra.mxu0 0
      %2324 = vmatprep.subr.bf16.mxu0 0
      %2325 = vmatpush1.bf16.xpose.msra.mxu0 0
      %2326 = vmatprep.subr.bf16.mxu0 0
      %2327 = vmatpush1.bf16.xpose.msra.mxu0 0
      %2328 = vmatprep.subr.bf16.mxu0 0
      %2329 = vmatpush1.bf16.xpose.msra.mxu0 0
      %2330 = vmatprep.subr.bf16.mxu0 0
      %2331 = vmatpush1.bf16.xpose.msra.mxu0 0
      %2332 = vmatprep.subr.bf16.mxu0 0
      %2333 = vmatpush1.bf16.xpose.msra.mxu0 0
      %2334 = vmatprep.subr.bf16.mxu0 0
      %2335 = vmatpush1.bf16.xpose.msra.mxu0 0
      %2336 = vmatprep.subr.bf16.mxu0 0
      %2337 = vmatpush1.bf16.xpose.msra.mxu0 0
      %2338 = vmatprep.subr.bf16.mxu0 0
      %2339 = vmatpush1.bf16.xpose.msra.mxu0 0
      %2340 = vmatprep.subr.bf16.mxu0 0
      %2341 = vmatpush1.bf16.xpose.msra.mxu0 0
      %2342 = vmatprep.subr.bf16.mxu0 0
      %2343 = vmatpush1.bf16.xpose.msra.mxu0 0
      %2344 = vmatprep.subr.bf16.mxu0 0
      %2345 = vmatpush1.bf16.xpose.msra.mxu0 0
      %2346 = vmatprep.subr.bf16.mxu0 0
      %2347 = vmatpush1.bf16.xpose.msra.mxu0 0
      %2348 = vmatprep.subr.bf16.mxu0 0
      %2349 = vmatpush1.bf16.xpose.msra.mxu0 0
      %2350 = vmatprep.subr.bf16.mxu0 0
      %2351 = vmatpush1.bf16.xpose.msra.mxu0 0
      %2352 = vmatprep.mubr.bf16.mxu0 0
      %2353 = vmatmul.mubr.bf16.gmra.mrb[0].mxu0 %v2315
      %v2354 = vpop.f32.mrb[0].mxu0
      %v2355 = vadd.f32 0.0, %v2354
      %v2356 = vpop.f32.mrb[0].mxu0
      %v2357 = vpop.f32.mrb[0].mxu0
      %v2358 = vpop.f32.mrb[0].mxu0
      %2359 = vdwg.mxu0
      %v2360 = vunpack.c.l.b16 %v1016
      %v2361 = vpack.c.b16 %v2360, %v2360
      %2362 = vrot.lane.b32.xlu0 %v2361, 96
      %v2363 = vpop.permute.xlu0 %2362
      %v2365 = vsel %vm1027, %v1016, 0
      %v2368 = vsel %vm1027, %v2363, 0
      %2370 = vmatprep.subr.bf16.mxu0 0
      %2371 = vmatpush1.bf16.xpose.msra.mxu0 %v2368
      %2372 = vmatprep.subr.bf16.mxu0 0
      %2373 = vmatpush1.bf16.xpose.msra.mxu0 0
      %2374 = vmatprep.subr.bf16.mxu0 0
      %2375 = vmatpush1.bf16.xpose.msra.mxu0 0
      %2376 = vmatprep.subr.bf16.mxu0 0
      %2377 = vmatpush1.bf16.xpose.msra.mxu0 0
      %2378 = vmatprep.subr.bf16.mxu0 0
      %2379 = vmatpush1.bf16.xpose.msra.mxu0 0
      %2380 = vmatprep.subr.bf16.mxu0 0
      %2381 = vmatpush1.bf16.xpose.msra.mxu0 0
      %2382 = vmatprep.subr.bf16.mxu0 0
      %2383 = vmatpush1.bf16.xpose.msra.mxu0 0
      %2384 = vmatprep.subr.bf16.mxu0 0
      %2385 = vmatpush1.bf16.xpose.msra.mxu0 0
      %2386 = vmatprep.subr.bf16.mxu0 0
      %2387 = vmatpush1.bf16.xpose.msra.mxu0 0
      %2388 = vmatprep.subr.bf16.mxu0 0
      %2389 = vmatpush1.bf16.xpose.msra.mxu0 0
      %2390 = vmatprep.subr.bf16.mxu0 0
      %2391 = vmatpush1.bf16.xpose.msra.mxu0 0
      %2392 = vmatprep.subr.bf16.mxu0 0
      %2393 = vmatpush1.bf16.xpose.msra.mxu0 0
      %2394 = vmatprep.subr.bf16.mxu0 0
      %2395 = vmatpush1.bf16.xpose.msra.mxu0 0
      %2396 = vmatprep.subr.bf16.mxu0 0
      %2397 = vmatpush1.bf16.xpose.msra.mxu0 0
      %2398 = vmatprep.subr.bf16.mxu0 0
      %2399 = vmatpush1.bf16.xpose.msra.mxu0 0
      %2400 = vmatprep.subr.bf16.mxu0 0
      %2401 = vmatpush1.bf16.xpose.msra.mxu0 0
      %2402 = vmatprep.mubr.bf16.mxu0 0
      %2403 = vmatmul.mubr.bf16.gmra.mrb[0].mxu0 %v2365
      %v2404 = vpop.f32.mrb[0].mxu0
      %v2405 = vadd.f32 0.0, %v2404
      %v2406 = vpop.f32.mrb[0].mxu0
      %v2407 = vpop.f32.mrb[0].mxu0
      %v2408 = vpop.f32.mrb[0].mxu0
      %2409 = vdwg.mxu0
      %v2410 = vunpack.c.l.b16 %v1018
      %v2411 = vpack.c.b16 %v2410, %v2410
      %2412 = vrot.lane.b32.xlu0 %v2411, 96
      %v2413 = vpop.permute.xlu0 %2412
      %v2415 = vsel %vm1027, %v1018, 0
      %v2418 = vsel %vm1027, %v2413, 0
      %2420 = vmatprep.subr.bf16.mxu0 0
      %2421 = vmatpush1.bf16.xpose.msra.mxu0 %v2418
      %2422 = vmatprep.subr.bf16.mxu0 0
      %2423 = vmatpush1.bf16.xpose.msra.mxu0 0
      %2424 = vmatprep.subr.bf16.mxu0 0
      %2425 = vmatpush1.bf16.xpose.msra.mxu0 0
      %2426 = vmatprep.subr.bf16.mxu0 0
      %2427 = vmatpush1.bf16.xpose.msra.mxu0 0
      %2428 = vmatprep.subr.bf16.mxu0 0
      %2429 = vmatpush1.bf16.xpose.msra.mxu0 0
      %2430 = vmatprep.subr.bf16.mxu0 0
      %2431 = vmatpush1.bf16.xpose.msra.mxu0 0
      %2432 = vmatprep.subr.bf16.mxu0 0
      %2433 = vmatpush1.bf16.xpose.msra.mxu0 0
      %2434 = vmatprep.subr.bf16.mxu0 0
      %2435 = vmatpush1.bf16.xpose.msra.mxu0 0
      %2436 = vmatprep.subr.bf16.mxu0 0
      %2437 = vmatpush1.bf16.xpose.msra.mxu0 0
      %2438 = vmatprep.subr.bf16.mxu0 0
      %2439 = vmatpush1.bf16.xpose.msra.mxu0 0
      %2440 = vmatprep.subr.bf16.mxu0 0
      %2441 = vmatpush1.bf16.xpose.msra.mxu0 0
      %2442 = vmatprep.subr.bf16.mxu0 0
      %2443 = vmatpush1.bf16.xpose.msra.mxu0 0
      %2444 = vmatprep.subr.bf16.mxu0 0
      %2445 = vmatpush1.bf16.xpose.msra.mxu0 0
      %2446 = vmatprep.subr.bf16.mxu0 0
      %2447 = vmatpush1.bf16.xpose.msra.mxu0 0
      %2448 = vmatprep.subr.bf16.mxu0 0
      %2449 = vmatpush1.bf16.xpose.msra.mxu0 0
      %2450 = vmatprep.subr.bf16.mxu0 0
      %2451 = vmatpush1.bf16.xpose.msra.mxu0 0
      %2452 = vmatprep.mubr.bf16.mxu0 0
      %2453 = vmatmul.mubr.bf16.gmra.mrb[0].mxu0 %v2415
      %v2454 = vpop.f32.mrb[0].mxu0
      %v2455 = vadd.f32 0.0, %v2454
      %v2456 = vpop.f32.mrb[0].mxu0
      %v2457 = vpop.f32.mrb[0].mxu0
      %v2458 = vpop.f32.mrb[0].mxu0
      %2459 = vdwg.mxu0
      %v2460 = vunpack.c.l.b16 %v1020
      %v2461 = vpack.c.b16 %v2460, %v2460
      %2462 = vrot.lane.b32.xlu0 %v2461, 96
      %v2463 = vpop.permute.xlu0 %2462
      %v2465 = vsel %vm1027, %v1020, 0
      %v2468 = vsel %vm1027, %v2463, 0
      %2470 = vmatprep.subr.bf16.mxu0 0
      %2471 = vmatpush1.bf16.xpose.msra.mxu0 %v2468
      %2472 = vmatprep.subr.bf16.mxu0 0
      %2473 = vmatpush1.bf16.xpose.msra.mxu0 0
      %2474 = vmatprep.subr.bf16.mxu0 0
      %2475 = vmatpush1.bf16.xpose.msra.mxu0 0
      %2476 = vmatprep.subr.bf16.mxu0 0
      %2477 = vmatpush1.bf16.xpose.msra.mxu0 0
      %2478 = vmatprep.subr.bf16.mxu0 0
      %2479 = vmatpush1.bf16.xpose.msra.mxu0 0
      %2480 = vmatprep.subr.bf16.mxu0 0
      %2481 = vmatpush1.bf16.xpose.msra.mxu0 0
      %2482 = vmatprep.subr.bf16.mxu0 0
      %2483 = vmatpush1.bf16.xpose.msra.mxu0 0
      %2484 = vmatprep.subr.bf16.mxu0 0
      %2485 = vmatpush1.bf16.xpose.msra.mxu0 0
      %2486 = vmatprep.subr.bf16.mxu0 0
      %2487 = vmatpush1.bf16.xpose.msra.mxu0 0
      %2488 = vmatprep.subr.bf16.mxu0 0
      %2489 = vmatpush1.bf16.xpose.msra.mxu0 0
      %2490 = vmatprep.subr.bf16.mxu0 0
      %2491 = vmatpush1.bf16.xpose.msra.mxu0 0
      %2492 = vmatprep.subr.bf16.mxu0 0
      %2493 = vmatpush1.bf16.xpose.msra.mxu0 0
      %2494 = vmatprep.subr.bf16.mxu0 0
      %2495 = vmatpush1.bf16.xpose.msra.mxu0 0
      %2496 = vmatprep.subr.bf16.mxu0 0
      %2497 = vmatpush1.bf16.xpose.msra.mxu0 0
      %2498 = vmatprep.subr.bf16.mxu0 0
      %2499 = vmatpush1.bf16.xpose.msra.mxu0 0
      %2500 = vmatprep.subr.bf16.mxu0 0
      %2501 = vmatpush1.bf16.xpose.msra.mxu0 0
      %2502 = vmatprep.mubr.bf16.mxu0 0
      %2503 = vmatmul.mubr.bf16.gmra.mrb[0].mxu0 %v2465
      %v2504 = vpop.f32.mrb[0].mxu0
      %v2505 = vadd.f32 0.0, %v2504
      %v2506 = vpop.f32.mrb[0].mxu0
      %v2507 = vpop.f32.mrb[0].mxu0
      %v2508 = vpop.f32.mrb[0].mxu0
      %2509 = vdwg.mxu0
      %v2510 = vunpack.c.l.b16 %v1022
      %v2511 = vpack.c.b16 %v2510, %v2510
      %2512 = vrot.lane.b32.xlu0 %v2511, 96
      %v2513 = vpop.permute.xlu0 %2512
      %v2515 = vsel %vm1027, %v1022, 0
      %v2518 = vsel %vm1027, %v2513, 0
      %2520 = vmatprep.subr.bf16.mxu0 0
      %2521 = vmatpush1.bf16.xpose.msra.mxu0 %v2518
      %2522 = vmatprep.subr.bf16.mxu0 0
      %2523 = vmatpush1.bf16.xpose.msra.mxu0 0
      %2524 = vmatprep.subr.bf16.mxu0 0
      %2525 = vmatpush1.bf16.xpose.msra.mxu0 0
      %2526 = vmatprep.subr.bf16.mxu0 0
      %2527 = vmatpush1.bf16.xpose.msra.mxu0 0
      %2528 = vmatprep.subr.bf16.mxu0 0
      %2529 = vmatpush1.bf16.xpose.msra.mxu0 0
      %2530 = vmatprep.subr.bf16.mxu0 0
      %2531 = vmatpush1.bf16.xpose.msra.mxu0 0
      %2532 = vmatprep.subr.bf16.mxu0 0
      %2533 = vmatpush1.bf16.xpose.msra.mxu0 0
      %2534 = vmatprep.subr.bf16.mxu0 0
      %2535 = vmatpush1.bf16.xpose.msra.mxu0 0
      %2536 = vmatprep.subr.bf16.mxu0 0
      %2537 = vmatpush1.bf16.xpose.msra.mxu0 0
      %2538 = vmatprep.subr.bf16.mxu0 0
      %2539 = vmatpush1.bf16.xpose.msra.mxu0 0
      %2540 = vmatprep.subr.bf16.mxu0 0
      %2541 = vmatpush1.bf16.xpose.msra.mxu0 0
      %2542 = vmatprep.subr.bf16.mxu0 0
      %2543 = vmatpush1.bf16.xpose.msra.mxu0 0
      %2544 = vmatprep.subr.bf16.mxu0 0
      %2545 = vmatpush1.bf16.xpose.msra.mxu0 0
      %2546 = vmatprep.subr.bf16.mxu0 0
      %2547 = vmatpush1.bf16.xpose.msra.mxu0 0
      %2548 = vmatprep.subr.bf16.mxu0 0
      %2549 = vmatpush1.bf16.xpose.msra.mxu0 0
      %2550 = vmatprep.subr.bf16.mxu0 0
      %2551 = vmatpush1.bf16.xpose.msra.mxu0 0
      %2552 = vmatprep.mubr.bf16.mxu0 0
      %2553 = vmatmul.mubr.bf16.gmra.mrb[0].mxu0 %v2515
      %v2554 = vpop.f32.mrb[0].mxu0
      %v2555 = vadd.f32 0.0, %v2554
      %v2556 = vpop.f32.mrb[0].mxu0
      %v2557 = vpop.f32.mrb[0].mxu0
      %v2558 = vpop.f32.mrb[0].mxu0
      %2559 = vdwg.mxu0
      %v2560 = vunpack.c.l.b16 %v1024
      %v2561 = vpack.c.b16 %v2560, %v2560
      %2562 = vrot.lane.b32.xlu0 %v2561, 96
      %v2563 = vpop.permute.xlu0 %2562
      %v2565 = vsel %vm1027, %v1024, 0
      %v2568 = vsel %vm1027, %v2563, 0
      %2570 = vmatprep.subr.bf16.mxu0 0
      %2571 = vmatpush1.bf16.xpose.msra.mxu0 %v2568
      %2572 = vmatprep.subr.bf16.mxu0 0
      %2573 = vmatpush1.bf16.xpose.msra.mxu0 0
      %2574 = vmatprep.subr.bf16.mxu0 0
      %2575 = vmatpush1.bf16.xpose.msra.mxu0 0
      %2576 = vmatprep.subr.bf16.mxu0 0
      %2577 = vmatpush1.bf16.xpose.msra.mxu0 0
      %2578 = vmatprep.subr.bf16.mxu0 0
      %2579 = vmatpush1.bf16.xpose.msra.mxu0 0
      %2580 = vmatprep.subr.bf16.mxu0 0
      %2581 = vmatpush1.bf16.xpose.msra.mxu0 0
      %2582 = vmatprep.subr.bf16.mxu0 0
      %2583 = vmatpush1.bf16.xpose.msra.mxu0 0
      %2584 = vmatprep.subr.bf16.mxu0 0
      %2585 = vmatpush1.bf16.xpose.msra.mxu0 0
      %2586 = vmatprep.subr.bf16.mxu0 0
      %2587 = vmatpush1.bf16.xpose.msra.mxu0 0
      %2588 = vmatprep.subr.bf16.mxu0 0
      %2589 = vmatpush1.bf16.xpose.msra.mxu0 0
      %2590 = vmatprep.subr.bf16.mxu0 0
      %2591 = vmatpush1.bf16.xpose.msra.mxu0 0
      %2592 = vmatprep.subr.bf16.mxu0 0
      %2593 = vmatpush1.bf16.xpose.msra.mxu0 0
      %2594 = vmatprep.subr.bf16.mxu0 0
      %2595 = vmatpush1.bf16.xpose.msra.mxu0 0
      %2596 = vmatprep.subr.bf16.mxu0 0
      %2597 = vmatpush1.bf16.xpose.msra.mxu0 0
      %2598 = vmatprep.subr.bf16.mxu0 0
      %2599 = vmatpush1.bf16.xpose.msra.mxu0 0
      %2600 = vmatprep.subr.bf16.mxu0 0
      %2601 = vmatpush1.bf16.xpose.msra.mxu0 0
      %2602 = vmatprep.mubr.bf16.mxu0 0
      %2603 = vmatmul.mubr.bf16.gmra.mrb[0].mxu0 %v2565
      %v2604 = vpop.f32.mrb[0].mxu0
      %v2605 = vadd.f32 0.0, %v2604
      %v2606 = vpop.f32.mrb[0].mxu0
      %v2607 = vpop.f32.mrb[0].mxu0
      %v2608 = vpop.f32.mrb[0].mxu0
      %2609 = vdwg.mxu0
      %v2610 = vmul.f32 %v1069, 0.35355338
      %v2611 = vmul.f32 %v1117, 0.35355338
      %v2612 = vmul.f32 %v1165, 0.35355338
      %v2613 = vmul.f32 %v1213, 0.35355338
      %v2614 = vmul.f32 %v1261, 0.35355338
      %v2615 = vmul.f32 %v1309, 0.35355338
      %v2616 = vmul.f32 %v1357, 0.35355338
      %v2617 = vmul.f32 %v1405, 0.35355338
      %v2618 = vmul.f32 %v1455, 0.35355338
      %v2619 = vmul.f32 %v1505, 0.35355338
      %v2620 = vmul.f32 %v1555, 0.35355338
      %v2621 = vmul.f32 %v1605, 0.35355338
      %v2622 = vmul.f32 %v1655, 0.35355338
      %v2623 = vmul.f32 %v1705, 0.35355338
      %v2624 = vmul.f32 %v1755, 0.35355338
      %v2625 = vmul.f32 %v1805, 0.35355338
      %v2626 = vmul.f32 %v1855, 0.35355338
      %v2627 = vmul.f32 %v1905, 0.35355338
      %v2628 = vmul.f32 %v1955, 0.35355338
      %v2629 = vmul.f32 %v2005, 0.35355338
      %v2630 = vmul.f32 %v2055, 0.35355338
      %v2631 = vmul.f32 %v2105, 0.35355338
      %v2632 = vmul.f32 %v2155, 0.35355338
      %v2633 = vmul.f32 %v2205, 0.35355338
      %v2634 = vmul.f32 %v2255, 0.35355338
      %v2635 = vmul.f32 %v2305, 0.35355338
      %v2636 = vmul.f32 %v2355, 0.35355338
      %v2637 = vmul.f32 %v2405, 0.35355338
      %v2638 = vmul.f32 %v2455, 0.35355338
      %v2639 = vmul.f32 %v2505, 0.35355338
      %v2640 = vmul.f32 %v2555, 0.35355338
      %v2641 = vmul.f32 %v2605, 0.35355338
      %v2642 = vld [vmem:[#allocation3] sm:$0xff]
      %v2643 = vld [vmem:[#allocation3 + $0x8] sm:$0xff]
      %v2644 = vld [vmem:[#allocation3 + $0x10] sm:$0xff]
      %v2645 = vld [vmem:[#allocation3 + $0x18] sm:$0xff]
      %v2646 = vld [vmem:[#allocation3 + $0x20] sm:$0xff]
      %v2647 = vld [vmem:[#allocation3 + $0x28] sm:$0xff]
      %v2648 = vld [vmem:[#allocation3 + $0x30] sm:$0xff]
      %v2649 = vld [vmem:[#allocation3 + $0x38] sm:$0xff]
      %v2650 = vld [vmem:[#allocation3 + $0x40] sm:$0xff]
      %v2651 = vld [vmem:[#allocation3 + $0x48] sm:$0xff]
      %v2652 = vld [vmem:[#allocation3 + $0x50] sm:$0xff]
      %v2653 = vld [vmem:[#allocation3 + $0x58] sm:$0xff]
      %v2654 = vld [vmem:[#allocation3 + $0x60] sm:$0xff]
      %v2655 = vld [vmem:[#allocation3 + $0x68] sm:$0xff]
      %v2656 = vld [vmem:[#allocation3 + $0x70] sm:$0xff]
      %v2657 = vld [vmem:[#allocation3 + $0x78] sm:$0xff]
      %v2658 = vld [vmem:[#allocation3 + $0x80] sm:$0xff]
      %v2659 = vld [vmem:[#allocation3 + $0x88] sm:$0xff]
      %v2660 = vld [vmem:[#allocation3 + $0x90] sm:$0xff]
      %v2661 = vld [vmem:[#allocation3 + $0x98] sm:$0xff]
      %v2662 = vld [vmem:[#allocation3 + $0xa0] sm:$0xff]
      %v2663 = vld [vmem:[#allocation3 + $0xa8] sm:$0xff]
      %v2664 = vld [vmem:[#allocation3 + $0xb0] sm:$0xff]
      %v2665 = vld [vmem:[#allocation3 + $0xb8] sm:$0xff]
      %v2666 = vld [vmem:[#allocation3 + $0xc0] sm:$0xff]
      %v2667 = vld [vmem:[#allocation3 + $0xc8] sm:$0xff]
      %v2668 = vld [vmem:[#allocation3 + $0xd0] sm:$0xff]
      %v2669 = vld [vmem:[#allocation3 + $0xd8] sm:$0xff]
      %v2670 = vld [vmem:[#allocation3 + $0xe0] sm:$0xff]
      %v2671 = vld [vmem:[#allocation3 + $0xe8] sm:$0xff]
      %v2672 = vld [vmem:[#allocation3 + $0xf0] sm:$0xff]
      %v2673 = vld [vmem:[#allocation3 + $0xf8] sm:$0xff]
      %v2674 = vadd.f32 %v2610, %v2642
      %v2675 = vadd.f32 %v2611, %v2643
      %v2676 = vadd.f32 %v2612, %v2644
      %v2677 = vadd.f32 %v2613, %v2645
      %v2678 = vadd.f32 %v2614, %v2646
      %v2679 = vadd.f32 %v2615, %v2647
      %v2680 = vadd.f32 %v2616, %v2648
      %v2681 = vadd.f32 %v2617, %v2649
      %v2682 = vadd.f32 %v2618, %v2650
      %v2683 = vadd.f32 %v2619, %v2651
      %v2684 = vadd.f32 %v2620, %v2652
      %v2685 = vadd.f32 %v2621, %v2653
      %v2686 = vadd.f32 %v2622, %v2654
      %v2687 = vadd.f32 %v2623, %v2655
      %v2688 = vadd.f32 %v2624, %v2656
      %v2689 = vadd.f32 %v2625, %v2657
      %v2690 = vadd.f32 %v2626, %v2658
      %v2691 = vadd.f32 %v2627, %v2659
      %v2692 = vadd.f32 %v2628, %v2660
      %v2693 = vadd.f32 %v2629, %v2661
      %v2694 = vadd.f32 %v2630, %v2662
      %v2695 = vadd.f32 %v2631, %v2663
      %v2696 = vadd.f32 %v2632, %v2664
      %v2697 = vadd.f32 %v2633, %v2665
      %v2698 = vadd.f32 %v2634, %v2666
      %v2699 = vadd.f32 %v2635, %v2667
      %v2700 = vadd.f32 %v2636, %v2668
      %v2701 = vadd.f32 %v2637, %v2669
      %v2702 = vadd.f32 %v2638, %v2670
      %v2703 = vadd.f32 %v2639, %v2671
      %v2704 = vadd.f32 %v2640, %v2672
      %v2705 = vadd.f32 %v2641, %v2673
      %2706 = vst.msk [vmem:[#allocation3] sm:$0xff] %vm1027, %v2674
      %2707 = vst.msk [vmem:[#allocation3 + $0x8] sm:$0xff] %vm1027, %v2675
      %2708 = vst.msk [vmem:[#allocation3 + $0x10] sm:$0xff] %vm1027, %v2676
      %2709 = vst.msk [vmem:[#allocation3 + $0x18] sm:$0xff] %vm1027, %v2677
      %2710 = vst.msk [vmem:[#allocation3 + $0x20] sm:$0xff] %vm1027, %v2678
      %2711 = vst.msk [vmem:[#allocation3 + $0x28] sm:$0xff] %vm1027, %v2679
      %2712 = vst.msk [vmem:[#allocation3 + $0x30] sm:$0xff] %vm1027, %v2680
      %2713 = vst.msk [vmem:[#allocation3 + $0x38] sm:$0xff] %vm1027, %v2681
      %2714 = vst.msk [vmem:[#allocation3 + $0x40] sm:$0xff] %vm1027, %v2682
      %2715 = vst.msk [vmem:[#allocation3 + $0x48] sm:$0xff] %vm1027, %v2683
      %2716 = vst.msk [vmem:[#allocation3 + $0x50] sm:$0xff] %vm1027, %v2684
      %2717 = vst.msk [vmem:[#allocation3 + $0x58] sm:$0xff] %vm1027, %v2685
      %2718 = vst.msk [vmem:[#allocation3 + $0x60] sm:$0xff] %vm1027, %v2686
      %2719 = vst.msk [vmem:[#allocation3 + $0x68] sm:$0xff] %vm1027, %v2687
      %2720 = vst.msk [vmem:[#allocation3 + $0x70] sm:$0xff] %vm1027, %v2688
      %2721 = vst.msk [vmem:[#allocation3 + $0x78] sm:$0xff] %vm1027, %v2689
      %2722 = vst.msk [vmem:[#allocation3 + $0x80] sm:$0xff] %vm1027, %v2690
      %2723 = vst.msk [vmem:[#allocation3 + $0x88] sm:$0xff] %vm1027, %v2691
      %2724 = vst.msk [vmem:[#allocation3 + $0x90] sm:$0xff] %vm1027, %v2692
      %2725 = vst.msk [vmem:[#allocation3 + $0x98] sm:$0xff] %vm1027, %v2693
      %2726 = vst.msk [vmem:[#allocation3 + $0xa0] sm:$0xff] %vm1027, %v2694
      %2727 = vst.msk [vmem:[#allocation3 + $0xa8] sm:$0xff] %vm1027, %v2695
      %2728 = vst.msk [vmem:[#allocation3 + $0xb0] sm:$0xff] %vm1027, %v2696
      %2729 = vst.msk [vmem:[#allocation3 + $0xb8] sm:$0xff] %vm1027, %v2697
      %2730 = vst.msk [vmem:[#allocation3 + $0xc0] sm:$0xff] %vm1027, %v2698
      %2731 = vst.msk [vmem:[#allocation3 + $0xc8] sm:$0xff] %vm1027, %v2699
      %2732 = vst.msk [vmem:[#allocation3 + $0xd0] sm:$0xff] %vm1027, %v2700
      %2733 = vst.msk [vmem:[#allocation3 + $0xd8] sm:$0xff] %vm1027, %v2701
      %2734 = vst.msk [vmem:[#allocation3 + $0xe0] sm:$0xff] %vm1027, %v2702
      %2735 = vst.msk [vmem:[#allocation3 + $0xe8] sm:$0xff] %vm1027, %v2703
      %2736 = vst.msk [vmem:[#allocation3 + $0xf0] sm:$0xff] %vm1027, %v2704
      %2737 = vst.msk [vmem:[#allocation3 + $0xf8] sm:$0xff] %vm1027, %v2705
      %v2738 = vsel %vm1027, %v2674, -inf
      %2739 = vmax.xlane.f32.xlu0 %v2738
      %v2740 = vpop.xlane.xlu0 %2739
      %v2741 = vsel %vm1027, %v2675, -inf
      %2742 = vmax.xlane.f32.xlu0 %v2741
      %v2743 = vpop.xlane.xlu0 %2742
      %v2744 = vsel %vm1027, %v2676, -inf
      %2745 = vmax.xlane.f32.xlu0 %v2744
      %v2746 = vpop.xlane.xlu0 %2745
      %v2747 = vsel %vm1027, %v2677, -inf
      %2748 = vmax.xlane.f32.xlu0 %v2747
      %v2749 = vpop.xlane.xlu0 %2748
      %v2750 = vsel %vm1027, %v2678, -inf
      %2751 = vmax.xlane.f32.xlu0 %v2750
      %v2752 = vpop.xlane.xlu0 %2751
      %v2753 = vsel %vm1027, %v2679, -inf
      %2754 = vmax.xlane.f32.xlu0 %v2753
      %v2755 = vpop.xlane.xlu0 %2754
      %v2756 = vsel %vm1027, %v2680, -inf
      %2757 = vmax.xlane.f32.xlu0 %v2756
      %v2758 = vpop.xlane.xlu0 %2757
      %v2759 = vsel %vm1027, %v2681, -inf
      %2760 = vmax.xlane.f32.xlu0 %v2759
      %v2761 = vpop.xlane.xlu0 %2760
      %v2762 = vsel %vm1027, %v2682, -inf
      %2763 = vmax.xlane.f32.xlu0 %v2762
      %v2764 = vpop.xlane.xlu0 %2763
      %v2765 = vsel %vm1027, %v2683, -inf
      %2766 = vmax.xlane.f32.xlu0 %v2765
      %v2767 = vpop.xlane.xlu0 %2766
      %v2768 = vsel %vm1027, %v2684, -inf
      %2769 = vmax.xlane.f32.xlu0 %v2768
      %v2770 = vpop.xlane.xlu0 %2769
      %v2771 = vsel %vm1027, %v2685, -inf
      %2772 = vmax.xlane.f32.xlu0 %v2771
      %v2773 = vpop.xlane.xlu0 %2772
      %v2774 = vsel %vm1027, %v2686, -inf
      %2775 = vmax.xlane.f32.xlu0 %v2774
      %v2776 = vpop.xlane.xlu0 %2775
      %v2777 = vsel %vm1027, %v2687, -inf
      %2778 = vmax.xlane.f32.xlu0 %v2777
      %v2779 = vpop.xlane.xlu0 %2778
      %v2780 = vsel %vm1027, %v2688, -inf
      %2781 = vmax.xlane.f32.xlu0 %v2780
      %v2782 = vpop.xlane.xlu0 %2781
      %v2783 = vsel %vm1027, %v2689, -inf
      %2784 = vmax.xlane.f32.xlu0 %v2783
      %v2785 = vpop.xlane.xlu0 %2784
      %v2786 = vsel %vm1027, %v2690, -inf
      %2787 = vmax.xlane.f32.xlu0 %v2786
      %v2788 = vpop.xlane.xlu0 %2787
      %v2789 = vsel %vm1027, %v2691, -inf
      %2790 = vmax.xlane.f32.xlu0 %v2789
      %v2791 = vpop.xlane.xlu0 %2790
      %v2792 = vsel %vm1027, %v2692, -inf
      %2793 = vmax.xlane.f32.xlu0 %v2792
      %v2794 = vpop.xlane.xlu0 %2793
      %v2795 = vsel %vm1027, %v2693, -inf
      %2796 = vmax.xlane.f32.xlu0 %v2795
      %v2797 = vpop.xlane.xlu0 %2796
      %v2798 = vsel %vm1027, %v2694, -inf
      %2799 = vmax.xlane.f32.xlu0 %v2798
      %v2800 = vpop.xlane.xlu0 %2799
      %v2801 = vsel %vm1027, %v2695, -inf
      %2802 = vmax.xlane.f32.xlu0 %v2801
      %v2803 = vpop.xlane.xlu0 %2802
      %v2804 = vsel %vm1027, %v2696, -inf
      %2805 = vmax.xlane.f32.xlu0 %v2804
      %v2806 = vpop.xlane.xlu0 %2805
      %v2807 = vsel %vm1027, %v2697, -inf
      %2808 = vmax.xlane.f32.xlu0 %v2807
      %v2809 = vpop.xlane.xlu0 %2808
      %v2810 = vsel %vm1027, %v2698, -inf
      %2811 = vmax.xlane.f32.xlu0 %v2810
      %v2812 = vpop.xlane.xlu0 %2811
      %v2813 = vsel %vm1027, %v2699, -inf
      %2814 = vmax.xlane.f32.xlu0 %v2813
      %v2815 = vpop.xlane.xlu0 %2814
      %v2816 = vsel %vm1027, %v2700, -inf
      %2817 = vmax.xlane.f32.xlu0 %v2816
      %v2818 = vpop.xlane.xlu0 %2817
      %v2819 = vsel %vm1027, %v2701, -inf
      %2820 = vmax.xlane.f32.xlu0 %v2819
      %v2821 = vpop.xlane.xlu0 %2820
      %v2822 = vsel %vm1027, %v2702, -inf
      %2823 = vmax.xlane.f32.xlu0 %v2822
      %v2824 = vpop.xlane.xlu0 %2823
      %v2825 = vsel %vm1027, %v2703, -inf
      %2826 = vmax.xlane.f32.xlu0 %v2825
      %v2827 = vpop.xlane.xlu0 %2826
      %v2828 = vsel %vm1027, %v2704, -inf
      %2829 = vmax.xlane.f32.xlu0 %v2828
      %v2830 = vpop.xlane.xlu0 %2829
      %v2831 = vsel %vm1027, %v2705, -inf
      %2832 = vmax.xlane.f32.xlu0 %v2831
      %v2833 = vpop.xlane.xlu0 %2832
      %v2834 = vsub.f32 %v2674, %v2740
      %v2835 = vsub.f32 %v2675, %v2743
      %v2836 = vsub.f32 %v2676, %v2746
      %v2837 = vsub.f32 %v2677, %v2749
      %v2838 = vsub.f32 %v2678, %v2752
      %v2839 = vsub.f32 %v2679, %v2755
      %v2840 = vsub.f32 %v2680, %v2758
      %v2841 = vsub.f32 %v2681, %v2761
      %v2842 = vsub.f32 %v2682, %v2764
      %v2843 = vsub.f32 %v2683, %v2767
      %v2844 = vsub.f32 %v2684, %v2770
      %v2845 = vsub.f32 %v2685, %v2773
      %v2846 = vsub.f32 %v2686, %v2776
      %v2847 = vsub.f32 %v2687, %v2779
      %v2848 = vsub.f32 %v2688, %v2782
      %v2849 = vsub.f32 %v2689, %v2785
      %v2850 = vsub.f32 %v2690, %v2788
      %v2851 = vsub.f32 %v2691, %v2791
      %v2852 = vsub.f32 %v2692, %v2794
      %v2853 = vsub.f32 %v2693, %v2797
      %v2854 = vsub.f32 %v2694, %v2800
      %v2855 = vsub.f32 %v2695, %v2803
      %v2856 = vsub.f32 %v2696, %v2806
      %v2857 = vsub.f32 %v2697, %v2809
      %v2858 = vsub.f32 %v2698, %v2812
      %v2859 = vsub.f32 %v2699, %v2815
      %v2860 = vsub.f32 %v2700, %v2818
      %v2861 = vsub.f32 %v2701, %v2821
      %v2862 = vsub.f32 %v2702, %v2824
      %v2863 = vsub.f32 %v2703, %v2827
      %v2864 = vsub.f32 %v2704, %v2830
      %v2865 = vsub.f32 %v2705, %v2833
      %v2866 = vmul.f32 %v2834, 1.442695
      %v2867 = vpow.pop %v2866
      %v2868 = vmul.f32 %v2835, 1.442695
      %v2869 = vpow.pop %v2868
      %v2870 = vmul.f32 %v2836, 1.442695
      %v2871 = vpow.pop %v2870
      %v2872 = vmul.f32 %v2837, 1.442695
      %v2873 = vpow.pop %v2872
      %v2874 = vmul.f32 %v2838, 1.442695
      %v2875 = vpow.pop %v2874
      %v2876 = vmul.f32 %v2839, 1.442695
      %v2877 = vpow.pop %v2876
      %v2878 = vmul.f32 %v2840, 1.442695
      %v2879 = vpow.pop %v2878
      %v2880 = vmul.f32 %v2841, 1.442695
      %v2881 = vpow.pop %v2880
      %v2882 = vmul.f32 %v2842, 1.442695
      %v2883 = vpow.pop %v2882
      %v2884 = vmul.f32 %v2843, 1.442695
      %v2885 = vpow.pop %v2884
      %v2886 = vmul.f32 %v2844, 1.442695
      %v2887 = vpow.pop %v2886
      %v2888 = vmul.f32 %v2845, 1.442695
      %v2889 = vpow.pop %v2888
      %v2890 = vmul.f32 %v2846, 1.442695
      %v2891 = vpow.pop %v2890
      %v2892 = vmul.f32 %v2847, 1.442695
      %v2893 = vpow.pop %v2892
      %v2894 = vmul.f32 %v2848, 1.442695
      %v2895 = vpow.pop %v2894
      %v2896 = vmul.f32 %v2849, 1.442695
      %v2897 = vpow.pop %v2896
      %v2898 = vmul.f32 %v2850, 1.442695
      %v2899 = vpow.pop %v2898
      %v2900 = vmul.f32 %v2851, 1.442695
      %v2901 = vpow.pop %v2900
      %v2902 = vmul.f32 %v2852, 1.442695
      %v2903 = vpow.pop %v2902
      %v2904 = vmul.f32 %v2853, 1.442695
      %v2905 = vpow.pop %v2904
      %v2906 = vmul.f32 %v2854, 1.442695
      %v2907 = vpow.pop %v2906
      %v2908 = vmul.f32 %v2855, 1.442695
      %v2909 = vpow.pop %v2908
      %v2910 = vmul.f32 %v2856, 1.442695
      %v2911 = vpow.pop %v2910
      %v2912 = vmul.f32 %v2857, 1.442695
      %v2913 = vpow.pop %v2912
      %v2914 = vmul.f32 %v2858, 1.442695
      %v2915 = vpow.pop %v2914
      %v2916 = vmul.f32 %v2859, 1.442695
      %v2917 = vpow.pop %v2916
      %v2918 = vmul.f32 %v2860, 1.442695
      %v2919 = vpow.pop %v2918
      %v2920 = vmul.f32 %v2861, 1.442695
      %v2921 = vpow.pop %v2920
      %v2922 = vmul.f32 %v2862, 1.442695
      %v2923 = vpow.pop %v2922
      %v2924 = vmul.f32 %v2863, 1.442695
      %v2925 = vpow.pop %v2924
      %v2926 = vmul.f32 %v2864, 1.442695
      %v2927 = vpow.pop %v2926
      %v2928 = vmul.f32 %v2865, 1.442695
      %v2929 = vpow.pop %v2928
      %v2930 = vsel %vm1027, %v2867, 0.0
      %2931 = vadd.xlane.f32.xlu0 %v2930
      %v2932 = vpop.xlane.xlu0 %2931
      %v2933 = vsel %vm1027, %v2869, 0.0
      %2934 = vadd.xlane.f32.xlu0 %v2933
      %v2935 = vpop.xlane.xlu0 %2934
      %v2936 = vsel %vm1027, %v2871, 0.0
      %2937 = vadd.xlane.f32.xlu0 %v2936
      %v2938 = vpop.xlane.xlu0 %2937
      %v2939 = vsel %vm1027, %v2873, 0.0
      %2940 = vadd.xlane.f32.xlu0 %v2939
      %v2941 = vpop.xlane.xlu0 %2940
      %v2942 = vsel %vm1027, %v2875, 0.0
      %2943 = vadd.xlane.f32.xlu0 %v2942
      %v2944 = vpop.xlane.xlu0 %2943
      %v2945 = vsel %vm1027, %v2877, 0.0
      %2946 = vadd.xlane.f32.xlu0 %v2945
      %v2947 = vpop.xlane.xlu0 %2946
      %v2948 = vsel %vm1027, %v2879, 0.0
      %2949 = vadd.xlane.f32.xlu0 %v2948
      %v2950 = vpop.xlane.xlu0 %2949
      %v2951 = vsel %vm1027, %v2881, 0.0
      %2952 = vadd.xlane.f32.xlu0 %v2951
      %v2953 = vpop.xlane.xlu0 %2952
      %v2954 = vsel %vm1027, %v2883, 0.0
      %2955 = vadd.xlane.f32.xlu0 %v2954
      %v2956 = vpop.xlane.xlu0 %2955
      %v2957 = vsel %vm1027, %v2885, 0.0
      %2958 = vadd.xlane.f32.xlu0 %v2957
      %v2959 = vpop.xlane.xlu0 %2958
      %v2960 = vsel %vm1027, %v2887, 0.0
      %2961 = vadd.xlane.f32.xlu0 %v2960
      %v2962 = vpop.xlane.xlu0 %2961
      %v2963 = vsel %vm1027, %v2889, 0.0
      %2964 = vadd.xlane.f32.xlu0 %v2963
      %v2965 = vpop.xlane.xlu0 %2964
      %v2966 = vsel %vm1027, %v2891, 0.0
      %2967 = vadd.xlane.f32.xlu0 %v2966
      %v2968 = vpop.xlane.xlu0 %2967
      %v2969 = vsel %vm1027, %v2893, 0.0
      %2970 = vadd.xlane.f32.xlu0 %v2969
      %v2971 = vpop.xlane.xlu0 %2970
      %v2972 = vsel %vm1027, %v2895, 0.0
      %2973 = vadd.xlane.f32.xlu0 %v2972
      %v2974 = vpop.xlane.xlu0 %2973
      %v2975 = vsel %vm1027, %v2897, 0.0
      %2976 = vadd.xlane.f32.xlu0 %v2975
      %v2977 = vpop.xlane.xlu0 %2976
      %v2978 = vsel %vm1027, %v2899, 0.0
      %2979 = vadd.xlane.f32.xlu0 %v2978
      %v2980 = vpop.xlane.xlu0 %2979
      %v2981 = vsel %vm1027, %v2901, 0.0
      %2982 = vadd.xlane.f32.xlu0 %v2981
      %v2983 = vpop.xlane.xlu0 %2982
      %v2984 = vsel %vm1027, %v2903, 0.0
      %2985 = vadd.xlane.f32.xlu0 %v2984
      %v2986 = vpop.xlane.xlu0 %2985
      %v2987 = vsel %vm1027, %v2905, 0.0
      %2988 = vadd.xlane.f32.xlu0 %v2987
      %v2989 = vpop.xlane.xlu0 %2988
      %v2990 = vsel %vm1027, %v2907, 0.0
      %2991 = vadd.xlane.f32.xlu0 %v2990
      %v2992 = vpop.xlane.xlu0 %2991
      %v2993 = vsel %vm1027, %v2909, 0.0
      %2994 = vadd.xlane.f32.xlu0 %v2993
      %v2995 = vpop.xlane.xlu0 %2994
      %v2996 = vsel %vm1027, %v2911, 0.0
      %2997 = vadd.xlane.f32.xlu0 %v2996
      %v2998 = vpop.xlane.xlu0 %2997
      %v2999 = vsel %vm1027, %v2913, 0.0
      %3000 = vadd.xlane.f32.xlu0 %v2999
      %v3001 = vpop.xlane.xlu0 %3000
      %v3002 = vsel %vm1027, %v2915, 0.0
      %3003 = vadd.xlane.f32.xlu0 %v3002
      %v3004 = vpop.xlane.xlu0 %3003
      %v3005 = vsel %vm1027, %v2917, 0.0
      %3006 = vadd.xlane.f32.xlu0 %v3005
      %v3007 = vpop.xlane.xlu0 %3006
      %v3008 = vsel %vm1027, %v2919, 0.0
      %3009 = vadd.xlane.f32.xlu0 %v3008
      %v3010 = vpop.xlane.xlu0 %3009
      %v3011 = vsel %vm1027, %v2921, 0.0
      %3012 = vadd.xlane.f32.xlu0 %v3011
      %v3013 = vpop.xlane.xlu0 %3012
      %v3014 = vsel %vm1027, %v2923, 0.0
      %3015 = vadd.xlane.f32.xlu0 %v3014
      %v3016 = vpop.xlane.xlu0 %3015
      %v3017 = vsel %vm1027, %v2925, 0.0
      %3018 = vadd.xlane.f32.xlu0 %v3017
      %v3019 = vpop.xlane.xlu0 %3018
      %v3020 = vsel %vm1027, %v2927, 0.0
      %3021 = vadd.xlane.f32.xlu0 %v3020
      %v3022 = vpop.xlane.xlu0 %3021
      %v3023 = vsel %vm1027, %v2929, 0.0
      %3024 = vadd.xlane.f32.xlu0 %v3023
      %v3025 = vpop.xlane.xlu0 %3024
      %v3026 = vrcp.pop %v2932
      %v3027 = vrcp.pop %v2935
      %v3028 = vrcp.pop %v2938
      %v3029 = vrcp.pop %v2941
      %v3030 = vrcp.pop %v2944
      %v3031 = vrcp.pop %v2947
      %v3032 = vrcp.pop %v2950
      %v3033 = vrcp.pop %v2953
      %v3034 = vrcp.pop %v2956
      %v3035 = vrcp.pop %v2959
      %v3036 = vrcp.pop %v2962
      %v3037 = vrcp.pop %v2965
      %v3038 = vrcp.pop %v2968
      %v3039 = vrcp.pop %v2971
      %v3040 = vrcp.pop %v2974
      %v3041 = vrcp.pop %v2977
      %v3042 = vrcp.pop %v2980
      %v3043 = vrcp.pop %v2983
      %v3044 = vrcp.pop %v2986
      %v3045 = vrcp.pop %v2989
      %v3046 = vrcp.pop %v2992
      %v3047 = vrcp.pop %v2995
      %v3048 = vrcp.pop %v2998
      %v3049 = vrcp.pop %v3001
      %v3050 = vrcp.pop %v3004
      %v3051 = vrcp.pop %v3007
      %v3052 = vrcp.pop %v3010
      %v3053 = vrcp.pop %v3013
      %v3054 = vrcp.pop %v3016
      %v3055 = vrcp.pop %v3019
      %v3056 = vrcp.pop %v3022
      %v3057 = vrcp.pop %v3025
      %v3058 = vmul.f32 %v2867, %v3026
      %v3059 = vmul.f32 %v2869, %v3027
      %v3060 = vmul.f32 %v2871, %v3028
      %v3061 = vmul.f32 %v2873, %v3029
      %v3062 = vmul.f32 %v2875, %v3030
      %v3063 = vmul.f32 %v2877, %v3031
      %v3064 = vmul.f32 %v2879, %v3032
      %v3065 = vmul.f32 %v2881, %v3033
      %v3066 = vmul.f32 %v2883, %v3034
      %v3067 = vmul.f32 %v2885, %v3035
      %v3068 = vmul.f32 %v2887, %v3036
      %v3069 = vmul.f32 %v2889, %v3037
      %v3070 = vmul.f32 %v2891, %v3038
      %v3071 = vmul.f32 %v2893, %v3039
      %v3072 = vmul.f32 %v2895, %v3040
      %v3073 = vmul.f32 %v2897, %v3041
      %v3074 = vmul.f32 %v2899, %v3042
      %v3075 = vmul.f32 %v2901, %v3043
      %v3076 = vmul.f32 %v2903, %v3044
      %v3077 = vmul.f32 %v2905, %v3045
      %v3078 = vmul.f32 %v2907, %v3046
      %v3079 = vmul.f32 %v2909, %v3047
      %v3080 = vmul.f32 %v2911, %v3048
      %v3081 = vmul.f32 %v2913, %v3049
      %v3082 = vmul.f32 %v2915, %v3050
      %v3083 = vmul.f32 %v2917, %v3051
      %v3084 = vmul.f32 %v2919, %v3052
      %v3085 = vmul.f32 %v2921, %v3053
      %v3086 = vmul.f32 %v2923, %v3054
      %v3087 = vmul.f32 %v2925, %v3055
      %v3088 = vmul.f32 %v2927, %v3056
      %v3089 = vmul.f32 %v2929, %v3057
      %v3090 = vpack.c.bf16 %v3058, %v3058
      %v3091 = vpack.c.bf16 %v3059, %v3059
      %v3092 = vpack.c.bf16 %v3060, %v3060
      %v3093 = vpack.c.bf16 %v3061, %v3061
      %v3094 = vpack.c.bf16 %v3062, %v3062
      %v3095 = vpack.c.bf16 %v3063, %v3063
      %v3096 = vpack.c.bf16 %v3064, %v3064
      %v3097 = vpack.c.bf16 %v3065, %v3065
      %v3098 = vpack.c.bf16 %v3066, %v3066
      %v3099 = vpack.c.bf16 %v3067, %v3067
      %v3100 = vpack.c.bf16 %v3068, %v3068
      %v3101 = vpack.c.bf16 %v3069, %v3069
      %v3102 = vpack.c.bf16 %v3070, %v3070
      %v3103 = vpack.c.bf16 %v3071, %v3071
      %v3104 = vpack.c.bf16 %v3072, %v3072
      %v3105 = vpack.c.bf16 %v3073, %v3073
      %v3106 = vpack.c.bf16 %v3074, %v3074
      %v3107 = vpack.c.bf16 %v3075, %v3075
      %v3108 = vpack.c.bf16 %v3076, %v3076
      %v3109 = vpack.c.bf16 %v3077, %v3077
      %v3110 = vpack.c.bf16 %v3078, %v3078
      %v3111 = vpack.c.bf16 %v3079, %v3079
      %v3112 = vpack.c.bf16 %v3080, %v3080
      %v3113 = vpack.c.bf16 %v3081, %v3081
      %v3114 = vpack.c.bf16 %v3082, %v3082
      %v3115 = vpack.c.bf16 %v3083, %v3083
      %v3116 = vpack.c.bf16 %v3084, %v3084
      %v3117 = vpack.c.bf16 %v3085, %v3085
      %v3118 = vpack.c.bf16 %v3086, %v3086
      %v3119 = vpack.c.bf16 %v3087, %v3087
      %v3120 = vpack.c.bf16 %v3088, %v3088
      %v3121 = vpack.c.bf16 %v3089, %v3089
      %3122 = vrot.lane.b32.xlu0 %v969, 64
      %v3123 = vpop.permute.xlu0 %3122
      %v3125 = vsel %vm1027, %v3090, 0
      %vm3127 = vcmask 1043456
      %v3129 = vsel %vm3127, %v3123, 0
      %3131 = vmatprep.subr.bf16.mxu0 0
      %3132 = vmatpush1.bf16.msra.mxu0 %v3129
      %3133 = vmatprep.subr.bf16.mxu0 0
      %3134 = vmatpush1.bf16.msra.mxu0 0
      %3135 = vmatprep.subr.bf16.mxu0 0
      %3136 = vmatpush1.bf16.msra.mxu0 0
      %3137 = vmatprep.subr.bf16.mxu0 0
      %3138 = vmatpush1.bf16.msra.mxu0 0
      %3139 = vmatprep.subr.bf16.mxu0 0
      %3140 = vmatpush1.bf16.msra.mxu0 0
      %3141 = vmatprep.subr.bf16.mxu0 0
      %3142 = vmatpush1.bf16.msra.mxu0 0
      %3143 = vmatprep.subr.bf16.mxu0 0
      %3144 = vmatpush1.bf16.msra.mxu0 0
      %3145 = vmatprep.subr.bf16.mxu0 0
      %3146 = vmatpush1.bf16.msra.mxu0 0
      %3147 = vmatprep.subr.bf16.mxu0 0
      %3148 = vmatpush1.bf16.msra.mxu0 0
      %3149 = vmatprep.subr.bf16.mxu0 0
      %3150 = vmatpush1.bf16.msra.mxu0 0
      %3151 = vmatprep.subr.bf16.mxu0 0
      %3152 = vmatpush1.bf16.msra.mxu0 0
      %3153 = vmatprep.subr.bf16.mxu0 0
      %3154 = vmatpush1.bf16.msra.mxu0 0
      %3155 = vmatprep.subr.bf16.mxu0 0
      %3156 = vmatpush1.bf16.msra.mxu0 0
      %3157 = vmatprep.subr.bf16.mxu0 0
      %3158 = vmatpush1.bf16.msra.mxu0 0
      %3159 = vmatprep.subr.bf16.mxu0 0
      %3160 = vmatpush1.bf16.msra.mxu0 0
      %3161 = vmatprep.subr.bf16.mxu0 0
      %3162 = vmatpush1.bf16.msra.mxu0 0
      %3163 = vmatprep.mubr.bf16.mxu0 0
      %3164 = vmatmul.mubr.bf16.gmra.mrb[0].mxu0 %v3125
      %v3165 = vpop.f32.mrb[0].mxu0
      %v3166 = vadd.f32 0.0, %v3165
      %v3167 = vpop.f32.mrb[0].mxu0
      %v3168 = vpop.f32.mrb[0].mxu0
      %v3169 = vpop.f32.mrb[0].mxu0
      %3170 = vdwg.mxu0
      %3171 = vrot.lane.b32.xlu0 %v970, 64
      %v3172 = vpop.permute.xlu0 %3171
      %v3174 = vsel %vm1027, %v3091, 0
      %v3177 = vsel %vm3127, %v3172, 0
      %3179 = vmatprep.subr.bf16.mxu0 0
      %3180 = vmatpush1.bf16.msra.mxu0 %v3177
      %3181 = vmatprep.subr.bf16.mxu0 0
      %3182 = vmatpush1.bf16.msra.mxu0 0
      %3183 = vmatprep.subr.bf16.mxu0 0
      %3184 = vmatpush1.bf16.msra.mxu0 0
      %3185 = vmatprep.subr.bf16.mxu0 0
      %3186 = vmatpush1.bf16.msra.mxu0 0
      %3187 = vmatprep.subr.bf16.mxu0 0
      %3188 = vmatpush1.bf16.msra.mxu0 0
      %3189 = vmatprep.subr.bf16.mxu0 0
      %3190 = vmatpush1.bf16.msra.mxu0 0
      %3191 = vmatprep.subr.bf16.mxu0 0
      %3192 = vmatpush1.bf16.msra.mxu0 0
      %3193 = vmatprep.subr.bf16.mxu0 0
      %3194 = vmatpush1.bf16.msra.mxu0 0
      %3195 = vmatprep.subr.bf16.mxu0 0
      %3196 = vmatpush1.bf16.msra.mxu0 0
      %3197 = vmatprep.subr.bf16.mxu0 0
      %3198 = vmatpush1.bf16.msra.mxu0 0
      %3199 = vmatprep.subr.bf16.mxu0 0
      %3200 = vmatpush1.bf16.msra.mxu0 0
      %3201 = vmatprep.subr.bf16.mxu0 0
      %3202 = vmatpush1.bf16.msra.mxu0 0
      %3203 = vmatprep.subr.bf16.mxu0 0
      %3204 = vmatpush1.bf16.msra.mxu0 0
      %3205 = vmatprep.subr.bf16.mxu0 0
      %3206 = vmatpush1.bf16.msra.mxu0 0
      %3207 = vmatprep.subr.bf16.mxu0 0
      %3208 = vmatpush1.bf16.msra.mxu0 0
      %3209 = vmatprep.subr.bf16.mxu0 0
      %3210 = vmatpush1.bf16.msra.mxu0 0
      %3211 = vmatprep.mubr.bf16.mxu0 0
      %3212 = vmatmul.mubr.bf16.gmra.mrb[0].mxu0 %v3174
      %v3213 = vpop.f32.mrb[0].mxu0
      %v3214 = vadd.f32 0.0, %v3213
      %v3215 = vpop.f32.mrb[0].mxu0
      %v3216 = vpop.f32.mrb[0].mxu0
      %v3217 = vpop.f32.mrb[0].mxu0
      %3218 = vdwg.mxu0
      %3219 = vrot.lane.b32.xlu0 %v971, 64
      %v3220 = vpop.permute.xlu0 %3219
      %v3222 = vsel %vm1027, %v3092, 0
      %v3225 = vsel %vm3127, %v3220, 0
      %3227 = vmatprep.subr.bf16.mxu0 0
      %3228 = vmatpush1.bf16.msra.mxu0 %v3225
      %3229 = vmatprep.subr.bf16.mxu0 0
      %3230 = vmatpush1.bf16.msra.mxu0 0
      %3231 = vmatprep.subr.bf16.mxu0 0
      %3232 = vmatpush1.bf16.msra.mxu0 0
      %3233 = vmatprep.subr.bf16.mxu0 0
      %3234 = vmatpush1.bf16.msra.mxu0 0
      %3235 = vmatprep.subr.bf16.mxu0 0
      %3236 = vmatpush1.bf16.msra.mxu0 0
      %3237 = vmatprep.subr.bf16.mxu0 0
      %3238 = vmatpush1.bf16.msra.mxu0 0
      %3239 = vmatprep.subr.bf16.mxu0 0
      %3240 = vmatpush1.bf16.msra.mxu0 0
      %3241 = vmatprep.subr.bf16.mxu0 0
      %3242 = vmatpush1.bf16.msra.mxu0 0
      %3243 = vmatprep.subr.bf16.mxu0 0
      %3244 = vmatpush1.bf16.msra.mxu0 0
      %3245 = vmatprep.subr.bf16.mxu0 0
      %3246 = vmatpush1.bf16.msra.mxu0 0
      %3247 = vmatprep.subr.bf16.mxu0 0
      %3248 = vmatpush1.bf16.msra.mxu0 0
      %3249 = vmatprep.subr.bf16.mxu0 0
      %3250 = vmatpush1.bf16.msra.mxu0 0
      %3251 = vmatprep.subr.bf16.mxu0 0
      %3252 = vmatpush1.bf16.msra.mxu0 0
      %3253 = vmatprep.subr.bf16.mxu0 0
      %3254 = vmatpush1.bf16.msra.mxu0 0
      %3255 = vmatprep.subr.bf16.mxu0 0
      %3256 = vmatpush1.bf16.msra.mxu0 0
      %3257 = vmatprep.subr.bf16.mxu0 0
      %3258 = vmatpush1.bf16.msra.mxu0 0
      %3259 = vmatprep.mubr.bf16.mxu0 0
      %3260 = vmatmul.mubr.bf16.gmra.mrb[0].mxu0 %v3222
      %v3261 = vpop.f32.mrb[0].mxu0
      %v3262 = vadd.f32 0.0, %v3261
      %v3263 = vpop.f32.mrb[0].mxu0
      %v3264 = vpop.f32.mrb[0].mxu0
      %v3265 = vpop.f32.mrb[0].mxu0
      %3266 = vdwg.mxu0
      %3267 = vrot.lane.b32.xlu0 %v972, 64
      %v3268 = vpop.permute.xlu0 %3267
      %v3270 = vsel %vm1027, %v3093, 0
      %v3273 = vsel %vm3127, %v3268, 0
      %3275 = vmatprep.subr.bf16.mxu0 0
      %3276 = vmatpush1.bf16.msra.mxu0 %v3273
      %3277 = vmatprep.subr.bf16.mxu0 0
      %3278 = vmatpush1.bf16.msra.mxu0 0
      %3279 = vmatprep.subr.bf16.mxu0 0
      %3280 = vmatpush1.bf16.msra.mxu0 0
      %3281 = vmatprep.subr.bf16.mxu0 0
      %3282 = vmatpush1.bf16.msra.mxu0 0
      %3283 = vmatprep.subr.bf16.mxu0 0
      %3284 = vmatpush1.bf16.msra.mxu0 0
      %3285 = vmatprep.subr.bf16.mxu0 0
      %3286 = vmatpush1.bf16.msra.mxu0 0
      %3287 = vmatprep.subr.bf16.mxu0 0
      %3288 = vmatpush1.bf16.msra.mxu0 0
      %3289 = vmatprep.subr.bf16.mxu0 0
      %3290 = vmatpush1.bf16.msra.mxu0 0
      %3291 = vmatprep.subr.bf16.mxu0 0
      %3292 = vmatpush1.bf16.msra.mxu0 0
      %3293 = vmatprep.subr.bf16.mxu0 0
      %3294 = vmatpush1.bf16.msra.mxu0 0
      %3295 = vmatprep.subr.bf16.mxu0 0
      %3296 = vmatpush1.bf16.msra.mxu0 0
      %3297 = vmatprep.subr.bf16.mxu0 0
      %3298 = vmatpush1.bf16.msra.mxu0 0
      %3299 = vmatprep.subr.bf16.mxu0 0
      %3300 = vmatpush1.bf16.msra.mxu0 0
      %3301 = vmatprep.subr.bf16.mxu0 0
      %3302 = vmatpush1.bf16.msra.mxu0 0
      %3303 = vmatprep.subr.bf16.mxu0 0
      %3304 = vmatpush1.bf16.msra.mxu0 0
      %3305 = vmatprep.subr.bf16.mxu0 0
      %3306 = vmatpush1.bf16.msra.mxu0 0
      %3307 = vmatprep.mubr.bf16.mxu0 0
      %3308 = vmatmul.mubr.bf16.gmra.mrb[0].mxu0 %v3270
      %v3309 = vpop.f32.mrb[0].mxu0
      %v3310 = vadd.f32 0.0, %v3309
      %v3311 = vpop.f32.mrb[0].mxu0
      %v3312 = vpop.f32.mrb[0].mxu0
      %v3313 = vpop.f32.mrb[0].mxu0
      %3314 = vdwg.mxu0
      %3315 = vrot.lane.b32.xlu0 %v973, 64
      %v3316 = vpop.permute.xlu0 %3315
      %v3318 = vsel %vm1027, %v3094, 0
      %v3321 = vsel %vm3127, %v3316, 0
      %3323 = vmatprep.subr.bf16.mxu0 0
      %3324 = vmatpush1.bf16.msra.mxu0 %v3321
      %3325 = vmatprep.subr.bf16.mxu0 0
      %3326 = vmatpush1.bf16.msra.mxu0 0
      %3327 = vmatprep.subr.bf16.mxu0 0
      %3328 = vmatpush1.bf16.msra.mxu0 0
      %3329 = vmatprep.subr.bf16.mxu0 0
      %3330 = vmatpush1.bf16.msra.mxu0 0
      %3331 = vmatprep.subr.bf16.mxu0 0
      %3332 = vmatpush1.bf16.msra.mxu0 0
      %3333 = vmatprep.subr.bf16.mxu0 0
      %3334 = vmatpush1.bf16.msra.mxu0 0
      %3335 = vmatprep.subr.bf16.mxu0 0
      %3336 = vmatpush1.bf16.msra.mxu0 0
      %3337 = vmatprep.subr.bf16.mxu0 0
      %3338 = vmatpush1.bf16.msra.mxu0 0
      %3339 = vmatprep.subr.bf16.mxu0 0
      %3340 = vmatpush1.bf16.msra.mxu0 0
      %3341 = vmatprep.subr.bf16.mxu0 0
      %3342 = vmatpush1.bf16.msra.mxu0 0
      %3343 = vmatprep.subr.bf16.mxu0 0
      %3344 = vmatpush1.bf16.msra.mxu0 0
      %3345 = vmatprep.subr.bf16.mxu0 0
      %3346 = vmatpush1.bf16.msra.mxu0 0
      %3347 = vmatprep.subr.bf16.mxu0 0
      %3348 = vmatpush1.bf16.msra.mxu0 0
      %3349 = vmatprep.subr.bf16.mxu0 0
      %3350 = vmatpush1.bf16.msra.mxu0 0
      %3351 = vmatprep.subr.bf16.mxu0 0
      %3352 = vmatpush1.bf16.msra.mxu0 0
      %3353 = vmatprep.subr.bf16.mxu0 0
      %3354 = vmatpush1.bf16.msra.mxu0 0
      %3355 = vmatprep.mubr.bf16.mxu0 0
      %3356 = vmatmul.mubr.bf16.gmra.mrb[0].mxu0 %v3318
      %v3357 = vpop.f32.mrb[0].mxu0
      %v3358 = vadd.f32 0.0, %v3357
      %v3359 = vpop.f32.mrb[0].mxu0
      %v3360 = vpop.f32.mrb[0].mxu0
      %v3361 = vpop.f32.mrb[0].mxu0
      %3362 = vdwg.mxu0
      %3363 = vrot.lane.b32.xlu0 %v974, 64
      %v3364 = vpop.permute.xlu0 %3363
      %v3366 = vsel %vm1027, %v3095, 0
      %v3369 = vsel %vm3127, %v3364, 0
      %3371 = vmatprep.subr.bf16.mxu0 0
      %3372 = vmatpush1.bf16.msra.mxu0 %v3369
      %3373 = vmatprep.subr.bf16.mxu0 0
      %3374 = vmatpush1.bf16.msra.mxu0 0
      %3375 = vmatprep.subr.bf16.mxu0 0
      %3376 = vmatpush1.bf16.msra.mxu0 0
      %3377 = vmatprep.subr.bf16.mxu0 0
      %3378 = vmatpush1.bf16.msra.mxu0 0
      %3379 = vmatprep.subr.bf16.mxu0 0
      %3380 = vmatpush1.bf16.msra.mxu0 0
      %3381 = vmatprep.subr.bf16.mxu0 0
      %3382 = vmatpush1.bf16.msra.mxu0 0
      %3383 = vmatprep.subr.bf16.mxu0 0
      %3384 = vmatpush1.bf16.msra.mxu0 0
      %3385 = vmatprep.subr.bf16.mxu0 0
      %3386 = vmatpush1.bf16.msra.mxu0 0
      %3387 = vmatprep.subr.bf16.mxu0 0
      %3388 = vmatpush1.bf16.msra.mxu0 0
      %3389 = vmatprep.subr.bf16.mxu0 0
      %3390 = vmatpush1.bf16.msra.mxu0 0
      %3391 = vmatprep.subr.bf16.mxu0 0
      %3392 = vmatpush1.bf16.msra.mxu0 0
      %3393 = vmatprep.subr.bf16.mxu0 0
      %3394 = vmatpush1.bf16.msra.mxu0 0
      %3395 = vmatprep.subr.bf16.mxu0 0
      %3396 = vmatpush1.bf16.msra.mxu0 0
      %3397 = vmatprep.subr.bf16.mxu0 0
      %3398 = vmatpush1.bf16.msra.mxu0 0
      %3399 = vmatprep.subr.bf16.mxu0 0
      %3400 = vmatpush1.bf16.msra.mxu0 0
      %3401 = vmatprep.subr.bf16.mxu0 0
      %3402 = vmatpush1.bf16.msra.mxu0 0
      %3403 = vmatprep.mubr.bf16.mxu0 0
      %3404 = vmatmul.mubr.bf16.gmra.mrb[0].mxu0 %v3366
      %v3405 = vpop.f32.mrb[0].mxu0
      %v3406 = vadd.f32 0.0, %v3405
      %v3407 = vpop.f32.mrb[0].mxu0
      %v3408 = vpop.f32.mrb[0].mxu0
      %v3409 = vpop.f32.mrb[0].mxu0
      %3410 = vdwg.mxu0
      %3411 = vrot.lane.b32.xlu0 %v975, 64
      %v3412 = vpop.permute.xlu0 %3411
      %v3414 = vsel %vm1027, %v3096, 0
      %v3417 = vsel %vm3127, %v3412, 0
      %3419 = vmatprep.subr.bf16.mxu0 0
      %3420 = vmatpush1.bf16.msra.mxu0 %v3417
      %3421 = vmatprep.subr.bf16.mxu0 0
      %3422 = vmatpush1.bf16.msra.mxu0 0
      %3423 = vmatprep.subr.bf16.mxu0 0
      %3424 = vmatpush1.bf16.msra.mxu0 0
      %3425 = vmatprep.subr.bf16.mxu0 0
      %3426 = vmatpush1.bf16.msra.mxu0 0
      %3427 = vmatprep.subr.bf16.mxu0 0
      %3428 = vmatpush1.bf16.msra.mxu0 0
      %3429 = vmatprep.subr.bf16.mxu0 0
      %3430 = vmatpush1.bf16.msra.mxu0 0
      %3431 = vmatprep.subr.bf16.mxu0 0
      %3432 = vmatpush1.bf16.msra.mxu0 0
      %3433 = vmatprep.subr.bf16.mxu0 0
      %3434 = vmatpush1.bf16.msra.mxu0 0
      %3435 = vmatprep.subr.bf16.mxu0 0
      %3436 = vmatpush1.bf16.msra.mxu0 0
      %3437 = vmatprep.subr.bf16.mxu0 0
      %3438 = vmatpush1.bf16.msra.mxu0 0
      %3439 = vmatprep.subr.bf16.mxu0 0
      %3440 = vmatpush1.bf16.msra.mxu0 0
      %3441 = vmatprep.subr.bf16.mxu0 0
      %3442 = vmatpush1.bf16.msra.mxu0 0
      %3443 = vmatprep.subr.bf16.mxu0 0
      %3444 = vmatpush1.bf16.msra.mxu0 0
      %3445 = vmatprep.subr.bf16.mxu0 0
      %3446 = vmatpush1.bf16.msra.mxu0 0
      %3447 = vmatprep.subr.bf16.mxu0 0
      %3448 = vmatpush1.bf16.msra.mxu0 0
      %3449 = vmatprep.subr.bf16.mxu0 0
      %3450 = vmatpush1.bf16.msra.mxu0 0
      %3451 = vmatprep.mubr.bf16.mxu0 0
      %3452 = vmatmul.mubr.bf16.gmra.mrb[0].mxu0 %v3414
      %v3453 = vpop.f32.mrb[0].mxu0
      %v3454 = vadd.f32 0.0, %v3453
      %v3455 = vpop.f32.mrb[0].mxu0
      %v3456 = vpop.f32.mrb[0].mxu0
      %v3457 = vpop.f32.mrb[0].mxu0
      %3458 = vdwg.mxu0
      %3459 = vrot.lane.b32.xlu0 %v976, 64
      %v3460 = vpop.permute.xlu0 %3459
      %v3462 = vsel %vm1027, %v3097, 0
      %v3465 = vsel %vm3127, %v3460, 0
      %3467 = vmatprep.subr.bf16.mxu0 0
      %3468 = vmatpush1.bf16.msra.mxu0 %v3465
      %3469 = vmatprep.subr.bf16.mxu0 0
      %3470 = vmatpush1.bf16.msra.mxu0 0
      %3471 = vmatprep.subr.bf16.mxu0 0
      %3472 = vmatpush1.bf16.msra.mxu0 0
      %3473 = vmatprep.subr.bf16.mxu0 0
      %3474 = vmatpush1.bf16.msra.mxu0 0
      %3475 = vmatprep.subr.bf16.mxu0 0
      %3476 = vmatpush1.bf16.msra.mxu0 0
      %3477 = vmatprep.subr.bf16.mxu0 0
      %3478 = vmatpush1.bf16.msra.mxu0 0
      %3479 = vmatprep.subr.bf16.mxu0 0
      %3480 = vmatpush1.bf16.msra.mxu0 0
      %3481 = vmatprep.subr.bf16.mxu0 0
      %3482 = vmatpush1.bf16.msra.mxu0 0
      %3483 = vmatprep.subr.bf16.mxu0 0
      %3484 = vmatpush1.bf16.msra.mxu0 0
      %3485 = vmatprep.subr.bf16.mxu0 0
      %3486 = vmatpush1.bf16.msra.mxu0 0
      %3487 = vmatprep.subr.bf16.mxu0 0
      %3488 = vmatpush1.bf16.msra.mxu0 0
      %3489 = vmatprep.subr.bf16.mxu0 0
      %3490 = vmatpush1.bf16.msra.mxu0 0
      %3491 = vmatprep.subr.bf16.mxu0 0
      %3492 = vmatpush1.bf16.msra.mxu0 0
      %3493 = vmatprep.subr.bf16.mxu0 0
      %3494 = vmatpush1.bf16.msra.mxu0 0
      %3495 = vmatprep.subr.bf16.mxu0 0
      %3496 = vmatpush1.bf16.msra.mxu0 0
      %3497 = vmatprep.subr.bf16.mxu0 0
      %3498 = vmatpush1.bf16.msra.mxu0 0
      %3499 = vmatprep.mubr.bf16.mxu0 0
      %3500 = vmatmul.mubr.bf16.gmra.mrb[0].mxu0 %v3462
      %v3501 = vpop.f32.mrb[0].mxu0
      %v3502 = vadd.f32 0.0, %v3501
      %v3503 = vpop.f32.mrb[0].mxu0
      %v3504 = vpop.f32.mrb[0].mxu0
      %v3505 = vpop.f32.mrb[0].mxu0
      %3506 = vdwg.mxu0
      %3507 = vrot.lane.b32.xlu0 %v1411, 64
      %v3508 = vpop.permute.xlu0 %3507
      %v3510 = vsel %vm1027, %v3098, 0
      %v3513 = vsel %vm3127, %v3508, 0
      %3515 = vmatprep.subr.bf16.mxu0 0
      %3516 = vmatpush1.bf16.msra.mxu0 %v3513
      %3517 = vmatprep.subr.bf16.mxu0 0
      %3518 = vmatpush1.bf16.msra.mxu0 0
      %3519 = vmatprep.subr.bf16.mxu0 0
      %3520 = vmatpush1.bf16.msra.mxu0 0
      %3521 = vmatprep.subr.bf16.mxu0 0
      %3522 = vmatpush1.bf16.msra.mxu0 0
      %3523 = vmatprep.subr.bf16.mxu0 0
      %3524 = vmatpush1.bf16.msra.mxu0 0
      %3525 = vmatprep.subr.bf16.mxu0 0
      %3526 = vmatpush1.bf16.msra.mxu0 0
      %3527 = vmatprep.subr.bf16.mxu0 0
      %3528 = vmatpush1.bf16.msra.mxu0 0
      %3529 = vmatprep.subr.bf16.mxu0 0
      %3530 = vmatpush1.bf16.msra.mxu0 0
      %3531 = vmatprep.subr.bf16.mxu0 0
      %3532 = vmatpush1.bf16.msra.mxu0 0
      %3533 = vmatprep.subr.bf16.mxu0 0
      %3534 = vmatpush1.bf16.msra.mxu0 0
      %3535 = vmatprep.subr.bf16.mxu0 0
      %3536 = vmatpush1.bf16.msra.mxu0 0
      %3537 = vmatprep.subr.bf16.mxu0 0
      %3538 = vmatpush1.bf16.msra.mxu0 0
      %3539 = vmatprep.subr.bf16.mxu0 0
      %3540 = vmatpush1.bf16.msra.mxu0 0
      %3541 = vmatprep.subr.bf16.mxu0 0
      %3542 = vmatpush1.bf16.msra.mxu0 0
      %3543 = vmatprep.subr.bf16.mxu0 0
      %3544 = vmatpush1.bf16.msra.mxu0 0
      %3545 = vmatprep.subr.bf16.mxu0 0
      %3546 = vmatpush1.bf16.msra.mxu0 0
      %3547 = vmatprep.mubr.bf16.mxu0 0
      %3548 = vmatmul.mubr.bf16.gmra.mrb[0].mxu0 %v3510
      %v3549 = vpop.f32.mrb[0].mxu0
      %v3550 = vadd.f32 0.0, %v3549
      %v3551 = vpop.f32.mrb[0].mxu0
      %v3552 = vpop.f32.mrb[0].mxu0
      %v3553 = vpop.f32.mrb[0].mxu0
      %3554 = vdwg.mxu0
      %3555 = vrot.lane.b32.xlu0 %v1461, 64
      %v3556 = vpop.permute.xlu0 %3555
      %v3558 = vsel %vm1027, %v3099, 0
      %v3561 = vsel %vm3127, %v3556, 0
      %3563 = vmatprep.subr.bf16.mxu0 0
      %3564 = vmatpush1.bf16.msra.mxu0 %v3561
      %3565 = vmatprep.subr.bf16.mxu0 0
      %3566 = vmatpush1.bf16.msra.mxu0 0
      %3567 = vmatprep.subr.bf16.mxu0 0
      %3568 = vmatpush1.bf16.msra.mxu0 0
      %3569 = vmatprep.subr.bf16.mxu0 0
      %3570 = vmatpush1.bf16.msra.mxu0 0
      %3571 = vmatprep.subr.bf16.mxu0 0
      %3572 = vmatpush1.bf16.msra.mxu0 0
      %3573 = vmatprep.subr.bf16.mxu0 0
      %3574 = vmatpush1.bf16.msra.mxu0 0
      %3575 = vmatprep.subr.bf16.mxu0 0
      %3576 = vmatpush1.bf16.msra.mxu0 0
      %3577 = vmatprep.subr.bf16.mxu0 0
      %3578 = vmatpush1.bf16.msra.mxu0 0
      %3579 = vmatprep.subr.bf16.mxu0 0
      %3580 = vmatpush1.bf16.msra.mxu0 0
      %3581 = vmatprep.subr.bf16.mxu0 0
      %3582 = vmatpush1.bf16.msra.mxu0 0
      %3583 = vmatprep.subr.bf16.mxu0 0
      %3584 = vmatpush1.bf16.msra.mxu0 0
      %3585 = vmatprep.subr.bf16.mxu0 0
      %3586 = vmatpush1.bf16.msra.mxu0 0
      %3587 = vmatprep.subr.bf16.mxu0 0
      %3588 = vmatpush1.bf16.msra.mxu0 0
      %3589 = vmatprep.subr.bf16.mxu0 0
      %3590 = vmatpush1.bf16.msra.mxu0 0
      %3591 = vmatprep.subr.bf16.mxu0 0
      %3592 = vmatpush1.bf16.msra.mxu0 0
      %3593 = vmatprep.subr.bf16.mxu0 0
      %3594 = vmatpush1.bf16.msra.mxu0 0
      %3595 = vmatprep.mubr.bf16.mxu0 0
      %3596 = vmatmul.mubr.bf16.gmra.mrb[0].mxu0 %v3558
      %v3597 = vpop.f32.mrb[0].mxu0
      %v3598 = vadd.f32 0.0, %v3597
      %v3599 = vpop.f32.mrb[0].mxu0
      %v3600 = vpop.f32.mrb[0].mxu0
      %v3601 = vpop.f32.mrb[0].mxu0
      %3602 = vdwg.mxu0
      %3603 = vrot.lane.b32.xlu0 %v1511, 64
      %v3604 = vpop.permute.xlu0 %3603
      %v3606 = vsel %vm1027, %v3100, 0
      %v3609 = vsel %vm3127, %v3604, 0
      %3611 = vmatprep.subr.bf16.mxu0 0
      %3612 = vmatpush1.bf16.msra.mxu0 %v3609
      %3613 = vmatprep.subr.bf16.mxu0 0
      %3614 = vmatpush1.bf16.msra.mxu0 0
      %3615 = vmatprep.subr.bf16.mxu0 0
      %3616 = vmatpush1.bf16.msra.mxu0 0
      %3617 = vmatprep.subr.bf16.mxu0 0
      %3618 = vmatpush1.bf16.msra.mxu0 0
      %3619 = vmatprep.subr.bf16.mxu0 0
      %3620 = vmatpush1.bf16.msra.mxu0 0
      %3621 = vmatprep.subr.bf16.mxu0 0
      %3622 = vmatpush1.bf16.msra.mxu0 0
      %3623 = vmatprep.subr.bf16.mxu0 0
      %3624 = vmatpush1.bf16.msra.mxu0 0
      %3625 = vmatprep.subr.bf16.mxu0 0
      %3626 = vmatpush1.bf16.msra.mxu0 0
      %3627 = vmatprep.subr.bf16.mxu0 0
      %3628 = vmatpush1.bf16.msra.mxu0 0
      %3629 = vmatprep.subr.bf16.mxu0 0
      %3630 = vmatpush1.bf16.msra.mxu0 0
      %3631 = vmatprep.subr.bf16.mxu0 0
      %3632 = vmatpush1.bf16.msra.mxu0 0
      %3633 = vmatprep.subr.bf16.mxu0 0
      %3634 = vmatpush1.bf16.msra.mxu0 0
      %3635 = vmatprep.subr.bf16.mxu0 0
      %3636 = vmatpush1.bf16.msra.mxu0 0
      %3637 = vmatprep.subr.bf16.mxu0 0
      %3638 = vmatpush1.bf16.msra.mxu0 0
      %3639 = vmatprep.subr.bf16.mxu0 0
      %3640 = vmatpush1.bf16.msra.mxu0 0
      %3641 = vmatprep.subr.bf16.mxu0 0
      %3642 = vmatpush1.bf16.msra.mxu0 0
      %3643 = vmatprep.mubr.bf16.mxu0 0
      %3644 = vmatmul.mubr.bf16.gmra.mrb[0].mxu0 %v3606
      %v3645 = vpop.f32.mrb[0].mxu0
      %v3646 = vadd.f32 0.0, %v3645
      %v3647 = vpop.f32.mrb[0].mxu0
      %v3648 = vpop.f32.mrb[0].mxu0
      %v3649 = vpop.f32.mrb[0].mxu0
      %3650 = vdwg.mxu0
      %3651 = vrot.lane.b32.xlu0 %v1561, 64
      %v3652 = vpop.permute.xlu0 %3651
      %v3654 = vsel %vm1027, %v3101, 0
      %v3657 = vsel %vm3127, %v3652, 0
      %3659 = vmatprep.subr.bf16.mxu0 0
      %3660 = vmatpush1.bf16.msra.mxu0 %v3657
      %3661 = vmatprep.subr.bf16.mxu0 0
      %3662 = vmatpush1.bf16.msra.mxu0 0
      %3663 = vmatprep.subr.bf16.mxu0 0
      %3664 = vmatpush1.bf16.msra.mxu0 0
      %3665 = vmatprep.subr.bf16.mxu0 0
      %3666 = vmatpush1.bf16.msra.mxu0 0
      %3667 = vmatprep.subr.bf16.mxu0 0
      %3668 = vmatpush1.bf16.msra.mxu0 0
      %3669 = vmatprep.subr.bf16.mxu0 0
      %3670 = vmatpush1.bf16.msra.mxu0 0
      %3671 = vmatprep.subr.bf16.mxu0 0
      %3672 = vmatpush1.bf16.msra.mxu0 0
      %3673 = vmatprep.subr.bf16.mxu0 0
      %3674 = vmatpush1.bf16.msra.mxu0 0
      %3675 = vmatprep.subr.bf16.mxu0 0
      %3676 = vmatpush1.bf16.msra.mxu0 0
      %3677 = vmatprep.subr.bf16.mxu0 0
      %3678 = vmatpush1.bf16.msra.mxu0 0
      %3679 = vmatprep.subr.bf16.mxu0 0
      %3680 = vmatpush1.bf16.msra.mxu0 0
      %3681 = vmatprep.subr.bf16.mxu0 0
      %3682 = vmatpush1.bf16.msra.mxu0 0
      %3683 = vmatprep.subr.bf16.mxu0 0
      %3684 = vmatpush1.bf16.msra.mxu0 0
      %3685 = vmatprep.subr.bf16.mxu0 0
      %3686 = vmatpush1.bf16.msra.mxu0 0
      %3687 = vmatprep.subr.bf16.mxu0 0
      %3688 = vmatpush1.bf16.msra.mxu0 0
      %3689 = vmatprep.subr.bf16.mxu0 0
      %3690 = vmatpush1.bf16.msra.mxu0 0
      %3691 = vmatprep.mubr.bf16.mxu0 0
      %3692 = vmatmul.mubr.bf16.gmra.mrb[0].mxu0 %v3654
      %v3693 = vpop.f32.mrb[0].mxu0
      %v3694 = vadd.f32 0.0, %v3693
      %v3695 = vpop.f32.mrb[0].mxu0
      %v3696 = vpop.f32.mrb[0].mxu0
      %v3697 = vpop.f32.mrb[0].mxu0
      %3698 = vdwg.mxu0
      %3699 = vrot.lane.b32.xlu0 %v1611, 64
      %v3700 = vpop.permute.xlu0 %3699
      %v3702 = vsel %vm1027, %v3102, 0
      %v3705 = vsel %vm3127, %v3700, 0
      %3707 = vmatprep.subr.bf16.mxu0 0
      %3708 = vmatpush1.bf16.msra.mxu0 %v3705
      %3709 = vmatprep.subr.bf16.mxu0 0
      %3710 = vmatpush1.bf16.msra.mxu0 0
      %3711 = vmatprep.subr.bf16.mxu0 0
      %3712 = vmatpush1.bf16.msra.mxu0 0
      %3713 = vmatprep.subr.bf16.mxu0 0
      %3714 = vmatpush1.bf16.msra.mxu0 0
      %3715 = vmatprep.subr.bf16.mxu0 0
      %3716 = vmatpush1.bf16.msra.mxu0 0
      %3717 = vmatprep.subr.bf16.mxu0 0
      %3718 = vmatpush1.bf16.msra.mxu0 0
      %3719 = vmatprep.subr.bf16.mxu0 0
      %3720 = vmatpush1.bf16.msra.mxu0 0
      %3721 = vmatprep.subr.bf16.mxu0 0
      %3722 = vmatpush1.bf16.msra.mxu0 0
      %3723 = vmatprep.subr.bf16.mxu0 0
      %3724 = vmatpush1.bf16.msra.mxu0 0
      %3725 = vmatprep.subr.bf16.mxu0 0
      %3726 = vmatpush1.bf16.msra.mxu0 0
      %3727 = vmatprep.subr.bf16.mxu0 0
      %3728 = vmatpush1.bf16.msra.mxu0 0
      %3729 = vmatprep.subr.bf16.mxu0 0
      %3730 = vmatpush1.bf16.msra.mxu0 0
      %3731 = vmatprep.subr.bf16.mxu0 0
      %3732 = vmatpush1.bf16.msra.mxu0 0
      %3733 = vmatprep.subr.bf16.mxu0 0
      %3734 = vmatpush1.bf16.msra.mxu0 0
      %3735 = vmatprep.subr.bf16.mxu0 0
      %3736 = vmatpush1.bf16.msra.mxu0 0
      %3737 = vmatprep.subr.bf16.mxu0 0
      %3738 = vmatpush1.bf16.msra.mxu0 0
      %3739 = vmatprep.mubr.bf16.mxu0 0
      %3740 = vmatmul.mubr.bf16.gmra.mrb[0].mxu0 %v3702
      %v3741 = vpop.f32.mrb[0].mxu0
      %v3742 = vadd.f32 0.0, %v3741
      %v3743 = vpop.f32.mrb[0].mxu0
      %v3744 = vpop.f32.mrb[0].mxu0
      %v3745 = vpop.f32.mrb[0].mxu0
      %3746 = vdwg.mxu0
      %3747 = vrot.lane.b32.xlu0 %v1661, 64
      %v3748 = vpop.permute.xlu0 %3747
      %v3750 = vsel %vm1027, %v3103, 0
      %v3753 = vsel %vm3127, %v3748, 0
      %3755 = vmatprep.subr.bf16.mxu0 0
      %3756 = vmatpush1.bf16.msra.mxu0 %v3753
      %3757 = vmatprep.subr.bf16.mxu0 0
      %3758 = vmatpush1.bf16.msra.mxu0 0
      %3759 = vmatprep.subr.bf16.mxu0 0
      %3760 = vmatpush1.bf16.msra.mxu0 0
      %3761 = vmatprep.subr.bf16.mxu0 0
      %3762 = vmatpush1.bf16.msra.mxu0 0
      %3763 = vmatprep.subr.bf16.mxu0 0
      %3764 = vmatpush1.bf16.msra.mxu0 0
      %3765 = vmatprep.subr.bf16.mxu0 0
      %3766 = vmatpush1.bf16.msra.mxu0 0
      %3767 = vmatprep.subr.bf16.mxu0 0
      %3768 = vmatpush1.bf16.msra.mxu0 0
      %3769 = vmatprep.subr.bf16.mxu0 0
      %3770 = vmatpush1.bf16.msra.mxu0 0
      %3771 = vmatprep.subr.bf16.mxu0 0
      %3772 = vmatpush1.bf16.msra.mxu0 0
      %3773 = vmatprep.subr.bf16.mxu0 0
      %3774 = vmatpush1.bf16.msra.mxu0 0
      %3775 = vmatprep.subr.bf16.mxu0 0
      %3776 = vmatpush1.bf16.msra.mxu0 0
      %3777 = vmatprep.subr.bf16.mxu0 0
      %3778 = vmatpush1.bf16.msra.mxu0 0
      %3779 = vmatprep.subr.bf16.mxu0 0
      %3780 = vmatpush1.bf16.msra.mxu0 0
      %3781 = vmatprep.subr.bf16.mxu0 0
      %3782 = vmatpush1.bf16.msra.mxu0 0
      %3783 = vmatprep.subr.bf16.mxu0 0
      %3784 = vmatpush1.bf16.msra.mxu0 0
      %3785 = vmatprep.subr.bf16.mxu0 0
      %3786 = vmatpush1.bf16.msra.mxu0 0
      %3787 = vmatprep.mubr.bf16.mxu0 0
      %3788 = vmatmul.mubr.bf16.gmra.mrb[0].mxu0 %v3750
      %v3789 = vpop.f32.mrb[0].mxu0
      %v3790 = vadd.f32 0.0, %v3789
      %v3791 = vpop.f32.mrb[0].mxu0
      %v3792 = vpop.f32.mrb[0].mxu0
      %v3793 = vpop.f32.mrb[0].mxu0
      %3794 = vdwg.mxu0
      %3795 = vrot.lane.b32.xlu0 %v1711, 64
      %v3796 = vpop.permute.xlu0 %3795
      %v3798 = vsel %vm1027, %v3104, 0
      %v3801 = vsel %vm3127, %v3796, 0
      %3803 = vmatprep.subr.bf16.mxu0 0
      %3804 = vmatpush1.bf16.msra.mxu0 %v3801
      %3805 = vmatprep.subr.bf16.mxu0 0
      %3806 = vmatpush1.bf16.msra.mxu0 0
      %3807 = vmatprep.subr.bf16.mxu0 0
      %3808 = vmatpush1.bf16.msra.mxu0 0
      %3809 = vmatprep.subr.bf16.mxu0 0
      %3810 = vmatpush1.bf16.msra.mxu0 0
      %3811 = vmatprep.subr.bf16.mxu0 0
      %3812 = vmatpush1.bf16.msra.mxu0 0
      %3813 = vmatprep.subr.bf16.mxu0 0
      %3814 = vmatpush1.bf16.msra.mxu0 0
      %3815 = vmatprep.subr.bf16.mxu0 0
      %3816 = vmatpush1.bf16.msra.mxu0 0
      %3817 = vmatprep.subr.bf16.mxu0 0
      %3818 = vmatpush1.bf16.msra.mxu0 0
      %3819 = vmatprep.subr.bf16.mxu0 0
      %3820 = vmatpush1.bf16.msra.mxu0 0
      %3821 = vmatprep.subr.bf16.mxu0 0
      %3822 = vmatpush1.bf16.msra.mxu0 0
      %3823 = vmatprep.subr.bf16.mxu0 0
      %3824 = vmatpush1.bf16.msra.mxu0 0
      %3825 = vmatprep.subr.bf16.mxu0 0
      %3826 = vmatpush1.bf16.msra.mxu0 0
      %3827 = vmatprep.subr.bf16.mxu0 0
      %3828 = vmatpush1.bf16.msra.mxu0 0
      %3829 = vmatprep.subr.bf16.mxu0 0
      %3830 = vmatpush1.bf16.msra.mxu0 0
      %3831 = vmatprep.subr.bf16.mxu0 0
      %3832 = vmatpush1.bf16.msra.mxu0 0
      %3833 = vmatprep.subr.bf16.mxu0 0
      %3834 = vmatpush1.bf16.msra.mxu0 0
      %3835 = vmatprep.mubr.bf16.mxu0 0
      %3836 = vmatmul.mubr.bf16.gmra.mrb[0].mxu0 %v3798
      %v3837 = vpop.f32.mrb[0].mxu0
      %v3838 = vadd.f32 0.0, %v3837
      %v3839 = vpop.f32.mrb[0].mxu0
      %v3840 = vpop.f32.mrb[0].mxu0
      %v3841 = vpop.f32.mrb[0].mxu0
      %3842 = vdwg.mxu0
      %3843 = vrot.lane.b32.xlu0 %v1761, 64
      %v3844 = vpop.permute.xlu0 %3843
      %v3846 = vsel %vm1027, %v3105, 0
      %v3849 = vsel %vm3127, %v3844, 0
      %3851 = vmatprep.subr.bf16.mxu0 0
      %3852 = vmatpush1.bf16.msra.mxu0 %v3849
      %3853 = vmatprep.subr.bf16.mxu0 0
      %3854 = vmatpush1.bf16.msra.mxu0 0
      %3855 = vmatprep.subr.bf16.mxu0 0
      %3856 = vmatpush1.bf16.msra.mxu0 0
      %3857 = vmatprep.subr.bf16.mxu0 0
      %3858 = vmatpush1.bf16.msra.mxu0 0
      %3859 = vmatprep.subr.bf16.mxu0 0
      %3860 = vmatpush1.bf16.msra.mxu0 0
      %3861 = vmatprep.subr.bf16.mxu0 0
      %3862 = vmatpush1.bf16.msra.mxu0 0
      %3863 = vmatprep.subr.bf16.mxu0 0
      %3864 = vmatpush1.bf16.msra.mxu0 0
      %3865 = vmatprep.subr.bf16.mxu0 0
      %3866 = vmatpush1.bf16.msra.mxu0 0
      %3867 = vmatprep.subr.bf16.mxu0 0
      %3868 = vmatpush1.bf16.msra.mxu0 0
      %3869 = vmatprep.subr.bf16.mxu0 0
      %3870 = vmatpush1.bf16.msra.mxu0 0
      %3871 = vmatprep.subr.bf16.mxu0 0
      %3872 = vmatpush1.bf16.msra.mxu0 0
      %3873 = vmatprep.subr.bf16.mxu0 0
      %3874 = vmatpush1.bf16.msra.mxu0 0
      %3875 = vmatprep.subr.bf16.mxu0 0
      %3876 = vmatpush1.bf16.msra.mxu0 0
      %3877 = vmatprep.subr.bf16.mxu0 0
      %3878 = vmatpush1.bf16.msra.mxu0 0
      %3879 = vmatprep.subr.bf16.mxu0 0
      %3880 = vmatpush1.bf16.msra.mxu0 0
      %3881 = vmatprep.subr.bf16.mxu0 0
      %3882 = vmatpush1.bf16.msra.mxu0 0
      %3883 = vmatprep.mubr.bf16.mxu0 0
      %3884 = vmatmul.mubr.bf16.gmra.mrb[0].mxu0 %v3846
      %v3885 = vpop.f32.mrb[0].mxu0
      %v3886 = vadd.f32 0.0, %v3885
      %v3887 = vpop.f32.mrb[0].mxu0
      %v3888 = vpop.f32.mrb[0].mxu0
      %v3889 = vpop.f32.mrb[0].mxu0
      %3890 = vdwg.mxu0
      %3891 = vrot.lane.b32.xlu0 %v1811, 64
      %v3892 = vpop.permute.xlu0 %3891
      %v3894 = vsel %vm1027, %v3106, 0
      %v3897 = vsel %vm3127, %v3892, 0
      %3899 = vmatprep.subr.bf16.mxu0 0
      %3900 = vmatpush1.bf16.msra.mxu0 %v3897
      %3901 = vmatprep.subr.bf16.mxu0 0
      %3902 = vmatpush1.bf16.msra.mxu0 0
      %3903 = vmatprep.subr.bf16.mxu0 0
      %3904 = vmatpush1.bf16.msra.mxu0 0
      %3905 = vmatprep.subr.bf16.mxu0 0
      %3906 = vmatpush1.bf16.msra.mxu0 0
      %3907 = vmatprep.subr.bf16.mxu0 0
      %3908 = vmatpush1.bf16.msra.mxu0 0
      %3909 = vmatprep.subr.bf16.mxu0 0
      %3910 = vmatpush1.bf16.msra.mxu0 0
      %3911 = vmatprep.subr.bf16.mxu0 0
      %3912 = vmatpush1.bf16.msra.mxu0 0
      %3913 = vmatprep.subr.bf16.mxu0 0
      %3914 = vmatpush1.bf16.msra.mxu0 0
      %3915 = vmatprep.subr.bf16.mxu0 0
      %3916 = vmatpush1.bf16.msra.mxu0 0
      %3917 = vmatprep.subr.bf16.mxu0 0
      %3918 = vmatpush1.bf16.msra.mxu0 0
      %3919 = vmatprep.subr.bf16.mxu0 0
      %3920 = vmatpush1.bf16.msra.mxu0 0
      %3921 = vmatprep.subr.bf16.mxu0 0
      %3922 = vmatpush1.bf16.msra.mxu0 0
      %3923 = vmatprep.subr.bf16.mxu0 0
      %3924 = vmatpush1.bf16.msra.mxu0 0
      %3925 = vmatprep.subr.bf16.mxu0 0
      %3926 = vmatpush1.bf16.msra.mxu0 0
      %3927 = vmatprep.subr.bf16.mxu0 0
      %3928 = vmatpush1.bf16.msra.mxu0 0
      %3929 = vmatprep.subr.bf16.mxu0 0
      %3930 = vmatpush1.bf16.msra.mxu0 0
      %3931 = vmatprep.mubr.bf16.mxu0 0
      %3932 = vmatmul.mubr.bf16.gmra.mrb[0].mxu0 %v3894
      %v3933 = vpop.f32.mrb[0].mxu0
      %v3934 = vadd.f32 0.0, %v3933
      %v3935 = vpop.f32.mrb[0].mxu0
      %v3936 = vpop.f32.mrb[0].mxu0
      %v3937 = vpop.f32.mrb[0].mxu0
      %3938 = vdwg.mxu0
      %3939 = vrot.lane.b32.xlu0 %v1861, 64
      %v3940 = vpop.permute.xlu0 %3939
      %v3942 = vsel %vm1027, %v3107, 0
      %v3945 = vsel %vm3127, %v3940, 0
      %3947 = vmatprep.subr.bf16.mxu0 0
      %3948 = vmatpush1.bf16.msra.mxu0 %v3945
      %3949 = vmatprep.subr.bf16.mxu0 0
      %3950 = vmatpush1.bf16.msra.mxu0 0
      %3951 = vmatprep.subr.bf16.mxu0 0
      %3952 = vmatpush1.bf16.msra.mxu0 0
      %3953 = vmatprep.subr.bf16.mxu0 0
      %3954 = vmatpush1.bf16.msra.mxu0 0
      %3955 = vmatprep.subr.bf16.mxu0 0
      %3956 = vmatpush1.bf16.msra.mxu0 0
      %3957 = vmatprep.subr.bf16.mxu0 0
      %3958 = vmatpush1.bf16.msra.mxu0 0
      %3959 = vmatprep.subr.bf16.mxu0 0
      %3960 = vmatpush1.bf16.msra.mxu0 0
      %3961 = vmatprep.subr.bf16.mxu0 0
      %3962 = vmatpush1.bf16.msra.mxu0 0
      %3963 = vmatprep.subr.bf16.mxu0 0
      %3964 = vmatpush1.bf16.msra.mxu0 0
      %3965 = vmatprep.subr.bf16.mxu0 0
      %3966 = vmatpush1.bf16.msra.mxu0 0
      %3967 = vmatprep.subr.bf16.mxu0 0
      %3968 = vmatpush1.bf16.msra.mxu0 0
      %3969 = vmatprep.subr.bf16.mxu0 0
      %3970 = vmatpush1.bf16.msra.mxu0 0
      %3971 = vmatprep.subr.bf16.mxu0 0
      %3972 = vmatpush1.bf16.msra.mxu0 0
      %3973 = vmatprep.subr.bf16.mxu0 0
      %3974 = vmatpush1.bf16.msra.mxu0 0
      %3975 = vmatprep.subr.bf16.mxu0 0
      %3976 = vmatpush1.bf16.msra.mxu0 0
      %3977 = vmatprep.subr.bf16.mxu0 0
      %3978 = vmatpush1.bf16.msra.mxu0 0
      %3979 = vmatprep.mubr.bf16.mxu0 0
      %3980 = vmatmul.mubr.bf16.gmra.mrb[0].mxu0 %v3942
      %v3981 = vpop.f32.mrb[0].mxu0
      %v3982 = vadd.f32 0.0, %v3981
      %v3983 = vpop.f32.mrb[0].mxu0
      %v3984 = vpop.f32.mrb[0].mxu0
      %v3985 = vpop.f32.mrb[0].mxu0
      %3986 = vdwg.mxu0
      %3987 = vrot.lane.b32.xlu0 %v1911, 64
      %v3988 = vpop.permute.xlu0 %3987
      %v3990 = vsel %vm1027, %v3108, 0
      %v3993 = vsel %vm3127, %v3988, 0
      %3995 = vmatprep.subr.bf16.mxu0 0
      %3996 = vmatpush1.bf16.msra.mxu0 %v3993
      %3997 = vmatprep.subr.bf16.mxu0 0
      %3998 = vmatpush1.bf16.msra.mxu0 0
      %3999 = vmatprep.subr.bf16.mxu0 0
      %4000 = vmatpush1.bf16.msra.mxu0 0
      %4001 = vmatprep.subr.bf16.mxu0 0
      %4002 = vmatpush1.bf16.msra.mxu0 0
      %4003 = vmatprep.subr.bf16.mxu0 0
      %4004 = vmatpush1.bf16.msra.mxu0 0
      %4005 = vmatprep.subr.bf16.mxu0 0
      %4006 = vmatpush1.bf16.msra.mxu0 0
      %4007 = vmatprep.subr.bf16.mxu0 0
      %4008 = vmatpush1.bf16.msra.mxu0 0
      %4009 = vmatprep.subr.bf16.mxu0 0
      %4010 = vmatpush1.bf16.msra.mxu0 0
      %4011 = vmatprep.subr.bf16.mxu0 0
      %4012 = vmatpush1.bf16.msra.mxu0 0
      %4013 = vmatprep.subr.bf16.mxu0 0
      %4014 = vmatpush1.bf16.msra.mxu0 0
      %4015 = vmatprep.subr.bf16.mxu0 0
      %4016 = vmatpush1.bf16.msra.mxu0 0
      %4017 = vmatprep.subr.bf16.mxu0 0
      %4018 = vmatpush1.bf16.msra.mxu0 0
      %4019 = vmatprep.subr.bf16.mxu0 0
      %4020 = vmatpush1.bf16.msra.mxu0 0
      %4021 = vmatprep.subr.bf16.mxu0 0
      %4022 = vmatpush1.bf16.msra.mxu0 0
      %4023 = vmatprep.subr.bf16.mxu0 0
      %4024 = vmatpush1.bf16.msra.mxu0 0
      %4025 = vmatprep.subr.bf16.mxu0 0
      %4026 = vmatpush1.bf16.msra.mxu0 0
      %4027 = vmatprep.mubr.bf16.mxu0 0
      %4028 = vmatmul.mubr.bf16.gmra.mrb[0].mxu0 %v3990
      %v4029 = vpop.f32.mrb[0].mxu0
      %v4030 = vadd.f32 0.0, %v4029
      %v4031 = vpop.f32.mrb[0].mxu0
      %v4032 = vpop.f32.mrb[0].mxu0
      %v4033 = vpop.f32.mrb[0].mxu0
      %4034 = vdwg.mxu0
      %4035 = vrot.lane.b32.xlu0 %v1961, 64
      %v4036 = vpop.permute.xlu0 %4035
      %v4038 = vsel %vm1027, %v3109, 0
      %v4041 = vsel %vm3127, %v4036, 0
      %4043 = vmatprep.subr.bf16.mxu0 0
      %4044 = vmatpush1.bf16.msra.mxu0 %v4041
      %4045 = vmatprep.subr.bf16.mxu0 0
      %4046 = vmatpush1.bf16.msra.mxu0 0
      %4047 = vmatprep.subr.bf16.mxu0 0
      %4048 = vmatpush1.bf16.msra.mxu0 0
      %4049 = vmatprep.subr.bf16.mxu0 0
      %4050 = vmatpush1.bf16.msra.mxu0 0
      %4051 = vmatprep.subr.bf16.mxu0 0
      %4052 = vmatpush1.bf16.msra.mxu0 0
      %4053 = vmatprep.subr.bf16.mxu0 0
      %4054 = vmatpush1.bf16.msra.mxu0 0
      %4055 = vmatprep.subr.bf16.mxu0 0
      %4056 = vmatpush1.bf16.msra.mxu0 0
      %4057 = vmatprep.subr.bf16.mxu0 0
      %4058 = vmatpush1.bf16.msra.mxu0 0
      %4059 = vmatprep.subr.bf16.mxu0 0
      %4060 = vmatpush1.bf16.msra.mxu0 0
      %4061 = vmatprep.subr.bf16.mxu0 0
      %4062 = vmatpush1.bf16.msra.mxu0 0
      %4063 = vmatprep.subr.bf16.mxu0 0
      %4064 = vmatpush1.bf16.msra.mxu0 0
      %4065 = vmatprep.subr.bf16.mxu0 0
      %4066 = vmatpush1.bf16.msra.mxu0 0
      %4067 = vmatprep.subr.bf16.mxu0 0
      %4068 = vmatpush1.bf16.msra.mxu0 0
      %4069 = vmatprep.subr.bf16.mxu0 0
      %4070 = vmatpush1.bf16.msra.mxu0 0
      %4071 = vmatprep.subr.bf16.mxu0 0
      %4072 = vmatpush1.bf16.msra.mxu0 0
      %4073 = vmatprep.subr.bf16.mxu0 0
      %4074 = vmatpush1.bf16.msra.mxu0 0
      %4075 = vmatprep.mubr.bf16.mxu0 0
      %4076 = vmatmul.mubr.bf16.gmra.mrb[0].mxu0 %v4038
      %v4077 = vpop.f32.mrb[0].mxu0
      %v4078 = vadd.f32 0.0, %v4077
      %v4079 = vpop.f32.mrb[0].mxu0
      %v4080 = vpop.f32.mrb[0].mxu0
      %v4081 = vpop.f32.mrb[0].mxu0
      %4082 = vdwg.mxu0
      %4083 = vrot.lane.b32.xlu0 %v2011, 64
      %v4084 = vpop.permute.xlu0 %4083
      %v4086 = vsel %vm1027, %v3110, 0
      %v4089 = vsel %vm3127, %v4084, 0
      %4091 = vmatprep.subr.bf16.mxu0 0
      %4092 = vmatpush1.bf16.msra.mxu0 %v4089
      %4093 = vmatprep.subr.bf16.mxu0 0
      %4094 = vmatpush1.bf16.msra.mxu0 0
      %4095 = vmatprep.subr.bf16.mxu0 0
      %4096 = vmatpush1.bf16.msra.mxu0 0
      %4097 = vmatprep.subr.bf16.mxu0 0
      %4098 = vmatpush1.bf16.msra.mxu0 0
      %4099 = vmatprep.subr.bf16.mxu0 0
      %4100 = vmatpush1.bf16.msra.mxu0 0
      %4101 = vmatprep.subr.bf16.mxu0 0
      %4102 = vmatpush1.bf16.msra.mxu0 0
      %4103 = vmatprep.subr.bf16.mxu0 0
      %4104 = vmatpush1.bf16.msra.mxu0 0
      %4105 = vmatprep.subr.bf16.mxu0 0
      %4106 = vmatpush1.bf16.msra.mxu0 0
      %4107 = vmatprep.subr.bf16.mxu0 0
      %4108 = vmatpush1.bf16.msra.mxu0 0
      %4109 = vmatprep.subr.bf16.mxu0 0
      %4110 = vmatpush1.bf16.msra.mxu0 0
      %4111 = vmatprep.subr.bf16.mxu0 0
      %4112 = vmatpush1.bf16.msra.mxu0 0
      %4113 = vmatprep.subr.bf16.mxu0 0
      %4114 = vmatpush1.bf16.msra.mxu0 0
      %4115 = vmatprep.subr.bf16.mxu0 0
      %4116 = vmatpush1.bf16.msra.mxu0 0
      %4117 = vmatprep.subr.bf16.mxu0 0
      %4118 = vmatpush1.bf16.msra.mxu0 0
      %4119 = vmatprep.subr.bf16.mxu0 0
      %4120 = vmatpush1.bf16.msra.mxu0 0
      %4121 = vmatprep.subr.bf16.mxu0 0
      %4122 = vmatpush1.bf16.msra.mxu0 0
      %4123 = vmatprep.mubr.bf16.mxu0 0
      %4124 = vmatmul.mubr.bf16.gmra.mrb[0].mxu0 %v4086
      %v4125 = vpop.f32.mrb[0].mxu0
      %v4126 = vadd.f32 0.0, %v4125
      %v4127 = vpop.f32.mrb[0].mxu0
      %v4128 = vpop.f32.mrb[0].mxu0
      %v4129 = vpop.f32.mrb[0].mxu0
      %4130 = vdwg.mxu0
      %4131 = vrot.lane.b32.xlu0 %v2061, 64
      %v4132 = vpop.permute.xlu0 %4131
      %v4134 = vsel %vm1027, %v3111, 0
      %v4137 = vsel %vm3127, %v4132, 0
      %4139 = vmatprep.subr.bf16.mxu0 0
      %4140 = vmatpush1.bf16.msra.mxu0 %v4137
      %4141 = vmatprep.subr.bf16.mxu0 0
      %4142 = vmatpush1.bf16.msra.mxu0 0
      %4143 = vmatprep.subr.bf16.mxu0 0
      %4144 = vmatpush1.bf16.msra.mxu0 0
      %4145 = vmatprep.subr.bf16.mxu0 0
      %4146 = vmatpush1.bf16.msra.mxu0 0
      %4147 = vmatprep.subr.bf16.mxu0 0
      %4148 = vmatpush1.bf16.msra.mxu0 0
      %4149 = vmatprep.subr.bf16.mxu0 0
      %4150 = vmatpush1.bf16.msra.mxu0 0
      %4151 = vmatprep.subr.bf16.mxu0 0
      %4152 = vmatpush1.bf16.msra.mxu0 0
      %4153 = vmatprep.subr.bf16.mxu0 0
      %4154 = vmatpush1.bf16.msra.mxu0 0
      %4155 = vmatprep.subr.bf16.mxu0 0
      %4156 = vmatpush1.bf16.msra.mxu0 0
      %4157 = vmatprep.subr.bf16.mxu0 0
      %4158 = vmatpush1.bf16.msra.mxu0 0
      %4159 = vmatprep.subr.bf16.mxu0 0
      %4160 = vmatpush1.bf16.msra.mxu0 0
      %4161 = vmatprep.subr.bf16.mxu0 0
      %4162 = vmatpush1.bf16.msra.mxu0 0
      %4163 = vmatprep.subr.bf16.mxu0 0
      %4164 = vmatpush1.bf16.msra.mxu0 0
      %4165 = vmatprep.subr.bf16.mxu0 0
      %4166 = vmatpush1.bf16.msra.mxu0 0
      %4167 = vmatprep.subr.bf16.mxu0 0
      %4168 = vmatpush1.bf16.msra.mxu0 0
      %4169 = vmatprep.subr.bf16.mxu0 0
      %4170 = vmatpush1.bf16.msra.mxu0 0
      %4171 = vmatprep.mubr.bf16.mxu0 0
      %4172 = vmatmul.mubr.bf16.gmra.mrb[0].mxu0 %v4134
      %v4173 = vpop.f32.mrb[0].mxu0
      %v4174 = vadd.f32 0.0, %v4173
      %v4175 = vpop.f32.mrb[0].mxu0
      %v4176 = vpop.f32.mrb[0].mxu0
      %v4177 = vpop.f32.mrb[0].mxu0
      %4178 = vdwg.mxu0
      %4179 = vrot.lane.b32.xlu0 %v2111, 64
      %v4180 = vpop.permute.xlu0 %4179
      %v4182 = vsel %vm1027, %v3112, 0
      %v4185 = vsel %vm3127, %v4180, 0
      %4187 = vmatprep.subr.bf16.mxu0 0
      %4188 = vmatpush1.bf16.msra.mxu0 %v4185
      %4189 = vmatprep.subr.bf16.mxu0 0
      %4190 = vmatpush1.bf16.msra.mxu0 0
      %4191 = vmatprep.subr.bf16.mxu0 0
      %4192 = vmatpush1.bf16.msra.mxu0 0
      %4193 = vmatprep.subr.bf16.mxu0 0
      %4194 = vmatpush1.bf16.msra.mxu0 0
      %4195 = vmatprep.subr.bf16.mxu0 0
      %4196 = vmatpush1.bf16.msra.mxu0 0
      %4197 = vmatprep.subr.bf16.mxu0 0
      %4198 = vmatpush1.bf16.msra.mxu0 0
      %4199 = vmatprep.subr.bf16.mxu0 0
      %4200 = vmatpush1.bf16.msra.mxu0 0
      %4201 = vmatprep.subr.bf16.mxu0 0
      %4202 = vmatpush1.bf16.msra.mxu0 0
      %4203 = vmatprep.subr.bf16.mxu0 0
      %4204 = vmatpush1.bf16.msra.mxu0 0
      %4205 = vmatprep.subr.bf16.mxu0 0
      %4206 = vmatpush1.bf16.msra.mxu0 0
      %4207 = vmatprep.subr.bf16.mxu0 0
      %4208 = vmatpush1.bf16.msra.mxu0 0
      %4209 = vmatprep.subr.bf16.mxu0 0
      %4210 = vmatpush1.bf16.msra.mxu0 0
      %4211 = vmatprep.subr.bf16.mxu0 0
      %4212 = vmatpush1.bf16.msra.mxu0 0
      %4213 = vmatprep.subr.bf16.mxu0 0
      %4214 = vmatpush1.bf16.msra.mxu0 0
      %4215 = vmatprep.subr.bf16.mxu0 0
      %4216 = vmatpush1.bf16.msra.mxu0 0
      %4217 = vmatprep.subr.bf16.mxu0 0
      %4218 = vmatpush1.bf16.msra.mxu0 0
      %4219 = vmatprep.mubr.bf16.mxu0 0
      %4220 = vmatmul.mubr.bf16.gmra.mrb[0].mxu0 %v4182
      %v4221 = vpop.f32.mrb[0].mxu0
      %v4222 = vadd.f32 0.0, %v4221
      %v4223 = vpop.f32.mrb[0].mxu0
      %v4224 = vpop.f32.mrb[0].mxu0
      %v4225 = vpop.f32.mrb[0].mxu0
      %4226 = vdwg.mxu0
      %4227 = vrot.lane.b32.xlu0 %v2161, 64
      %v4228 = vpop.permute.xlu0 %4227
      %v4230 = vsel %vm1027, %v3113, 0
      %v4233 = vsel %vm3127, %v4228, 0
      %4235 = vmatprep.subr.bf16.mxu0 0
      %4236 = vmatpush1.bf16.msra.mxu0 %v4233
      %4237 = vmatprep.subr.bf16.mxu0 0
      %4238 = vmatpush1.bf16.msra.mxu0 0
      %4239 = vmatprep.subr.bf16.mxu0 0
      %4240 = vmatpush1.bf16.msra.mxu0 0
      %4241 = vmatprep.subr.bf16.mxu0 0
      %4242 = vmatpush1.bf16.msra.mxu0 0
      %4243 = vmatprep.subr.bf16.mxu0 0
      %4244 = vmatpush1.bf16.msra.mxu0 0
      %4245 = vmatprep.subr.bf16.mxu0 0
      %4246 = vmatpush1.bf16.msra.mxu0 0
      %4247 = vmatprep.subr.bf16.mxu0 0
      %4248 = vmatpush1.bf16.msra.mxu0 0
      %4249 = vmatprep.subr.bf16.mxu0 0
      %4250 = vmatpush1.bf16.msra.mxu0 0
      %4251 = vmatprep.subr.bf16.mxu0 0
      %4252 = vmatpush1.bf16.msra.mxu0 0
      %4253 = vmatprep.subr.bf16.mxu0 0
      %4254 = vmatpush1.bf16.msra.mxu0 0
      %4255 = vmatprep.subr.bf16.mxu0 0
      %4256 = vmatpush1.bf16.msra.mxu0 0
      %4257 = vmatprep.subr.bf16.mxu0 0
      %4258 = vmatpush1.bf16.msra.mxu0 0
      %4259 = vmatprep.subr.bf16.mxu0 0
      %4260 = vmatpush1.bf16.msra.mxu0 0
      %4261 = vmatprep.subr.bf16.mxu0 0
      %4262 = vmatpush1.bf16.msra.mxu0 0
      %4263 = vmatprep.subr.bf16.mxu0 0
      %4264 = vmatpush1.bf16.msra.mxu0 0
      %4265 = vmatprep.subr.bf16.mxu0 0
      %4266 = vmatpush1.bf16.msra.mxu0 0
      %4267 = vmatprep.mubr.bf16.mxu0 0
      %4268 = vmatmul.mubr.bf16.gmra.mrb[0].mxu0 %v4230
      %v4269 = vpop.f32.mrb[0].mxu0
      %v4270 = vadd.f32 0.0, %v4269
      %v4271 = vpop.f32.mrb[0].mxu0
      %v4272 = vpop.f32.mrb[0].mxu0
      %v4273 = vpop.f32.mrb[0].mxu0
      %4274 = vdwg.mxu0
      %4275 = vrot.lane.b32.xlu0 %v2211, 64
      %v4276 = vpop.permute.xlu0 %4275
      %v4278 = vsel %vm1027, %v3114, 0
      %v4281 = vsel %vm3127, %v4276, 0
      %4283 = vmatprep.subr.bf16.mxu0 0
      %4284 = vmatpush1.bf16.msra.mxu0 %v4281
      %4285 = vmatprep.subr.bf16.mxu0 0
      %4286 = vmatpush1.bf16.msra.mxu0 0
      %4287 = vmatprep.subr.bf16.mxu0 0
      %4288 = vmatpush1.bf16.msra.mxu0 0
      %4289 = vmatprep.subr.bf16.mxu0 0
      %4290 = vmatpush1.bf16.msra.mxu0 0
      %4291 = vmatprep.subr.bf16.mxu0 0
      %4292 = vmatpush1.bf16.msra.mxu0 0
      %4293 = vmatprep.subr.bf16.mxu0 0
      %4294 = vmatpush1.bf16.msra.mxu0 0
      %4295 = vmatprep.subr.bf16.mxu0 0
      %4296 = vmatpush1.bf16.msra.mxu0 0
      %4297 = vmatprep.subr.bf16.mxu0 0
      %4298 = vmatpush1.bf16.msra.mxu0 0
      %4299 = vmatprep.subr.bf16.mxu0 0
      %4300 = vmatpush1.bf16.msra.mxu0 0
      %4301 = vmatprep.subr.bf16.mxu0 0
      %4302 = vmatpush1.bf16.msra.mxu0 0
      %4303 = vmatprep.subr.bf16.mxu0 0
      %4304 = vmatpush1.bf16.msra.mxu0 0
      %4305 = vmatprep.subr.bf16.mxu0 0
      %4306 = vmatpush1.bf16.msra.mxu0 0
      %4307 = vmatprep.subr.bf16.mxu0 0
      %4308 = vmatpush1.bf16.msra.mxu0 0
      %4309 = vmatprep.subr.bf16.mxu0 0
      %4310 = vmatpush1.bf16.msra.mxu0 0
      %4311 = vmatprep.subr.bf16.mxu0 0
      %4312 = vmatpush1.bf16.msra.mxu0 0
      %4313 = vmatprep.subr.bf16.mxu0 0
      %4314 = vmatpush1.bf16.msra.mxu0 0
      %4315 = vmatprep.mubr.bf16.mxu0 0
      %4316 = vmatmul.mubr.bf16.gmra.mrb[0].mxu0 %v4278
      %v4317 = vpop.f32.mrb[0].mxu0
      %v4318 = vadd.f32 0.0, %v4317
      %v4319 = vpop.f32.mrb[0].mxu0
      %v4320 = vpop.f32.mrb[0].mxu0
      %v4321 = vpop.f32.mrb[0].mxu0
      %4322 = vdwg.mxu0
      %4323 = vrot.lane.b32.xlu0 %v2261, 64
      %v4324 = vpop.permute.xlu0 %4323
      %v4326 = vsel %vm1027, %v3115, 0
      %v4329 = vsel %vm3127, %v4324, 0
      %4331 = vmatprep.subr.bf16.mxu0 0
      %4332 = vmatpush1.bf16.msra.mxu0 %v4329
      %4333 = vmatprep.subr.bf16.mxu0 0
      %4334 = vmatpush1.bf16.msra.mxu0 0
      %4335 = vmatprep.subr.bf16.mxu0 0
      %4336 = vmatpush1.bf16.msra.mxu0 0
      %4337 = vmatprep.subr.bf16.mxu0 0
      %4338 = vmatpush1.bf16.msra.mxu0 0
      %4339 = vmatprep.subr.bf16.mxu0 0
      %4340 = vmatpush1.bf16.msra.mxu0 0
      %4341 = vmatprep.subr.bf16.mxu0 0
      %4342 = vmatpush1.bf16.msra.mxu0 0
      %4343 = vmatprep.subr.bf16.mxu0 0
      %4344 = vmatpush1.bf16.msra.mxu0 0
      %4345 = vmatprep.subr.bf16.mxu0 0
      %4346 = vmatpush1.bf16.msra.mxu0 0
      %4347 = vmatprep.subr.bf16.mxu0 0
      %4348 = vmatpush1.bf16.msra.mxu0 0
      %4349 = vmatprep.subr.bf16.mxu0 0
      %4350 = vmatpush1.bf16.msra.mxu0 0
      %4351 = vmatprep.subr.bf16.mxu0 0
      %4352 = vmatpush1.bf16.msra.mxu0 0
      %4353 = vmatprep.subr.bf16.mxu0 0
      %4354 = vmatpush1.bf16.msra.mxu0 0
      %4355 = vmatprep.subr.bf16.mxu0 0
      %4356 = vmatpush1.bf16.msra.mxu0 0
      %4357 = vmatprep.subr.bf16.mxu0 0
      %4358 = vmatpush1.bf16.msra.mxu0 0
      %4359 = vmatprep.subr.bf16.mxu0 0
      %4360 = vmatpush1.bf16.msra.mxu0 0
      %4361 = vmatprep.subr.bf16.mxu0 0
      %4362 = vmatpush1.bf16.msra.mxu0 0
      %4363 = vmatprep.mubr.bf16.mxu0 0
      %4364 = vmatmul.mubr.bf16.gmra.mrb[0].mxu0 %v4326
      %v4365 = vpop.f32.mrb[0].mxu0
      %v4366 = vadd.f32 0.0, %v4365
      %v4367 = vpop.f32.mrb[0].mxu0
      %v4368 = vpop.f32.mrb[0].mxu0
      %v4369 = vpop.f32.mrb[0].mxu0
      %4370 = vdwg.mxu0
      %4371 = vrot.lane.b32.xlu0 %v2311, 64
      %v4372 = vpop.permute.xlu0 %4371
      %v4374 = vsel %vm1027, %v3116, 0
      %v4377 = vsel %vm3127, %v4372, 0
      %4379 = vmatprep.subr.bf16.mxu0 0
      %4380 = vmatpush1.bf16.msra.mxu0 %v4377
      %4381 = vmatprep.subr.bf16.mxu0 0
      %4382 = vmatpush1.bf16.msra.mxu0 0
      %4383 = vmatprep.subr.bf16.mxu0 0
      %4384 = vmatpush1.bf16.msra.mxu0 0
      %4385 = vmatprep.subr.bf16.mxu0 0
      %4386 = vmatpush1.bf16.msra.mxu0 0
      %4387 = vmatprep.subr.bf16.mxu0 0
      %4388 = vmatpush1.bf16.msra.mxu0 0
      %4389 = vmatprep.subr.bf16.mxu0 0
      %4390 = vmatpush1.bf16.msra.mxu0 0
      %4391 = vmatprep.subr.bf16.mxu0 0
      %4392 = vmatpush1.bf16.msra.mxu0 0
      %4393 = vmatprep.subr.bf16.mxu0 0
      %4394 = vmatpush1.bf16.msra.mxu0 0
      %4395 = vmatprep.subr.bf16.mxu0 0
      %4396 = vmatpush1.bf16.msra.mxu0 0
      %4397 = vmatprep.subr.bf16.mxu0 0
      %4398 = vmatpush1.bf16.msra.mxu0 0
      %4399 = vmatprep.subr.bf16.mxu0 0
      %4400 = vmatpush1.bf16.msra.mxu0 0
      %4401 = vmatprep.subr.bf16.mxu0 0
      %4402 = vmatpush1.bf16.msra.mxu0 0
      %4403 = vmatprep.subr.bf16.mxu0 0
      %4404 = vmatpush1.bf16.msra.mxu0 0
      %4405 = vmatprep.subr.bf16.mxu0 0
      %4406 = vmatpush1.bf16.msra.mxu0 0
      %4407 = vmatprep.subr.bf16.mxu0 0
      %4408 = vmatpush1.bf16.msra.mxu0 0
      %4409 = vmatprep.subr.bf16.mxu0 0
      %4410 = vmatpush1.bf16.msra.mxu0 0
      %4411 = vmatprep.mubr.bf16.mxu0 0
      %4412 = vmatmul.mubr.bf16.gmra.mrb[0].mxu0 %v4374
      %v4413 = vpop.f32.mrb[0].mxu0
      %v4414 = vadd.f32 0.0, %v4413
      %v4415 = vpop.f32.mrb[0].mxu0
      %v4416 = vpop.f32.mrb[0].mxu0
      %v4417 = vpop.f32.mrb[0].mxu0
      %4418 = vdwg.mxu0
      %4419 = vrot.lane.b32.xlu0 %v2361, 64
      %v4420 = vpop.permute.xlu0 %4419
      %v4422 = vsel %vm1027, %v3117, 0
      %v4425 = vsel %vm3127, %v4420, 0
      %4427 = vmatprep.subr.bf16.mxu0 0
      %4428 = vmatpush1.bf16.msra.mxu0 %v4425
      %4429 = vmatprep.subr.bf16.mxu0 0
      %4430 = vmatpush1.bf16.msra.mxu0 0
      %4431 = vmatprep.subr.bf16.mxu0 0
      %4432 = vmatpush1.bf16.msra.mxu0 0
      %4433 = vmatprep.subr.bf16.mxu0 0
      %4434 = vmatpush1.bf16.msra.mxu0 0
      %4435 = vmatprep.subr.bf16.mxu0 0
      %4436 = vmatpush1.bf16.msra.mxu0 0
      %4437 = vmatprep.subr.bf16.mxu0 0
      %4438 = vmatpush1.bf16.msra.mxu0 0
      %4439 = vmatprep.subr.bf16.mxu0 0
      %4440 = vmatpush1.bf16.msra.mxu0 0
      %4441 = vmatprep.subr.bf16.mxu0 0
      %4442 = vmatpush1.bf16.msra.mxu0 0
      %4443 = vmatprep.subr.bf16.mxu0 0
      %4444 = vmatpush1.bf16.msra.mxu0 0
      %4445 = vmatprep.subr.bf16.mxu0 0
      %4446 = vmatpush1.bf16.msra.mxu0 0
      %4447 = vmatprep.subr.bf16.mxu0 0
      %4448 = vmatpush1.bf16.msra.mxu0 0
      %4449 = vmatprep.subr.bf16.mxu0 0
      %4450 = vmatpush1.bf16.msra.mxu0 0
      %4451 = vmatprep.subr.bf16.mxu0 0
      %4452 = vmatpush1.bf16.msra.mxu0 0
      %4453 = vmatprep.subr.bf16.mxu0 0
      %4454 = vmatpush1.bf16.msra.mxu0 0
      %4455 = vmatprep.subr.bf16.mxu0 0
      %4456 = vmatpush1.bf16.msra.mxu0 0
      %4457 = vmatprep.subr.bf16.mxu0 0
      %4458 = vmatpush1.bf16.msra.mxu0 0
      %4459 = vmatprep.mubr.bf16.mxu0 0
      %4460 = vmatmul.mubr.bf16.gmra.mrb[0].mxu0 %v4422
      %v4461 = vpop.f32.mrb[0].mxu0
      %v4462 = vadd.f32 0.0, %v4461
      %v4463 = vpop.f32.mrb[0].mxu0
      %v4464 = vpop.f32.mrb[0].mxu0
      %v4465 = vpop.f32.mrb[0].mxu0
      %4466 = vdwg.mxu0
      %4467 = vrot.lane.b32.xlu0 %v2411, 64
      %v4468 = vpop.permute.xlu0 %4467
      %v4470 = vsel %vm1027, %v3118, 0
      %v4473 = vsel %vm3127, %v4468, 0
      %4475 = vmatprep.subr.bf16.mxu0 0
      %4476 = vmatpush1.bf16.msra.mxu0 %v4473
      %4477 = vmatprep.subr.bf16.mxu0 0
      %4478 = vmatpush1.bf16.msra.mxu0 0
      %4479 = vmatprep.subr.bf16.mxu0 0
      %4480 = vmatpush1.bf16.msra.mxu0 0
      %4481 = vmatprep.subr.bf16.mxu0 0
      %4482 = vmatpush1.bf16.msra.mxu0 0
      %4483 = vmatprep.subr.bf16.mxu0 0
      %4484 = vmatpush1.bf16.msra.mxu0 0
      %4485 = vmatprep.subr.bf16.mxu0 0
      %4486 = vmatpush1.bf16.msra.mxu0 0
      %4487 = vmatprep.subr.bf16.mxu0 0
      %4488 = vmatpush1.bf16.msra.mxu0 0
      %4489 = vmatprep.subr.bf16.mxu0 0
      %4490 = vmatpush1.bf16.msra.mxu0 0
      %4491 = vmatprep.subr.bf16.mxu0 0
      %4492 = vmatpush1.bf16.msra.mxu0 0
      %4493 = vmatprep.subr.bf16.mxu0 0
      %4494 = vmatpush1.bf16.msra.mxu0 0
      %4495 = vmatprep.subr.bf16.mxu0 0
      %4496 = vmatpush1.bf16.msra.mxu0 0
      %4497 = vmatprep.subr.bf16.mxu0 0
      %4498 = vmatpush1.bf16.msra.mxu0 0
      %4499 = vmatprep.subr.bf16.mxu0 0
      %4500 = vmatpush1.bf16.msra.mxu0 0
      %4501 = vmatprep.subr.bf16.mxu0 0
      %4502 = vmatpush1.bf16.msra.mxu0 0
      %4503 = vmatprep.subr.bf16.mxu0 0
      %4504 = vmatpush1.bf16.msra.mxu0 0
      %4505 = vmatprep.subr.bf16.mxu0 0
      %4506 = vmatpush1.bf16.msra.mxu0 0
      %4507 = vmatprep.mubr.bf16.mxu0 0
      %4508 = vmatmul.mubr.bf16.gmra.mrb[0].mxu0 %v4470
      %v4509 = vpop.f32.mrb[0].mxu0
      %v4510 = vadd.f32 0.0, %v4509
      %v4511 = vpop.f32.mrb[0].mxu0
      %v4512 = vpop.f32.mrb[0].mxu0
      %v4513 = vpop.f32.mrb[0].mxu0
      %4514 = vdwg.mxu0
      %4515 = vrot.lane.b32.xlu0 %v2461, 64
      %v4516 = vpop.permute.xlu0 %4515
      %v4518 = vsel %vm1027, %v3119, 0
      %v4521 = vsel %vm3127, %v4516, 0
      %4523 = vmatprep.subr.bf16.mxu0 0
      %4524 = vmatpush1.bf16.msra.mxu0 %v4521
      %4525 = vmatprep.subr.bf16.mxu0 0
      %4526 = vmatpush1.bf16.msra.mxu0 0
      %4527 = vmatprep.subr.bf16.mxu0 0
      %4528 = vmatpush1.bf16.msra.mxu0 0
      %4529 = vmatprep.subr.bf16.mxu0 0
      %4530 = vmatpush1.bf16.msra.mxu0 0
      %4531 = vmatprep.subr.bf16.mxu0 0
      %4532 = vmatpush1.bf16.msra.mxu0 0
      %4533 = vmatprep.subr.bf16.mxu0 0
      %4534 = vmatpush1.bf16.msra.mxu0 0
      %4535 = vmatprep.subr.bf16.mxu0 0
      %4536 = vmatpush1.bf16.msra.mxu0 0
      %4537 = vmatprep.subr.bf16.mxu0 0
      %4538 = vmatpush1.bf16.msra.mxu0 0
      %4539 = vmatprep.subr.bf16.mxu0 0
      %4540 = vmatpush1.bf16.msra.mxu0 0
      %4541 = vmatprep.subr.bf16.mxu0 0
      %4542 = vmatpush1.bf16.msra.mxu0 0
      %4543 = vmatprep.subr.bf16.mxu0 0
      %4544 = vmatpush1.bf16.msra.mxu0 0
      %4545 = vmatprep.subr.bf16.mxu0 0
      %4546 = vmatpush1.bf16.msra.mxu0 0
      %4547 = vmatprep.subr.bf16.mxu0 0
      %4548 = vmatpush1.bf16.msra.mxu0 0
      %4549 = vmatprep.subr.bf16.mxu0 0
      %4550 = vmatpush1.bf16.msra.mxu0 0
      %4551 = vmatprep.subr.bf16.mxu0 0
      %4552 = vmatpush1.bf16.msra.mxu0 0
      %4553 = vmatprep.subr.bf16.mxu0 0
      %4554 = vmatpush1.bf16.msra.mxu0 0
      %4555 = vmatprep.mubr.bf16.mxu0 0
      %4556 = vmatmul.mubr.bf16.gmra.mrb[0].mxu0 %v4518
      %v4557 = vpop.f32.mrb[0].mxu0
      %v4558 = vadd.f32 0.0, %v4557
      %v4559 = vpop.f32.mrb[0].mxu0
      %v4560 = vpop.f32.mrb[0].mxu0
      %v4561 = vpop.f32.mrb[0].mxu0
      %4562 = vdwg.mxu0
      %4563 = vrot.lane.b32.xlu0 %v2511, 64
      %v4564 = vpop.permute.xlu0 %4563
      %v4566 = vsel %vm1027, %v3120, 0
      %v4569 = vsel %vm3127, %v4564, 0
      %4571 = vmatprep.subr.bf16.mxu0 0
      %4572 = vmatpush1.bf16.msra.mxu0 %v4569
      %4573 = vmatprep.subr.bf16.mxu0 0
      %4574 = vmatpush1.bf16.msra.mxu0 0
      %4575 = vmatprep.subr.bf16.mxu0 0
      %4576 = vmatpush1.bf16.msra.mxu0 0
      %4577 = vmatprep.subr.bf16.mxu0 0
      %4578 = vmatpush1.bf16.msra.mxu0 0
      %4579 = vmatprep.subr.bf16.mxu0 0
      %4580 = vmatpush1.bf16.msra.mxu0 0
      %4581 = vmatprep.subr.bf16.mxu0 0
      %4582 = vmatpush1.bf16.msra.mxu0 0
      %4583 = vmatprep.subr.bf16.mxu0 0
      %4584 = vmatpush1.bf16.msra.mxu0 0
      %4585 = vmatprep.subr.bf16.mxu0 0
      %4586 = vmatpush1.bf16.msra.mxu0 0
      %4587 = vmatprep.subr.bf16.mxu0 0
      %4588 = vmatpush1.bf16.msra.mxu0 0
      %4589 = vmatprep.subr.bf16.mxu0 0
      %4590 = vmatpush1.bf16.msra.mxu0 0
      %4591 = vmatprep.subr.bf16.mxu0 0
      %4592 = vmatpush1.bf16.msra.mxu0 0
      %4593 = vmatprep.subr.bf16.mxu0 0
      %4594 = vmatpush1.bf16.msra.mxu0 0
      %4595 = vmatprep.subr.bf16.mxu0 0
      %4596 = vmatpush1.bf16.msra.mxu0 0
      %4597 = vmatprep.subr.bf16.mxu0 0
      %4598 = vmatpush1.bf16.msra.mxu0 0
      %4599 = vmatprep.subr.bf16.mxu0 0
      %4600 = vmatpush1.bf16.msra.mxu0 0
      %4601 = vmatprep.subr.bf16.mxu0 0
      %4602 = vmatpush1.bf16.msra.mxu0 0
      %4603 = vmatprep.mubr.bf16.mxu0 0
      %4604 = vmatmul.mubr.bf16.gmra.mrb[0].mxu0 %v4566
      %v4605 = vpop.f32.mrb[0].mxu0
      %v4606 = vadd.f32 0.0, %v4605
      %v4607 = vpop.f32.mrb[0].mxu0
      %v4608 = vpop.f32.mrb[0].mxu0
      %v4609 = vpop.f32.mrb[0].mxu0
      %4610 = vdwg.mxu0
      %4611 = vrot.lane.b32.xlu0 %v2561, 64
      %v4612 = vpop.permute.xlu0 %4611
      %v4614 = vsel %vm1027, %v3121, 0
      %v4617 = vsel %vm3127, %v4612, 0
      %4619 = vmatprep.subr.bf16.mxu0 0
      %4620 = vmatpush1.bf16.msra.mxu0 %v4617
      %4621 = vmatprep.subr.bf16.mxu0 0
      %4622 = vmatpush1.bf16.msra.mxu0 0
      %4623 = vmatprep.subr.bf16.mxu0 0
      %4624 = vmatpush1.bf16.msra.mxu0 0
      %4625 = vmatprep.subr.bf16.mxu0 0
      %4626 = vmatpush1.bf16.msra.mxu0 0
      %4627 = vmatprep.subr.bf16.mxu0 0
      %4628 = vmatpush1.bf16.msra.mxu0 0
      %4629 = vmatprep.subr.bf16.mxu0 0
      %4630 = vmatpush1.bf16.msra.mxu0 0
      %4631 = vmatprep.subr.bf16.mxu0 0
      %4632 = vmatpush1.bf16.msra.mxu0 0
      %4633 = vmatprep.subr.bf16.mxu0 0
      %4634 = vmatpush1.bf16.msra.mxu0 0
      %4635 = vmatprep.subr.bf16.mxu0 0
      %4636 = vmatpush1.bf16.msra.mxu0 0
      %4637 = vmatprep.subr.bf16.mxu0 0
      %4638 = vmatpush1.bf16.msra.mxu0 0
      %4639 = vmatprep.subr.bf16.mxu0 0
      %4640 = vmatpush1.bf16.msra.mxu0 0
      %4641 = vmatprep.subr.bf16.mxu0 0
      %4642 = vmatpush1.bf16.msra.mxu0 0
      %4643 = vmatprep.subr.bf16.mxu0 0
      %4644 = vmatpush1.bf16.msra.mxu0 0
      %4645 = vmatprep.subr.bf16.mxu0 0
      %4646 = vmatpush1.bf16.msra.mxu0 0
      %4647 = vmatprep.subr.bf16.mxu0 0
      %4648 = vmatpush1.bf16.msra.mxu0 0
      %4649 = vmatprep.subr.bf16.mxu0 0
      %4650 = vmatpush1.bf16.msra.mxu0 0
      %4651 = vmatprep.mubr.bf16.mxu0 0
      %4652 = vmatmul.mubr.bf16.gmra.mrb[0].mxu0 %v4614
      %v4653 = vpop.f32.mrb[0].mxu0
      %v4654 = vadd.f32 0.0, %v4653
      %v4655 = vpop.f32.mrb[0].mxu0
      %v4656 = vpop.f32.mrb[0].mxu0
      %v4657 = vpop.f32.mrb[0].mxu0
      %4658 = vdwg.mxu0
      %v4659 = vpack.c.bf16 %v3166, %v3166
      %v4660 = vpack.c.bf16 %v3214, %v3214
      %v4661 = vpack.c.bf16 %v3262, %v3262
      %v4662 = vpack.c.bf16 %v3310, %v3310
      %v4663 = vpack.c.bf16 %v3358, %v3358
      %v4664 = vpack.c.bf16 %v3406, %v3406
      %v4665 = vpack.c.bf16 %v3454, %v3454
      %v4666 = vpack.c.bf16 %v3502, %v3502
      %v4667 = vpack.c.bf16 %v3550, %v3550
      %v4668 = vpack.c.bf16 %v3598, %v3598
      %v4669 = vpack.c.bf16 %v3646, %v3646
      %v4670 = vpack.c.bf16 %v3694, %v3694
      %v4671 = vpack.c.bf16 %v3742, %v3742
      %v4672 = vpack.c.bf16 %v3790, %v3790
      %v4673 = vpack.c.bf16 %v3838, %v3838
      %v4674 = vpack.c.bf16 %v3886, %v3886
      %v4675 = vpack.c.bf16 %v3934, %v3934
      %v4676 = vpack.c.bf16 %v3982, %v3982
      %v4677 = vpack.c.bf16 %v4030, %v4030
      %v4678 = vpack.c.bf16 %v4078, %v4078
      %v4679 = vpack.c.bf16 %v4126, %v4126
      %v4680 = vpack.c.bf16 %v4174, %v4174
      %v4681 = vpack.c.bf16 %v4222, %v4222
      %v4682 = vpack.c.bf16 %v4270, %v4270
      %v4683 = vpack.c.bf16 %v4318, %v4318
      %v4684 = vpack.c.bf16 %v4366, %v4366
      %v4685 = vpack.c.bf16 %v4414, %v4414
      %v4686 = vpack.c.bf16 %v4462, %v4462
      %v4687 = vpack.c.bf16 %v4510, %v4510
      %v4688 = vpack.c.bf16 %v4558, %v4558
      %v4689 = vpack.c.bf16 %v4606, %v4606
      %v4690 = vpack.c.bf16 %v4654, %v4654
      %4699 = vrot.lane.b32.xlu0 %v4667, 8
      %v4700 = vpop.permute.xlu0 %4699
      %4701 = vrot.lane.b32.xlu0 %v4668, 8
      %v4702 = vpop.permute.xlu0 %4701
      %4703 = vrot.lane.b32.xlu0 %v4669, 8
      %v4704 = vpop.permute.xlu0 %4703
      %4705 = vrot.lane.b32.xlu0 %v4670, 8
      %v4706 = vpop.permute.xlu0 %4705
      %4707 = vrot.lane.b32.xlu0 %v4671, 8
      %v4708 = vpop.permute.xlu0 %4707
      %4709 = vrot.lane.b32.xlu0 %v4672, 8
      %v4710 = vpop.permute.xlu0 %4709
      %4711 = vrot.lane.b32.xlu0 %v4673, 8
      %v4712 = vpop.permute.xlu0 %4711
      %4713 = vrot.lane.b32.xlu0 %v4674, 8
      %v4714 = vpop.permute.xlu0 %4713
      %4723 = vrot.lane.b32.xlu0 %v4675, 16
      %v4724 = vpop.permute.xlu0 %4723
      %4725 = vrot.lane.b32.xlu0 %v4676, 16
      %v4726 = vpop.permute.xlu0 %4725
      %4727 = vrot.lane.b32.xlu0 %v4677, 16
      %v4728 = vpop.permute.xlu0 %4727
      %4729 = vrot.lane.b32.xlu0 %v4678, 16
      %v4730 = vpop.permute.xlu0 %4729
      %4731 = vrot.lane.b32.xlu0 %v4679, 16
      %v4732 = vpop.permute.xlu0 %4731
      %4733 = vrot.lane.b32.xlu0 %v4680, 16
      %v4734 = vpop.permute.xlu0 %4733
      %4735 = vrot.lane.b32.xlu0 %v4681, 16
      %v4736 = vpop.permute.xlu0 %4735
      %4737 = vrot.lane.b32.xlu0 %v4682, 16
      %v4738 = vpop.permute.xlu0 %4737
      %4747 = vrot.lane.b32.xlu0 %v4683, 24
      %v4748 = vpop.permute.xlu0 %4747
      %4749 = vrot.lane.b32.xlu0 %v4684, 24
      %v4750 = vpop.permute.xlu0 %4749
      %4751 = vrot.lane.b32.xlu0 %v4685, 24
      %v4752 = vpop.permute.xlu0 %4751
      %4753 = vrot.lane.b32.xlu0 %v4686, 24
      %v4754 = vpop.permute.xlu0 %4753
      %4755 = vrot.lane.b32.xlu0 %v4687, 24
      %v4756 = vpop.permute.xlu0 %4755
      %4757 = vrot.lane.b32.xlu0 %v4688, 24
      %v4758 = vpop.permute.xlu0 %4757
      %4759 = vrot.lane.b32.xlu0 %v4689, 24
      %v4760 = vpop.permute.xlu0 %4759
      %4761 = vrot.lane.b32.xlu0 %v4690, 24
      %v4762 = vpop.permute.xlu0 %4761
      %v4765 = vsel %vm1027, %v4659, %v4700
      %v4768 = vsel %vm1027, %v4660, %v4702
      %v4771 = vsel %vm1027, %v4661, %v4704
      %v4774 = vsel %vm1027, %v4662, %v4706
      %v4777 = vsel %vm1027, %v4663, %v4708
      %v4780 = vsel %vm1027, %v4664, %v4710
      %v4783 = vsel %vm1027, %v4665, %v4712
      %v4786 = vsel %vm1027, %v4666, %v4714
      %vm4787 = vcmask 130048
      %v4789 = vsel %vm4787, %v4765, %v4724
      %v4791 = vsel %vm4787, %v4768, %v4726
      %v4793 = vsel %vm4787, %v4771, %v4728
      %v4795 = vsel %vm4787, %v4774, %v4730
      %v4797 = vsel %vm4787, %v4777, %v4732
      %v4799 = vsel %vm4787, %v4780, %v4734
      %v4801 = vsel %vm4787, %v4783, %v4736
      %v4803 = vsel %vm4787, %v4786, %v4738
      %vm4804 = vcmask 195584
      %v4806 = vsel %vm4804, %v4789, %v4748
      %v4808 = vsel %vm4804, %v4791, %v4750
      %v4810 = vsel %vm4804, %v4793, %v4752
      %v4812 = vsel %vm4804, %v4795, %v4754
      %v4814 = vsel %vm4804, %v4797, %v4756
      %v4816 = vsel %vm4804, %v4799, %v4758
      %v4818 = vsel %vm4804, %v4801, %v4760
      %v4820 = vsel %vm4804, %v4803, %v4762
      %v4821 = vld [vmem:[%s647] sm:$0xf]
      %v4822 = vld [vmem:[%s647 + $0x4] sm:$0xf]
      %v4823 = vld [vmem:[%s647 + $0x8] sm:$0xf]
      %v4824 = vld [vmem:[%s647 + $0xc] sm:$0xf]
      %v4825 = vld [vmem:[%s650] sm:$0x1]
      %v4827 = vlaneseq
      %v4828 = vshrl.u32 %v4827, 7
      %v4829 = vsub.s32 0, %v4828
      %v4830 = vrot.slane %v4825, %v4829
      %v4840 = vunpack.c.l.b16 %v4806
      %v4841 = vunpack.c.l.b16 %v4808
      %v4842 = vunpack.c.l.b16 %v4810
      %v4843 = vunpack.c.l.b16 %v4812
      %v4844 = vunpack.c.l.b16 %v4814
      %v4845 = vunpack.c.l.b16 %v4816
      %v4846 = vunpack.c.l.b16 %v4818
      %v4847 = vunpack.c.l.b16 %v4820
      %v4848 = vpack.c.b16 %v4841, %v4840
      %v4849 = vpack.c.b16 %v4843, %v4842
      %v4850 = vpack.c.b16 %v4845, %v4844
      %v4851 = vpack.c.b16 %v4847, %v4846
      %v4856 = vunpack.c.l.b16 %v4821
      %v4857 = vunpack.c.l.b16 %v4822
      %v4858 = vunpack.c.l.b16 %v4823
      %v4859 = vunpack.c.l.b16 %v4824
      %v4860 = vpack.c.b16 %v4857, %v4856
      %v4861 = vpack.c.b16 %v4859, %v4858
      %v4865 = vsel %vm875, %v4848, 0
      %v4868 = vsel %vm875, %v4849, 0
      %v4871 = vsel %vm875, %v4850, 0
      %v4874 = vsel %vm875, %v4851, 0
      %4876 = vmatprep.subr.bf16.mxu0 0
      %4877 = vmatpush1.bf16.msra.mxu0 %v4860
      %4878 = vmatprep.subr.bf16.mxu0 0
      %4879 = vmatpush1.bf16.msra.mxu0 %v4861
      %4880 = vmatprep.subr.bf16.mxu0 0
      %4881 = vmatpush1.bf16.msra.mxu0 0
      %4882 = vmatprep.subr.bf16.mxu0 0
      %4883 = vmatpush1.bf16.msra.mxu0 0
      %4884 = vmatprep.subr.bf16.mxu0 0
      %4885 = vmatpush1.bf16.msra.mxu0 0
      %4886 = vmatprep.subr.bf16.mxu0 0
      %4887 = vmatpush1.bf16.msra.mxu0 0
      %4888 = vmatprep.subr.bf16.mxu0 0
      %4889 = vmatpush1.bf16.msra.mxu0 0
      %4890 = vmatprep.subr.bf16.mxu0 0
      %4891 = vmatpush1.bf16.msra.mxu0 0
      %4892 = vmatprep.subr.bf16.mxu0 0
      %4893 = vmatpush1.bf16.msra.mxu0 0
      %4894 = vmatprep.subr.bf16.mxu0 0
      %4895 = vmatpush1.bf16.msra.mxu0 0
      %4896 = vmatprep.subr.bf16.mxu0 0
      %4897 = vmatpush1.bf16.msra.mxu0 0
      %4898 = vmatprep.subr.bf16.mxu0 0
      %4899 = vmatpush1.bf16.msra.mxu0 0
      %4900 = vmatprep.subr.bf16.mxu0 0
      %4901 = vmatpush1.bf16.msra.mxu0 0
      %4902 = vmatprep.subr.bf16.mxu0 0
      %4903 = vmatpush1.bf16.msra.mxu0 0
      %4904 = vmatprep.subr.bf16.mxu0 0
      %4905 = vmatpush1.bf16.msra.mxu0 0
      %4906 = vmatprep.subr.bf16.mxu0 0
      %4907 = vmatpush1.bf16.msra.mxu0 0
      %4908 = vmatprep.mubr.bf16.mxu0 0
      %4909 = vmatmul.mubr.bf16.gmra.mrb[0].mxu0 %v4865
      %v4910 = vpop.f32.mrb[0].mxu0
      %v4911 = vadd.f32 %v4830, %v4910
      %v4912 = vpop.f32.mrb[0].mxu0
      %v4913 = vpop.f32.mrb[0].mxu0
      %v4914 = vadd.f32 %v4830, %v4913
      %v4915 = vpop.f32.mrb[0].mxu0
      %4916 = vmatprep.mubr.bf16.mxu0 0
      %4917 = vmatmul.mubr.bf16.gmra.mrb[0].mxu0 %v4868
      %v4918 = vpop.f32.mrb[0].mxu0
      %v4919 = vadd.f32 %v4830, %v4918
      %v4920 = vpop.f32.mrb[0].mxu0
      %v4921 = vpop.f32.mrb[0].mxu0
      %v4922 = vadd.f32 %v4830, %v4921
      %v4923 = vpop.f32.mrb[0].mxu0
      %4924 = vmatprep.mubr.bf16.mxu0 0
      %4925 = vmatmul.mubr.bf16.gmra.mrb[0].mxu0 %v4871
      %v4926 = vpop.f32.mrb[0].mxu0
      %v4927 = vadd.f32 %v4830, %v4926
      %v4928 = vpop.f32.mrb[0].mxu0
      %v4929 = vpop.f32.mrb[0].mxu0
      %v4930 = vadd.f32 %v4830, %v4929
      %v4931 = vpop.f32.mrb[0].mxu0
      %4932 = vmatprep.mubr.bf16.mxu0 0
      %4933 = vmatmul.mubr.bf16.gmra.mrb[0].mxu0 %v4874
      %v4934 = vpop.f32.mrb[0].mxu0
      %v4935 = vadd.f32 %v4830, %v4934
      %v4936 = vpop.f32.mrb[0].mxu0
      %v4937 = vpop.f32.mrb[0].mxu0
      %v4938 = vadd.f32 %v4830, %v4937
      %v4939 = vpop.f32.mrb[0].mxu0
      %4940 = vdwg.mxu0
      %v4941 = vadd.f32 %v840, %v4911
      %v4942 = vadd.f32 %v841, %v4914
      %v4943 = vadd.f32 %v842, %v4919
      %v4944 = vadd.f32 %v843, %v4922
      %v4945 = vadd.f32 %v844, %v4927
      %v4946 = vadd.f32 %v845, %v4930
      %v4947 = vadd.f32 %v846, %v4935
      %v4948 = vadd.f32 %v847, %v4938
      %v4949 = vld [vmem:[%s669] sm:$0x1]
      %v4950 = vld [vmem:[%s672] sm:$0x1]
      %vm4951 = vcmask 523264
      %v4953 = vsel %vm4951, 1.0, 0
      %4955 = vmatprep.subr.mxu0 0.0
      %4956 = vmatpush1.msra.mxu0 %v4941
      %4957 = vmatprep.subr.mxu0 0.0
      %4958 = vmatpush1.msra.mxu0 %v4942
      %4959 = vmatprep.subr.mxu0 0.0
      %4960 = vmatpush1.msra.mxu0 %v4943
      %4961 = vmatprep.subr.mxu0 0.0
      %4962 = vmatpush1.msra.mxu0 %v4944
      %4963 = vmatprep.subr.mxu0 0.0
      %4964 = vmatpush1.msra.mxu0 %v4945
      %4965 = vmatprep.subr.mxu0 0.0
      %4966 = vmatpush1.msra.mxu0 %v4946
      %4967 = vmatprep.subr.mxu0 0.0
      %4968 = vmatpush1.msra.mxu0 %v4947
      %4969 = vmatprep.subr.mxu0 0.0
      %4970 = vmatpush1.msra.mxu0 %v4948
      %4971 = vmatprep.subr.mxu0 0.0
      %4972 = vmatpush1.msra.mxu0 0.0
      %4973 = vmatprep.subr.mxu0 0.0
      %4974 = vmatpush1.msra.mxu0 0.0
      %4975 = vmatprep.subr.mxu0 0.0
      %4976 = vmatpush1.msra.mxu0 0.0
      %4977 = vmatprep.subr.mxu0 0.0
      %4978 = vmatpush1.msra.mxu0 0.0
      %4979 = vmatprep.subr.mxu0 0.0
      %4980 = vmatpush1.msra.mxu0 0.0
      %4981 = vmatprep.subr.mxu0 0.0
      %4982 = vmatpush1.msra.mxu0 0.0
      %4983 = vmatprep.subr.mxu0 0.0
      %4984 = vmatpush1.msra.mxu0 0.0
      %4985 = vmatprep.subr.mxu0 0.0
      %4986 = vmatpush1.msra.mxu0 0.0
      %4987 = vmatprep.subr.mxu0 0.0
      %4988 = vmatpush1.msra.mxu0 0.0
      %4989 = vmatprep.subr.mxu0 0.0
      %4990 = vmatpush1.msra.mxu0 0.0
      %4991 = vmatprep.subr.mxu0 0.0
      %4992 = vmatpush1.msra.mxu0 0.0
      %4993 = vmatprep.subr.mxu0 0.0
      %4994 = vmatpush1.msra.mxu0 0.0
      %4995 = vmatprep.subr.mxu0 0.0
      %4996 = vmatpush1.msra.mxu0 0.0
      %4997 = vmatprep.subr.mxu0 0.0
      %4998 = vmatpush1.msra.mxu0 0.0
      %4999 = vmatprep.subr.mxu0 0.0
      %5000 = vmatpush1.msra.mxu0 0.0
      %5001 = vmatprep.subr.mxu0 0.0
      %5002 = vmatpush1.msra.mxu0 0.0
      %5003 = vmatprep.subr.mxu0 0.0
      %5004 = vmatpush1.msra.mxu0 0.0
      %5005 = vmatprep.subr.mxu0 0.0
      %5006 = vmatpush1.msra.mxu0 0.0
      %5007 = vmatprep.subr.mxu0 0.0
      %5008 = vmatpush1.msra.mxu0 0.0
      %5009 = vmatprep.subr.mxu0 0.0
      %5010 = vmatpush1.msra.mxu0 0.0
      %5011 = vmatprep.subr.mxu0 0.0
      %5012 = vmatpush1.msra.mxu0 0.0
      %5013 = vmatprep.subr.mxu0 0.0
      %5014 = vmatpush1.msra.mxu0 0.0
      %5015 = vmatprep.subr.mxu0 0.0
      %5016 = vmatpush1.msra.mxu0 0.0
      %5017 = vmatprep.subr.mxu0 0.0
      %5018 = vmatpush1.msra.mxu0 0.0
      %5019 = vmatprep.mubr.f32.mxu0 0.0
      %5020 = vmatmul.mubr.f32.gmra.mrb[0].mxu0 %v4953
      %v5021 = vpop.f32.mrb[0].mxu0
      %v5022 = vadd.f32 0.0, %v5021
      %v5023 = vpop.f32.mrb[0].mxu0
      %5024 = vdwg.mxu0
      %v5025 = vmul.f32 %v5022, 0.015625
      %v5026 = vlaneseq
      %v5027 = vshrl.u32 %v5026, 7
      %v5028 = vsub.s32 0, %v5027
      %v5029 = vrot.slane %v5025, %v5028
      %v5030 = vsub.f32 %v4941, %v5029
      %v5031 = vsub.f32 %v4942, %v5029
      %v5032 = vsub.f32 %v4943, %v5029
      %v5033 = vsub.f32 %v4944, %v5029
      %v5034 = vsub.f32 %v4945, %v5029
      %v5035 = vsub.f32 %v4946, %v5029
      %v5036 = vsub.f32 %v4947, %v5029
      %v5037 = vsub.f32 %v4948, %v5029
      %v5038 = vmul.f32 %v5030, %v5030
      %v5039 = vmul.f32 %v5031, %v5031
      %v5040 = vmul.f32 %v5032, %v5032
      %v5041 = vmul.f32 %v5033, %v5033
      %v5042 = vmul.f32 %v5034, %v5034
      %v5043 = vmul.f32 %v5035, %v5035
      %v5044 = vmul.f32 %v5036, %v5036
      %v5045 = vmul.f32 %v5037, %v5037
      %5046 = vmatprep.subr.mxu0 0.0
      %5047 = vmatpush1.msra.mxu0 %v5038
      %5048 = vmatprep.subr.mxu0 0.0
      %5049 = vmatpush1.msra.mxu0 %v5039
      %5050 = vmatprep.subr.mxu0 0.0
      %5051 = vmatpush1.msra.mxu0 %v5040
      %5052 = vmatprep.subr.mxu0 0.0
      %5053 = vmatpush1.msra.mxu0 %v5041
      %5054 = vmatprep.subr.mxu0 0.0
      %5055 = vmatpush1.msra.mxu0 %v5042
      %5056 = vmatprep.subr.mxu0 0.0
      %5057 = vmatpush1.msra.mxu0 %v5043
      %5058 = vmatprep.subr.mxu0 0.0
      %5059 = vmatpush1.msra.mxu0 %v5044
      %5060 = vmatprep.subr.mxu0 0.0
      %5061 = vmatpush1.msra.mxu0 %v5045
      %5062 = vmatprep.subr.mxu0 0.0
      %5063 = vmatpush1.msra.mxu0 0.0
      %5064 = vmatprep.subr.mxu0 0.0
      %5065 = vmatpush1.msra.mxu0 0.0
      %5066 = vmatprep.subr.mxu0 0.0
      %5067 = vmatpush1.msra.mxu0 0.0
      %5068 = vmatprep.subr.mxu0 0.0
      %5069 = vmatpush1.msra.mxu0 0.0
      %5070 = vmatprep.subr.mxu0 0.0
      %5071 = vmatpush1.msra.mxu0 0.0
      %5072 = vmatprep.subr.mxu0 0.0
      %5073 = vmatpush1.msra.mxu0 0.0
      %5074 = vmatprep.subr.mxu0 0.0
      %5075 = vmatpush1.msra.mxu0 0.0
      %5076 = vmatprep.subr.mxu0 0.0
      %5077 = vmatpush1.msra.mxu0 0.0
      %5078 = vmatprep.subr.mxu0 0.0
      %5079 = vmatpush1.msra.mxu0 0.0
      %5080 = vmatprep.subr.mxu0 0.0
      %5081 = vmatpush1.msra.mxu0 0.0
      %5082 = vmatprep.subr.mxu0 0.0
      %5083 = vmatpush1.msra.mxu0 0.0
      %5084 = vmatprep.subr.mxu0 0.0
      %5085 = vmatpush1.msra.mxu0 0.0
      %5086 = vmatprep.subr.mxu0 0.0
      %5087 = vmatpush1.msra.mxu0 0.0
      %5088 = vmatprep.subr.mxu0 0.0
      %5089 = vmatpush1.msra.mxu0 0.0
      %5090 = vmatprep.subr.mxu0 0.0
      %5091 = vmatpush1.msra.mxu0 0.0
      %5092 = vmatprep.subr.mxu0 0.0
      %5093 = vmatpush1.msra.mxu0 0.0
      %5094 = vmatprep.subr.mxu0 0.0
      %5095 = vmatpush1.msra.mxu0 0.0
      %5096 = vmatprep.subr.mxu0 0.0
      %5097 = vmatpush1.msra.mxu0 0.0
      %5098 = vmatprep.subr.mxu0 0.0
      %5099 = vmatpush1.msra.mxu0 0.0
      %5100 = vmatprep.subr.mxu0 0.0
      %5101 = vmatpush1.msra.mxu0 0.0
      %5102 = vmatprep.subr.mxu0 0.0
      %5103 = vmatpush1.msra.mxu0 0.0
      %5104 = vmatprep.subr.mxu0 0.0
      %5105 = vmatpush1.msra.mxu0 0.0
      %5106 = vmatprep.subr.mxu0 0.0
      %5107 = vmatpush1.msra.mxu0 0.0
      %5108 = vmatprep.subr.mxu0 0.0
      %5109 = vmatpush1.msra.mxu0 0.0
      %5110 = vmatprep.mubr.f32.mxu0 0.0
      %5111 = vmatmul.mubr.f32.gmra.mrb[0].mxu0 %v4953
      %v5112 = vpop.f32.mrb[0].mxu0
      %v5113 = vadd.f32 0.0, %v5112
      %v5114 = vpop.f32.mrb[0].mxu0
      %5115 = vdwg.mxu0
      %v5116 = vmul.f32 %v5113, 0.015625
      %v5118 = vlaneseq
      %v5119 = vshrl.u32 %v5118, 7
      %v5120 = vsub.s32 0, %v5119
      %v5121 = vrot.slane %v4949, %v5120
      %v5123 = vmul.f32 %v5121, %v5030
      %v5124 = vmul.f32 %v5121, %v5031
      %v5125 = vmul.f32 %v5121, %v5032
      %v5126 = vmul.f32 %v5121, %v5033
      %v5127 = vmul.f32 %v5121, %v5034
      %v5128 = vmul.f32 %v5121, %v5035
      %v5129 = vmul.f32 %v5121, %v5036
      %v5130 = vmul.f32 %v5121, %v5037
      %v5131 = vadd.f32 %v5116, 1e-05
      %v5132 = vrsqrt.pop %v5131
      %v5133 = vlaneseq
      %v5134 = vshrl.u32 %v5133, 7
      %v5135 = vsub.s32 0, %v5134
      %v5136 = vrot.slane %v5132, %v5135
      %v5137 = vmul.f32 %v5123, %v5136
      %v5138 = vmul.f32 %v5124, %v5136
      %v5139 = vmul.f32 %v5125, %v5136
      %v5140 = vmul.f32 %v5126, %v5136
      %v5141 = vmul.f32 %v5127, %v5136
      %v5142 = vmul.f32 %v5128, %v5136
      %v5143 = vmul.f32 %v5129, %v5136
      %v5144 = vmul.f32 %v5130, %v5136
      %v5146 = vlaneseq
      %v5147 = vshrl.u32 %v5146, 7
      %v5148 = vsub.s32 0, %v5147
      %v5149 = vrot.slane %v4950, %v5148
      %v5151 = vadd.f32 %v5137, %v5149
      %v5152 = vadd.f32 %v5138, %v5149
      %v5153 = vadd.f32 %v5139, %v5149
      %v5154 = vadd.f32 %v5140, %v5149
      %v5155 = vadd.f32 %v5141, %v5149
      %v5156 = vadd.f32 %v5142, %v5149
      %v5157 = vadd.f32 %v5143, %v5149
      %v5158 = vadd.f32 %v5144, %v5149
      %v5159 = vpack.c.bf16 %v5152, %v5151
      %v5160 = vpack.c.bf16 %v5154, %v5153
      %v5161 = vpack.c.bf16 %v5156, %v5155
      %v5162 = vpack.c.bf16 %v5158, %v5157
      %v5163 = vld [vmem:[%s655] sm:$0xf]
      %v5164 = vld [vmem:[%s655 + $0x4] sm:$0xf]
      %v5165 = vld [vmem:[%s655 + $0x8] sm:$0xf]
      %v5166 = vld [vmem:[%s655 + $0xc] sm:$0xf]
      %v5167 = vld [vmem:[%s658] sm:$0x1]
      %v5169 = vlaneseq
      %v5170 = vshrl.u32 %v5169, 7
      %v5171 = vsub.s32 0, %v5170
      %v5172 = vrot.slane %v5167, %v5171
      %v5178 = vunpack.c.l.b16 %v5163
      %v5179 = vunpack.c.l.b16 %v5164
      %v5180 = vunpack.c.l.b16 %v5165
      %v5181 = vunpack.c.l.b16 %v5166
      %v5182 = vpack.c.b16 %v5179, %v5178
      %v5183 = vpack.c.b16 %v5181, %v5180
      %v5187 = vsel %vm875, %v5159, 0
      %v5190 = vsel %vm875, %v5160, 0
      %v5193 = vsel %vm875, %v5161, 0
      %v5196 = vsel %vm875, %v5162, 0
      %5198 = vmatprep.subr.bf16.mxu0 0
      %5199 = vmatpush1.bf16.msra.mxu0 %v5182
      %5200 = vmatprep.subr.bf16.mxu0 0
      %5201 = vmatpush1.bf16.msra.mxu0 %v5183
      %5202 = vmatprep.subr.bf16.mxu0 0
      %5203 = vmatpush1.bf16.msra.mxu0 0
      %5204 = vmatprep.subr.bf16.mxu0 0
      %5205 = vmatpush1.bf16.msra.mxu0 0
      %5206 = vmatprep.subr.bf16.mxu0 0
      %5207 = vmatpush1.bf16.msra.mxu0 0
      %5208 = vmatprep.subr.bf16.mxu0 0
      %5209 = vmatpush1.bf16.msra.mxu0 0
      %5210 = vmatprep.subr.bf16.mxu0 0
      %5211 = vmatpush1.bf16.msra.mxu0 0
      %5212 = vmatprep.subr.bf16.mxu0 0
      %5213 = vmatpush1.bf16.msra.mxu0 0
      %5214 = vmatprep.subr.bf16.mxu0 0
      %5215 = vmatpush1.bf16.msra.mxu0 0
      %5216 = vmatprep.subr.bf16.mxu0 0
      %5217 = vmatpush1.bf16.msra.mxu0 0
      %5218 = vmatprep.subr.bf16.mxu0 0
      %5219 = vmatpush1.bf16.msra.mxu0 0
      %5220 = vmatprep.subr.bf16.mxu0 0
      %5221 = vmatpush1.bf16.msra.mxu0 0
      %5222 = vmatprep.subr.bf16.mxu0 0
      %5223 = vmatpush1.bf16.msra.mxu0 0
      %5224 = vmatprep.subr.bf16.mxu0 0
      %5225 = vmatpush1.bf16.msra.mxu0 0
      %5226 = vmatprep.subr.bf16.mxu0 0
      %5227 = vmatpush1.bf16.msra.mxu0 0
      %5228 = vmatprep.subr.bf16.mxu0 0
      %5229 = vmatpush1.bf16.msra.mxu0 0
      %5230 = vmatprep.mubr.bf16.mxu0 0
      %5231 = vmatmul.mubr.bf16.gmra.mrb[0].mxu0 %v5187
      %v5232 = vpop.f32.mrb[0].mxu0
      %v5233 = vadd.f32 %v5172, %v5232
      %v5234 = vpop.f32.mrb[0].mxu0
      %v5235 = vpop.f32.mrb[0].mxu0
      %v5236 = vadd.f32 %v5172, %v5235
      %v5237 = vpop.f32.mrb[0].mxu0
      %5238 = vmatprep.mubr.bf16.mxu0 0
      %5239 = vmatmul.mubr.bf16.gmra.mrb[0].mxu0 %v5190
      %v5240 = vpop.f32.mrb[0].mxu0
      %v5241 = vadd.f32 %v5172, %v5240
      %v5242 = vpop.f32.mrb[0].mxu0
      %v5243 = vpop.f32.mrb[0].mxu0
      %v5244 = vadd.f32 %v5172, %v5243
      %v5245 = vpop.f32.mrb[0].mxu0
      %5246 = vmatprep.mubr.bf16.mxu0 0
      %5247 = vmatmul.mubr.bf16.gmra.mrb[0].mxu0 %v5193
      %v5248 = vpop.f32.mrb[0].mxu0
      %v5249 = vadd.f32 %v5172, %v5248
      %v5250 = vpop.f32.mrb[0].mxu0
      %v5251 = vpop.f32.mrb[0].mxu0
      %v5252 = vadd.f32 %v5172, %v5251
      %v5253 = vpop.f32.mrb[0].mxu0
      %5254 = vmatprep.mubr.bf16.mxu0 0
      %5255 = vmatmul.mubr.bf16.gmra.mrb[0].mxu0 %v5196
      %v5256 = vpop.f32.mrb[0].mxu0
      %v5257 = vadd.f32 %v5172, %v5256
      %v5258 = vpop.f32.mrb[0].mxu0
      %v5259 = vpop.f32.mrb[0].mxu0
      %v5260 = vadd.f32 %v5172, %v5259
      %v5261 = vpop.f32.mrb[0].mxu0
      %5262 = vdwg.mxu0
      %v5263 = vmul.f32 %v5233, 0.5
      %v5264 = vmul.f32 %v5236, 0.5
      %v5265 = vmul.f32 %v5241, 0.5
      %v5266 = vmul.f32 %v5244, 0.5
      %v5267 = vmul.f32 %v5249, 0.5
      %v5268 = vmul.f32 %v5252, 0.5
      %v5269 = vmul.f32 %v5257, 0.5
      %v5270 = vmul.f32 %v5260, 0.5
      %v5271 = vmul.f32 %v5233, 0.044715
      %v5272 = vmul.f32 %v5236, 0.044715
      %v5273 = vmul.f32 %v5241, 0.044715
      %v5274 = vmul.f32 %v5244, 0.044715
      %v5275 = vmul.f32 %v5249, 0.044715
      %v5276 = vmul.f32 %v5252, 0.044715
      %v5277 = vmul.f32 %v5257, 0.044715
      %v5278 = vmul.f32 %v5260, 0.044715
      %v5279 = vmul.f32 %v5271, %v5233
      %v5280 = vmul.f32 %v5272, %v5236
      %v5281 = vmul.f32 %v5273, %v5241
      %v5282 = vmul.f32 %v5274, %v5244
      %v5283 = vmul.f32 %v5275, %v5249
      %v5284 = vmul.f32 %v5276, %v5252
      %v5285 = vmul.f32 %v5277, %v5257
      %v5286 = vmul.f32 %v5278, %v5260
      %v5287 = vmul.f32 %v5279, %v5233
      %v5288 = vmul.f32 %v5280, %v5236
      %v5289 = vmul.f32 %v5281, %v5241
      %v5290 = vmul.f32 %v5282, %v5244
      %v5291 = vmul.f32 %v5283, %v5249
      %v5292 = vmul.f32 %v5284, %v5252
      %v5293 = vmul.f32 %v5285, %v5257
      %v5294 = vmul.f32 %v5286, %v5260
      %v5295 = vadd.f32 %v5233, %v5287
      %v5296 = vadd.f32 %v5236, %v5288
      %v5297 = vadd.f32 %v5241, %v5289
      %v5298 = vadd.f32 %v5244, %v5290
      %v5299 = vadd.f32 %v5249, %v5291
      %v5300 = vadd.f32 %v5252, %v5292
      %v5301 = vadd.f32 %v5257, %v5293
      %v5302 = vadd.f32 %v5260, %v5294
      %v5303 = vmul.f32 %v5295, 0.7978846
      %v5304 = vmul.f32 %v5296, 0.7978846
      %v5305 = vmul.f32 %v5297, 0.7978846
      %v5306 = vmul.f32 %v5298, 0.7978846
      %v5307 = vmul.f32 %v5299, 0.7978846
      %v5308 = vmul.f32 %v5300, 0.7978846
      %v5309 = vmul.f32 %v5301, 0.7978846
      %v5310 = vmul.f32 %v5302, 0.7978846
      %v5311 = vtanh.pop %v5303
      %v5312 = vtanh.pop %v5304
      %v5313 = vtanh.pop %v5305
      %v5314 = vtanh.pop %v5306
      %v5315 = vtanh.pop %v5307
      %v5316 = vtanh.pop %v5308
      %v5317 = vtanh.pop %v5309
      %v5318 = vtanh.pop %v5310
      %v5319 = vadd.f32 %v5311, 1.0
      %v5320 = vadd.f32 %v5312, 1.0
      %v5321 = vadd.f32 %v5313, 1.0
      %v5322 = vadd.f32 %v5314, 1.0
      %v5323 = vadd.f32 %v5315, 1.0
      %v5324 = vadd.f32 %v5316, 1.0
      %v5325 = vadd.f32 %v5317, 1.0
      %v5326 = vadd.f32 %v5318, 1.0
      %v5327 = vmul.f32 %v5263, %v5319
      %v5328 = vmul.f32 %v5264, %v5320
      %v5329 = vmul.f32 %v5265, %v5321
      %v5330 = vmul.f32 %v5266, %v5322
      %v5331 = vmul.f32 %v5267, %v5323
      %v5332 = vmul.f32 %v5268, %v5324
      %v5333 = vmul.f32 %v5269, %v5325
      %v5334 = vmul.f32 %v5270, %v5326
      %v5335 = vpack.c.bf16 %v5328, %v5327
      %v5336 = vpack.c.bf16 %v5330, %v5329
      %v5337 = vpack.c.bf16 %v5332, %v5331
      %v5338 = vpack.c.bf16 %v5334, %v5333
      %v5339 = vld [vmem:[%s663] sm:$0xf]
      %v5340 = vld [vmem:[%s663 + $0x4] sm:$0xf]
      %v5341 = vld [vmem:[%s663 + $0x8] sm:$0xf]
      %v5342 = vld [vmem:[%s663 + $0xc] sm:$0xf]
      %v5343 = vld [vmem:[%s663 + $0x10] sm:$0xf]
      %v5344 = vld [vmem:[%s663 + $0x14] sm:$0xf]
      %v5345 = vld [vmem:[%s663 + $0x18] sm:$0xf]
      %v5346 = vld [vmem:[%s663 + $0x1c] sm:$0xf]
      %v5347 = vld [vmem:[%s666] sm:$0x1]
      %v5349 = vlaneseq
      %v5350 = vshrl.u32 %v5349, 7
      %v5351 = vsub.s32 0, %v5350
      %v5352 = vrot.slane %v5347, %v5351
      %v5362 = vunpack.c.l.b16 %v5339
      %v5363 = vunpack.c.l.b16 %v5340
      %v5364 = vunpack.c.l.b16 %v5341
      %v5365 = vunpack.c.l.b16 %v5342
      %v5366 = vunpack.c.l.b16 %v5343
      %v5367 = vunpack.c.l.b16 %v5344
      %v5368 = vunpack.c.l.b16 %v5345
      %v5369 = vunpack.c.l.b16 %v5346
      %v5370 = vpack.c.b16 %v5363, %v5362
      %v5371 = vpack.c.b16 %v5365, %v5364
      %v5372 = vpack.c.b16 %v5367, %v5366
      %v5373 = vpack.c.b16 %v5369, %v5368
      %v5379 = vsel %vm4951, %v5335, 0
      %v5382 = vsel %vm4951, %v5336, 0
      %v5385 = vsel %vm4951, %v5337, 0
      %v5388 = vsel %vm4951, %v5338, 0
      %5390 = vmatprep.subr.bf16.mxu0 0
      %5391 = vmatpush1.bf16.msra.mxu0 %v5370
      %5392 = vmatprep.subr.bf16.mxu0 0
      %5393 = vmatpush1.bf16.msra.mxu0 %v5371
      %5394 = vmatprep.subr.bf16.mxu0 0
      %5395 = vmatpush1.bf16.msra.mxu0 %v5372
      %5396 = vmatprep.subr.bf16.mxu0 0
      %5397 = vmatpush1.bf16.msra.mxu0 %v5373
      %5398 = vmatprep.subr.bf16.mxu0 0
      %5399 = vmatpush1.bf16.msra.mxu0 0
      %5400 = vmatprep.subr.bf16.mxu0 0
      %5401 = vmatpush1.bf16.msra.mxu0 0
      %5402 = vmatprep.subr.bf16.mxu0 0
      %5403 = vmatpush1.bf16.msra.mxu0 0
      %5404 = vmatprep.subr.bf16.mxu0 0
      %5405 = vmatpush1.bf16.msra.mxu0 0
      %5406 = vmatprep.subr.bf16.mxu0 0
      %5407 = vmatpush1.bf16.msra.mxu0 0
      %5408 = vmatprep.subr.bf16.mxu0 0
      %5409 = vmatpush1.bf16.msra.mxu0 0
      %5410 = vmatprep.subr.bf16.mxu0 0
      %5411 = vmatpush1.bf16.msra.mxu0 0
      %5412 = vmatprep.subr.bf16.mxu0 0
      %5413 = vmatpush1.bf16.msra.mxu0 0
      %5414 = vmatprep.subr.bf16.mxu0 0
      %5415 = vmatpush1.bf16.msra.mxu0 0
      %5416 = vmatprep.subr.bf16.mxu0 0
      %5417 = vmatpush1.bf16.msra.mxu0 0
      %5418 = vmatprep.subr.bf16.mxu0 0
      %5419 = vmatpush1.bf16.msra.mxu0 0
      %5420 = vmatprep.subr.bf16.mxu0 0
      %5421 = vmatpush1.bf16.msra.mxu0 0
      %5422 = vmatprep.mubr.bf16.mxu0 0
      %5423 = vmatmul.mubr.bf16.gmra.mrb[0].mxu0 %v5379
      %v5424 = vpop.f32.mrb[0].mxu0
      %v5425 = vadd.f32 %v5352, %v5424
      %v5426 = vpop.f32.mrb[0].mxu0
      %v5427 = vpop.f32.mrb[0].mxu0
      %v5428 = vadd.f32 %v5352, %v5427
      %v5429 = vpop.f32.mrb[0].mxu0
      %5430 = vmatprep.mubr.bf16.mxu0 0
      %5431 = vmatmul.mubr.bf16.gmra.mrb[0].mxu0 %v5382
      %v5432 = vpop.f32.mrb[0].mxu0
      %v5433 = vadd.f32 %v5352, %v5432
      %v5434 = vpop.f32.mrb[0].mxu0
      %v5435 = vpop.f32.mrb[0].mxu0
      %v5436 = vadd.f32 %v5352, %v5435
      %v5437 = vpop.f32.mrb[0].mxu0
      %5438 = vmatprep.mubr.bf16.mxu0 0
      %5439 = vmatmul.mubr.bf16.gmra.mrb[0].mxu0 %v5385
      %v5440 = vpop.f32.mrb[0].mxu0
      %v5441 = vadd.f32 %v5352, %v5440
      %v5442 = vpop.f32.mrb[0].mxu0
      %v5443 = vpop.f32.mrb[0].mxu0
      %v5444 = vadd.f32 %v5352, %v5443
      %v5445 = vpop.f32.mrb[0].mxu0
      %5446 = vmatprep.mubr.bf16.mxu0 0
      %5447 = vmatmul.mubr.bf16.gmra.mrb[0].mxu0 %v5388
      %v5448 = vpop.f32.mrb[0].mxu0
      %v5449 = vadd.f32 %v5352, %v5448
      %v5450 = vpop.f32.mrb[0].mxu0
      %v5451 = vpop.f32.mrb[0].mxu0
      %v5452 = vadd.f32 %v5352, %v5451
      %v5453 = vpop.f32.mrb[0].mxu0
      %5454 = vdwg.mxu0
      %v5455 = vadd.f32 %v5151, %v5425
      %v5456 = vadd.f32 %v5152, %v5428
      %v5457 = vadd.f32 %v5153, %v5433
      %v5458 = vadd.f32 %v5154, %v5436
      %v5459 = vadd.f32 %v5155, %v5441
      %v5460 = vadd.f32 %v5156, %v5444
      %v5461 = vadd.f32 %v5157, %v5449
      %v5462 = vadd.f32 %v5158, %v5452
      %v5463 = vld [vmem:[%s675] sm:$0x1]
      %v5464 = vld [vmem:[%s678] sm:$0x1]
      %5465 = vmatprep.subr.mxu0 0.0
      %5466 = vmatpush1.msra.mxu0 %v5455
      %5467 = vmatprep.subr.mxu0 0.0
      %5468 = vmatpush1.msra.mxu0 %v5456
      %5469 = vmatprep.subr.mxu0 0.0
      %5470 = vmatpush1.msra.mxu0 %v5457
      %5471 = vmatprep.subr.mxu0 0.0
      %5472 = vmatpush1.msra.mxu0 %v5458
      %5473 = vmatprep.subr.mxu0 0.0
      %5474 = vmatpush1.msra.mxu0 %v5459
      %5475 = vmatprep.subr.mxu0 0.0
      %5476 = vmatpush1.msra.mxu0 %v5460
      %5477 = vmatprep.subr.mxu0 0.0
      %5478 = vmatpush1.msra.mxu0 %v5461
      %5479 = vmatprep.subr.mxu0 0.0
      %5480 = vmatpush1.msra.mxu0 %v5462
      %5481 = vmatprep.subr.mxu0 0.0
      %5482 = vmatpush1.msra.mxu0 0.0
      %5483 = vmatprep.subr.mxu0 0.0
      %5484 = vmatpush1.msra.mxu0 0.0
      %5485 = vmatprep.subr.mxu0 0.0
      %5486 = vmatpush1.msra.mxu0 0.0
      %5487 = vmatprep.subr.mxu0 0.0
      %5488 = vmatpush1.msra.mxu0 0.0
      %5489 = vmatprep.subr.mxu0 0.0
      %5490 = vmatpush1.msra.mxu0 0.0
      %5491 = vmatprep.subr.mxu0 0.0
      %5492 = vmatpush1.msra.mxu0 0.0
      %5493 = vmatprep.subr.mxu0 0.0
      %5494 = vmatpush1.msra.mxu0 0.0
      %5495 = vmatprep.subr.mxu0 0.0
      %5496 = vmatpush1.msra.mxu0 0.0
      %5497 = vmatprep.subr.mxu0 0.0
      %5498 = vmatpush1.msra.mxu0 0.0
      %5499 = vmatprep.subr.mxu0 0.0
      %5500 = vmatpush1.msra.mxu0 0.0
      %5501 = vmatprep.subr.mxu0 0.0
      %5502 = vmatpush1.msra.mxu0 0.0
      %5503 = vmatprep.subr.mxu0 0.0
      %5504 = vmatpush1.msra.mxu0 0.0
      %5505 = vmatprep.subr.mxu0 0.0
      %5506 = vmatpush1.msra.mxu0 0.0
      %5507 = vmatprep.subr.mxu0 0.0
      %5508 = vmatpush1.msra.mxu0 0.0
      %5509 = vmatprep.subr.mxu0 0.0
      %5510 = vmatpush1.msra.mxu0 0.0
      %5511 = vmatprep.subr.mxu0 0.0
      %5512 = vmatpush1.msra.mxu0 0.0
      %5513 = vmatprep.subr.mxu0 0.0
      %5514 = vmatpush1.msra.mxu0 0.0
      %5515 = vmatprep.subr.mxu0 0.0
      %5516 = vmatpush1.msra.mxu0 0.0
      %5517 = vmatprep.subr.mxu0 0.0
      %5518 = vmatpush1.msra.mxu0 0.0
      %5519 = vmatprep.subr.mxu0 0.0
      %5520 = vmatpush1.msra.mxu0 0.0
      %5521 = vmatprep.subr.mxu0 0.0
      %5522 = vmatpush1.msra.mxu0 0.0
      %5523 = vmatprep.subr.mxu0 0.0
      %5524 = vmatpush1.msra.mxu0 0.0
      %5525 = vmatprep.subr.mxu0 0.0
      %5526 = vmatpush1.msra.mxu0 0.0
      %5527 = vmatprep.subr.mxu0 0.0
      %5528 = vmatpush1.msra.mxu0 0.0
      %5529 = vmatprep.mubr.f32.mxu0 0.0
      %5530 = vmatmul.mubr.f32.gmra.mrb[0].mxu0 %v4953
      %v5531 = vpop.f32.mrb[0].mxu0
      %v5532 = vadd.f32 0.0, %v5531
      %v5533 = vpop.f32.mrb[0].mxu0
      %5534 = vdwg.mxu0
      %v5535 = vmul.f32 %v5532, 0.015625
      %v5536 = vlaneseq
      %v5537 = vshrl.u32 %v5536, 7
      %v5538 = vsub.s32 0, %v5537
      %v5539 = vrot.slane %v5535, %v5538
      %v5540 = vsub.f32 %v5455, %v5539
      %v5541 = vsub.f32 %v5456, %v5539
      %v5542 = vsub.f32 %v5457, %v5539
      %v5543 = vsub.f32 %v5458, %v5539
      %v5544 = vsub.f32 %v5459, %v5539
      %v5545 = vsub.f32 %v5460, %v5539
      %v5546 = vsub.f32 %v5461, %v5539
      %v5547 = vsub.f32 %v5462, %v5539
      %v5548 = vmul.f32 %v5540, %v5540
      %v5549 = vmul.f32 %v5541, %v5541
      %v5550 = vmul.f32 %v5542, %v5542
      %v5551 = vmul.f32 %v5543, %v5543
      %v5552 = vmul.f32 %v5544, %v5544
      %v5553 = vmul.f32 %v5545, %v5545
      %v5554 = vmul.f32 %v5546, %v5546
      %v5555 = vmul.f32 %v5547, %v5547
      %5556 = vmatprep.subr.mxu0 0.0
      %5557 = vmatpush1.msra.mxu0 %v5548
      %5558 = vmatprep.subr.mxu0 0.0
      %5559 = vmatpush1.msra.mxu0 %v5549
      %5560 = vmatprep.subr.mxu0 0.0
      %5561 = vmatpush1.msra.mxu0 %v5550
      %5562 = vmatprep.subr.mxu0 0.0
      %5563 = vmatpush1.msra.mxu0 %v5551
      %5564 = vmatprep.subr.mxu0 0.0
      %5565 = vmatpush1.msra.mxu0 %v5552
      %5566 = vmatprep.subr.mxu0 0.0
      %5567 = vmatpush1.msra.mxu0 %v5553
      %5568 = vmatprep.subr.mxu0 0.0
      %5569 = vmatpush1.msra.mxu0 %v5554
      %5570 = vmatprep.subr.mxu0 0.0
      %5571 = vmatpush1.msra.mxu0 %v5555
      %5572 = vmatprep.subr.mxu0 0.0
      %5573 = vmatpush1.msra.mxu0 0.0
      %5574 = vmatprep.subr.mxu0 0.0
      %5575 = vmatpush1.msra.mxu0 0.0
      %5576 = vmatprep.subr.mxu0 0.0
      %5577 = vmatpush1.msra.mxu0 0.0
      %5578 = vmatprep.subr.mxu0 0.0
      %5579 = vmatpush1.msra.mxu0 0.0
      %5580 = vmatprep.subr.mxu0 0.0
      %5581 = vmatpush1.msra.mxu0 0.0
      %5582 = vmatprep.subr.mxu0 0.0
      %5583 = vmatpush1.msra.mxu0 0.0
      %5584 = vmatprep.subr.mxu0 0.0
      %5585 = vmatpush1.msra.mxu0 0.0
      %5586 = vmatprep.subr.mxu0 0.0
      %5587 = vmatpush1.msra.mxu0 0.0
      %5588 = vmatprep.subr.mxu0 0.0
      %5589 = vmatpush1.msra.mxu0 0.0
      %5590 = vmatprep.subr.mxu0 0.0
      %5591 = vmatpush1.msra.mxu0 0.0
      %5592 = vmatprep.subr.mxu0 0.0
      %5593 = vmatpush1.msra.mxu0 0.0
      %5594 = vmatprep.subr.mxu0 0.0
      %5595 = vmatpush1.msra.mxu0 0.0
      %5596 = vmatprep.subr.mxu0 0.0
      %5597 = vmatpush1.msra.mxu0 0.0
      %5598 = vmatprep.subr.mxu0 0.0
      %5599 = vmatpush1.msra.mxu0 0.0
      %5600 = vmatprep.subr.mxu0 0.0
      %5601 = vmatpush1.msra.mxu0 0.0
      %5602 = vmatprep.subr.mxu0 0.0
      %5603 = vmatpush1.msra.mxu0 0.0
      %5604 = vmatprep.subr.mxu0 0.0
      %5605 = vmatpush1.msra.mxu0 0.0
      %5606 = vmatprep.subr.mxu0 0.0
      %5607 = vmatpush1.msra.mxu0 0.0
      %5608 = vmatprep.subr.mxu0 0.0
      %5609 = vmatpush1.msra.mxu0 0.0
      %5610 = vmatprep.subr.mxu0 0.0
      %5611 = vmatpush1.msra.mxu0 0.0
      %5612 = vmatprep.subr.mxu0 0.0
      %5613 = vmatpush1.msra.mxu0 0.0
      %5614 = vmatprep.subr.mxu0 0.0
      %5615 = vmatpush1.msra.mxu0 0.0
      %5616 = vmatprep.subr.mxu0 0.0
      %5617 = vmatpush1.msra.mxu0 0.0
      %5618 = vmatprep.subr.mxu0 0.0
      %5619 = vmatpush1.msra.mxu0 0.0
      %5620 = vmatprep.mubr.f32.mxu0 0.0
      %5621 = vmatmul.mubr.f32.gmra.mrb[0].mxu0 %v4953
      %v5622 = vpop.f32.mrb[0].mxu0
      %v5623 = vadd.f32 0.0, %v5622
      %v5624 = vpop.f32.mrb[0].mxu0
      %5625 = vdwg.mxu0
      %v5626 = vmul.f32 %v5623, 0.015625
      %v5628 = vlaneseq
      %v5629 = vshrl.u32 %v5628, 7
      %v5630 = vsub.s32 0, %v5629
      %v5631 = vrot.slane %v5463, %v5630
      %v5633 = vmul.f32 %v5631, %v5540
      %v5634 = vmul.f32 %v5631, %v5541
      %v5635 = vmul.f32 %v5631, %v5542
      %v5636 = vmul.f32 %v5631, %v5543
      %v5637 = vmul.f32 %v5631, %v5544
      %v5638 = vmul.f32 %v5631, %v5545
      %v5639 = vmul.f32 %v5631, %v5546
      %v5640 = vmul.f32 %v5631, %v5547
      %v5641 = vadd.f32 %v5626, 1e-05
      %v5642 = vrsqrt.pop %v5641
      %v5643 = vlaneseq
      %v5644 = vshrl.u32 %v5643, 7
      %v5645 = vsub.s32 0, %v5644
      %v5646 = vrot.slane %v5642, %v5645
      %v5647 = vmul.f32 %v5633, %v5646
      %v5648 = vmul.f32 %v5634, %v5646
      %v5649 = vmul.f32 %v5635, %v5646
      %v5650 = vmul.f32 %v5636, %v5646
      %v5651 = vmul.f32 %v5637, %v5646
      %v5652 = vmul.f32 %v5638, %v5646
      %v5653 = vmul.f32 %v5639, %v5646
      %v5654 = vmul.f32 %v5640, %v5646
      %v5656 = vlaneseq
      %v5657 = vshrl.u32 %v5656, 7
      %v5658 = vsub.s32 0, %v5657
      %v5659 = vrot.slane %v5464, %v5658
      %v5661 = vadd.f32 %v5647, %v5659
      %v5662 = vadd.f32 %v5648, %v5659
      %v5663 = vadd.f32 %v5649, %v5659
      %v5664 = vadd.f32 %v5650, %v5659
      %v5665 = vadd.f32 %v5651, %v5659
      %v5666 = vadd.f32 %v5652, %v5659
      %v5667 = vadd.f32 %v5653, %v5659
      %v5668 = vadd.f32 %v5654, %v5659
      %5669 = vst.msk [vmem:[#allocation2] sm:$0xff] %vm875, %v5661
      %5670 = vst.msk [vmem:[#allocation2 + $0x8] sm:$0xff] %vm875, %v5662
      %5671 = vst.msk [vmem:[#allocation2 + $0x10] sm:$0xff] %vm875, %v5663
      %5672 = vst.msk [vmem:[#allocation2 + $0x18] sm:$0xff] %vm875, %v5664
      %5673 = vst.msk [vmem:[#allocation2 + $0x20] sm:$0xff] %vm875, %v5665
      %5674 = vst.msk [vmem:[#allocation2 + $0x28] sm:$0xff] %vm875, %v5666
      %5675 = vst.msk [vmem:[#allocation2 + $0x30] sm:$0xff] %vm875, %v5667
      %5676 = vst.msk [vmem:[#allocation2 + $0x38] sm:$0xff] %vm875, %v5668
      %p5677 = scmp.eq.s32.totalorder %s27, 1
      // Predicated region
      $region89: #{patchtst_self_forward.2} parent=83 // pred_check
        %p5678 = pneg %p5677
      $region90: #{patchtst_self_forward.2} parent=83 // pred_check_branch
        %5680 = sbr.rel (%p5678) target = $region92
      $region91: #{patchtst_self_forward.2} parent=83 // pred_region
        %v5681 = vpack.c.bf16 %v5662, %v5661
        %v5682 = vpack.c.bf16 %v5664, %v5663
        %v5683 = vpack.c.bf16 %v5666, %v5665
        %v5684 = vpack.c.bf16 %v5668, %v5667
        %v5689 = vunpack.c.l.b16 %v5681
        %v5690 = vunpack.c.h.b16 %v5681
        %v5691 = vunpack.c.l.b16 %v5682
        %v5692 = vunpack.c.h.b16 %v5682
        %v5693 = vunpack.c.l.b16 %v5683
        %v5694 = vunpack.c.h.b16 %v5683
        %v5695 = vunpack.c.l.b16 %v5684
        %v5696 = vunpack.c.h.b16 %v5684
        %v5697 = vpack.c.b16 %v5689, %v5689
        %v5698 = vpack.c.b16 %v5690, %v5690
        %v5699 = vpack.c.b16 %v5691, %v5691
        %v5700 = vpack.c.b16 %v5692, %v5692
        %v5701 = vpack.c.b16 %v5693, %v5693
        %v5702 = vpack.c.b16 %v5694, %v5694
        %v5703 = vpack.c.b16 %v5695, %v5695
        %v5704 = vpack.c.b16 %v5696, %v5696
        %vm5713 = vcmask 257024
        %5714 = vst.msk [vmem:[%s16] sm:$0xf] %vm5713, %v5697
        %5715 = vst.msk [vmem:[%s16 + $0x4] sm:$0xf] %vm5713, %v5698
        %5716 = vst.msk [vmem:[%s16 + $0x8] sm:$0xf] %vm5713, %v5699
        %5717 = vst.msk [vmem:[%s16 + $0xc] sm:$0xf] %vm5713, %v5700
        %5718 = vst.msk [vmem:[%s16 + $0x10] sm:$0xf] %vm5713, %v5701
        %5719 = vst.msk [vmem:[%s16 + $0x14] sm:$0xf] %vm5713, %v5702
        %5720 = vst.msk [vmem:[%s16 + $0x18] sm:$0xf] %vm5713, %v5703
        %5721 = vst.msk [vmem:[%s16 + $0x1c] sm:$0xf] %vm5713, %v5704
      $region92: #{patchtst_self_forward.2} parent=83 // pred_fallthru
        _
      // Predicated region
      $region93: #{patchtst_self_forward.2} parent=83 // pred_check
        %p5722 = pneg %p436
      $region94: #{patchtst_self_forward.2} parent=83 // pred_check_branch
        %5724 = sbr.rel (%p5722) target = $region96
      $region95: #{patchtst_self_forward.2} parent=83 // pred_region
        _
      $region96: #{patchtst_self_forward.2} parent=83 // pred_fallthru
        _
      // Predicated region
      $region97: #{patchtst_self_forward.2} parent=83 // pred_check
        %p5725 = pneg %p436
      $region98: #{patchtst_self_forward.2} parent=83 // pred_check_branch
        %5727 = sbr.rel (%p5725) target = $region100
      $region99: #{patchtst_self_forward.2} parent=83 // pred_region
        _
      $region100: #{patchtst_self_forward.2} parent=83 // pred_fallthru
        _
    $region84: #{patchtst_self_forward.2} parent=5 // pred_fallthru
      _
    %p5728 = scmp.le.s32.totalorder 2, %s22
    // Predicated region
    $region101: #{patchtst_self_forward.2} parent=5 // pred_check
      %p5729 = pneg %p5728
    $region102: #{patchtst_self_forward.2} parent=5 // pred_check_branch
      %5731 = sbr.rel (%p5729) target = $region104
    $region103: #{patchtst_self_forward.2} parent=5 // pred_region
      %s5732 = ssub.s32 %s22, 2
    $region104: #{patchtst_self_forward.2} parent=5 // pred_fallthru
      _
  $region6: #{patchtst_self_forward.2} parent=0 // loop_footer
    %s26 = sadd.s32 1, %s22
  $region7: #{patchtst_self_forward.2} parent=0 // loop_footer_branch
    %21 = sbr.rel target = $region3
  $region8: #{patchtst_self_forward.2} parent=0 // loop_exit
    _

</llo_original>
